<compile_context>
chip_gen: v7x
topology: tpu7x:2x2x1
jax: 0.10.0
libtpu: 0.0.40
codegen_flags: <defaults>
</compile_context>

<pallas_src>
import math
import functools

import jax
import jax.numpy as jnp
from jax import lax
from jax.experimental import pallas as pl
from jax.experimental.pallas import tpu as pltpu


_LN_EPS = 1e-5


# ----------------------------- fused Pallas kernels --------------------------

def _attn_block_kernel(xt_ref, xf_ref, wq_ref, bq_ref, wk_ref, bk_ref,
                       wv_ref, bv_ref, wo_ref, bo_ref, lnw_ref, lnb_ref,
                       o_ref, *, num_heads, head_dim, eps):
    """Fused AttentionBlock for one batch element.

    Q/K/V projections -> per-head softmax(QK^T / d) V -> output projection
    -> skip connection -> LayerNorm over the full (len, dim) slab.
    """
    x_to = xt_ref[0]      # (Lq, Dto)
    x_from = xf_ref[0]    # (Lk, Dfrom)

    q = jnp.dot(x_to, wq_ref[...], preferred_element_type=jnp.float32) + bq_ref[...]
    k = jnp.dot(x_from, wk_ref[...], preferred_element_type=jnp.float32) + bk_ref[...]
    v = jnp.dot(x_from, wv_ref[...], preferred_element_type=jnp.float32) + bv_ref[...]

    wo = wo_ref[...]      # (H*d, Dto)
    inv_d = 1.0 / float(head_dim)

    out_acc = None
    # num_heads is tiny; Python loop unrolls at trace time, everything stays in vregs.
    for h in range(num_heads):
        lo = h * head_dim
        hi = lo + head_dim
        qh = q[:, lo:hi]                   # (Lq, d)
        kh = k[:, lo:hi]                   # (Lk, d)
        vh = v[:, lo:hi]                   # (Lk, d)
        # QK^T without materializing a transpose: contract last dims of both.
        s = lax.dot_general(qh, kh, (((1,), (1,)), ((), ())),
                            preferred_element_type=jnp.float32) * inv_d
        m = jnp.max(s, axis=-1, keepdims=True)
        p = jnp.exp(s - m)
        attn = p * pl.reciprocal(jnp.sum(p, axis=-1, keepdims=True), approx=True)
        oh = jnp.dot(attn, vh, preferred_element_type=jnp.float32)     # (Lq, d)
        # Fold the output projection into the head loop:
        #   concat_h(oh) @ Wo == sum_h oh @ Wo[h*d:(h+1)*d, :]
        contrib = jnp.dot(oh, wo[lo:hi, :], preferred_element_type=jnp.float32)
        out_acc = contrib if out_acc is None else out_acc + contrib

    out = out_acc + bo_ref[...]            # (Lq, Dto)

    # skip + LayerNorm over the whole (Lq, Dto) slab: nn.LayerNorm((len, dim)).
    x = x_to + out
    mu = jnp.mean(x)
    var = jnp.mean(jnp.square(x - mu))
    xn = (x - mu) * lax.rsqrt(var + eps)
    o_ref[0] = xn * lnw_ref[...] + lnb_ref[...]


def _ffn_block_kernel(x_ref, w1_ref, b1_ref, w2_ref, b2_ref, lnw_ref, lnb_ref,
                      o_ref, *, eps):
    """Fused FFN (Linear->ReLU->Linear) + skip + LayerNorm for one batch element."""
    # TODO(synk): training-mode nn.Dropout (stochastic) is not implemented; eval-mode identity.
    x = x_ref[0]                                                       # (L, D)
    h = jnp.dot(x, w1_ref[...], preferred_element_type=jnp.float32) + b1_ref[...]
    h = jnp.maximum(h, 0.0)
    y = jnp.dot(h, w2_ref[...], preferred_element_type=jnp.float32) + b2_ref[...]

    z = y + x
    mu = jnp.mean(z)
    var = jnp.mean(jnp.square(z - mu))
    zn = (z - mu) * lax.rsqrt(var + eps)
    o_ref[0] = zn * lnw_ref[...] + lnb_ref[...]


# ----------------------------- Pallas wrappers --------------------------------

def attention_block_fwd(p, X_to, X_from, num_heads):
    """Fused AttentionBlock: one pallas_call, grid over batch."""
    B, Lq, Dto = X_to.shape
    _, Lk, Dfrom = X_from.shape
    L = p["q"]["w"].shape[1]               # latent dim
    d = L // num_heads

    kernel = functools.partial(_attn_block_kernel,
                               num_heads=num_heads, head_dim=d, eps=_LN_EPS)
    return pl.pallas_call(
        kernel,
        out_shape=jax.ShapeDtypeStruct((B, Lq, Dto), jnp.float32),
        grid=(B,),
        in_specs=[
            pl.BlockSpec((1, Lq, Dto), lambda b: (b, 0, 0)),      # X_to
            pl.BlockSpec((1, Lk, Dfrom), lambda b: (b, 0, 0)),    # X_from
            pl.BlockSpec((Dto, L), lambda b: (0, 0)),             # Wq [in, out]
            pl.BlockSpec((1, L), lambda b: (0, 0)),               # bq
            pl.BlockSpec((Dfrom, L), lambda b: (0, 0)),           # Wk
            pl.BlockSpec((1, L), lambda b: (0, 0)),               # bk
            pl.BlockSpec((Dfrom, L), lambda b: (0, 0)),           # Wv
            pl.BlockSpec((1, L), lambda b: (0, 0)),               # bv
            pl.BlockSpec((L, Dto), lambda b: (0, 0)),             # Wout
            pl.BlockSpec((1, Dto), lambda b: (0, 0)),             # bout
            pl.BlockSpec((Lq, Dto), lambda b: (0, 0)),            # ln_w
            pl.BlockSpec((Lq, Dto), lambda b: (0, 0)),            # ln_b
        ],
        out_specs=pl.BlockSpec((1, Lq, Dto), lambda b: (b, 0, 0)),
        compiler_params=pltpu.CompilerParams(dimension_semantics=("parallel",)),
    )(X_to, X_from,
      p["q"]["w"], p["q"]["b"], p["k"]["w"], p["k"]["b"],
      p["v"]["w"], p["v"]["b"], p["out"]["w"], p["out"]["b"],
      p["ln_w"], p["ln_b"])


def ffn_skip_ln_fwd(p, X):
    """Fused FFN + skip + LayerNorm: one pallas_call, grid over batch."""
    B, Lq, D = X.shape
    Hd = p["ffn1"]["w"].shape[1]
    return pl.pallas_call(
        functools.partial(_ffn_block_kernel, eps=_LN_EPS),
        out_shape=jax.ShapeDtypeStruct((B, Lq, D), jnp.float32),
        grid=(B,),
        in_specs=[
            pl.BlockSpec((1, Lq, D), lambda b: (b, 0, 0)),        # X
            pl.BlockSpec((D, Hd), lambda b: (0, 0)),              # W1 [in, out]
            pl.BlockSpec((1, Hd), lambda b: (0, 0)),              # b1
            pl.BlockSpec((Hd, D), lambda b: (0, 0)),              # W2
            pl.BlockSpec((1, D), lambda b: (0, 0)),               # b2
            pl.BlockSpec((Lq, D), lambda b: (0, 0)),              # ln_w
            pl.BlockSpec((Lq, D), lambda b: (0, 0)),              # ln_b
        ],
        out_specs=pl.BlockSpec((1, Lq, D), lambda b: (b, 0, 0)),
        compiler_params=pltpu.CompilerParams(dimension_semantics=("parallel",)),
    )(X, p["ffn1"]["w"], p["ffn1"]["b"], p["ffn2"]["w"], p["ffn2"]["b"],
      p["ln_w"], p["ln_b"])


# --------------------------- parameter construction --------------------------

def init_linear_params(key, in_dim, out_dim):
    """PyTorch nn.Linear init; weight stored [in, out] (pre-transposed for MXU)."""
    kw, kb = jax.random.split(key)
    bound = 1.0 / math.sqrt(in_dim)
    w = jax.random.uniform(kw, (in_dim, out_dim), jnp.float32, -bound, bound)
    b = jax.random.uniform(kb, (1, out_dim), jnp.float32, -bound, bound)
    return {"w": w, "b": b}


def init_attention_block(key, to_dim, to_len, from_dim, latent_dim):
    ks = jax.random.split(key, 4)
    return {
        "q": init_linear_params(ks[0], to_dim, latent_dim),
        "k": init_linear_params(ks[1], from_dim, latent_dim),
        "v": init_linear_params(ks[2], from_dim, latent_dim),
        "out": init_linear_params(ks[3], latent_dim, to_dim),
        "ln_w": jnp.ones((to_len, to_dim), jnp.float32),
        "ln_b": jnp.zeros((to_len, to_dim), jnp.float32),
    }


def init_encoder_block(key, to_dim, to_len, latent_dim):
    k1, k2, k3 = jax.random.split(key, 3)
    return {
        "attn": init_attention_block(k1, to_dim, to_len, to_dim, latent_dim),
        "ffn1": init_linear_params(k2, to_dim, 4 * to_dim),
        "ffn2": init_linear_params(k3, 4 * to_dim, to_dim),
        "ln_w": jnp.ones((to_len, to_dim), jnp.float32),
        "ln_b": jnp.zeros((to_len, to_dim), jnp.float32),
    }


def init_decoder_block(key, to_dim, to_len, from_dim, latent_dim):
    k1, k2 = jax.random.split(key)
    return {
        "cross": init_attention_block(k1, to_dim, to_len, from_dim, latent_dim),
        "enc": init_encoder_block(k2, to_dim, to_len, latent_dim),
    }


def init_transformer(key, num_blocks, to_dim, to_len, from_dim, from_len, latent_dim):
    keys = jax.random.split(key, 2 * num_blocks)
    enc = [init_encoder_block(keys[i], to_dim, to_len, latent_dim)
           for i in range(num_blocks)]
    # Decoder in the PyTorch Transformer: to_dim<-from_dim, to_len<-from_len,
    # from_dim<-to_dim (cross-attends to the encoder output).
    dec = [init_decoder_block(keys[num_blocks + i], from_dim, from_len, to_dim, latent_dim)
           for i in range(num_blocks)]
    return {"encoder": enc, "decoder": dec}


# ------------------------------- forward pass --------------------------------

def encoder_block_fwd(p, X, num_heads):
    X = attention_block_fwd(p["attn"], X, X, num_heads)
    return ffn_skip_ln_fwd(p, X)


def decoder_block_fwd(p, X_to, X_from, num_heads):
    X_to = attention_block_fwd(p["cross"], X_to, X_from, num_heads)
    return encoder_block_fwd(p["enc"], X_to, num_heads)


def transformer_fwd(params, X_to, X_from, num_heads):
    for blk in params["encoder"]:
        X_to = encoder_block_fwd(blk, X_to, num_heads)
    X = X_from
    for blk in params["decoder"]:
        X = decoder_block_fwd(blk, X, X_to, num_heads)
    return X


# ------------------------- pure-JAX reference (check) ------------------------

def _ref_linear(x, w, b):
    # w is [in, out]
    return jnp.einsum("btd,do->bto", x, w, precision=lax.Precision.HIGHEST) + b


def _ref_skip_ln(x0, x1, w, b, eps=_LN_EPS):
    x = x0 + x1
    mu = jnp.mean(x, axis=(1, 2), keepdims=True)
    var = jnp.mean(jnp.square(x - mu), axis=(1, 2), keepdims=True)
    return (x - mu) / jnp.sqrt(var + eps) * w + b


def _ref_attention_block(p, X_to, X_from, H):
    Q = _ref_linear(X_to, p["q"]["w"], p["q"]["b"])
    K = _ref_linear(X_from, p["k"]["w"], p["k"]["b"])
    V = _ref_linear(X_from, p["v"]["w"], p["v"]["b"])
    B, Tq, L = Q.shape
    Tk = K.shape[1]
    d = L // H
    Qh = Q.reshape(B, Tq, H, d).transpose(0, 2, 1, 3)
    Kh = K.reshape(B, Tk, H, d).transpose(0, 2, 1, 3)
    Vh = V.reshape(B, Tk, H, d).transpose(0, 2, 1, 3)
    s = jnp.einsum("bhqd,bhkd->bhqk", Qh, Kh,
                   precision=lax.Precision.HIGHEST) / d
    attn = jax.nn.softmax(s, axis=-1)
    O = jnp.einsum("bhqk,bhkd->bhqd", attn, Vh,
                   precision=lax.Precision.HIGHEST)
    O = O.transpose(0, 2, 1, 3).reshape(B, Tq, L)
    out = _ref_linear(O, p["out"]["w"], p["out"]["b"])
    return _ref_skip_ln(X_to, out, p["ln_w"], p["ln_b"])


def _ref_encoder_block(p, X, H):
    X = _ref_attention_block(p["attn"], X, X, H)
    h = jnp.maximum(_ref_linear(X, p["ffn1"]["w"], p["ffn1"]["b"]), 0.0)
    Y = _ref_linear(h, p["ffn2"]["w"], p["ffn2"]["b"])
    return _ref_skip_ln(Y, X, p["ln_w"], p["ln_b"])


def _ref_decoder_block(p, X_to, X_from, H):
    X_to = _ref_attention_block(p["cross"], X_to, X_from, H)
    return _ref_encoder_block(p["enc"], X_to, H)


def transformer_ref(params, X_to, X_from, H):
    for blk in params["encoder"]:
        X_to = _ref_encoder_block(blk, X_to, H)
    X = X_from
    for blk in params["decoder"]:
        X = _ref_decoder_block(blk, X, X_to, H)
    return X


# ----------------------------------- main ------------------------------------

if __name__ == "__main__":
    num_blocks = 2
    num_heads = 4
    to_dim, to_len = 32, 8
    from_dim, from_len = 16, 8
    latent_dim = 32
    batch = 2

    key = jax.random.PRNGKey(0)
    kp, kx, ky = jax.random.split(key, 3)
    params = init_transformer(kp, num_blocks, to_dim, to_len,
                              from_dim, from_len, latent_dim)
    X_to = jax.random.normal(kx, (batch, to_len, to_dim), jnp.float32)
    X_from = jax.random.normal(ky, (batch, from_len, from_dim), jnp.float32)

    fwd = jax.jit(transformer_fwd, static_argnums=(3,))
    out = fwd(params, X_to, X_from, num_heads)
    out = jax.block_until_ready(out)

    assert out.shape == (batch, from_len, from_dim), out.shape
    ref = transformer_ref(params, X_to, X_from, num_heads)
    assert jnp.allclose(out, ref, atol=2e-2, rtol=2e-2), \
        float(jnp.max(jnp.abs(out - ref)))

    print("KERNEL_OK")
</pallas_src>

<mosaic_0001>
module attributes {stable_mosaic.version = 11 : i64} {
  func.func @_attn_block_kernel(%arg0: i32, %arg1: memref<1x8x32xf32, #tpu.memory_space<vmem>>, %arg2: memref<1x8x32xf32, #tpu.memory_space<vmem>>, %arg3: memref<32x32xf32, #tpu.memory_space<vmem>>, %arg4: memref<1x32xf32, #tpu.memory_space<vmem>>, %arg5: memref<32x32xf32, #tpu.memory_space<vmem>>, %arg6: memref<1x32xf32, #tpu.memory_space<vmem>>, %arg7: memref<32x32xf32, #tpu.memory_space<vmem>>, %arg8: memref<1x32xf32, #tpu.memory_space<vmem>>, %arg9: memref<32x32xf32, #tpu.memory_space<vmem>>, %arg10: memref<1x32xf32, #tpu.memory_space<vmem>>, %arg11: memref<8x32xf32, #tpu.memory_space<vmem>>, %arg12: memref<8x32xf32, #tpu.memory_space<vmem>>, %arg13: memref<1x8x32xf32, #tpu.memory_space<vmem>>) attributes {dimension_semantics = [#tpu.dimension_semantics<parallel>], iteration_bounds = array<i64: 2>, scalar_prefetch = 0 : i64, scratch_operands = 0 : i64, tpu.core_type = #tpu.core_type<tc>, window_params = [{transform_indices = @transform_0, window_bounds = array<i64: 1, 8, 32>}, {transform_indices = @transform_1, window_bounds = array<i64: 1, 8, 32>}, {pipeline_mode = #tpu.pipeline_mode<synchronous>, transform_indices = @transform_2, window_bounds = array<i64: 32, 32>}, {pipeline_mode = #tpu.pipeline_mode<synchronous>, transform_indices = @transform_3, window_bounds = array<i64: 1, 32>}, {pipeline_mode = #tpu.pipeline_mode<synchronous>, transform_indices = @transform_4, window_bounds = array<i64: 32, 32>}, {pipeline_mode = #tpu.pipeline_mode<synchronous>, transform_indices = @transform_5, window_bounds = array<i64: 1, 32>}, {pipeline_mode = #tpu.pipeline_mode<synchronous>, transform_indices = @transform_6, window_bounds = array<i64: 32, 32>}, {pipeline_mode = #tpu.pipeline_mode<synchronous>, transform_indices = @transform_7, window_bounds = array<i64: 1, 32>}, {pipeline_mode = #tpu.pipeline_mode<synchronous>, transform_indices = @transform_8, window_bounds = array<i64: 32, 32>}, {pipeline_mode = #tpu.pipeline_mode<synchronous>, transform_indices = @transform_9, window_bounds = array<i64: 1, 32>}, {pipeline_mode = #tpu.pipeline_mode<synchronous>, transform_indices = @transform_10, window_bounds = array<i64: 8, 32>}, {pipeline_mode = #tpu.pipeline_mode<synchronous>, transform_indices = @transform_11, window_bounds = array<i64: 8, 32>}, {transform_indices = @transform_12, window_bounds = array<i64: 1, 8, 32>}]} {
    %c0 = arith.constant 0 : index
    %c0_0 = arith.constant 0 : index
    %c0_1 = arith.constant 0 : index
    %0 = vector.load %arg1[%c0, %c0_0, %c0_1] : memref<1x8x32xf32, #tpu.memory_space<vmem>>, vector<1x8x32xf32>
    %1 = vector.shape_cast %0 : vector<1x8x32xf32> to vector<8x32xf32>
    %c0_2 = arith.constant 0 : index
    %c0_3 = arith.constant 0 : index
    %c0_4 = arith.constant 0 : index
    %2 = vector.load %arg2[%c0_2, %c0_3, %c0_4] : memref<1x8x32xf32, #tpu.memory_space<vmem>>, vector<1x8x32xf32>
    %3 = vector.shape_cast %2 : vector<1x8x32xf32> to vector<8x32xf32>
    %c0_5 = arith.constant 0 : index
    %c0_6 = arith.constant 0 : index
    %4 = vector.load %arg3[%c0_5, %c0_6] : memref<32x32xf32, #tpu.memory_space<vmem>>, vector<32x32xf32>
    %cst = arith.constant dense<0.000000e+00> : vector<8x32xf32>
    %5 = tpu.matmul %1, %4, %cst {dimension_numbers = #tpu.dot_dimension_numbers<[1], [0], [0], [1], [0, 0, 1, 1], [], []>} : vector<8x32xf32>, vector<32x32xf32>, vector<8x32xf32> -> vector<8x32xf32>
    %c0_7 = arith.constant 0 : index
    %c0_8 = arith.constant 0 : index
    %6 = vector.load %arg4[%c0_7, %c0_8] : memref<1x32xf32, #tpu.memory_space<vmem>>, vector<1x32xf32>
    %7 = vector.broadcast %6 : vector<1x32xf32> to vector<8x32xf32>
    %8 = arith.addf %5, %7 : vector<8x32xf32>
    %c0_9 = arith.constant 0 : index
    %c0_10 = arith.constant 0 : index
    %9 = vector.load %arg5[%c0_9, %c0_10] : memref<32x32xf32, #tpu.memory_space<vmem>>, vector<32x32xf32>
    %cst_11 = arith.constant dense<0.000000e+00> : vector<8x32xf32>
    %10 = tpu.matmul %3, %9, %cst_11 {dimension_numbers = #tpu.dot_dimension_numbers<[1], [0], [0], [1], [0, 0, 1, 1], [], []>} : vector<8x32xf32>, vector<32x32xf32>, vector<8x32xf32> -> vector<8x32xf32>
    %c0_12 = arith.constant 0 : index
    %c0_13 = arith.constant 0 : index
    %11 = vector.load %arg6[%c0_12, %c0_13] : memref<1x32xf32, #tpu.memory_space<vmem>>, vector<1x32xf32>
    %12 = vector.broadcast %11 : vector<1x32xf32> to vector<8x32xf32>
    %13 = arith.addf %10, %12 : vector<8x32xf32>
    %c0_14 = arith.constant 0 : index
    %c0_15 = arith.constant 0 : index
    %14 = vector.load %arg7[%c0_14, %c0_15] : memref<32x32xf32, #tpu.memory_space<vmem>>, vector<32x32xf32>
    %cst_16 = arith.constant dense<0.000000e+00> : vector<8x32xf32>
    %15 = tpu.matmul %3, %14, %cst_16 {dimension_numbers = #tpu.dot_dimension_numbers<[1], [0], [0], [1], [0, 0, 1, 1], [], []>} : vector<8x32xf32>, vector<32x32xf32>, vector<8x32xf32> -> vector<8x32xf32>
    %c0_17 = arith.constant 0 : index
    %c0_18 = arith.constant 0 : index
    %16 = vector.load %arg8[%c0_17, %c0_18] : memref<1x32xf32, #tpu.memory_space<vmem>>, vector<1x32xf32>
    %17 = vector.broadcast %16 : vector<1x32xf32> to vector<8x32xf32>
    %18 = arith.addf %15, %17 : vector<8x32xf32>
    %c0_19 = arith.constant 0 : index
    %c0_20 = arith.constant 0 : index
    %19 = vector.load %arg9[%c0_19, %c0_20] : memref<32x32xf32, #tpu.memory_space<vmem>>, vector<32x32xf32>
    %20 = vector.extract_strided_slice %8 {offsets = [0, 0], sizes = [8, 8], strides = [1, 1]} : vector<8x32xf32> to vector<8x8xf32>
    %21 = vector.extract_strided_slice %13 {offsets = [0, 0], sizes = [8, 8], strides = [1, 1]} : vector<8x32xf32> to vector<8x8xf32>
    %22 = vector.extract_strided_slice %18 {offsets = [0, 0], sizes = [8, 8], strides = [1, 1]} : vector<8x32xf32> to vector<8x8xf32>
    %cst_21 = arith.constant dense<0.000000e+00> : vector<8x8xf32>
    %23 = tpu.matmul %20, %21, %cst_21 {dimension_numbers = #tpu.dot_dimension_numbers<[1], [1], [0], [0], [0, 0, 1, 0], [], []>} : vector<8x8xf32>, vector<8x8xf32>, vector<8x8xf32> -> vector<8x8xf32>
    %cst_22 = arith.constant 1.250000e-01 : f32
    %24 = vector.broadcast %cst_22 : f32 to vector<8x8xf32>
    %25 = arith.mulf %23, %24 : vector<8x8xf32>
    %cst_23 = arith.constant dense<0xFF800000> : vector<8xf32>
    %26 = vector.multi_reduction <maximumf>, %25, %cst_23 [1] : vector<8x8xf32> to vector<8xf32>
    %27 = vector.shape_cast %26 : vector<8xf32> to vector<8x1xf32>
    %28 = vector.broadcast %27 : vector<8x1xf32> to vector<8x8xf32>
    %29 = arith.subf %25, %28 : vector<8x8xf32>
    %30 = math.exp %29 : vector<8x8xf32>
    %cst_24 = arith.constant dense<0.000000e+00> : vector<8xf32>
    %31 = vector.multi_reduction <add>, %30, %cst_24 [1] : vector<8x8xf32> to vector<8xf32>
    %32 = vector.shape_cast %31 : vector<8xf32> to vector<8x1xf32>
    %33 = tpu.reciprocal %32 {approx = true} : vector<8x1xf32> -> vector<8x1xf32>
    %34 = vector.broadcast %33 : vector<8x1xf32> to vector<8x8xf32>
    %35 = arith.mulf %30, %34 : vector<8x8xf32>
    %cst_25 = arith.constant dense<0.000000e+00> : vector<8x8xf32>
    %36 = tpu.matmul %35, %22, %cst_25 {dimension_numbers = #tpu.dot_dimension_numbers<[1], [0], [0], [1], [0, 0, 1, 1], [], []>} : vector<8x8xf32>, vector<8x8xf32>, vector<8x8xf32> -> vector<8x8xf32>
    %37 = vector.extract_strided_slice %19 {offsets = [0, 0], sizes = [8, 32], strides = [1, 1]} : vector<32x32xf32> to vector<8x32xf32>
    %cst_26 = arith.constant dense<0.000000e+00> : vector<8x32xf32>
    %38 = tpu.matmul %36, %37, %cst_26 {dimension_numbers = #tpu.dot_dimension_numbers<[1], [0], [0], [1], [0, 0, 1, 1], [], []>} : vector<8x8xf32>, vector<8x32xf32>, vector<8x32xf32> -> vector<8x32xf32>
    %39 = vector.extract_strided_slice %8 {offsets = [0, 8], sizes = [8, 8], strides = [1, 1]} : vector<8x32xf32> to vector<8x8xf32>
    %40 = vector.extract_strided_slice %13 {offsets = [0, 8], sizes = [8, 8], strides = [1, 1]} : vector<8x32xf32> to vector<8x8xf32>
    %41 = vector.extract_strided_slice %18 {offsets = [0, 8], sizes = [8, 8], strides = [1, 1]} : vector<8x32xf32> to vector<8x8xf32>
    %cst_27 = arith.constant dense<0.000000e+00> : vector<8x8xf32>
    %42 = tpu.matmul %39, %40, %cst_27 {dimension_numbers = #tpu.dot_dimension_numbers<[1], [1], [0], [0], [0, 0, 1, 0], [], []>} : vector<8x8xf32>, vector<8x8xf32>, vector<8x8xf32> -> vector<8x8xf32>
    %cst_28 = arith.constant 1.250000e-01 : f32
    %43 = vector.broadcast %cst_28 : f32 to vector<8x8xf32>
    %44 = arith.mulf %42, %43 : vector<8x8xf32>
    %cst_29 = arith.constant dense<0xFF800000> : vector<8xf32>
    %45 = vector.multi_reduction <maximumf>, %44, %cst_29 [1] : vector<8x8xf32> to vector<8xf32>
    %46 = vector.shape_cast %45 : vector<8xf32> to vector<8x1xf32>
    %47 = vector.broadcast %46 : vector<8x1xf32> to vector<8x8xf32>
    %48 = arith.subf %44, %47 : vector<8x8xf32>
    %49 = math.exp %48 : vector<8x8xf32>
    %cst_30 = arith.constant dense<0.000000e+00> : vector<8xf32>
    %50 = vector.multi_reduction <add>, %49, %cst_30 [1] : vector<8x8xf32> to vector<8xf32>
    %51 = vector.shape_cast %50 : vector<8xf32> to vector<8x1xf32>
    %52 = tpu.reciprocal %51 {approx = true} : vector<8x1xf32> -> vector<8x1xf32>
    %53 = vector.broadcast %52 : vector<8x1xf32> to vector<8x8xf32>
    %54 = arith.mulf %49, %53 : vector<8x8xf32>
    %cst_31 = arith.constant dense<0.000000e+00> : vector<8x8xf32>
    %55 = tpu.matmul %54, %41, %cst_31 {dimension_numbers = #tpu.dot_dimension_numbers<[1], [0], [0], [1], [0, 0, 1, 1], [], []>} : vector<8x8xf32>, vector<8x8xf32>, vector<8x8xf32> -> vector<8x8xf32>
    %56 = vector.extract_strided_slice %19 {offsets = [8, 0], sizes = [8, 32], strides = [1, 1]} : vector<32x32xf32> to vector<8x32xf32>
    %cst_32 = arith.constant dense<0.000000e+00> : vector<8x32xf32>
    %57 = tpu.matmul %55, %56, %cst_32 {dimension_numbers = #tpu.dot_dimension_numbers<[1], [0], [0], [1], [0, 0, 1, 1], [], []>} : vector<8x8xf32>, vector<8x32xf32>, vector<8x32xf32> -> vector<8x32xf32>
    %58 = arith.addf %38, %57 : vector<8x32xf32>
    %59 = vector.extract_strided_slice %8 {offsets = [0, 16], sizes = [8, 8], strides = [1, 1]} : vector<8x32xf32> to vector<8x8xf32>
    %60 = vector.extract_strided_slice %13 {offsets = [0, 16], sizes = [8, 8], strides = [1, 1]} : vector<8x32xf32> to vector<8x8xf32>
    %61 = vector.extract_strided_slice %18 {offsets = [0, 16], sizes = [8, 8], strides = [1, 1]} : vector<8x32xf32> to vector<8x8xf32>
    %cst_33 = arith.constant dense<0.000000e+00> : vector<8x8xf32>
    %62 = tpu.matmul %59, %60, %cst_33 {dimension_numbers = #tpu.dot_dimension_numbers<[1], [1], [0], [0], [0, 0, 1, 0], [], []>} : vector<8x8xf32>, vector<8x8xf32>, vector<8x8xf32> -> vector<8x8xf32>
    %cst_34 = arith.constant 1.250000e-01 : f32
    %63 = vector.broadcast %cst_34 : f32 to vector<8x8xf32>
    %64 = arith.mulf %62, %63 : vector<8x8xf32>
    %cst_35 = arith.constant dense<0xFF800000> : vector<8xf32>
    %65 = vector.multi_reduction <maximumf>, %64, %cst_35 [1] : vector<8x8xf32> to vector<8xf32>
    %66 = vector.shape_cast %65 : vector<8xf32> to vector<8x1xf32>
    %67 = vector.broadcast %66 : vector<8x1xf32> to vector<8x8xf32>
    %68 = arith.subf %64, %67 : vector<8x8xf32>
    %69 = math.exp %68 : vector<8x8xf32>
    %cst_36 = arith.constant dense<0.000000e+00> : vector<8xf32>
    %70 = vector.multi_reduction <add>, %69, %cst_36 [1] : vector<8x8xf32> to vector<8xf32>
    %71 = vector.shape_cast %70 : vector<8xf32> to vector<8x1xf32>
    %72 = tpu.reciprocal %71 {approx = true} : vector<8x1xf32> -> vector<8x1xf32>
    %73 = vector.broadcast %72 : vector<8x1xf32> to vector<8x8xf32>
    %74 = arith.mulf %69, %73 : vector<8x8xf32>
    %cst_37 = arith.constant dense<0.000000e+00> : vector<8x8xf32>
    %75 = tpu.matmul %74, %61, %cst_37 {dimension_numbers = #tpu.dot_dimension_numbers<[1], [0], [0], [1], [0, 0, 1, 1], [], []>} : vector<8x8xf32>, vector<8x8xf32>, vector<8x8xf32> -> vector<8x8xf32>
    %76 = vector.extract_strided_slice %19 {offsets = [16, 0], sizes = [8, 32], strides = [1, 1]} : vector<32x32xf32> to vector<8x32xf32>
    %cst_38 = arith.constant dense<0.000000e+00> : vector<8x32xf32>
    %77 = tpu.matmul %75, %76, %cst_38 {dimension_numbers = #tpu.dot_dimension_numbers<[1], [0], [0], [1], [0, 0, 1, 1], [], []>} : vector<8x8xf32>, vector<8x32xf32>, vector<8x32xf32> -> vector<8x32xf32>
    %78 = arith.addf %58, %77 : vector<8x32xf32>
    %79 = vector.extract_strided_slice %8 {offsets = [0, 24], sizes = [8, 8], strides = [1, 1]} : vector<8x32xf32> to vector<8x8xf32>
    %80 = vector.extract_strided_slice %13 {offsets = [0, 24], sizes = [8, 8], strides = [1, 1]} : vector<8x32xf32> to vector<8x8xf32>
    %81 = vector.extract_strided_slice %18 {offsets = [0, 24], sizes = [8, 8], strides = [1, 1]} : vector<8x32xf32> to vector<8x8xf32>
    %cst_39 = arith.constant dense<0.000000e+00> : vector<8x8xf32>
    %82 = tpu.matmul %79, %80, %cst_39 {dimension_numbers = #tpu.dot_dimension_numbers<[1], [1], [0], [0], [0, 0, 1, 0], [], []>} : vector<8x8xf32>, vector<8x8xf32>, vector<8x8xf32> -> vector<8x8xf32>
    %cst_40 = arith.constant 1.250000e-01 : f32
    %83 = vector.broadcast %cst_40 : f32 to vector<8x8xf32>
    %84 = arith.mulf %82, %83 : vector<8x8xf32>
    %cst_41 = arith.constant dense<0xFF800000> : vector<8xf32>
    %85 = vector.multi_reduction <maximumf>, %84, %cst_41 [1] : vector<8x8xf32> to vector<8xf32>
    %86 = vector.shape_cast %85 : vector<8xf32> to vector<8x1xf32>
    %87 = vector.broadcast %86 : vector<8x1xf32> to vector<8x8xf32>
    %88 = arith.subf %84, %87 : vector<8x8xf32>
    %89 = math.exp %88 : vector<8x8xf32>
    %cst_42 = arith.constant dense<0.000000e+00> : vector<8xf32>
    %90 = vector.multi_reduction <add>, %89, %cst_42 [1] : vector<8x8xf32> to vector<8xf32>
    %91 = vector.shape_cast %90 : vector<8xf32> to vector<8x1xf32>
    %92 = tpu.reciprocal %91 {approx = true} : vector<8x1xf32> -> vector<8x1xf32>
    %93 = vector.broadcast %92 : vector<8x1xf32> to vector<8x8xf32>
    %94 = arith.mulf %89, %93 : vector<8x8xf32>
    %cst_43 = arith.constant dense<0.000000e+00> : vector<8x8xf32>
    %95 = tpu.matmul %94, %81, %cst_43 {dimension_numbers = #tpu.dot_dimension_numbers<[1], [0], [0], [1], [0, 0, 1, 1], [], []>} : vector<8x8xf32>, vector<8x8xf32>, vector<8x8xf32> -> vector<8x8xf32>
    %96 = vector.extract_strided_slice %19 {offsets = [24, 0], sizes = [8, 32], strides = [1, 1]} : vector<32x32xf32> to vector<8x32xf32>
    %cst_44 = arith.constant dense<0.000000e+00> : vector<8x32xf32>
    %97 = tpu.matmul %95, %96, %cst_44 {dimension_numbers = #tpu.dot_dimension_numbers<[1], [0], [0], [1], [0, 0, 1, 1], [], []>} : vector<8x8xf32>, vector<8x32xf32>, vector<8x32xf32> -> vector<8x32xf32>
    %98 = arith.addf %78, %97 : vector<8x32xf32>
    %c0_45 = arith.constant 0 : index
    %c0_46 = arith.constant 0 : index
    %99 = vector.load %arg10[%c0_45, %c0_46] : memref<1x32xf32, #tpu.memory_space<vmem>>, vector<1x32xf32>
    %100 = vector.broadcast %99 : vector<1x32xf32> to vector<8x32xf32>
    %101 = arith.addf %98, %100 : vector<8x32xf32>
    %102 = arith.addf %1, %101 : vector<8x32xf32>
    %103 = vector.shape_cast %102 : vector<8x32xf32> to vector<1x8x32xf32>
    %cst_47 = arith.constant dense<0.000000e+00> : vector<1xf32>
    %104 = vector.multi_reduction <add>, %103, %cst_47 [1, 2] : vector<1x8x32xf32> to vector<1xf32>
    %105 = vector.shape_cast %104 : vector<1xf32> to vector<1x1x1xf32>
    %106 = vector.extract %105[0, 0, 0] : f32 from vector<1x1x1xf32>
    %cst_48 = arith.constant 2.560000e+02 : f32
    %107 = arith.divf %106, %cst_48 : f32
    %108 = vector.broadcast %107 : f32 to vector<8x32xf32>
    %109 = arith.subf %102, %108 : vector<8x32xf32>
    %110 = arith.mulf %109, %109 : vector<8x32xf32>
    %111 = vector.shape_cast %110 : vector<8x32xf32> to vector<1x8x32xf32>
    %cst_49 = arith.constant dense<0.000000e+00> : vector<1xf32>
    %112 = vector.multi_reduction <add>, %111, %cst_49 [1, 2] : vector<1x8x32xf32> to vector<1xf32>
    %113 = vector.shape_cast %112 : vector<1xf32> to vector<1x1x1xf32>
    %114 = vector.extract %113[0, 0, 0] : f32 from vector<1x1x1xf32>
    %cst_50 = arith.constant 2.560000e+02 : f32
    %115 = arith.divf %114, %cst_50 : f32
    %116 = vector.broadcast %107 : f32 to vector<8x32xf32>
    %117 = arith.subf %102, %116 : vector<8x32xf32>
    %cst_51 = arith.constant 9.99999974E-6 : f32
    %118 = arith.addf %115, %cst_51 : f32
    %119 = math.rsqrt %118 : f32
    %120 = vector.broadcast %119 : f32 to vector<8x32xf32>
    %121 = arith.mulf %117, %120 : vector<8x32xf32>
    %c0_52 = arith.constant 0 : index
    %c0_53 = arith.constant 0 : index
    %122 = vector.load %arg11[%c0_52, %c0_53] : memref<8x32xf32, #tpu.memory_space<vmem>>, vector<8x32xf32>
    %123 = arith.mulf %121, %122 : vector<8x32xf32>
    %c0_54 = arith.constant 0 : index
    %c0_55 = arith.constant 0 : index
    %124 = vector.load %arg12[%c0_54, %c0_55] : memref<8x32xf32, #tpu.memory_space<vmem>>, vector<8x32xf32>
    %125 = arith.addf %123, %124 : vector<8x32xf32>
    %c0_56 = arith.constant 0 : index
    %c0_57 = arith.constant 0 : index
    %c0_58 = arith.constant 0 : index
    %126 = vector.load %arg13[%c0_56, %c0_57, %c0_58] : memref<1x8x32xf32, #tpu.memory_space<vmem>>, vector<1x8x32xf32>
    %127 = vector.shape_cast %126 : vector<1x8x32xf32> to vector<8x32xf32>
    %128 = vector.shape_cast %125 : vector<8x32xf32> to vector<1x8x32xf32>
    tpu.vector_store %arg13[%c0_56, %c0_57, %c0_58], %128 {strides = array<i32>} : memref<1x8x32xf32, #tpu.memory_space<vmem>>, vector<1x8x32xf32>,
    return
  }
  func.func @transform_0(%arg0: i32) -> (i32, i32, i32) {
    %c0_i32 = arith.constant 0 : i32
    %c0_i32_0 = arith.constant 0 : i32
    %c0_i32_1 = arith.constant 0 : i32
    return %arg0, %c0_i32, %c0_i32_0 : i32, i32, i32
  }
  func.func @transform_1(%arg0: i32) -> (i32, i32, i32) {
    %c0_i32 = arith.constant 0 : i32
    %c0_i32_0 = arith.constant 0 : i32
    %c0_i32_1 = arith.constant 0 : i32
    return %arg0, %c0_i32, %c0_i32_0 : i32, i32, i32
  }
  func.func @transform_2(%arg0: i32) -> (i32, i32) {
    %c0_i32 = arith.constant 0 : i32
    %c0_i32_0 = arith.constant 0 : i32
    %c0_i32_1 = arith.constant 0 : i32
    return %c0_i32, %c0_i32_0 : i32, i32
  }
  func.func @transform_3(%arg0: i32) -> (i32, i32) {
    %c0_i32 = arith.constant 0 : i32
    %c0_i32_0 = arith.constant 0 : i32
    %c0_i32_1 = arith.constant 0 : i32
    return %c0_i32, %c0_i32_0 : i32, i32
  }
  func.func @transform_4(%arg0: i32) -> (i32, i32) {
    %c0_i32 = arith.constant 0 : i32
    %c0_i32_0 = arith.constant 0 : i32
    %c0_i32_1 = arith.constant 0 : i32
    return %c0_i32, %c0_i32_0 : i32, i32
  }
  func.func @transform_5(%arg0: i32) -> (i32, i32) {
    %c0_i32 = arith.constant 0 : i32
    %c0_i32_0 = arith.constant 0 : i32
    %c0_i32_1 = arith.constant 0 : i32
    return %c0_i32, %c0_i32_0 : i32, i32
  }
  func.func @transform_6(%arg0: i32) -> (i32, i32) {
    %c0_i32 = arith.constant 0 : i32
    %c0_i32_0 = arith.constant 0 : i32
    %c0_i32_1 = arith.constant 0 : i32
    return %c0_i32, %c0_i32_0 : i32, i32
  }
  func.func @transform_7(%arg0: i32) -> (i32, i32) {
    %c0_i32 = arith.constant 0 : i32
    %c0_i32_0 = arith.constant 0 : i32
    %c0_i32_1 = arith.constant 0 : i32
    return %c0_i32, %c0_i32_0 : i32, i32
  }
  func.func @transform_8(%arg0: i32) -> (i32, i32) {
    %c0_i32 = arith.constant 0 : i32
    %c0_i32_0 = arith.constant 0 : i32
    %c0_i32_1 = arith.constant 0 : i32
    return %c0_i32, %c0_i32_0 : i32, i32
  }
  func.func @transform_9(%arg0: i32) -> (i32, i32) {
    %c0_i32 = arith.constant 0 : i32
    %c0_i32_0 = arith.constant 0 : i32
    %c0_i32_1 = arith.constant 0 : i32
    return %c0_i32, %c0_i32_0 : i32, i32
  }
  func.func @transform_10(%arg0: i32) -> (i32, i32) {
    %c0_i32 = arith.constant 0 : i32
    %c0_i32_0 = arith.constant 0 : i32
    %c0_i32_1 = arith.constant 0 : i32
    return %c0_i32, %c0_i32_0 : i32, i32
  }
  func.func @transform_11(%arg0: i32) -> (i32, i32) {
    %c0_i32 = arith.constant 0 : i32
    %c0_i32_0 = arith.constant 0 : i32
    %c0_i32_1 = arith.constant 0 : i32
    return %c0_i32, %c0_i32_0 : i32, i32
  }
  func.func @transform_12(%arg0: i32) -> (i32, i32, i32) {
    %c0_i32 = arith.constant 0 : i32
    %c0_i32_0 = arith.constant 0 : i32
    %c0_i32_1 = arith.constant 0 : i32
    return %arg0, %c0_i32, %c0_i32_0 : i32, i32, i32
  }
}

module attributes {stable_mosaic.version = 11 : i64} {
  func.func @_ffn_block_kernel(%arg0: i32, %arg1: memref<1x8x32xf32, #tpu.memory_space<vmem>>, %arg2: memref<32x128xf32, #tpu.memory_space<vmem>>, %arg3: memref<1x128xf32, #tpu.memory_space<vmem>>, %arg4: memref<128x32xf32, #tpu.memory_space<vmem>>, %arg5: memref<1x32xf32, #tpu.memory_space<vmem>>, %arg6: memref<8x32xf32, #tpu.memory_space<vmem>>, %arg7: memref<8x32xf32, #tpu.memory_space<vmem>>, %arg8: memref<1x8x32xf32, #tpu.memory_space<vmem>>) attributes {dimension_semantics = [#tpu.dimension_semantics<parallel>], iteration_bounds = array<i64: 2>, scalar_prefetch = 0 : i64, scratch_operands = 0 : i64, tpu.core_type = #tpu.core_type<tc>, window_params = [{transform_indices = @transform_0, window_bounds = array<i64: 1, 8, 32>}, {pipeline_mode = #tpu.pipeline_mode<synchronous>, transform_indices = @transform_1, window_bounds = array<i64: 32, 128>}, {pipeline_mode = #tpu.pipeline_mode<synchronous>, transform_indices = @transform_2, window_bounds = array<i64: 1, 128>}, {pipeline_mode = #tpu.pipeline_mode<synchronous>, transform_indices = @transform_3, window_bounds = array<i64: 128, 32>}, {pipeline_mode = #tpu.pipeline_mode<synchronous>, transform_indices = @transform_4, window_bounds = array<i64: 1, 32>}, {pipeline_mode = #tpu.pipeline_mode<synchronous>, transform_indices = @transform_5, window_bounds = array<i64: 8, 32>}, {pipeline_mode = #tpu.pipeline_mode<synchronous>, transform_indices = @transform_6, window_bounds = array<i64: 8, 32>}, {transform_indices = @transform_7, window_bounds = array<i64: 1, 8, 32>}]} {
    %c0 = arith.constant 0 : index
    %c0_0 = arith.constant 0 : index
    %c0_1 = arith.constant 0 : index
    %0 = vector.load %arg1[%c0, %c0_0, %c0_1] : memref<1x8x32xf32, #tpu.memory_space<vmem>>, vector<1x8x32xf32>
    %1 = vector.shape_cast %0 : vector<1x8x32xf32> to vector<8x32xf32>
    %c0_2 = arith.constant 0 : index
    %c0_3 = arith.constant 0 : index
    %2 = vector.load %arg2[%c0_2, %c0_3] : memref<32x128xf32, #tpu.memory_space<vmem>>, vector<32x128xf32>
    %cst = arith.constant dense<0.000000e+00> : vector<8x128xf32>
    %3 = tpu.matmul %1, %2, %cst {dimension_numbers = #tpu.dot_dimension_numbers<[1], [0], [0], [1], [0, 0, 1, 1], [], []>} : vector<8x32xf32>, vector<32x128xf32>, vector<8x128xf32> -> vector<8x128xf32>
    %c0_4 = arith.constant 0 : index
    %c0_5 = arith.constant 0 : index
    %4 = vector.load %arg3[%c0_4, %c0_5] : memref<1x128xf32, #tpu.memory_space<vmem>>, vector<1x128xf32>
    %5 = vector.broadcast %4 : vector<1x128xf32> to vector<8x128xf32>
    %6 = arith.addf %3, %5 : vector<8x128xf32>
    %cst_6 = arith.constant 0.000000e+00 : f32
    %7 = vector.broadcast %cst_6 : f32 to vector<8x128xf32>
    %8 = arith.maximumf %6, %7 : vector<8x128xf32>
    %c0_7 = arith.constant 0 : index
    %c0_8 = arith.constant 0 : index
    %9 = vector.load %arg4[%c0_7, %c0_8] : memref<128x32xf32, #tpu.memory_space<vmem>>, vector<128x32xf32>
    %cst_9 = arith.constant dense<0.000000e+00> : vector<8x32xf32>
    %10 = tpu.matmul %8, %9, %cst_9 {dimension_numbers = #tpu.dot_dimension_numbers<[1], [0], [0], [1], [0, 0, 1, 1], [], []>} : vector<8x128xf32>, vector<128x32xf32>, vector<8x32xf32> -> vector<8x32xf32>
    %c0_10 = arith.constant 0 : index
    %c0_11 = arith.constant 0 : index
    %11 = vector.load %arg5[%c0_10, %c0_11] : memref<1x32xf32, #tpu.memory_space<vmem>>, vector<1x32xf32>
    %12 = vector.broadcast %11 : vector<1x32xf32> to vector<8x32xf32>
    %13 = arith.addf %10, %12 : vector<8x32xf32>
    %14 = arith.addf %13, %1 : vector<8x32xf32>
    %15 = vector.shape_cast %14 : vector<8x32xf32> to vector<1x8x32xf32>
    %cst_12 = arith.constant dense<0.000000e+00> : vector<1xf32>
    %16 = vector.multi_reduction <add>, %15, %cst_12 [1, 2] : vector<1x8x32xf32> to vector<1xf32>
    %17 = vector.shape_cast %16 : vector<1xf32> to vector<1x1x1xf32>
    %18 = vector.extract %17[0, 0, 0] : f32 from vector<1x1x1xf32>
    %cst_13 = arith.constant 2.560000e+02 : f32
    %19 = arith.divf %18, %cst_13 : f32
    %20 = vector.broadcast %19 : f32 to vector<8x32xf32>
    %21 = arith.subf %14, %20 : vector<8x32xf32>
    %22 = arith.mulf %21, %21 : vector<8x32xf32>
    %23 = vector.shape_cast %22 : vector<8x32xf32> to vector<1x8x32xf32>
    %cst_14 = arith.constant dense<0.000000e+00> : vector<1xf32>
    %24 = vector.multi_reduction <add>, %23, %cst_14 [1, 2] : vector<1x8x32xf32> to vector<1xf32>
    %25 = vector.shape_cast %24 : vector<1xf32> to vector<1x1x1xf32>
    %26 = vector.extract %25[0, 0, 0] : f32 from vector<1x1x1xf32>
    %cst_15 = arith.constant 2.560000e+02 : f32
    %27 = arith.divf %26, %cst_15 : f32
    %28 = vector.broadcast %19 : f32 to vector<8x32xf32>
    %29 = arith.subf %14, %28 : vector<8x32xf32>
    %cst_16 = arith.constant 9.99999974E-6 : f32
    %30 = arith.addf %27, %cst_16 : f32
    %31 = math.rsqrt %30 : f32
    %32 = vector.broadcast %31 : f32 to vector<8x32xf32>
    %33 = arith.mulf %29, %32 : vector<8x32xf32>
    %c0_17 = arith.constant 0 : index
    %c0_18 = arith.constant 0 : index
    %34 = vector.load %arg6[%c0_17, %c0_18] : memref<8x32xf32, #tpu.memory_space<vmem>>, vector<8x32xf32>
    %35 = arith.mulf %33, %34 : vector<8x32xf32>
    %c0_19 = arith.constant 0 : index
    %c0_20 = arith.constant 0 : index
    %36 = vector.load %arg7[%c0_19, %c0_20] : memref<8x32xf32, #tpu.memory_space<vmem>>, vector<8x32xf32>
    %37 = arith.addf %35, %36 : vector<8x32xf32>
    %c0_21 = arith.constant 0 : index
    %c0_22 = arith.constant 0 : index
    %c0_23 = arith.constant 0 : index
    %38 = vector.load %arg8[%c0_21, %c0_22, %c0_23] : memref<1x8x32xf32, #tpu.memory_space<vmem>>, vector<1x8x32xf32>
    %39 = vector.shape_cast %38 : vector<1x8x32xf32> to vector<8x32xf32>
    %40 = vector.shape_cast %37 : vector<8x32xf32> to vector<1x8x32xf32>
    tpu.vector_store %arg8[%c0_21, %c0_22, %c0_23], %40 {strides = array<i32>} : memref<1x8x32xf32, #tpu.memory_space<vmem>>, vector<1x8x32xf32>,
    return
  }
  func.func @transform_0(%arg0: i32) -> (i32, i32, i32) {
    %c0_i32 = arith.constant 0 : i32
    %c0_i32_0 = arith.constant 0 : i32
    %c0_i32_1 = arith.constant 0 : i32
    return %arg0, %c0_i32, %c0_i32_0 : i32, i32, i32
  }
  func.func @transform_1(%arg0: i32) -> (i32, i32) {
    %c0_i32 = arith.constant 0 : i32
    %c0_i32_0 = arith.constant 0 : i32
    %c0_i32_1 = arith.constant 0 : i32
    return %c0_i32, %c0_i32_0 : i32, i32
  }
  func.func @transform_2(%arg0: i32) -> (i32, i32) {
    %c0_i32 = arith.constant 0 : i32
    %c0_i32_0 = arith.constant 0 : i32
    %c0_i32_1 = arith.constant 0 : i32
    return %c0_i32, %c0_i32_0 : i32, i32
  }
  func.func @transform_3(%arg0: i32) -> (i32, i32) {
    %c0_i32 = arith.constant 0 : i32
    %c0_i32_0 = arith.constant 0 : i32
    %c0_i32_1 = arith.constant 0 : i32
    return %c0_i32, %c0_i32_0 : i32, i32
  }
  func.func @transform_4(%arg0: i32) -> (i32, i32) {
    %c0_i32 = arith.constant 0 : i32
    %c0_i32_0 = arith.constant 0 : i32
    %c0_i32_1 = arith.constant 0 : i32
    return %c0_i32, %c0_i32_0 : i32, i32
  }
  func.func @transform_5(%arg0: i32) -> (i32, i32) {
    %c0_i32 = arith.constant 0 : i32
    %c0_i32_0 = arith.constant 0 : i32
    %c0_i32_1 = arith.constant 0 : i32
    return %c0_i32, %c0_i32_0 : i32, i32
  }
  func.func @transform_6(%arg0: i32) -> (i32, i32) {
    %c0_i32 = arith.constant 0 : i32
    %c0_i32_0 = arith.constant 0 : i32
    %c0_i32_1 = arith.constant 0 : i32
    return %c0_i32, %c0_i32_0 : i32, i32
  }
  func.func @transform_7(%arg0: i32) -> (i32, i32, i32) {
    %c0_i32 = arith.constant 0 : i32
    %c0_i32_0 = arith.constant 0 : i32
    %c0_i32_1 = arith.constant 0 : i32
    return %arg0, %c0_i32, %c0_i32_0 : i32, i32, i32
  }
}

module attributes {stable_mosaic.version = 11 : i64} {
  func.func @_attn_block_kernel(%arg0: i32, %arg1: memref<1x8x16xf32, #tpu.memory_space<vmem>>, %arg2: memref<1x8x16xf32, #tpu.memory_space<vmem>>, %arg3: memref<16x32xf32, #tpu.memory_space<vmem>>, %arg4: memref<1x32xf32, #tpu.memory_space<vmem>>, %arg5: memref<16x32xf32, #tpu.memory_space<vmem>>, %arg6: memref<1x32xf32, #tpu.memory_space<vmem>>, %arg7: memref<16x32xf32, #tpu.memory_space<vmem>>, %arg8: memref<1x32xf32, #tpu.memory_space<vmem>>, %arg9: memref<32x16xf32, #tpu.memory_space<vmem>>, %arg10: memref<1x16xf32, #tpu.memory_space<vmem>>, %arg11: memref<8x16xf32, #tpu.memory_space<vmem>>, %arg12: memref<8x16xf32, #tpu.memory_space<vmem>>, %arg13: memref<1x8x16xf32, #tpu.memory_space<vmem>>) attributes {dimension_semantics = [#tpu.dimension_semantics<parallel>], iteration_bounds = array<i64: 2>, scalar_prefetch = 0 : i64, scratch_operands = 0 : i64, tpu.core_type = #tpu.core_type<tc>, window_params = [{transform_indices = @transform_0, window_bounds = array<i64: 1, 8, 16>}, {transform_indices = @transform_1, window_bounds = array<i64: 1, 8, 16>}, {pipeline_mode = #tpu.pipeline_mode<synchronous>, transform_indices = @transform_2, window_bounds = array<i64: 16, 32>}, {pipeline_mode = #tpu.pipeline_mode<synchronous>, transform_indices = @transform_3, window_bounds = array<i64: 1, 32>}, {pipeline_mode = #tpu.pipeline_mode<synchronous>, transform_indices = @transform_4, window_bounds = array<i64: 16, 32>}, {pipeline_mode = #tpu.pipeline_mode<synchronous>, transform_indices = @transform_5, window_bounds = array<i64: 1, 32>}, {pipeline_mode = #tpu.pipeline_mode<synchronous>, transform_indices = @transform_6, window_bounds = array<i64: 16, 32>}, {pipeline_mode = #tpu.pipeline_mode<synchronous>, transform_indices = @transform_7, window_bounds = array<i64: 1, 32>}, {pipeline_mode = #tpu.pipeline_mode<synchronous>, transform_indices = @transform_8, window_bounds = array<i64: 32, 16>}, {pipeline_mode = #tpu.pipeline_mode<synchronous>, transform_indices = @transform_9, window_bounds = array<i64: 1, 16>}, {pipeline_mode = #tpu.pipeline_mode<synchronous>, transform_indices = @transform_10, window_bounds = array<i64: 8, 16>}, {pipeline_mode = #tpu.pipeline_mode<synchronous>, transform_indices = @transform_11, window_bounds = array<i64: 8, 16>}, {transform_indices = @transform_12, window_bounds = array<i64: 1, 8, 16>}]} {
    %c0 = arith.constant 0 : index
    %c0_0 = arith.constant 0 : index
    %c0_1 = arith.constant 0 : index
    %0 = vector.load %arg1[%c0, %c0_0, %c0_1] : memref<1x8x16xf32, #tpu.memory_space<vmem>>, vector<1x8x16xf32>
    %1 = vector.shape_cast %0 : vector<1x8x16xf32> to vector<8x16xf32>
    %c0_2 = arith.constant 0 : index
    %c0_3 = arith.constant 0 : index
    %c0_4 = arith.constant 0 : index
    %2 = vector.load %arg2[%c0_2, %c0_3, %c0_4] : memref<1x8x16xf32, #tpu.memory_space<vmem>>, vector<1x8x16xf32>
    %3 = vector.shape_cast %2 : vector<1x8x16xf32> to vector<8x16xf32>
    %c0_5 = arith.constant 0 : index
    %c0_6 = arith.constant 0 : index
    %4 = vector.load %arg3[%c0_5, %c0_6] : memref<16x32xf32, #tpu.memory_space<vmem>>, vector<16x32xf32>
    %cst = arith.constant dense<0.000000e+00> : vector<8x32xf32>
    %5 = tpu.matmul %1, %4, %cst {dimension_numbers = #tpu.dot_dimension_numbers<[1], [0], [0], [1], [0, 0, 1, 1], [], []>} : vector<8x16xf32>, vector<16x32xf32>, vector<8x32xf32> -> vector<8x32xf32>
    %c0_7 = arith.constant 0 : index
    %c0_8 = arith.constant 0 : index
    %6 = vector.load %arg4[%c0_7, %c0_8] : memref<1x32xf32, #tpu.memory_space<vmem>>, vector<1x32xf32>
    %7 = vector.broadcast %6 : vector<1x32xf32> to vector<8x32xf32>
    %8 = arith.addf %5, %7 : vector<8x32xf32>
    %c0_9 = arith.constant 0 : index
    %c0_10 = arith.constant 0 : index
    %9 = vector.load %arg5[%c0_9, %c0_10] : memref<16x32xf32, #tpu.memory_space<vmem>>, vector<16x32xf32>
    %cst_11 = arith.constant dense<0.000000e+00> : vector<8x32xf32>
    %10 = tpu.matmul %3, %9, %cst_11 {dimension_numbers = #tpu.dot_dimension_numbers<[1], [0], [0], [1], [0, 0, 1, 1], [], []>} : vector<8x16xf32>, vector<16x32xf32>, vector<8x32xf32> -> vector<8x32xf32>
    %c0_12 = arith.constant 0 : index
    %c0_13 = arith.constant 0 : index
    %11 = vector.load %arg6[%c0_12, %c0_13] : memref<1x32xf32, #tpu.memory_space<vmem>>, vector<1x32xf32>
    %12 = vector.broadcast %11 : vector<1x32xf32> to vector<8x32xf32>
    %13 = arith.addf %10, %12 : vector<8x32xf32>
    %c0_14 = arith.constant 0 : index
    %c0_15 = arith.constant 0 : index
    %14 = vector.load %arg7[%c0_14, %c0_15] : memref<16x32xf32, #tpu.memory_space<vmem>>, vector<16x32xf32>
    %cst_16 = arith.constant dense<0.000000e+00> : vector<8x32xf32>
    %15 = tpu.matmul %3, %14, %cst_16 {dimension_numbers = #tpu.dot_dimension_numbers<[1], [0], [0], [1], [0, 0, 1, 1], [], []>} : vector<8x16xf32>, vector<16x32xf32>, vector<8x32xf32> -> vector<8x32xf32>
    %c0_17 = arith.constant 0 : index
    %c0_18 = arith.constant 0 : index
    %16 = vector.load %arg8[%c0_17, %c0_18] : memref<1x32xf32, #tpu.memory_space<vmem>>, vector<1x32xf32>
    %17 = vector.broadcast %16 : vector<1x32xf32> to vector<8x32xf32>
    %18 = arith.addf %15, %17 : vector<8x32xf32>
    %c0_19 = arith.constant 0 : index
    %c0_20 = arith.constant 0 : index
    %19 = vector.load %arg9[%c0_19, %c0_20] : memref<32x16xf32, #tpu.memory_space<vmem>>, vector<32x16xf32>
    %20 = vector.extract_strided_slice %8 {offsets = [0, 0], sizes = [8, 8], strides = [1, 1]} : vector<8x32xf32> to vector<8x8xf32>
    %21 = vector.extract_strided_slice %13 {offsets = [0, 0], sizes = [8, 8], strides = [1, 1]} : vector<8x32xf32> to vector<8x8xf32>
    %22 = vector.extract_strided_slice %18 {offsets = [0, 0], sizes = [8, 8], strides = [1, 1]} : vector<8x32xf32> to vector<8x8xf32>
    %cst_21 = arith.constant dense<0.000000e+00> : vector<8x8xf32>
    %23 = tpu.matmul %20, %21, %cst_21 {dimension_numbers = #tpu.dot_dimension_numbers<[1], [1], [0], [0], [0, 0, 1, 0], [], []>} : vector<8x8xf32>, vector<8x8xf32>, vector<8x8xf32> -> vector<8x8xf32>
    %cst_22 = arith.constant 1.250000e-01 : f32
    %24 = vector.broadcast %cst_22 : f32 to vector<8x8xf32>
    %25 = arith.mulf %23, %24 : vector<8x8xf32>
    %cst_23 = arith.constant dense<0xFF800000> : vector<8xf32>
    %26 = vector.multi_reduction <maximumf>, %25, %cst_23 [1] : vector<8x8xf32> to vector<8xf32>
    %27 = vector.shape_cast %26 : vector<8xf32> to vector<8x1xf32>
    %28 = vector.broadcast %27 : vector<8x1xf32> to vector<8x8xf32>
    %29 = arith.subf %25, %28 : vector<8x8xf32>
    %30 = math.exp %29 : vector<8x8xf32>
    %cst_24 = arith.constant dense<0.000000e+00> : vector<8xf32>
    %31 = vector.multi_reduction <add>, %30, %cst_24 [1] : vector<8x8xf32> to vector<8xf32>
    %32 = vector.shape_cast %31 : vector<8xf32> to vector<8x1xf32>
    %33 = tpu.reciprocal %32 {approx = true} : vector<8x1xf32> -> vector<8x1xf32>
    %34 = vector.broadcast %33 : vector<8x1xf32> to vector<8x8xf32>
    %35 = arith.mulf %30, %34 : vector<8x8xf32>
    %cst_25 = arith.constant dense<0.000000e+00> : vector<8x8xf32>
    %36 = tpu.matmul %35, %22, %cst_25 {dimension_numbers = #tpu.dot_dimension_numbers<[1], [0], [0], [1], [0, 0, 1, 1], [], []>} : vector<8x8xf32>, vector<8x8xf32>, vector<8x8xf32> -> vector<8x8xf32>
    %37 = vector.extract_strided_slice %19 {offsets = [0, 0], sizes = [8, 16], strides = [1, 1]} : vector<32x16xf32> to vector<8x16xf32>
    %cst_26 = arith.constant dense<0.000000e+00> : vector<8x16xf32>
    %38 = tpu.matmul %36, %37, %cst_26 {dimension_numbers = #tpu.dot_dimension_numbers<[1], [0], [0], [1], [0, 0, 1, 1], [], []>} : vector<8x8xf32>, vector<8x16xf32>, vector<8x16xf32> -> vector<8x16xf32>
    %39 = vector.extract_strided_slice %8 {offsets = [0, 8], sizes = [8, 8], strides = [1, 1]} : vector<8x32xf32> to vector<8x8xf32>
    %40 = vector.extract_strided_slice %13 {offsets = [0, 8], sizes = [8, 8], strides = [1, 1]} : vector<8x32xf32> to vector<8x8xf32>
    %41 = vector.extract_strided_slice %18 {offsets = [0, 8], sizes = [8, 8], strides = [1, 1]} : vector<8x32xf32> to vector<8x8xf32>
    %cst_27 = arith.constant dense<0.000000e+00> : vector<8x8xf32>
    %42 = tpu.matmul %39, %40, %cst_27 {dimension_numbers = #tpu.dot_dimension_numbers<[1], [1], [0], [0], [0, 0, 1, 0], [], []>} : vector<8x8xf32>, vector<8x8xf32>, vector<8x8xf32> -> vector<8x8xf32>
    %cst_28 = arith.constant 1.250000e-01 : f32
    %43 = vector.broadcast %cst_28 : f32 to vector<8x8xf32>
    %44 = arith.mulf %42, %43 : vector<8x8xf32>
    %cst_29 = arith.constant dense<0xFF800000> : vector<8xf32>
    %45 = vector.multi_reduction <maximumf>, %44, %cst_29 [1] : vector<8x8xf32> to vector<8xf32>
    %46 = vector.shape_cast %45 : vector<8xf32> to vector<8x1xf32>
    %47 = vector.broadcast %46 : vector<8x1xf32> to vector<8x8xf32>
    %48 = arith.subf %44, %47 : vector<8x8xf32>
    %49 = math.exp %48 : vector<8x8xf32>
    %cst_30 = arith.constant dense<0.000000e+00> : vector<8xf32>
    %50 = vector.multi_reduction <add>, %49, %cst_30 [1] : vector<8x8xf32> to vector<8xf32>
    %51 = vector.shape_cast %50 : vector<8xf32> to vector<8x1xf32>
    %52 = tpu.reciprocal %51 {approx = true} : vector<8x1xf32> -> vector<8x1xf32>
    %53 = vector.broadcast %52 : vector<8x1xf32> to vector<8x8xf32>
    %54 = arith.mulf %49, %53 : vector<8x8xf32>
    %cst_31 = arith.constant dense<0.000000e+00> : vector<8x8xf32>
    %55 = tpu.matmul %54, %41, %cst_31 {dimension_numbers = #tpu.dot_dimension_numbers<[1], [0], [0], [1], [0, 0, 1, 1], [], []>} : vector<8x8xf32>, vector<8x8xf32>, vector<8x8xf32> -> vector<8x8xf32>
    %56 = vector.extract_strided_slice %19 {offsets = [8, 0], sizes = [8, 16], strides = [1, 1]} : vector<32x16xf32> to vector<8x16xf32>
    %cst_32 = arith.constant dense<0.000000e+00> : vector<8x16xf32>
    %57 = tpu.matmul %55, %56, %cst_32 {dimension_numbers = #tpu.dot_dimension_numbers<[1], [0], [0], [1], [0, 0, 1, 1], [], []>} : vector<8x8xf32>, vector<8x16xf32>, vector<8x16xf32> -> vector<8x16xf32>
    %58 = arith.addf %38, %57 : vector<8x16xf32>
    %59 = vector.extract_strided_slice %8 {offsets = [0, 16], sizes = [8, 8], strides = [1, 1]} : vector<8x32xf32> to vector<8x8xf32>
    %60 = vector.extract_strided_slice %13 {offsets = [0, 16], sizes = [8, 8], strides = [1, 1]} : vector<8x32xf32> to vector<8x8xf32>
    %61 = vector.extract_strided_slice %18 {offsets = [0, 16], sizes = [8, 8], strides = [1, 1]} : vector<8x32xf32> to vector<8x8xf32>
    %cst_33 = arith.constant dense<0.000000e+00> : vector<8x8xf32>
    %62 = tpu.matmul %59, %60, %cst_33 {dimension_numbers = #tpu.dot_dimension_numbers<[1], [1], [0], [0], [0, 0, 1, 0], [], []>} : vector<8x8xf32>, vector<8x8xf32>, vector<8x8xf32> -> vector<8x8xf32>
    %cst_34 = arith.constant 1.250000e-01 : f32
    %63 = vector.broadcast %cst_34 : f32 to vector<8x8xf32>
    %64 = arith.mulf %62, %63 : vector<8x8xf32>
    %cst_35 = arith.constant dense<0xFF800000> : vector<8xf32>
    %65 = vector.multi_reduction <maximumf>, %64, %cst_35 [1] : vector<8x8xf32> to vector<8xf32>
    %66 = vector.shape_cast %65 : vector<8xf32> to vector<8x1xf32>
    %67 = vector.broadcast %66 : vector<8x1xf32> to vector<8x8xf32>
    %68 = arith.subf %64, %67 : vector<8x8xf32>
    %69 = math.exp %68 : vector<8x8xf32>
    %cst_36 = arith.constant dense<0.000000e+00> : vector<8xf32>
    %70 = vector.multi_reduction <add>, %69, %cst_36 [1] : vector<8x8xf32> to vector<8xf32>
    %71 = vector.shape_cast %70 : vector<8xf32> to vector<8x1xf32>
    %72 = tpu.reciprocal %71 {approx = true} : vector<8x1xf32> -> vector<8x1xf32>
    %73 = vector.broadcast %72 : vector<8x1xf32> to vector<8x8xf32>
    %74 = arith.mulf %69, %73 : vector<8x8xf32>
    %cst_37 = arith.constant dense<0.000000e+00> : vector<8x8xf32>
    %75 = tpu.matmul %74, %61, %cst_37 {dimension_numbers = #tpu.dot_dimension_numbers<[1], [0], [0], [1], [0, 0, 1, 1], [], []>} : vector<8x8xf32>, vector<8x8xf32>, vector<8x8xf32> -> vector<8x8xf32>
    %76 = vector.extract_strided_slice %19 {offsets = [16, 0], sizes = [8, 16], strides = [1, 1]} : vector<32x16xf32> to vector<8x16xf32>
    %cst_38 = arith.constant dense<0.000000e+00> : vector<8x16xf32>
    %77 = tpu.matmul %75, %76, %cst_38 {dimension_numbers = #tpu.dot_dimension_numbers<[1], [0], [0], [1], [0, 0, 1, 1], [], []>} : vector<8x8xf32>, vector<8x16xf32>, vector<8x16xf32> -> vector<8x16xf32>
    %78 = arith.addf %58, %77 : vector<8x16xf32>
    %79 = vector.extract_strided_slice %8 {offsets = [0, 24], sizes = [8, 8], strides = [1, 1]} : vector<8x32xf32> to vector<8x8xf32>
    %80 = vector.extract_strided_slice %13 {offsets = [0, 24], sizes = [8, 8], strides = [1, 1]} : vector<8x32xf32> to vector<8x8xf32>
    %81 = vector.extract_strided_slice %18 {offsets = [0, 24], sizes = [8, 8], strides = [1, 1]} : vector<8x32xf32> to vector<8x8xf32>
    %cst_39 = arith.constant dense<0.000000e+00> : vector<8x8xf32>
    %82 = tpu.matmul %79, %80, %cst_39 {dimension_numbers = #tpu.dot_dimension_numbers<[1], [1], [0], [0], [0, 0, 1, 0], [], []>} : vector<8x8xf32>, vector<8x8xf32>, vector<8x8xf32> -> vector<8x8xf32>
    %cst_40 = arith.constant 1.250000e-01 : f32
    %83 = vector.broadcast %cst_40 : f32 to vector<8x8xf32>
    %84 = arith.mulf %82, %83 : vector<8x8xf32>
    %cst_41 = arith.constant dense<0xFF800000> : vector<8xf32>
    %85 = vector.multi_reduction <maximumf>, %84, %cst_41 [1] : vector<8x8xf32> to vector<8xf32>
    %86 = vector.shape_cast %85 : vector<8xf32> to vector<8x1xf32>
    %87 = vector.broadcast %86 : vector<8x1xf32> to vector<8x8xf32>
    %88 = arith.subf %84, %87 : vector<8x8xf32>
    %89 = math.exp %88 : vector<8x8xf32>
    %cst_42 = arith.constant dense<0.000000e+00> : vector<8xf32>
    %90 = vector.multi_reduction <add>, %89, %cst_42 [1] : vector<8x8xf32> to vector<8xf32>
    %91 = vector.shape_cast %90 : vector<8xf32> to vector<8x1xf32>
    %92 = tpu.reciprocal %91 {approx = true} : vector<8x1xf32> -> vector<8x1xf32>
    %93 = vector.broadcast %92 : vector<8x1xf32> to vector<8x8xf32>
    %94 = arith.mulf %89, %93 : vector<8x8xf32>
    %cst_43 = arith.constant dense<0.000000e+00> : vector<8x8xf32>
    %95 = tpu.matmul %94, %81, %cst_43 {dimension_numbers = #tpu.dot_dimension_numbers<[1], [0], [0], [1], [0, 0, 1, 1], [], []>} : vector<8x8xf32>, vector<8x8xf32>, vector<8x8xf32> -> vector<8x8xf32>
    %96 = vector.extract_strided_slice %19 {offsets = [24, 0], sizes = [8, 16], strides = [1, 1]} : vector<32x16xf32> to vector<8x16xf32>
    %cst_44 = arith.constant dense<0.000000e+00> : vector<8x16xf32>
    %97 = tpu.matmul %95, %96, %cst_44 {dimension_numbers = #tpu.dot_dimension_numbers<[1], [0], [0], [1], [0, 0, 1, 1], [], []>} : vector<8x8xf32>, vector<8x16xf32>, vector<8x16xf32> -> vector<8x16xf32>
    %98 = arith.addf %78, %97 : vector<8x16xf32>
    %c0_45 = arith.constant 0 : index
    %c0_46 = arith.constant 0 : index
    %99 = vector.load %arg10[%c0_45, %c0_46] : memref<1x16xf32, #tpu.memory_space<vmem>>, vector<1x16xf32>
    %100 = vector.broadcast %99 : vector<1x16xf32> to vector<8x16xf32>
    %101 = arith.addf %98, %100 : vector<8x16xf32>
    %102 = arith.addf %1, %101 : vector<8x16xf32>
    %103 = vector.shape_cast %102 : vector<8x16xf32> to vector<1x8x16xf32>
    %cst_47 = arith.constant dense<0.000000e+00> : vector<1xf32>
    %104 = vector.multi_reduction <add>, %103, %cst_47 [1, 2] : vector<1x8x16xf32> to vector<1xf32>
    %105 = vector.shape_cast %104 : vector<1xf32> to vector<1x1x1xf32>
    %106 = vector.extract %105[0, 0, 0] : f32 from vector<1x1x1xf32>
    %cst_48 = arith.constant 1.280000e+02 : f32
    %107 = arith.divf %106, %cst_48 : f32
    %108 = vector.broadcast %107 : f32 to vector<8x16xf32>
    %109 = arith.subf %102, %108 : vector<8x16xf32>
    %110 = arith.mulf %109, %109 : vector<8x16xf32>
    %111 = vector.shape_cast %110 : vector<8x16xf32> to vector<1x8x16xf32>
    %cst_49 = arith.constant dense<0.000000e+00> : vector<1xf32>
    %112 = vector.multi_reduction <add>, %111, %cst_49 [1, 2] : vector<1x8x16xf32> to vector<1xf32>
    %113 = vector.shape_cast %112 : vector<1xf32> to vector<1x1x1xf32>
    %114 = vector.extract %113[0, 0, 0] : f32 from vector<1x1x1xf32>
    %cst_50 = arith.constant 1.280000e+02 : f32
    %115 = arith.divf %114, %cst_50 : f32
    %116 = vector.broadcast %107 : f32 to vector<8x16xf32>
    %117 = arith.subf %102, %116 : vector<8x16xf32>
    %cst_51 = arith.constant 9.99999974E-6 : f32
    %118 = arith.addf %115, %cst_51 : f32
    %119 = math.rsqrt %118 : f32
    %120 = vector.broadcast %119 : f32 to vector<8x16xf32>
    %121 = arith.mulf %117, %120 : vector<8x16xf32>
    %c0_52 = arith.constant 0 : index
    %c0_53 = arith.constant 0 : index
    %122 = vector.load %arg11[%c0_52, %c0_53] : memref<8x16xf32, #tpu.memory_space<vmem>>, vector<8x16xf32>
    %123 = arith.mulf %121, %122 : vector<8x16xf32>
    %c0_54 = arith.constant 0 : index
    %c0_55 = arith.constant 0 : index
    %124 = vector.load %arg12[%c0_54, %c0_55] : memref<8x16xf32, #tpu.memory_space<vmem>>, vector<8x16xf32>
    %125 = arith.addf %123, %124 : vector<8x16xf32>
    %c0_56 = arith.constant 0 : index
    %c0_57 = arith.constant 0 : index
    %c0_58 = arith.constant 0 : index
    %126 = vector.load %arg13[%c0_56, %c0_57, %c0_58] : memref<1x8x16xf32, #tpu.memory_space<vmem>>, vector<1x8x16xf32>
    %127 = vector.shape_cast %126 : vector<1x8x16xf32> to vector<8x16xf32>
    %128 = vector.shape_cast %125 : vector<8x16xf32> to vector<1x8x16xf32>
    tpu.vector_store %arg13[%c0_56, %c0_57, %c0_58], %128 {strides = array<i32>} : memref<1x8x16xf32, #tpu.memory_space<vmem>>, vector<1x8x16xf32>,
    return
  }
  func.func @transform_0(%arg0: i32) -> (i32, i32, i32) {
    %c0_i32 = arith.constant 0 : i32
    %c0_i32_0 = arith.constant 0 : i32
    %c0_i32_1 = arith.constant 0 : i32
    return %arg0, %c0_i32, %c0_i32_0 : i32, i32, i32
  }
  func.func @transform_1(%arg0: i32) -> (i32, i32, i32) {
    %c0_i32 = arith.constant 0 : i32
    %c0_i32_0 = arith.constant 0 : i32
    %c0_i32_1 = arith.constant 0 : i32
    return %arg0, %c0_i32, %c0_i32_0 : i32, i32, i32
  }
  func.func @transform_2(%arg0: i32) -> (i32, i32) {
    %c0_i32 = arith.constant 0 : i32
    %c0_i32_0 = arith.constant 0 : i32
    %c0_i32_1 = arith.constant 0 : i32
    return %c0_i32, %c0_i32_0 : i32, i32
  }
  func.func @transform_3(%arg0: i32) -> (i32, i32) {
    %c0_i32 = arith.constant 0 : i32
    %c0_i32_0 = arith.constant 0 : i32
    %c0_i32_1 = arith.constant 0 : i32
    return %c0_i32, %c0_i32_0 : i32, i32
  }
  func.func @transform_4(%arg0: i32) -> (i32, i32) {
    %c0_i32 = arith.constant 0 : i32
    %c0_i32_0 = arith.constant 0 : i32
    %c0_i32_1 = arith.constant 0 : i32
    return %c0_i32, %c0_i32_0 : i32, i32
  }
  func.func @transform_5(%arg0: i32) -> (i32, i32) {
    %c0_i32 = arith.constant 0 : i32
    %c0_i32_0 = arith.constant 0 : i32
    %c0_i32_1 = arith.constant 0 : i32
    return %c0_i32, %c0_i32_0 : i32, i32
  }
  func.func @transform_6(%arg0: i32) -> (i32, i32) {
    %c0_i32 = arith.constant 0 : i32
    %c0_i32_0 = arith.constant 0 : i32
    %c0_i32_1 = arith.constant 0 : i32
    return %c0_i32, %c0_i32_0 : i32, i32
  }
  func.func @transform_7(%arg0: i32) -> (i32, i32) {
    %c0_i32 = arith.constant 0 : i32
    %c0_i32_0 = arith.constant 0 : i32
    %c0_i32_1 = arith.constant 0 : i32
    return %c0_i32, %c0_i32_0 : i32, i32
  }
  func.func @transform_8(%arg0: i32) -> (i32, i32) {
    %c0_i32 = arith.constant 0 : i32
    %c0_i32_0 = arith.constant 0 : i32
    %c0_i32_1 = arith.constant 0 : i32
    return %c0_i32, %c0_i32_0 : i32, i32
  }
  func.func @transform_9(%arg0: i32) -> (i32, i32) {
    %c0_i32 = arith.constant 0 : i32
    %c0_i32_0 = arith.constant 0 : i32
    %c0_i32_1 = arith.constant 0 : i32
    return %c0_i32, %c0_i32_0 : i32, i32
  }
  func.func @transform_10(%arg0: i32) -> (i32, i32) {
    %c0_i32 = arith.constant 0 : i32
    %c0_i32_0 = arith.constant 0 : i32
    %c0_i32_1 = arith.constant 0 : i32
    return %c0_i32, %c0_i32_0 : i32, i32
  }
  func.func @transform_11(%arg0: i32) -> (i32, i32) {
    %c0_i32 = arith.constant 0 : i32
    %c0_i32_0 = arith.constant 0 : i32
    %c0_i32_1 = arith.constant 0 : i32
    return %c0_i32, %c0_i32_0 : i32, i32
  }
  func.func @transform_12(%arg0: i32) -> (i32, i32, i32) {
    %c0_i32 = arith.constant 0 : i32
    %c0_i32_0 = arith.constant 0 : i32
    %c0_i32_1 = arith.constant 0 : i32
    return %arg0, %c0_i32, %c0_i32_0 : i32, i32, i32
  }
}

module attributes {stable_mosaic.version = 11 : i64} {
  func.func @_attn_block_kernel(%arg0: i32, %arg1: memref<1x8x16xf32, #tpu.memory_space<vmem>>, %arg2: memref<1x8x32xf32, #tpu.memory_space<vmem>>, %arg3: memref<16x32xf32, #tpu.memory_space<vmem>>, %arg4: memref<1x32xf32, #tpu.memory_space<vmem>>, %arg5: memref<32x32xf32, #tpu.memory_space<vmem>>, %arg6: memref<1x32xf32, #tpu.memory_space<vmem>>, %arg7: memref<32x32xf32, #tpu.memory_space<vmem>>, %arg8: memref<1x32xf32, #tpu.memory_space<vmem>>, %arg9: memref<32x16xf32, #tpu.memory_space<vmem>>, %arg10: memref<1x16xf32, #tpu.memory_space<vmem>>, %arg11: memref<8x16xf32, #tpu.memory_space<vmem>>, %arg12: memref<8x16xf32, #tpu.memory_space<vmem>>, %arg13: memref<1x8x16xf32, #tpu.memory_space<vmem>>) attributes {dimension_semantics = [#tpu.dimension_semantics<parallel>], iteration_bounds = array<i64: 2>, scalar_prefetch = 0 : i64, scratch_operands = 0 : i64, tpu.core_type = #tpu.core_type<tc>, window_params = [{transform_indices = @transform_0, window_bounds = array<i64: 1, 8, 16>}, {transform_indices = @transform_1, window_bounds = array<i64: 1, 8, 32>}, {pipeline_mode = #tpu.pipeline_mode<synchronous>, transform_indices = @transform_2, window_bounds = array<i64: 16, 32>}, {pipeline_mode = #tpu.pipeline_mode<synchronous>, transform_indices = @transform_3, window_bounds = array<i64: 1, 32>}, {pipeline_mode = #tpu.pipeline_mode<synchronous>, transform_indices = @transform_4, window_bounds = array<i64: 32, 32>}, {pipeline_mode = #tpu.pipeline_mode<synchronous>, transform_indices = @transform_5, window_bounds = array<i64: 1, 32>}, {pipeline_mode = #tpu.pipeline_mode<synchronous>, transform_indices = @transform_6, window_bounds = array<i64: 32, 32>}, {pipeline_mode = #tpu.pipeline_mode<synchronous>, transform_indices = @transform_7, window_bounds = array<i64: 1, 32>}, {pipeline_mode = #tpu.pipeline_mode<synchronous>, transform_indices = @transform_8, window_bounds = array<i64: 32, 16>}, {pipeline_mode = #tpu.pipeline_mode<synchronous>, transform_indices = @transform_9, window_bounds = array<i64: 1, 16>}, {pipeline_mode = #tpu.pipeline_mode<synchronous>, transform_indices = @transform_10, window_bounds = array<i64: 8, 16>}, {pipeline_mode = #tpu.pipeline_mode<synchronous>, transform_indices = @transform_11, window_bounds = array<i64: 8, 16>}, {transform_indices = @transform_12, window_bounds = array<i64: 1, 8, 16>}]} {
    %c0 = arith.constant 0 : index
    %c0_0 = arith.constant 0 : index
    %c0_1 = arith.constant 0 : index
    %0 = vector.load %arg1[%c0, %c0_0, %c0_1] : memref<1x8x16xf32, #tpu.memory_space<vmem>>, vector<1x8x16xf32>
    %1 = vector.shape_cast %0 : vector<1x8x16xf32> to vector<8x16xf32>
    %c0_2 = arith.constant 0 : index
    %c0_3 = arith.constant 0 : index
    %c0_4 = arith.constant 0 : index
    %2 = vector.load %arg2[%c0_2, %c0_3, %c0_4] : memref<1x8x32xf32, #tpu.memory_space<vmem>>, vector<1x8x32xf32>
    %3 = vector.shape_cast %2 : vector<1x8x32xf32> to vector<8x32xf32>
    %c0_5 = arith.constant 0 : index
    %c0_6 = arith.constant 0 : index
    %4 = vector.load %arg3[%c0_5, %c0_6] : memref<16x32xf32, #tpu.memory_space<vmem>>, vector<16x32xf32>
    %cst = arith.constant dense<0.000000e+00> : vector<8x32xf32>
    %5 = tpu.matmul %1, %4, %cst {dimension_numbers = #tpu.dot_dimension_numbers<[1], [0], [0], [1], [0, 0, 1, 1], [], []>} : vector<8x16xf32>, vector<16x32xf32>, vector<8x32xf32> -> vector<8x32xf32>
    %c0_7 = arith.constant 0 : index
    %c0_8 = arith.constant 0 : index
    %6 = vector.load %arg4[%c0_7, %c0_8] : memref<1x32xf32, #tpu.memory_space<vmem>>, vector<1x32xf32>
    %7 = vector.broadcast %6 : vector<1x32xf32> to vector<8x32xf32>
    %8 = arith.addf %5, %7 : vector<8x32xf32>
    %c0_9 = arith.constant 0 : index
    %c0_10 = arith.constant 0 : index
    %9 = vector.load %arg5[%c0_9, %c0_10] : memref<32x32xf32, #tpu.memory_space<vmem>>, vector<32x32xf32>
    %cst_11 = arith.constant dense<0.000000e+00> : vector<8x32xf32>
    %10 = tpu.matmul %3, %9, %cst_11 {dimension_numbers = #tpu.dot_dimension_numbers<[1], [0], [0], [1], [0, 0, 1, 1], [], []>} : vector<8x32xf32>, vector<32x32xf32>, vector<8x32xf32> -> vector<8x32xf32>
    %c0_12 = arith.constant 0 : index
    %c0_13 = arith.constant 0 : index
    %11 = vector.load %arg6[%c0_12, %c0_13] : memref<1x32xf32, #tpu.memory_space<vmem>>, vector<1x32xf32>
    %12 = vector.broadcast %11 : vector<1x32xf32> to vector<8x32xf32>
    %13 = arith.addf %10, %12 : vector<8x32xf32>
    %c0_14 = arith.constant 0 : index
    %c0_15 = arith.constant 0 : index
    %14 = vector.load %arg7[%c0_14, %c0_15] : memref<32x32xf32, #tpu.memory_space<vmem>>, vector<32x32xf32>
    %cst_16 = arith.constant dense<0.000000e+00> : vector<8x32xf32>
    %15 = tpu.matmul %3, %14, %cst_16 {dimension_numbers = #tpu.dot_dimension_numbers<[1], [0], [0], [1], [0, 0, 1, 1], [], []>} : vector<8x32xf32>, vector<32x32xf32>, vector<8x32xf32> -> vector<8x32xf32>
    %c0_17 = arith.constant 0 : index
    %c0_18 = arith.constant 0 : index
    %16 = vector.load %arg8[%c0_17, %c0_18] : memref<1x32xf32, #tpu.memory_space<vmem>>, vector<1x32xf32>
    %17 = vector.broadcast %16 : vector<1x32xf32> to vector<8x32xf32>
    %18 = arith.addf %15, %17 : vector<8x32xf32>
    %c0_19 = arith.constant 0 : index
    %c0_20 = arith.constant 0 : index
    %19 = vector.load %arg9[%c0_19, %c0_20] : memref<32x16xf32, #tpu.memory_space<vmem>>, vector<32x16xf32>
    %20 = vector.extract_strided_slice %8 {offsets = [0, 0], sizes = [8, 8], strides = [1, 1]} : vector<8x32xf32> to vector<8x8xf32>
    %21 = vector.extract_strided_slice %13 {offsets = [0, 0], sizes = [8, 8], strides = [1, 1]} : vector<8x32xf32> to vector<8x8xf32>
    %22 = vector.extract_strided_slice %18 {offsets = [0, 0], sizes = [8, 8], strides = [1, 1]} : vector<8x32xf32> to vector<8x8xf32>
    %cst_21 = arith.constant dense<0.000000e+00> : vector<8x8xf32>
    %23 = tpu.matmul %20, %21, %cst_21 {dimension_numbers = #tpu.dot_dimension_numbers<[1], [1], [0], [0], [0, 0, 1, 0], [], []>} : vector<8x8xf32>, vector<8x8xf32>, vector<8x8xf32> -> vector<8x8xf32>
    %cst_22 = arith.constant 1.250000e-01 : f32
    %24 = vector.broadcast %cst_22 : f32 to vector<8x8xf32>
    %25 = arith.mulf %23, %24 : vector<8x8xf32>
    %cst_23 = arith.constant dense<0xFF800000> : vector<8xf32>
    %26 = vector.multi_reduction <maximumf>, %25, %cst_23 [1] : vector<8x8xf32> to vector<8xf32>
    %27 = vector.shape_cast %26 : vector<8xf32> to vector<8x1xf32>
    %28 = vector.broadcast %27 : vector<8x1xf32> to vector<8x8xf32>
    %29 = arith.subf %25, %28 : vector<8x8xf32>
    %30 = math.exp %29 : vector<8x8xf32>
    %cst_24 = arith.constant dense<0.000000e+00> : vector<8xf32>
    %31 = vector.multi_reduction <add>, %30, %cst_24 [1] : vector<8x8xf32> to vector<8xf32>
    %32 = vector.shape_cast %31 : vector<8xf32> to vector<8x1xf32>
    %33 = tpu.reciprocal %32 {approx = true} : vector<8x1xf32> -> vector<8x1xf32>
    %34 = vector.broadcast %33 : vector<8x1xf32> to vector<8x8xf32>
    %35 = arith.mulf %30, %34 : vector<8x8xf32>
    %cst_25 = arith.constant dense<0.000000e+00> : vector<8x8xf32>
    %36 = tpu.matmul %35, %22, %cst_25 {dimension_numbers = #tpu.dot_dimension_numbers<[1], [0], [0], [1], [0, 0, 1, 1], [], []>} : vector<8x8xf32>, vector<8x8xf32>, vector<8x8xf32> -> vector<8x8xf32>
    %37 = vector.extract_strided_slice %19 {offsets = [0, 0], sizes = [8, 16], strides = [1, 1]} : vector<32x16xf32> to vector<8x16xf32>
    %cst_26 = arith.constant dense<0.000000e+00> : vector<8x16xf32>
    %38 = tpu.matmul %36, %37, %cst_26 {dimension_numbers = #tpu.dot_dimension_numbers<[1], [0], [0], [1], [0, 0, 1, 1], [], []>} : vector<8x8xf32>, vector<8x16xf32>, vector<8x16xf32> -> vector<8x16xf32>
    %39 = vector.extract_strided_slice %8 {offsets = [0, 8], sizes = [8, 8], strides = [1, 1]} : vector<8x32xf32> to vector<8x8xf32>
    %40 = vector.extract_strided_slice %13 {offsets = [0, 8], sizes = [8, 8], strides = [1, 1]} : vector<8x32xf32> to vector<8x8xf32>
    %41 = vector.extract_strided_slice %18 {offsets = [0, 8], sizes = [8, 8], strides = [1, 1]} : vector<8x32xf32> to vector<8x8xf32>
    %cst_27 = arith.constant dense<0.000000e+00> : vector<8x8xf32>
    %42 = tpu.matmul %39, %40, %cst_27 {dimension_numbers = #tpu.dot_dimension_numbers<[1], [1], [0], [0], [0, 0, 1, 0], [], []>} : vector<8x8xf32>, vector<8x8xf32>, vector<8x8xf32> -> vector<8x8xf32>
    %cst_28 = arith.constant 1.250000e-01 : f32
    %43 = vector.broadcast %cst_28 : f32 to vector<8x8xf32>
    %44 = arith.mulf %42, %43 : vector<8x8xf32>
    %cst_29 = arith.constant dense<0xFF800000> : vector<8xf32>
    %45 = vector.multi_reduction <maximumf>, %44, %cst_29 [1] : vector<8x8xf32> to vector<8xf32>
    %46 = vector.shape_cast %45 : vector<8xf32> to vector<8x1xf32>
    %47 = vector.broadcast %46 : vector<8x1xf32> to vector<8x8xf32>
    %48 = arith.subf %44, %47 : vector<8x8xf32>
    %49 = math.exp %48 : vector<8x8xf32>
    %cst_30 = arith.constant dense<0.000000e+00> : vector<8xf32>
    %50 = vector.multi_reduction <add>, %49, %cst_30 [1] : vector<8x8xf32> to vector<8xf32>
    %51 = vector.shape_cast %50 : vector<8xf32> to vector<8x1xf32>
    %52 = tpu.reciprocal %51 {approx = true} : vector<8x1xf32> -> vector<8x1xf32>
    %53 = vector.broadcast %52 : vector<8x1xf32> to vector<8x8xf32>
    %54 = arith.mulf %49, %53 : vector<8x8xf32>
    %cst_31 = arith.constant dense<0.000000e+00> : vector<8x8xf32>
    %55 = tpu.matmul %54, %41, %cst_31 {dimension_numbers = #tpu.dot_dimension_numbers<[1], [0], [0], [1], [0, 0, 1, 1], [], []>} : vector<8x8xf32>, vector<8x8xf32>, vector<8x8xf32> -> vector<8x8xf32>
    %56 = vector.extract_strided_slice %19 {offsets = [8, 0], sizes = [8, 16], strides = [1, 1]} : vector<32x16xf32> to vector<8x16xf32>
    %cst_32 = arith.constant dense<0.000000e+00> : vector<8x16xf32>
    %57 = tpu.matmul %55, %56, %cst_32 {dimension_numbers = #tpu.dot_dimension_numbers<[1], [0], [0], [1], [0, 0, 1, 1], [], []>} : vector<8x8xf32>, vector<8x16xf32>, vector<8x16xf32> -> vector<8x16xf32>
    %58 = arith.addf %38, %57 : vector<8x16xf32>
    %59 = vector.extract_strided_slice %8 {offsets = [0, 16], sizes = [8, 8], strides = [1, 1]} : vector<8x32xf32> to vector<8x8xf32>
    %60 = vector.extract_strided_slice %13 {offsets = [0, 16], sizes = [8, 8], strides = [1, 1]} : vector<8x32xf32> to vector<8x8xf32>
    %61 = vector.extract_strided_slice %18 {offsets = [0, 16], sizes = [8, 8], strides = [1, 1]} : vector<8x32xf32> to vector<8x8xf32>
    %cst_33 = arith.constant dense<0.000000e+00> : vector<8x8xf32>
    %62 = tpu.matmul %59, %60, %cst_33 {dimension_numbers = #tpu.dot_dimension_numbers<[1], [1], [0], [0], [0, 0, 1, 0], [], []>} : vector<8x8xf32>, vector<8x8xf32>, vector<8x8xf32> -> vector<8x8xf32>
    %cst_34 = arith.constant 1.250000e-01 : f32
    %63 = vector.broadcast %cst_34 : f32 to vector<8x8xf32>
    %64 = arith.mulf %62, %63 : vector<8x8xf32>
    %cst_35 = arith.constant dense<0xFF800000> : vector<8xf32>
    %65 = vector.multi_reduction <maximumf>, %64, %cst_35 [1] : vector<8x8xf32> to vector<8xf32>
    %66 = vector.shape_cast %65 : vector<8xf32> to vector<8x1xf32>
    %67 = vector.broadcast %66 : vector<8x1xf32> to vector<8x8xf32>
    %68 = arith.subf %64, %67 : vector<8x8xf32>
    %69 = math.exp %68 : vector<8x8xf32>
    %cst_36 = arith.constant dense<0.000000e+00> : vector<8xf32>
    %70 = vector.multi_reduction <add>, %69, %cst_36 [1] : vector<8x8xf32> to vector<8xf32>
    %71 = vector.shape_cast %70 : vector<8xf32> to vector<8x1xf32>
    %72 = tpu.reciprocal %71 {approx = true} : vector<8x1xf32> -> vector<8x1xf32>
    %73 = vector.broadcast %72 : vector<8x1xf32> to vector<8x8xf32>
    %74 = arith.mulf %69, %73 : vector<8x8xf32>
    %cst_37 = arith.constant dense<0.000000e+00> : vector<8x8xf32>
    %75 = tpu.matmul %74, %61, %cst_37 {dimension_numbers = #tpu.dot_dimension_numbers<[1], [0], [0], [1], [0, 0, 1, 1], [], []>} : vector<8x8xf32>, vector<8x8xf32>, vector<8x8xf32> -> vector<8x8xf32>
    %76 = vector.extract_strided_slice %19 {offsets = [16, 0], sizes = [8, 16], strides = [1, 1]} : vector<32x16xf32> to vector<8x16xf32>
    %cst_38 = arith.constant dense<0.000000e+00> : vector<8x16xf32>
    %77 = tpu.matmul %75, %76, %cst_38 {dimension_numbers = #tpu.dot_dimension_numbers<[1], [0], [0], [1], [0, 0, 1, 1], [], []>} : vector<8x8xf32>, vector<8x16xf32>, vector<8x16xf32> -> vector<8x16xf32>
    %78 = arith.addf %58, %77 : vector<8x16xf32>
    %79 = vector.extract_strided_slice %8 {offsets = [0, 24], sizes = [8, 8], strides = [1, 1]} : vector<8x32xf32> to vector<8x8xf32>
    %80 = vector.extract_strided_slice %13 {offsets = [0, 24], sizes = [8, 8], strides = [1, 1]} : vector<8x32xf32> to vector<8x8xf32>
    %81 = vector.extract_strided_slice %18 {offsets = [0, 24], sizes = [8, 8], strides = [1, 1]} : vector<8x32xf32> to vector<8x8xf32>
    %cst_39 = arith.constant dense<0.000000e+00> : vector<8x8xf32>
    %82 = tpu.matmul %79, %80, %cst_39 {dimension_numbers = #tpu.dot_dimension_numbers<[1], [1], [0], [0], [0, 0, 1, 0], [], []>} : vector<8x8xf32>, vector<8x8xf32>, vector<8x8xf32> -> vector<8x8xf32>
    %cst_40 = arith.constant 1.250000e-01 : f32
    %83 = vector.broadcast %cst_40 : f32 to vector<8x8xf32>
    %84 = arith.mulf %82, %83 : vector<8x8xf32>
    %cst_41 = arith.constant dense<0xFF800000> : vector<8xf32>
    %85 = vector.multi_reduction <maximumf>, %84, %cst_41 [1] : vector<8x8xf32> to vector<8xf32>
    %86 = vector.shape_cast %85 : vector<8xf32> to vector<8x1xf32>
    %87 = vector.broadcast %86 : vector<8x1xf32> to vector<8x8xf32>
    %88 = arith.subf %84, %87 : vector<8x8xf32>
    %89 = math.exp %88 : vector<8x8xf32>
    %cst_42 = arith.constant dense<0.000000e+00> : vector<8xf32>
    %90 = vector.multi_reduction <add>, %89, %cst_42 [1] : vector<8x8xf32> to vector<8xf32>
    %91 = vector.shape_cast %90 : vector<8xf32> to vector<8x1xf32>
    %92 = tpu.reciprocal %91 {approx = true} : vector<8x1xf32> -> vector<8x1xf32>
    %93 = vector.broadcast %92 : vector<8x1xf32> to vector<8x8xf32>
    %94 = arith.mulf %89, %93 : vector<8x8xf32>
    %cst_43 = arith.constant dense<0.000000e+00> : vector<8x8xf32>
    %95 = tpu.matmul %94, %81, %cst_43 {dimension_numbers = #tpu.dot_dimension_numbers<[1], [0], [0], [1], [0, 0, 1, 1], [], []>} : vector<8x8xf32>, vector<8x8xf32>, vector<8x8xf32> -> vector<8x8xf32>
    %96 = vector.extract_strided_slice %19 {offsets = [24, 0], sizes = [8, 16], strides = [1, 1]} : vector<32x16xf32> to vector<8x16xf32>
    %cst_44 = arith.constant dense<0.000000e+00> : vector<8x16xf32>
    %97 = tpu.matmul %95, %96, %cst_44 {dimension_numbers = #tpu.dot_dimension_numbers<[1], [0], [0], [1], [0, 0, 1, 1], [], []>} : vector<8x8xf32>, vector<8x16xf32>, vector<8x16xf32> -> vector<8x16xf32>
    %98 = arith.addf %78, %97 : vector<8x16xf32>
    %c0_45 = arith.constant 0 : index
    %c0_46 = arith.constant 0 : index
    %99 = vector.load %arg10[%c0_45, %c0_46] : memref<1x16xf32, #tpu.memory_space<vmem>>, vector<1x16xf32>
    %100 = vector.broadcast %99 : vector<1x16xf32> to vector<8x16xf32>
    %101 = arith.addf %98, %100 : vector<8x16xf32>
    %102 = arith.addf %1, %101 : vector<8x16xf32>
    %103 = vector.shape_cast %102 : vector<8x16xf32> to vector<1x8x16xf32>
    %cst_47 = arith.constant dense<0.000000e+00> : vector<1xf32>
    %104 = vector.multi_reduction <add>, %103, %cst_47 [1, 2] : vector<1x8x16xf32> to vector<1xf32>
    %105 = vector.shape_cast %104 : vector<1xf32> to vector<1x1x1xf32>
    %106 = vector.extract %105[0, 0, 0] : f32 from vector<1x1x1xf32>
    %cst_48 = arith.constant 1.280000e+02 : f32
    %107 = arith.divf %106, %cst_48 : f32
    %108 = vector.broadcast %107 : f32 to vector<8x16xf32>
    %109 = arith.subf %102, %108 : vector<8x16xf32>
    %110 = arith.mulf %109, %109 : vector<8x16xf32>
    %111 = vector.shape_cast %110 : vector<8x16xf32> to vector<1x8x16xf32>
    %cst_49 = arith.constant dense<0.000000e+00> : vector<1xf32>
    %112 = vector.multi_reduction <add>, %111, %cst_49 [1, 2] : vector<1x8x16xf32> to vector<1xf32>
    %113 = vector.shape_cast %112 : vector<1xf32> to vector<1x1x1xf32>
    %114 = vector.extract %113[0, 0, 0] : f32 from vector<1x1x1xf32>
    %cst_50 = arith.constant 1.280000e+02 : f32
    %115 = arith.divf %114, %cst_50 : f32
    %116 = vector.broadcast %107 : f32 to vector<8x16xf32>
    %117 = arith.subf %102, %116 : vector<8x16xf32>
    %cst_51 = arith.constant 9.99999974E-6 : f32
    %118 = arith.addf %115, %cst_51 : f32
    %119 = math.rsqrt %118 : f32
    %120 = vector.broadcast %119 : f32 to vector<8x16xf32>
    %121 = arith.mulf %117, %120 : vector<8x16xf32>
    %c0_52 = arith.constant 0 : index
    %c0_53 = arith.constant 0 : index
    %122 = vector.load %arg11[%c0_52, %c0_53] : memref<8x16xf32, #tpu.memory_space<vmem>>, vector<8x16xf32>
    %123 = arith.mulf %121, %122 : vector<8x16xf32>
    %c0_54 = arith.constant 0 : index
    %c0_55 = arith.constant 0 : index
    %124 = vector.load %arg12[%c0_54, %c0_55] : memref<8x16xf32, #tpu.memory_space<vmem>>, vector<8x16xf32>
    %125 = arith.addf %123, %124 : vector<8x16xf32>
    %c0_56 = arith.constant 0 : index
    %c0_57 = arith.constant 0 : index
    %c0_58 = arith.constant 0 : index
    %126 = vector.load %arg13[%c0_56, %c0_57, %c0_58] : memref<1x8x16xf32, #tpu.memory_space<vmem>>, vector<1x8x16xf32>
    %127 = vector.shape_cast %126 : vector<1x8x16xf32> to vector<8x16xf32>
    %128 = vector.shape_cast %125 : vector<8x16xf32> to vector<1x8x16xf32>
    tpu.vector_store %arg13[%c0_56, %c0_57, %c0_58], %128 {strides = array<i32>} : memref<1x8x16xf32, #tpu.memory_space<vmem>>, vector<1x8x16xf32>,
    return
  }
  func.func @transform_0(%arg0: i32) -> (i32, i32, i32) {
    %c0_i32 = arith.constant 0 : i32
    %c0_i32_0 = arith.constant 0 : i32
    %c0_i32_1 = arith.constant 0 : i32
    return %arg0, %c0_i32, %c0_i32_0 : i32, i32, i32
  }
  func.func @transform_1(%arg0: i32) -> (i32, i32, i32) {
    %c0_i32 = arith.constant 0 : i32
    %c0_i32_0 = arith.constant 0 : i32
    %c0_i32_1 = arith.constant 0 : i32
    return %arg0, %c0_i32, %c0_i32_0 : i32, i32, i32
  }
  func.func @transform_2(%arg0: i32) -> (i32, i32) {
    %c0_i32 = arith.constant 0 : i32
    %c0_i32_0 = arith.constant 0 : i32
    %c0_i32_1 = arith.constant 0 : i32
    return %c0_i32, %c0_i32_0 : i32, i32
  }
  func.func @transform_3(%arg0: i32) -> (i32, i32) {
    %c0_i32 = arith.constant 0 : i32
    %c0_i32_0 = arith.constant 0 : i32
    %c0_i32_1 = arith.constant 0 : i32
    return %c0_i32, %c0_i32_0 : i32, i32
  }
  func.func @transform_4(%arg0: i32) -> (i32, i32) {
    %c0_i32 = arith.constant 0 : i32
    %c0_i32_0 = arith.constant 0 : i32
    %c0_i32_1 = arith.constant 0 : i32
    return %c0_i32, %c0_i32_0 : i32, i32
  }
  func.func @transform_5(%arg0: i32) -> (i32, i32) {
    %c0_i32 = arith.constant 0 : i32
    %c0_i32_0 = arith.constant 0 : i32
    %c0_i32_1 = arith.constant 0 : i32
    return %c0_i32, %c0_i32_0 : i32, i32
  }
  func.func @transform_6(%arg0: i32) -> (i32, i32) {
    %c0_i32 = arith.constant 0 : i32
    %c0_i32_0 = arith.constant 0 : i32
    %c0_i32_1 = arith.constant 0 : i32
    return %c0_i32, %c0_i32_0 : i32, i32
  }
  func.func @transform_7(%arg0: i32) -> (i32, i32) {
    %c0_i32 = arith.constant 0 : i32
    %c0_i32_0 = arith.constant 0 : i32
    %c0_i32_1 = arith.constant 0 : i32
    return %c0_i32, %c0_i32_0 : i32, i32
  }
  func.func @transform_8(%arg0: i32) -> (i32, i32) {
    %c0_i32 = arith.constant 0 : i32
    %c0_i32_0 = arith.constant 0 : i32
    %c0_i32_1 = arith.constant 0 : i32
    return %c0_i32, %c0_i32_0 : i32, i32
  }
  func.func @transform_9(%arg0: i32) -> (i32, i32) {
    %c0_i32 = arith.constant 0 : i32
    %c0_i32_0 = arith.constant 0 : i32
    %c0_i32_1 = arith.constant 0 : i32
    return %c0_i32, %c0_i32_0 : i32, i32
  }
  func.func @transform_10(%arg0: i32) -> (i32, i32) {
    %c0_i32 = arith.constant 0 : i32
    %c0_i32_0 = arith.constant 0 : i32
    %c0_i32_1 = arith.constant 0 : i32
    return %c0_i32, %c0_i32_0 : i32, i32
  }
  func.func @transform_11(%arg0: i32) -> (i32, i32) {
    %c0_i32 = arith.constant 0 : i32
    %c0_i32_0 = arith.constant 0 : i32
    %c0_i32_1 = arith.constant 0 : i32
    return %c0_i32, %c0_i32_0 : i32, i32
  }
  func.func @transform_12(%arg0: i32) -> (i32, i32, i32) {
    %c0_i32 = arith.constant 0 : i32
    %c0_i32_0 = arith.constant 0 : i32
    %c0_i32_1 = arith.constant 0 : i32
    return %arg0, %c0_i32, %c0_i32_0 : i32, i32, i32
  }
}

module attributes {stable_mosaic.version = 11 : i64} {
  func.func @_ffn_block_kernel(%arg0: i32, %arg1: memref<1x8x16xf32, #tpu.memory_space<vmem>>, %arg2: memref<16x64xf32, #tpu.memory_space<vmem>>, %arg3: memref<1x64xf32, #tpu.memory_space<vmem>>, %arg4: memref<64x16xf32, #tpu.memory_space<vmem>>, %arg5: memref<1x16xf32, #tpu.memory_space<vmem>>, %arg6: memref<8x16xf32, #tpu.memory_space<vmem>>, %arg7: memref<8x16xf32, #tpu.memory_space<vmem>>, %arg8: memref<1x8x16xf32, #tpu.memory_space<vmem>>) attributes {dimension_semantics = [#tpu.dimension_semantics<parallel>], iteration_bounds = array<i64: 2>, scalar_prefetch = 0 : i64, scratch_operands = 0 : i64, tpu.core_type = #tpu.core_type<tc>, window_params = [{transform_indices = @transform_0, window_bounds = array<i64: 1, 8, 16>}, {pipeline_mode = #tpu.pipeline_mode<synchronous>, transform_indices = @transform_1, window_bounds = array<i64: 16, 64>}, {pipeline_mode = #tpu.pipeline_mode<synchronous>, transform_indices = @transform_2, window_bounds = array<i64: 1, 64>}, {pipeline_mode = #tpu.pipeline_mode<synchronous>, transform_indices = @transform_3, window_bounds = array<i64: 64, 16>}, {pipeline_mode = #tpu.pipeline_mode<synchronous>, transform_indices = @transform_4, window_bounds = array<i64: 1, 16>}, {pipeline_mode = #tpu.pipeline_mode<synchronous>, transform_indices = @transform_5, window_bounds = array<i64: 8, 16>}, {pipeline_mode = #tpu.pipeline_mode<synchronous>, transform_indices = @transform_6, window_bounds = array<i64: 8, 16>}, {transform_indices = @transform_7, window_bounds = array<i64: 1, 8, 16>}]} {
    %c0 = arith.constant 0 : index
    %c0_0 = arith.constant 0 : index
    %c0_1 = arith.constant 0 : index
    %0 = vector.load %arg1[%c0, %c0_0, %c0_1] : memref<1x8x16xf32, #tpu.memory_space<vmem>>, vector<1x8x16xf32>
    %1 = vector.shape_cast %0 : vector<1x8x16xf32> to vector<8x16xf32>
    %c0_2 = arith.constant 0 : index
    %c0_3 = arith.constant 0 : index
    %2 = vector.load %arg2[%c0_2, %c0_3] : memref<16x64xf32, #tpu.memory_space<vmem>>, vector<16x64xf32>
    %cst = arith.constant dense<0.000000e+00> : vector<8x64xf32>
    %3 = tpu.matmul %1, %2, %cst {dimension_numbers = #tpu.dot_dimension_numbers<[1], [0], [0], [1], [0, 0, 1, 1], [], []>} : vector<8x16xf32>, vector<16x64xf32>, vector<8x64xf32> -> vector<8x64xf32>
    %c0_4 = arith.constant 0 : index
    %c0_5 = arith.constant 0 : index
    %4 = vector.load %arg3[%c0_4, %c0_5] : memref<1x64xf32, #tpu.memory_space<vmem>>, vector<1x64xf32>
    %5 = vector.broadcast %4 : vector<1x64xf32> to vector<8x64xf32>
    %6 = arith.addf %3, %5 : vector<8x64xf32>
    %cst_6 = arith.constant 0.000000e+00 : f32
    %7 = vector.broadcast %cst_6 : f32 to vector<8x64xf32>
    %8 = arith.maximumf %6, %7 : vector<8x64xf32>
    %c0_7 = arith.constant 0 : index
    %c0_8 = arith.constant 0 : index
    %9 = vector.load %arg4[%c0_7, %c0_8] : memref<64x16xf32, #tpu.memory_space<vmem>>, vector<64x16xf32>
    %cst_9 = arith.constant dense<0.000000e+00> : vector<8x16xf32>
    %10 = tpu.matmul %8, %9, %cst_9 {dimension_numbers = #tpu.dot_dimension_numbers<[1], [0], [0], [1], [0, 0, 1, 1], [], []>} : vector<8x64xf32>, vector<64x16xf32>, vector<8x16xf32> -> vector<8x16xf32>
    %c0_10 = arith.constant 0 : index
    %c0_11 = arith.constant 0 : index
    %11 = vector.load %arg5[%c0_10, %c0_11] : memref<1x16xf32, #tpu.memory_space<vmem>>, vector<1x16xf32>
    %12 = vector.broadcast %11 : vector<1x16xf32> to vector<8x16xf32>
    %13 = arith.addf %10, %12 : vector<8x16xf32>
    %14 = arith.addf %13, %1 : vector<8x16xf32>
    %15 = vector.shape_cast %14 : vector<8x16xf32> to vector<1x8x16xf32>
    %cst_12 = arith.constant dense<0.000000e+00> : vector<1xf32>
    %16 = vector.multi_reduction <add>, %15, %cst_12 [1, 2] : vector<1x8x16xf32> to vector<1xf32>
    %17 = vector.shape_cast %16 : vector<1xf32> to vector<1x1x1xf32>
    %18 = vector.extract %17[0, 0, 0] : f32 from vector<1x1x1xf32>
    %cst_13 = arith.constant 1.280000e+02 : f32
    %19 = arith.divf %18, %cst_13 : f32
    %20 = vector.broadcast %19 : f32 to vector<8x16xf32>
    %21 = arith.subf %14, %20 : vector<8x16xf32>
    %22 = arith.mulf %21, %21 : vector<8x16xf32>
    %23 = vector.shape_cast %22 : vector<8x16xf32> to vector<1x8x16xf32>
    %cst_14 = arith.constant dense<0.000000e+00> : vector<1xf32>
    %24 = vector.multi_reduction <add>, %23, %cst_14 [1, 2] : vector<1x8x16xf32> to vector<1xf32>
    %25 = vector.shape_cast %24 : vector<1xf32> to vector<1x1x1xf32>
    %26 = vector.extract %25[0, 0, 0] : f32 from vector<1x1x1xf32>
    %cst_15 = arith.constant 1.280000e+02 : f32
    %27 = arith.divf %26, %cst_15 : f32
    %28 = vector.broadcast %19 : f32 to vector<8x16xf32>
    %29 = arith.subf %14, %28 : vector<8x16xf32>
    %cst_16 = arith.constant 9.99999974E-6 : f32
    %30 = arith.addf %27, %cst_16 : f32
    %31 = math.rsqrt %30 : f32
    %32 = vector.broadcast %31 : f32 to vector<8x16xf32>
    %33 = arith.mulf %29, %32 : vector<8x16xf32>
    %c0_17 = arith.constant 0 : index
    %c0_18 = arith.constant 0 : index
    %34 = vector.load %arg6[%c0_17, %c0_18] : memref<8x16xf32, #tpu.memory_space<vmem>>, vector<8x16xf32>
    %35 = arith.mulf %33, %34 : vector<8x16xf32>
    %c0_19 = arith.constant 0 : index
    %c0_20 = arith.constant 0 : index
    %36 = vector.load %arg7[%c0_19, %c0_20] : memref<8x16xf32, #tpu.memory_space<vmem>>, vector<8x16xf32>
    %37 = arith.addf %35, %36 : vector<8x16xf32>
    %c0_21 = arith.constant 0 : index
    %c0_22 = arith.constant 0 : index
    %c0_23 = arith.constant 0 : index
    %38 = vector.load %arg8[%c0_21, %c0_22, %c0_23] : memref<1x8x16xf32, #tpu.memory_space<vmem>>, vector<1x8x16xf32>
    %39 = vector.shape_cast %38 : vector<1x8x16xf32> to vector<8x16xf32>
    %40 = vector.shape_cast %37 : vector<8x16xf32> to vector<1x8x16xf32>
    tpu.vector_store %arg8[%c0_21, %c0_22, %c0_23], %40 {strides = array<i32>} : memref<1x8x16xf32, #tpu.memory_space<vmem>>, vector<1x8x16xf32>,
    return
  }
  func.func @transform_0(%arg0: i32) -> (i32, i32, i32) {
    %c0_i32 = arith.constant 0 : i32
    %c0_i32_0 = arith.constant 0 : i32
    %c0_i32_1 = arith.constant 0 : i32
    return %arg0, %c0_i32, %c0_i32_0 : i32, i32, i32
  }
  func.func @transform_1(%arg0: i32) -> (i32, i32) {
    %c0_i32 = arith.constant 0 : i32
    %c0_i32_0 = arith.constant 0 : i32
    %c0_i32_1 = arith.constant 0 : i32
    return %c0_i32, %c0_i32_0 : i32, i32
  }
  func.func @transform_2(%arg0: i32) -> (i32, i32) {
    %c0_i32 = arith.constant 0 : i32
    %c0_i32_0 = arith.constant 0 : i32
    %c0_i32_1 = arith.constant 0 : i32
    return %c0_i32, %c0_i32_0 : i32, i32
  }
  func.func @transform_3(%arg0: i32) -> (i32, i32) {
    %c0_i32 = arith.constant 0 : i32
    %c0_i32_0 = arith.constant 0 : i32
    %c0_i32_1 = arith.constant 0 : i32
    return %c0_i32, %c0_i32_0 : i32, i32
  }
  func.func @transform_4(%arg0: i32) -> (i32, i32) {
    %c0_i32 = arith.constant 0 : i32
    %c0_i32_0 = arith.constant 0 : i32
    %c0_i32_1 = arith.constant 0 : i32
    return %c0_i32, %c0_i32_0 : i32, i32
  }
  func.func @transform_5(%arg0: i32) -> (i32, i32) {
    %c0_i32 = arith.constant 0 : i32
    %c0_i32_0 = arith.constant 0 : i32
    %c0_i32_1 = arith.constant 0 : i32
    return %c0_i32, %c0_i32_0 : i32, i32
  }
  func.func @transform_6(%arg0: i32) -> (i32, i32) {
    %c0_i32 = arith.constant 0 : i32
    %c0_i32_0 = arith.constant 0 : i32
    %c0_i32_1 = arith.constant 0 : i32
    return %c0_i32, %c0_i32_0 : i32, i32
  }
  func.func @transform_7(%arg0: i32) -> (i32, i32, i32) {
    %c0_i32 = arith.constant 0 : i32
    %c0_i32_0 = arith.constant 0 : i32
    %c0_i32_1 = arith.constant 0 : i32
    return %arg0, %c0_i32, %c0_i32_0 : i32, i32, i32
  }
}

module attributes {stable_mosaic.version = 11 : i64} {
  func.func @_ffn_block_kernel(%arg0: i32, %arg1: memref<1x8x16xf32, #tpu.memory_space<vmem>>, %arg2: memref<16x64xf32, #tpu.memory_space<vmem>>, %arg3: memref<1x64xf32, #tpu.memory_space<vmem>>, %arg4: memref<64x16xf32, #tpu.memory_space<vmem>>, %arg5: memref<1x16xf32, #tpu.memory_space<vmem>>, %arg6: memref<8x16xf32, #tpu.memory_space<vmem>>, %arg7: memref<8x16xf32, #tpu.memory_space<vmem>>, %arg8: memref<1x8x16xf32, #tpu.memory_space<vmem>>) attributes {dimension_semantics = [#tpu.dimension_semantics<parallel>], iteration_bounds = array<i64: 2>, scalar_prefetch = 0 : i64, scratch_operands = 0 : i64, tpu.core_type = #tpu.core_type<tc>, window_params = [{transform_indices = @transform_0, window_bounds = array<i64: 1, 8, 16>}, {pipeline_mode = #tpu.pipeline_mode<synchronous>, transform_indices = @transform_1, window_bounds = array<i64: 16, 64>}, {pipeline_mode = #tpu.pipeline_mode<synchronous>, transform_indices = @transform_2, window_bounds = array<i64: 1, 64>}, {pipeline_mode = #tpu.pipeline_mode<synchronous>, transform_indices = @transform_3, window_bounds = array<i64: 64, 16>}, {pipeline_mode = #tpu.pipeline_mode<synchronous>, transform_indices = @transform_4, window_bounds = array<i64: 1, 16>}, {pipeline_mode = #tpu.pipeline_mode<synchronous>, transform_indices = @transform_5, window_bounds = array<i64: 8, 16>}, {pipeline_mode = #tpu.pipeline_mode<synchronous>, transform_indices = @transform_6, window_bounds = array<i64: 8, 16>}, {transform_indices = @transform_7, window_bounds = array<i64: 1, 8, 16>}]} {
    %c0 = arith.constant 0 : index
    %c0_0 = arith.constant 0 : index
    %c0_1 = arith.constant 0 : index
    %0 = vector.load %arg1[%c0, %c0_0, %c0_1] : memref<1x8x16xf32, #tpu.memory_space<vmem>>, vector<1x8x16xf32>
    %1 = vector.shape_cast %0 : vector<1x8x16xf32> to vector<8x16xf32>
    %c0_2 = arith.constant 0 : index
    %c0_3 = arith.constant 0 : index
    %2 = vector.load %arg2[%c0_2, %c0_3] : memref<16x64xf32, #tpu.memory_space<vmem>>, vector<16x64xf32>
    %cst = arith.constant dense<0.000000e+00> : vector<8x64xf32>
    %3 = tpu.matmul %1, %2, %cst {dimension_numbers = #tpu.dot_dimension_numbers<[1], [0], [0], [1], [0, 0, 1, 1], [], []>} : vector<8x16xf32>, vector<16x64xf32>, vector<8x64xf32> -> vector<8x64xf32>
    %c0_4 = arith.constant 0 : index
    %c0_5 = arith.constant 0 : index
    %4 = vector.load %arg3[%c0_4, %c0_5] : memref<1x64xf32, #tpu.memory_space<vmem>>, vector<1x64xf32>
    %5 = vector.broadcast %4 : vector<1x64xf32> to vector<8x64xf32>
    %6 = arith.addf %3, %5 : vector<8x64xf32>
    %cst_6 = arith.constant 0.000000e+00 : f32
    %7 = vector.broadcast %cst_6 : f32 to vector<8x64xf32>
    %8 = arith.maximumf %6, %7 : vector<8x64xf32>
    %c0_7 = arith.constant 0 : index
    %c0_8 = arith.constant 0 : index
    %9 = vector.load %arg4[%c0_7, %c0_8] : memref<64x16xf32, #tpu.memory_space<vmem>>, vector<64x16xf32>
    %cst_9 = arith.constant dense<0.000000e+00> : vector<8x16xf32>
    %10 = tpu.matmul %8, %9, %cst_9 {dimension_numbers = #tpu.dot_dimension_numbers<[1], [0], [0], [1], [0, 0, 1, 1], [], []>} : vector<8x64xf32>, vector<64x16xf32>, vector<8x16xf32> -> vector<8x16xf32>
    %c0_10 = arith.constant 0 : index
    %c0_11 = arith.constant 0 : index
    %11 = vector.load %arg5[%c0_10, %c0_11] : memref<1x16xf32, #tpu.memory_space<vmem>>, vector<1x16xf32>
    %12 = vector.broadcast %11 : vector<1x16xf32> to vector<8x16xf32>
    %13 = arith.addf %10, %12 : vector<8x16xf32>
    %14 = arith.addf %13, %1 : vector<8x16xf32>
    %15 = vector.shape_cast %14 : vector<8x16xf32> to vector<1x8x16xf32>
    %cst_12 = arith.constant dense<0.000000e+00> : vector<1xf32>
    %16 = vector.multi_reduction <add>, %15, %cst_12 [1, 2] : vector<1x8x16xf32> to vector<1xf32>
    %17 = vector.shape_cast %16 : vector<1xf32> to vector<1x1x1xf32>
    %18 = vector.extract %17[0, 0, 0] : f32 from vector<1x1x1xf32>
    %cst_13 = arith.constant 1.280000e+02 : f32
    %19 = arith.divf %18, %cst_13 : f32
    %20 = vector.broadcast %19 : f32 to vector<8x16xf32>
    %21 = arith.subf %14, %20 : vector<8x16xf32>
    %22 = arith.mulf %21, %21 : vector<8x16xf32>
    %23 = vector.shape_cast %22 : vector<8x16xf32> to vector<1x8x16xf32>
    %cst_14 = arith.constant dense<0.000000e+00> : vector<1xf32>
    %24 = vector.multi_reduction <add>, %23, %cst_14 [1, 2] : vector<1x8x16xf32> to vector<1xf32>
    %25 = vector.shape_cast %24 : vector<1xf32> to vector<1x1x1xf32>
    %26 = vector.extract %25[0, 0, 0] : f32 from vector<1x1x1xf32>
    %cst_15 = arith.constant 1.280000e+02 : f32
    %27 = arith.divf %26, %cst_15 : f32
    %28 = vector.broadcast %19 : f32 to vector<8x16xf32>
    %29 = arith.subf %14, %28 : vector<8x16xf32>
    %cst_16 = arith.constant 9.99999974E-6 : f32
    %30 = arith.addf %27, %cst_16 : f32
    %31 = math.rsqrt %30 : f32
    %32 = vector.broadcast %31 : f32 to vector<8x16xf32>
    %33 = arith.mulf %29, %32 : vector<8x16xf32>
    %c0_17 = arith.constant 0 : index
    %c0_18 = arith.constant 0 : index
    %34 = vector.load %arg6[%c0_17, %c0_18] : memref<8x16xf32, #tpu.memory_space<vmem>>, vector<8x16xf32>
    %35 = arith.mulf %33, %34 : vector<8x16xf32>
    %c0_19 = arith.constant 0 : index
    %c0_20 = arith.constant 0 : index
    %36 = vector.load %arg7[%c0_19, %c0_20] : memref<8x16xf32, #tpu.memory_space<vmem>>, vector<8x16xf32>
    %37 = arith.addf %35, %36 : vector<8x16xf32>
    %c0_21 = arith.constant 0 : index
    %c0_22 = arith.constant 0 : index
    %c0_23 = arith.constant 0 : index
    %38 = vector.load %arg8[%c0_21, %c0_22, %c0_23] : memref<1x8x16xf32, #tpu.memory_space<vmem>>, vector<1x8x16xf32>
    %39 = vector.shape_cast %38 : vector<1x8x16xf32> to vector<8x16xf32>
    %40 = vector.shape_cast %37 : vector<8x16xf32> to vector<1x8x16xf32>
    tpu.vector_store %arg8[%c0_21, %c0_22, %c0_23], %40 {strides = array<i32>} : memref<1x8x16xf32, #tpu.memory_space<vmem>>, vector<1x8x16xf32>,
    return
  }
  func.func @transform_0(%arg0: i32) -> (i32, i32, i32) {
    %c0_i32 = arith.constant 0 : i32
    %c0_i32_0 = arith.constant 0 : i32
    %c0_i32_1 = arith.constant 0 : i32
    return %arg0, %c0_i32, %c0_i32_0 : i32, i32, i32
  }
  func.func @transform_1(%arg0: i32) -> (i32, i32) {
    %c0_i32 = arith.constant 0 : i32
    %c0_i32_0 = arith.constant 0 : i32
    %c0_i32_1 = arith.constant 0 : i32
    return %c0_i32, %c0_i32_0 : i32, i32
  }
  func.func @transform_2(%arg0: i32) -> (i32, i32) {
    %c0_i32 = arith.constant 0 : i32
    %c0_i32_0 = arith.constant 0 : i32
    %c0_i32_1 = arith.constant 0 : i32
    return %c0_i32, %c0_i32_0 : i32, i32
  }
  func.func @transform_3(%arg0: i32) -> (i32, i32) {
    %c0_i32 = arith.constant 0 : i32
    %c0_i32_0 = arith.constant 0 : i32
    %c0_i32_1 = arith.constant 0 : i32
    return %c0_i32, %c0_i32_0 : i32, i32
  }
  func.func @transform_4(%arg0: i32) -> (i32, i32) {
    %c0_i32 = arith.constant 0 : i32
    %c0_i32_0 = arith.constant 0 : i32
    %c0_i32_1 = arith.constant 0 : i32
    return %c0_i32, %c0_i32_0 : i32, i32
  }
  func.func @transform_5(%arg0: i32) -> (i32, i32) {
    %c0_i32 = arith.constant 0 : i32
    %c0_i32_0 = arith.constant 0 : i32
    %c0_i32_1 = arith.constant 0 : i32
    return %c0_i32, %c0_i32_0 : i32, i32
  }
  func.func @transform_6(%arg0: i32) -> (i32, i32) {
    %c0_i32 = arith.constant 0 : i32
    %c0_i32_0 = arith.constant 0 : i32
    %c0_i32_1 = arith.constant 0 : i32
    return %c0_i32, %c0_i32_0 : i32, i32
  }
  func.func @transform_7(%arg0: i32) -> (i32, i32, i32) {
    %c0_i32 = arith.constant 0 : i32
    %c0_i32_0 = arith.constant 0 : i32
    %c0_i32_1 = arith.constant 0 : i32
    return %arg0, %c0_i32, %c0_i32_0 : i32, i32, i32
  }
}

</mosaic_0001>

<llo_original>
// kernel: transformer_fwd.11
$region0: #{transformer_fwd.11}
  #allocation0 [shape = 'u32[]', space=smem, size = 0x4, offset = 0x4, fixed_abs, tag = 'smem constant byte address 0x4 - core index']
  #allocation1 [shape = 'u32[144,128]{1,0:T(1,128)}', space=vmem, size = 0x12000, scoped, tag = 'internal scratch']
  %s0 = inlined_call_operand.vmem [shape: f32[2,8,32], index: 0, kind: input, shape index: {}]
  %s1 = inlined_call_operand.vmem [shape: f32[32,128], index: 1, kind: input, shape index: {}]
  %s2 = inlined_call_operand.vmem [shape: f32[1,128], index: 2, kind: input, shape index: {}]
  %s3 = inlined_call_operand.vmem [shape: f32[128,32], index: 3, kind: input, shape index: {}]
  %s4 = inlined_call_operand.vmem [shape: f32[1,32], index: 4, kind: input, shape index: {}]
  %s5 = inlined_call_operand.vmem [shape: f32[8,32], index: 5, kind: input, shape index: {}]
  %s6 = inlined_call_operand.vmem [shape: f32[8,32], index: 6, kind: input, shape index: {}]
  %s7 = inlined_call_operand.vmem [shape: f32[2,8,32], index: 7, kind: output, shape index: {}]
  %s8 = sld [smem:[#allocation0]]
  $region61: #{transformer_fwd.11} parent=0
    _
  %s10 = ssub.s32 1, %s8
  %s11 = scalar_select 0, %s10, %s8
  loop: start=0, step=1, limit=4
  $region2: #{transformer_fwd.11} parent=0 // loop_pre_header
    _
  $region3: #{transformer_fwd.11} parent=0 // loop_header
    %s13 = sphi 0, %s17
    %p14 = scmp.ge.s32.totalorder %s13, 4
    %s23 = sphi 0, %s25
    %s26 = sphi 0, %s23
    %s27 = sphi 0, %s26
    %s43 = sphi 0, %s27
    %s47 = sphi 0, %s47
    %s49 = sphi 0, %s47
    %s50 = sphi 0, %s49
    %s64 = sphi 0, %s50
    %s68 = sphi 0, %s68
    %s70 = sphi 0, %s68
    %s71 = sphi 0, %s70
    %s85 = sphi 0, %s71
    %s89 = sphi 0, %s89
    %s91 = sphi 0, %s89
    %s92 = sphi 0, %s91
    %s106 = sphi 0, %s92
    %s110 = sphi 0, %s110
    %s112 = sphi 0, %s110
    %s113 = sphi 0, %s112
    %s127 = sphi 0, %s113
    %s131 = sphi 0, %s131
    %s133 = sphi 0, %s131
    %s134 = sphi 0, %s133
    %s148 = sphi 0, %s134
    %s152 = sphi 0, %s152
    %s154 = sphi 0, %s152
    %s155 = sphi 0, %s154
    %s169 = sphi 0, %s155
    %s175 = sphi 0, %s177
    %s178 = sphi 0, %s175
    %s179 = sphi 0, %s178
    %s195 = sphi 0, %s179
  $region4: #{transformer_fwd.11} parent=0 // loop_header_branch
    %16 = sbr.rel (%p14) target = $region8
  $region5: #{transformer_fwd.11} parent=0 // loop_body
    %s18 = ssub.s32 %s13, 1
    %s19 = ssub.s32 %s13, 2
    %s20 = sadd.s32 %s13, 1
    %s21 = ssub.s32 %s13, %s20
    %p22 = scmp.eq.s32.totalorder %s21, 0
    %s24 = sadd.s32 %s23, 1
    %s25 = scalar_select %p22, %s23, %s24
    %p28 = pneg %p22
    %p29 = scmp.eq.s32.totalorder %s13, 1
    %p30 = por %p28, %p29
    %p31 = scmp.ne.s32.totalorder %s23, %s26
    %p32 = scmp.eq.s32.totalorder %s13, 0
    %p33 = por %p31, %p32
    %p34 = scmp.ne.s32.totalorder %s23, %s26
    %p35 = scmp.eq.s32.totalorder %s18, 1
    %p36 = por %p34, %p35
    %p37 = scmp.ne.s32.totalorder %s26, %s27
    %p38 = scmp.eq.s32.totalorder %s18, 0
    %p39 = por %p37, %p38
    %p40 = scmp.ne.s32.totalorder %s26, %s27
    %p41 = scmp.eq.s32.totalorder %s19, 1
    %p42 = por %p40, %p41
    %p44 = scmp.ne.s32.totalorder %s27, %s43
    %p45 = scmp.eq.s32.totalorder %s19, 0
    %p46 = por %p44, %p45
    %s48 = sadd.s32 %s47, 1
    %p51 = scmp.eq.s32.totalorder %s13, 1
    %p52 = scmp.ne.s32.totalorder %s47, %s49
    %p53 = scmp.eq.s32.totalorder %s13, 0
    %p54 = por %p52, %p53
    %p55 = scmp.ne.s32.totalorder %s47, %s49
    %p56 = scmp.eq.s32.totalorder %s18, 1
    %p57 = por %p55, %p56
    %p58 = scmp.ne.s32.totalorder %s49, %s50
    %p59 = scmp.eq.s32.totalorder %s18, 0
    %p60 = por %p58, %p59
    %p61 = scmp.ne.s32.totalorder %s49, %s50
    %p62 = scmp.eq.s32.totalorder %s19, 1
    %p63 = por %p61, %p62
    %p65 = scmp.ne.s32.totalorder %s50, %s64
    %p66 = scmp.eq.s32.totalorder %s19, 0
    %p67 = por %p65, %p66
    %s69 = sadd.s32 %s68, 1
    %p72 = scmp.eq.s32.totalorder %s13, 1
    %p73 = scmp.ne.s32.totalorder %s68, %s70
    %p74 = scmp.eq.s32.totalorder %s13, 0
    %p75 = por %p73, %p74
    %p76 = scmp.ne.s32.totalorder %s68, %s70
    %p77 = scmp.eq.s32.totalorder %s18, 1
    %p78 = por %p76, %p77
    %p79 = scmp.ne.s32.totalorder %s70, %s71
    %p80 = scmp.eq.s32.totalorder %s18, 0
    %p81 = por %p79, %p80
    %p82 = scmp.ne.s32.totalorder %s70, %s71
    %p83 = scmp.eq.s32.totalorder %s19, 1
    %p84 = por %p82, %p83
    %p86 = scmp.ne.s32.totalorder %s71, %s85
    %p87 = scmp.eq.s32.totalorder %s19, 0
    %p88 = por %p86, %p87
    %s90 = sadd.s32 %s89, 1
    %p93 = scmp.eq.s32.totalorder %s13, 1
    %p94 = scmp.ne.s32.totalorder %s89, %s91
    %p95 = scmp.eq.s32.totalorder %s13, 0
    %p96 = por %p94, %p95
    %p97 = scmp.ne.s32.totalorder %s89, %s91
    %p98 = scmp.eq.s32.totalorder %s18, 1
    %p99 = por %p97, %p98
    %p100 = scmp.ne.s32.totalorder %s91, %s92
    %p101 = scmp.eq.s32.totalorder %s18, 0
    %p102 = por %p100, %p101
    %p103 = scmp.ne.s32.totalorder %s91, %s92
    %p104 = scmp.eq.s32.totalorder %s19, 1
    %p105 = por %p103, %p104
    %p107 = scmp.ne.s32.totalorder %s92, %s106
    %p108 = scmp.eq.s32.totalorder %s19, 0
    %p109 = por %p107, %p108
    %s111 = sadd.s32 %s110, 1
    %p114 = scmp.eq.s32.totalorder %s13, 1
    %p115 = scmp.ne.s32.totalorder %s110, %s112
    %p116 = scmp.eq.s32.totalorder %s13, 0
    %p117 = por %p115, %p116
    %p118 = scmp.ne.s32.totalorder %s110, %s112
    %p119 = scmp.eq.s32.totalorder %s18, 1
    %p120 = por %p118, %p119
    %p121 = scmp.ne.s32.totalorder %s112, %s113
    %p122 = scmp.eq.s32.totalorder %s18, 0
    %p123 = por %p121, %p122
    %p124 = scmp.ne.s32.totalorder %s112, %s113
    %p125 = scmp.eq.s32.totalorder %s19, 1
    %p126 = por %p124, %p125
    %p128 = scmp.ne.s32.totalorder %s113, %s127
    %p129 = scmp.eq.s32.totalorder %s19, 0
    %p130 = por %p128, %p129
    %s132 = sadd.s32 %s131, 1
    %p135 = scmp.eq.s32.totalorder %s13, 1
    %p136 = scmp.ne.s32.totalorder %s131, %s133
    %p137 = scmp.eq.s32.totalorder %s13, 0
    %p138 = por %p136, %p137
    %p139 = scmp.ne.s32.totalorder %s131, %s133
    %p140 = scmp.eq.s32.totalorder %s18, 1
    %p141 = por %p139, %p140
    %p142 = scmp.ne.s32.totalorder %s133, %s134
    %p143 = scmp.eq.s32.totalorder %s18, 0
    %p144 = por %p142, %p143
    %p145 = scmp.ne.s32.totalorder %s133, %s134
    %p146 = scmp.eq.s32.totalorder %s19, 1
    %p147 = por %p145, %p146
    %p149 = scmp.ne.s32.totalorder %s134, %s148
    %p150 = scmp.eq.s32.totalorder %s19, 0
    %p151 = por %p149, %p150
    %s153 = sadd.s32 %s152, 1
    %p156 = scmp.eq.s32.totalorder %s13, 1
    %p157 = scmp.ne.s32.totalorder %s152, %s154
    %p158 = scmp.eq.s32.totalorder %s13, 0
    %p159 = por %p157, %p158
    %p160 = scmp.ne.s32.totalorder %s152, %s154
    %p161 = scmp.eq.s32.totalorder %s18, 1
    %p162 = por %p160, %p161
    %p163 = scmp.ne.s32.totalorder %s154, %s155
    %p164 = scmp.eq.s32.totalorder %s18, 0
    %p165 = por %p163, %p164
    %p166 = scmp.ne.s32.totalorder %s154, %s155
    %p167 = scmp.eq.s32.totalorder %s19, 1
    %p168 = por %p166, %p167
    %p170 = scmp.ne.s32.totalorder %s155, %s169
    %p171 = scmp.eq.s32.totalorder %s19, 0
    %p172 = por %p170, %p171
    %s173 = ssub.s32 %s13, %s20
    %p174 = scmp.eq.s32.totalorder %s173, 0
    %s176 = sadd.s32 %s175, 1
    %s177 = scalar_select %p174, %s175, %s176
    %p180 = pneg %p174
    %p181 = scmp.eq.s32.totalorder %s13, 1
    %p182 = por %p180, %p181
    %p183 = scmp.ne.s32.totalorder %s175, %s178
    %p184 = scmp.eq.s32.totalorder %s13, 0
    %p185 = por %p183, %p184
    %p186 = scmp.ne.s32.totalorder %s175, %s178
    %p187 = scmp.eq.s32.totalorder %s18, 1
    %p188 = por %p186, %p187
    %p189 = scmp.ne.s32.totalorder %s178, %s179
    %p190 = scmp.eq.s32.totalorder %s18, 0
    %p191 = por %p189, %p190
    %p192 = scmp.ne.s32.totalorder %s178, %s179
    %p193 = scmp.eq.s32.totalorder %s19, 1
    %p194 = por %p192, %p193
    %p196 = scmp.ne.s32.totalorder %s179, %s195
    %p197 = scmp.eq.s32.totalorder %s19, 0
    %p198 = por %p196, %p197
    %p199 = scmp.le.s32.totalorder 1, %s13
    %p200 = scmp.lt.s32.totalorder %s13, 3
    %p201 = pnand %p199, %p200
    %p202 = pneg %p201
    // Predicated region
    $region9: #{transformer_fwd.11} parent=5 // pred_check
      _
    $region10: #{transformer_fwd.11} parent=5 // pred_check_branch
      %204 = sbr.rel (%p201) target = $region12
    $region11: #{transformer_fwd.11} parent=5 // pred_region
      %s205 = ssub.s32 %s13, 1
      // Predicated region
      $region13: #{transformer_fwd.11} parent=11 // pred_check
        %p206 = pneg %p60
      $region14: #{transformer_fwd.11} parent=11 // pred_check_branch
        %208 = sbr.rel (%p206) target = $region16
      $region15: #{transformer_fwd.11} parent=11 // pred_region
        _
      $region16: #{transformer_fwd.11} parent=11 // pred_fallthru
        _
      // Predicated region
      $region17: #{transformer_fwd.11} parent=11 // pred_check
        %p209 = pneg %p81
      $region18: #{transformer_fwd.11} parent=11 // pred_check_branch
        %211 = sbr.rel (%p209) target = $region20
      $region19: #{transformer_fwd.11} parent=11 // pred_region
        _
      $region20: #{transformer_fwd.11} parent=11 // pred_fallthru
        _
      // Predicated region
      $region21: #{transformer_fwd.11} parent=11 // pred_check
        %p212 = pneg %p102
      $region22: #{transformer_fwd.11} parent=11 // pred_check_branch
        %214 = sbr.rel (%p212) target = $region24
      $region23: #{transformer_fwd.11} parent=11 // pred_region
        _
      $region24: #{transformer_fwd.11} parent=11 // pred_fallthru
        _
      // Predicated region
      $region25: #{transformer_fwd.11} parent=11 // pred_check
        %p215 = pneg %p123
      $region26: #{transformer_fwd.11} parent=11 // pred_check_branch
        %217 = sbr.rel (%p215) target = $region28
      $region27: #{transformer_fwd.11} parent=11 // pred_region
        _
      $region28: #{transformer_fwd.11} parent=11 // pred_fallthru
        _
      // Predicated region
      $region29: #{transformer_fwd.11} parent=11 // pred_check
        %p218 = pneg %p144
      $region30: #{transformer_fwd.11} parent=11 // pred_check_branch
        %220 = sbr.rel (%p218) target = $region32
      $region31: #{transformer_fwd.11} parent=11 // pred_region
        _
      $region32: #{transformer_fwd.11} parent=11 // pred_fallthru
        _
      // Predicated region
      $region33: #{transformer_fwd.11} parent=11 // pred_check
        %p221 = pneg %p165
      $region34: #{transformer_fwd.11} parent=11 // pred_check_branch
        %223 = sbr.rel (%p221) target = $region36
      $region35: #{transformer_fwd.11} parent=11 // pred_region
        _
      $region36: #{transformer_fwd.11} parent=11 // pred_fallthru
        _
    $region12: #{transformer_fwd.11} parent=5 // pred_fallthru
      _
    %p224 = scmp.lt.s32.totalorder %s13, 2
    // Predicated region
    $region37: #{transformer_fwd.11} parent=5 // pred_check
      %p225 = pneg %p224
    $region38: #{transformer_fwd.11} parent=5 // pred_check_branch
      %227 = sbr.rel (%p225) target = $region40
    $region39: #{transformer_fwd.11} parent=5 // pred_region
      // Predicated region
      $region41: #{transformer_fwd.11} parent=39 // pred_check
        %p228 = pneg %p33
      $region42: #{transformer_fwd.11} parent=39 // pred_check_branch
        %230 = sbr.rel (%p228) target = $region44
      $region43: #{transformer_fwd.11} parent=39 // pred_region
        %p231 = scmp.lt.s32.totalorder %s13, 1
        %s232 = scalar_select %p231, %s13, 1
        %s233 = smul.addr %s232, 8
        %s234 = scalar_lea.vmem %s0, %s233
      $region44: #{transformer_fwd.11} parent=39 // pred_fallthru
        _
    $region40: #{transformer_fwd.11} parent=5 // pred_fallthru
      _
    %p235 = scmp.le.s32.totalorder 1, %s13
    %p236 = scmp.lt.s32.totalorder %s13, 3
    %p237 = pnand %p235, %p236
    %p238 = pneg %p237
    // Predicated region
    $region45: #{transformer_fwd.11} parent=5 // pred_check
      _
    $region46: #{transformer_fwd.11} parent=5 // pred_check_branch
      %240 = sbr.rel (%p237) target = $region48
    $region47: #{transformer_fwd.11} parent=5 // pred_region
      %s241 = ssub.s32 %s13, 1
      %p242 = scmp.lt.s32.totalorder %s18, 1
      %s243 = scalar_select %p242, %s18, 1
      %s244 = smul.addr %s243, 8
      %s245 = scalar_lea.vmem %s0, %s244
      %p246 = pneg %p39
      %p247 = pneg %p36
      %p248 = pneg %p60
      %p249 = pneg %p57
      %p250 = pneg %p81
      %p251 = pneg %p78
      %p252 = pneg %p102
      %p253 = pneg %p99
      %p254 = pneg %p123
      %p255 = pneg %p120
      %p256 = pneg %p144
      %p257 = pneg %p141
      %p258 = pneg %p165
      %p259 = pneg %p162
      %p260 = pneg %p191
      %p261 = pneg %p188
      %p262 = scmp.lt.s32.totalorder %s18, 1
      %s263 = scalar_select %p262, %s18, 1
      %s264 = smul.addr %s263, 8
      %s265 = scalar_lea.vmem %s7, %s264
      %p266 = scmp.lt.s32.totalorder %s18, 1
      %s267 = scalar_select %p266, %s18, 1
      %s268 = smul.addr %s267, 8
      %s269 = scalar_lea.vmem %s0, %s268
      %p270 = scmp.lt.s32.totalorder %s18, 1
      %s271 = scalar_select %p270, %s18, 1
      %s272 = smul.addr %s271, 8
      %s273 = scalar_lea.vmem %s7, %s272
      %v274 = vld [vmem:[%s269] sm:$0xff]
      %v275 = vld [vmem:[%s1] sm:$0xff]
      %v276 = vld [vmem:[%s1 + $0x8] sm:$0xff]
      %v277 = vld [vmem:[%s1 + $0x10] sm:$0xff]
      %v278 = vld [vmem:[%s1 + $0x18] sm:$0xff]
      %v279 = vld [vmem:[%s2] sm:$0x1]
      %v281 = vlaneseq
      %v282 = vshrl.u32 %v281, 7
      %v283 = vsub.s32 0, %v282
      %v284 = vrot.slane %v279, %v283
      %vm286 = vcmask 261120
      %v288 = vsel %vm286, %v274, 0
      %290 = vmatprep.subr.mxu0 0.0
      %291 = vmatpush1.msra.mxu0 %v275
      %292 = vmatprep.subr.mxu0 0.0
      %293 = vmatpush1.msra.mxu0 %v276
      %294 = vmatprep.subr.mxu0 0.0
      %295 = vmatpush1.msra.mxu0 %v277
      %296 = vmatprep.subr.mxu0 0.0
      %297 = vmatpush1.msra.mxu0 %v278
      %298 = vmatprep.subr.mxu0 0.0
      %299 = vmatpush1.msra.mxu0 0.0
      %300 = vmatprep.subr.mxu0 0.0
      %301 = vmatpush1.msra.mxu0 0.0
      %302 = vmatprep.subr.mxu0 0.0
      %303 = vmatpush1.msra.mxu0 0.0
      %304 = vmatprep.subr.mxu0 0.0
      %305 = vmatpush1.msra.mxu0 0.0
      %306 = vmatprep.subr.mxu0 0.0
      %307 = vmatpush1.msra.mxu0 0.0
      %308 = vmatprep.subr.mxu0 0.0
      %309 = vmatpush1.msra.mxu0 0.0
      %310 = vmatprep.subr.mxu0 0.0
      %311 = vmatpush1.msra.mxu0 0.0
      %312 = vmatprep.subr.mxu0 0.0
      %313 = vmatpush1.msra.mxu0 0.0
      %314 = vmatprep.subr.mxu0 0.0
      %315 = vmatpush1.msra.mxu0 0.0
      %316 = vmatprep.subr.mxu0 0.0
      %317 = vmatpush1.msra.mxu0 0.0
      %318 = vmatprep.subr.mxu0 0.0
      %319 = vmatpush1.msra.mxu0 0.0
      %320 = vmatprep.subr.mxu0 0.0
      %321 = vmatpush1.msra.mxu0 0.0
      %322 = vmatprep.subr.mxu0 0.0
      %323 = vmatpush1.msra.mxu0 0.0
      %324 = vmatprep.subr.mxu0 0.0
      %325 = vmatpush1.msra.mxu0 0.0
      %326 = vmatprep.subr.mxu0 0.0
      %327 = vmatpush1.msra.mxu0 0.0
      %328 = vmatprep.subr.mxu0 0.0
      %329 = vmatpush1.msra.mxu0 0.0
      %330 = vmatprep.subr.mxu0 0.0
      %331 = vmatpush1.msra.mxu0 0.0
      %332 = vmatprep.subr.mxu0 0.0
      %333 = vmatpush1.msra.mxu0 0.0
      %334 = vmatprep.subr.mxu0 0.0
      %335 = vmatpush1.msra.mxu0 0.0
      %336 = vmatprep.subr.mxu0 0.0
      %337 = vmatpush1.msra.mxu0 0.0
      %338 = vmatprep.subr.mxu0 0.0
      %339 = vmatpush1.msra.mxu0 0.0
      %340 = vmatprep.subr.mxu0 0.0
      %341 = vmatpush1.msra.mxu0 0.0
      %342 = vmatprep.subr.mxu0 0.0
      %343 = vmatpush1.msra.mxu0 0.0
      %344 = vmatprep.subr.mxu0 0.0
      %345 = vmatpush1.msra.mxu0 0.0
      %346 = vmatprep.subr.mxu0 0.0
      %347 = vmatpush1.msra.mxu0 0.0
      %348 = vmatprep.subr.mxu0 0.0
      %349 = vmatpush1.msra.mxu0 0.0
      %350 = vmatprep.subr.mxu0 0.0
      %351 = vmatpush1.msra.mxu0 0.0
      %352 = vmatprep.subr.mxu0 0.0
      %353 = vmatpush1.msra.mxu0 0.0
      %354 = vmatprep.mubr.f32.mxu0 0.0
      %355 = vmatmul.mubr.f32.gmra.mrb[0].mxu0 %v288
      %v356 = vpop.f32.mrb[0].mxu0
      %v357 = vadd.f32 %v284, %v356
      %v358 = vpop.f32.mrb[0].mxu0
      %359 = vdwg.mxu0
      %v360 = vmax.f32 %v357, 0.0
      %v361 = vld [vmem:[%s3] sm:$0xff]
      %v362 = vld [vmem:[%s3 + $0x8] sm:$0xff]
      %v363 = vld [vmem:[%s3 + $0x10] sm:$0xff]
      %v364 = vld [vmem:[%s3 + $0x18] sm:$0xff]
      %v365 = vld [vmem:[%s3 + $0x20] sm:$0xff]
      %v366 = vld [vmem:[%s3 + $0x28] sm:$0xff]
      %v367 = vld [vmem:[%s3 + $0x30] sm:$0xff]
      %v368 = vld [vmem:[%s3 + $0x38] sm:$0xff]
      %v369 = vld [vmem:[%s3 + $0x40] sm:$0xff]
      %v370 = vld [vmem:[%s3 + $0x48] sm:$0xff]
      %v371 = vld [vmem:[%s3 + $0x50] sm:$0xff]
      %v372 = vld [vmem:[%s3 + $0x58] sm:$0xff]
      %v373 = vld [vmem:[%s3 + $0x60] sm:$0xff]
      %v374 = vld [vmem:[%s3 + $0x68] sm:$0xff]
      %v375 = vld [vmem:[%s3 + $0x70] sm:$0xff]
      %v376 = vld [vmem:[%s3 + $0x78] sm:$0xff]
      %v377 = vld [vmem:[%s4] sm:$0x1]
      %v379 = vlaneseq
      %v380 = vshrl.u32 %v379, 7
      %v381 = vsub.s32 0, %v380
      %v382 = vrot.slane %v377, %v381
      %384 = vmatprep.subr.mxu0 0.0
      %385 = vmatpush1.msra.mxu0 %v361
      %386 = vmatprep.subr.mxu0 0.0
      %387 = vmatpush1.msra.mxu0 %v362
      %388 = vmatprep.subr.mxu0 0.0
      %389 = vmatpush1.msra.mxu0 %v363
      %390 = vmatprep.subr.mxu0 0.0
      %391 = vmatpush1.msra.mxu0 %v364
      %392 = vmatprep.subr.mxu0 0.0
      %393 = vmatpush1.msra.mxu0 %v365
      %394 = vmatprep.subr.mxu0 0.0
      %395 = vmatpush1.msra.mxu0 %v366
      %396 = vmatprep.subr.mxu0 0.0
      %397 = vmatpush1.msra.mxu0 %v367
      %398 = vmatprep.subr.mxu0 0.0
      %399 = vmatpush1.msra.mxu0 %v368
      %400 = vmatprep.subr.mxu0 0.0
      %401 = vmatpush1.msra.mxu0 %v369
      %402 = vmatprep.subr.mxu0 0.0
      %403 = vmatpush1.msra.mxu0 %v370
      %404 = vmatprep.subr.mxu0 0.0
      %405 = vmatpush1.msra.mxu0 %v371
      %406 = vmatprep.subr.mxu0 0.0
      %407 = vmatpush1.msra.mxu0 %v372
      %408 = vmatprep.subr.mxu0 0.0
      %409 = vmatpush1.msra.mxu0 %v373
      %410 = vmatprep.subr.mxu0 0.0
      %411 = vmatpush1.msra.mxu0 %v374
      %412 = vmatprep.subr.mxu0 0.0
      %413 = vmatpush1.msra.mxu0 %v375
      %414 = vmatprep.subr.mxu0 0.0
      %415 = vmatpush1.msra.mxu0 %v376
      %416 = vmatprep.subr.mxu0 0.0
      %417 = vmatpush1.msra.mxu0 0.0
      %418 = vmatprep.subr.mxu0 0.0
      %419 = vmatpush1.msra.mxu0 0.0
      %420 = vmatprep.subr.mxu0 0.0
      %421 = vmatpush1.msra.mxu0 0.0
      %422 = vmatprep.subr.mxu0 0.0
      %423 = vmatpush1.msra.mxu0 0.0
      %424 = vmatprep.subr.mxu0 0.0
      %425 = vmatpush1.msra.mxu0 0.0
      %426 = vmatprep.subr.mxu0 0.0
      %427 = vmatpush1.msra.mxu0 0.0
      %428 = vmatprep.subr.mxu0 0.0
      %429 = vmatpush1.msra.mxu0 0.0
      %430 = vmatprep.subr.mxu0 0.0
      %431 = vmatpush1.msra.mxu0 0.0
      %432 = vmatprep.subr.mxu0 0.0
      %433 = vmatpush1.msra.mxu0 0.0
      %434 = vmatprep.subr.mxu0 0.0
      %435 = vmatpush1.msra.mxu0 0.0
      %436 = vmatprep.subr.mxu0 0.0
      %437 = vmatpush1.msra.mxu0 0.0
      %438 = vmatprep.subr.mxu0 0.0
      %439 = vmatpush1.msra.mxu0 0.0
      %440 = vmatprep.subr.mxu0 0.0
      %441 = vmatpush1.msra.mxu0 0.0
      %442 = vmatprep.subr.mxu0 0.0
      %443 = vmatpush1.msra.mxu0 0.0
      %444 = vmatprep.subr.mxu0 0.0
      %445 = vmatpush1.msra.mxu0 0.0
      %446 = vmatprep.subr.mxu0 0.0
      %447 = vmatpush1.msra.mxu0 0.0
      %448 = vmatprep.mubr.f32.mxu0 0.0
      %449 = vmatmul.mubr.f32.gmra.mrb[0].mxu0 %v360
      %v450 = vpop.f32.mrb[0].mxu0
      %v451 = vadd.f32 %v382, %v450
      %v452 = vpop.f32.mrb[0].mxu0
      %453 = vdwg.mxu0
      %v454 = vadd.f32 %v451, %v274
      %v455 = vsel %vm286, %v454, 0.0
      %456 = vadd.xlane.f32.xlu0 %v455
      %v457 = vpop.xlane.xlu0 %456
      %v458 = vrot.slane %v457, 4
      %v459 = vadd.f32 %v457, %v458
      %v460 = vrot.slane %v459, 2
      %v461 = vadd.f32 %v459, %v460
      %v462 = vrot.slane %v461, 1
      %v463 = vadd.f32 %v461, %v462
      %s464 = vtos %v463
      %v465 = vrcp.pop 256.0
      %s466 = vtos %v465
      %s467 = smul.f32 %s464, %s466
      %v468 = vstv %s467
      %v469 = vsub.f32 %v454, %v468
      %v470 = vmul.f32 %v469, %v469
      %v471 = vsel %vm286, %v470, 0.0
      %472 = vadd.xlane.f32.xlu0 %v471
      %v473 = vpop.xlane.xlu0 %472
      %v474 = vrot.slane %v473, 4
      %v475 = vadd.f32 %v473, %v474
      %v476 = vrot.slane %v475, 2
      %v477 = vadd.f32 %v475, %v476
      %v478 = vrot.slane %v477, 1
      %v479 = vadd.f32 %v477, %v478
      %s480 = vtos %v479
      %v481 = vrcp.pop 256.0
      %s482 = vtos %v481
      %s483 = smul.f32 %s480, %s482
      %s484 = sadd.f32 %s483, 1e-05
      %v485 = vstv %s484
      %v486 = vrsqrt.pop %v485
      %s487 = vtos %v486
      %v488 = vstv %s487
      %v489 = vmul.f32 %v469, %v488
      %v490 = vld [vmem:[%s5] sm:$0xff]
      %v491 = vmul.f32 %v489, %v490
      %v492 = vld [vmem:[%s6] sm:$0xff]
      %v493 = vadd.f32 %v491, %v492
      %494 = vst.msk [vmem:[%s273] sm:$0xff] %vm286, %v493
      %p495 = scmp.lt.s32.totalorder %s18, 1
      %s496 = scalar_select %p495, %s18, 1
      %s497 = smul.addr %s496, 8
      %s498 = scalar_lea.vmem %s7, %s497
      // Predicated region
      $region49: #{transformer_fwd.11} parent=47 // pred_check
        %p499 = pneg %p188
      $region50: #{transformer_fwd.11} parent=47 // pred_check_branch
        %501 = sbr.rel (%p499) target = $region52
      $region51: #{transformer_fwd.11} parent=47 // pred_region
        _
      $region52: #{transformer_fwd.11} parent=47 // pred_fallthru
        _
    $region48: #{transformer_fwd.11} parent=5 // pred_fallthru
      _
    %p502 = scmp.le.s32.totalorder 2, %s13
    // Predicated region
    $region53: #{transformer_fwd.11} parent=5 // pred_check
      %p503 = pneg %p502
    $region54: #{transformer_fwd.11} parent=5 // pred_check_branch
      %505 = sbr.rel (%p503) target = $region56
    $region55: #{transformer_fwd.11} parent=5 // pred_region
      %s506 = ssub.s32 %s13, 2
      // Predicated region
      $region57: #{transformer_fwd.11} parent=55 // pred_check
        %p507 = pneg %p194
      $region58: #{transformer_fwd.11} parent=55 // pred_check_branch
        %509 = sbr.rel (%p507) target = $region60
      $region59: #{transformer_fwd.11} parent=55 // pred_region
        %p510 = scmp.lt.s32.totalorder %s19, 1
        %s511 = scalar_select %p510, %s19, 1
        %s512 = smul.addr %s511, 8
        %s513 = scalar_lea.vmem %s7, %s512
      $region60: #{transformer_fwd.11} parent=55 // pred_fallthru
        _
    $region56: #{transformer_fwd.11} parent=5 // pred_fallthru
      _
  $region6: #{transformer_fwd.11} parent=0 // loop_footer
    %s17 = sadd.s32 1, %s13
  $region7: #{transformer_fwd.11} parent=0 // loop_footer_branch
    %12 = sbr.rel target = $region3
  $region8: #{transformer_fwd.11} parent=0 // loop_exit
    _

// kernel: transformer_fwd.10
$region0: #{transformer_fwd.10}
  #allocation0 [shape = 'u32[]', space=smem, size = 0x4, offset = 0x4, fixed_abs, tag = 'smem constant byte address 0x4 - core index']
  #allocation1 [shape = 'u32[144,128]{1,0:T(1,128)}', space=vmem, size = 0x12000, scoped, tag = 'internal scratch']
  %s0 = inlined_call_operand.vmem [shape: f32[2,8,32], index: 0, kind: input, shape index: {}, may-alias: {0,1}]
  %s1 = inlined_call_operand.vmem [shape: f32[2,8,32], index: 1, kind: input, shape index: {}, may-alias: {0,1}]
  %s2 = inlined_call_operand.vmem [shape: f32[32,32], index: 2, kind: input, shape index: {}]
  %s3 = inlined_call_operand.vmem [shape: f32[1,32], index: 3, kind: input, shape index: {}]
  %s4 = inlined_call_operand.vmem [shape: f32[32,32], index: 4, kind: input, shape index: {}]
  %s5 = inlined_call_operand.vmem [shape: f32[1,32], index: 5, kind: input, shape index: {}]
  %s6 = inlined_call_operand.vmem [shape: f32[32,32], index: 6, kind: input, shape index: {}]
  %s7 = inlined_call_operand.vmem [shape: f32[1,32], index: 7, kind: input, shape index: {}]
  %s8 = inlined_call_operand.vmem [shape: f32[32,32], index: 8, kind: input, shape index: {}]
  %s9 = inlined_call_operand.vmem [shape: f32[1,32], index: 9, kind: input, shape index: {}]
  %s10 = inlined_call_operand.vmem [shape: f32[8,32], index: 10, kind: input, shape index: {}]
  %s11 = inlined_call_operand.vmem [shape: f32[8,32], index: 11, kind: input, shape index: {}]
  %s12 = inlined_call_operand.vmem [shape: f32[2,8,32], index: 12, kind: output, shape index: {}]
  %s13 = sld [smem:[#allocation0]]
  $region81: #{transformer_fwd.10} parent=0
    _
  %s15 = ssub.s32 1, %s13
  %s16 = scalar_select 0, %s15, %s13
  loop: start=0, step=1, limit=4
  $region2: #{transformer_fwd.10} parent=0 // loop_pre_header
    _
  $region3: #{transformer_fwd.10} parent=0 // loop_header
    %s18 = sphi 0, %s22
    %p19 = scmp.ge.s32.totalorder %s18, 4
    %s28 = sphi 0, %s30
    %s31 = sphi 0, %s28
    %s32 = sphi 0, %s31
    %s48 = sphi 0, %s32
    %s54 = sphi 0, %s56
    %s57 = sphi 0, %s54
    %s58 = sphi 0, %s57
    %s74 = sphi 0, %s58
    %s78 = sphi 0, %s78
    %s80 = sphi 0, %s78
    %s81 = sphi 0, %s80
    %s95 = sphi 0, %s81
    %s99 = sphi 0, %s99
    %s101 = sphi 0, %s99
    %s102 = sphi 0, %s101
    %s116 = sphi 0, %s102
    %s120 = sphi 0, %s120
    %s122 = sphi 0, %s120
    %s123 = sphi 0, %s122
    %s137 = sphi 0, %s123
    %s141 = sphi 0, %s141
    %s143 = sphi 0, %s141
    %s144 = sphi 0, %s143
    %s158 = sphi 0, %s144
    %s162 = sphi 0, %s162
    %s164 = sphi 0, %s162
    %s165 = sphi 0, %s164
    %s179 = sphi 0, %s165
    %s183 = sphi 0, %s183
    %s185 = sphi 0, %s183
    %s186 = sphi 0, %s185
    %s200 = sphi 0, %s186
    %s204 = sphi 0, %s204
    %s206 = sphi 0, %s204
    %s207 = sphi 0, %s206
    %s221 = sphi 0, %s207
    %s225 = sphi 0, %s225
    %s227 = sphi 0, %s225
    %s228 = sphi 0, %s227
    %s242 = sphi 0, %s228
    %s246 = sphi 0, %s246
    %s248 = sphi 0, %s246
    %s249 = sphi 0, %s248
    %s263 = sphi 0, %s249
    %s267 = sphi 0, %s267
    %s269 = sphi 0, %s267
    %s270 = sphi 0, %s269
    %s284 = sphi 0, %s270
    %s290 = sphi 0, %s292
    %s293 = sphi 0, %s290
    %s294 = sphi 0, %s293
    %s310 = sphi 0, %s294
  $region4: #{transformer_fwd.10} parent=0 // loop_header_branch
    %21 = sbr.rel (%p19) target = $region8
  $region5: #{transformer_fwd.10} parent=0 // loop_body
    %s23 = ssub.s32 %s18, 1
    %s24 = ssub.s32 %s18, 2
    %s25 = sadd.s32 %s18, 1
    %s26 = ssub.s32 %s18, %s25
    %p27 = scmp.eq.s32.totalorder %s26, 0
    %s29 = sadd.s32 %s28, 1
    %s30 = scalar_select %p27, %s28, %s29
    %p33 = pneg %p27
    %p34 = scmp.eq.s32.totalorder %s18, 1
    %p35 = por %p33, %p34
    %p36 = scmp.ne.s32.totalorder %s28, %s31
    %p37 = scmp.eq.s32.totalorder %s18, 0
    %p38 = por %p36, %p37
    %p39 = scmp.ne.s32.totalorder %s28, %s31
    %p40 = scmp.eq.s32.totalorder %s23, 1
    %p41 = por %p39, %p40
    %p42 = scmp.ne.s32.totalorder %s31, %s32
    %p43 = scmp.eq.s32.totalorder %s23, 0
    %p44 = por %p42, %p43
    %p45 = scmp.ne.s32.totalorder %s31, %s32
    %p46 = scmp.eq.s32.totalorder %s24, 1
    %p47 = por %p45, %p46
    %p49 = scmp.ne.s32.totalorder %s32, %s48
    %p50 = scmp.eq.s32.totalorder %s24, 0
    %p51 = por %p49, %p50
    %s52 = ssub.s32 %s18, %s25
    %p53 = scmp.eq.s32.totalorder %s52, 0
    %s55 = sadd.s32 %s54, 1
    %s56 = scalar_select %p53, %s54, %s55
    %p59 = pneg %p53
    %p60 = scmp.eq.s32.totalorder %s18, 1
    %p61 = por %p59, %p60
    %p62 = scmp.ne.s32.totalorder %s54, %s57
    %p63 = scmp.eq.s32.totalorder %s18, 0
    %p64 = por %p62, %p63
    %p65 = scmp.ne.s32.totalorder %s54, %s57
    %p66 = scmp.eq.s32.totalorder %s23, 1
    %p67 = por %p65, %p66
    %p68 = scmp.ne.s32.totalorder %s57, %s58
    %p69 = scmp.eq.s32.totalorder %s23, 0
    %p70 = por %p68, %p69
    %p71 = scmp.ne.s32.totalorder %s57, %s58
    %p72 = scmp.eq.s32.totalorder %s24, 1
    %p73 = por %p71, %p72
    %p75 = scmp.ne.s32.totalorder %s58, %s74
    %p76 = scmp.eq.s32.totalorder %s24, 0
    %p77 = por %p75, %p76
    %s79 = sadd.s32 %s78, 1
    %p82 = scmp.eq.s32.totalorder %s18, 1
    %p83 = scmp.ne.s32.totalorder %s78, %s80
    %p84 = scmp.eq.s32.totalorder %s18, 0
    %p85 = por %p83, %p84
    %p86 = scmp.ne.s32.totalorder %s78, %s80
    %p87 = scmp.eq.s32.totalorder %s23, 1
    %p88 = por %p86, %p87
    %p89 = scmp.ne.s32.totalorder %s80, %s81
    %p90 = scmp.eq.s32.totalorder %s23, 0
    %p91 = por %p89, %p90
    %p92 = scmp.ne.s32.totalorder %s80, %s81
    %p93 = scmp.eq.s32.totalorder %s24, 1
    %p94 = por %p92, %p93
    %p96 = scmp.ne.s32.totalorder %s81, %s95
    %p97 = scmp.eq.s32.totalorder %s24, 0
    %p98 = por %p96, %p97
    %s100 = sadd.s32 %s99, 1
    %p103 = scmp.eq.s32.totalorder %s18, 1
    %p104 = scmp.ne.s32.totalorder %s99, %s101
    %p105 = scmp.eq.s32.totalorder %s18, 0
    %p106 = por %p104, %p105
    %p107 = scmp.ne.s32.totalorder %s99, %s101
    %p108 = scmp.eq.s32.totalorder %s23, 1
    %p109 = por %p107, %p108
    %p110 = scmp.ne.s32.totalorder %s101, %s102
    %p111 = scmp.eq.s32.totalorder %s23, 0
    %p112 = por %p110, %p111
    %p113 = scmp.ne.s32.totalorder %s101, %s102
    %p114 = scmp.eq.s32.totalorder %s24, 1
    %p115 = por %p113, %p114
    %p117 = scmp.ne.s32.totalorder %s102, %s116
    %p118 = scmp.eq.s32.totalorder %s24, 0
    %p119 = por %p117, %p118
    %s121 = sadd.s32 %s120, 1
    %p124 = scmp.eq.s32.totalorder %s18, 1
    %p125 = scmp.ne.s32.totalorder %s120, %s122
    %p126 = scmp.eq.s32.totalorder %s18, 0
    %p127 = por %p125, %p126
    %p128 = scmp.ne.s32.totalorder %s120, %s122
    %p129 = scmp.eq.s32.totalorder %s23, 1
    %p130 = por %p128, %p129
    %p131 = scmp.ne.s32.totalorder %s122, %s123
    %p132 = scmp.eq.s32.totalorder %s23, 0
    %p133 = por %p131, %p132
    %p134 = scmp.ne.s32.totalorder %s122, %s123
    %p135 = scmp.eq.s32.totalorder %s24, 1
    %p136 = por %p134, %p135
    %p138 = scmp.ne.s32.totalorder %s123, %s137
    %p139 = scmp.eq.s32.totalorder %s24, 0
    %p140 = por %p138, %p139
    %s142 = sadd.s32 %s141, 1
    %p145 = scmp.eq.s32.totalorder %s18, 1
    %p146 = scmp.ne.s32.totalorder %s141, %s143
    %p147 = scmp.eq.s32.totalorder %s18, 0
    %p148 = por %p146, %p147
    %p149 = scmp.ne.s32.totalorder %s141, %s143
    %p150 = scmp.eq.s32.totalorder %s23, 1
    %p151 = por %p149, %p150
    %p152 = scmp.ne.s32.totalorder %s143, %s144
    %p153 = scmp.eq.s32.totalorder %s23, 0
    %p154 = por %p152, %p153
    %p155 = scmp.ne.s32.totalorder %s143, %s144
    %p156 = scmp.eq.s32.totalorder %s24, 1
    %p157 = por %p155, %p156
    %p159 = scmp.ne.s32.totalorder %s144, %s158
    %p160 = scmp.eq.s32.totalorder %s24, 0
    %p161 = por %p159, %p160
    %s163 = sadd.s32 %s162, 1
    %p166 = scmp.eq.s32.totalorder %s18, 1
    %p167 = scmp.ne.s32.totalorder %s162, %s164
    %p168 = scmp.eq.s32.totalorder %s18, 0
    %p169 = por %p167, %p168
    %p170 = scmp.ne.s32.totalorder %s162, %s164
    %p171 = scmp.eq.s32.totalorder %s23, 1
    %p172 = por %p170, %p171
    %p173 = scmp.ne.s32.totalorder %s164, %s165
    %p174 = scmp.eq.s32.totalorder %s23, 0
    %p175 = por %p173, %p174
    %p176 = scmp.ne.s32.totalorder %s164, %s165
    %p177 = scmp.eq.s32.totalorder %s24, 1
    %p178 = por %p176, %p177
    %p180 = scmp.ne.s32.totalorder %s165, %s179
    %p181 = scmp.eq.s32.totalorder %s24, 0
    %p182 = por %p180, %p181
    %s184 = sadd.s32 %s183, 1
    %p187 = scmp.eq.s32.totalorder %s18, 1
    %p188 = scmp.ne.s32.totalorder %s183, %s185
    %p189 = scmp.eq.s32.totalorder %s18, 0
    %p190 = por %p188, %p189
    %p191 = scmp.ne.s32.totalorder %s183, %s185
    %p192 = scmp.eq.s32.totalorder %s23, 1
    %p193 = por %p191, %p192
    %p194 = scmp.ne.s32.totalorder %s185, %s186
    %p195 = scmp.eq.s32.totalorder %s23, 0
    %p196 = por %p194, %p195
    %p197 = scmp.ne.s32.totalorder %s185, %s186
    %p198 = scmp.eq.s32.totalorder %s24, 1
    %p199 = por %p197, %p198
    %p201 = scmp.ne.s32.totalorder %s186, %s200
    %p202 = scmp.eq.s32.totalorder %s24, 0
    %p203 = por %p201, %p202
    %s205 = sadd.s32 %s204, 1
    %p208 = scmp.eq.s32.totalorder %s18, 1
    %p209 = scmp.ne.s32.totalorder %s204, %s206
    %p210 = scmp.eq.s32.totalorder %s18, 0
    %p211 = por %p209, %p210
    %p212 = scmp.ne.s32.totalorder %s204, %s206
    %p213 = scmp.eq.s32.totalorder %s23, 1
    %p214 = por %p212, %p213
    %p215 = scmp.ne.s32.totalorder %s206, %s207
    %p216 = scmp.eq.s32.totalorder %s23, 0
    %p217 = por %p215, %p216
    %p218 = scmp.ne.s32.totalorder %s206, %s207
    %p219 = scmp.eq.s32.totalorder %s24, 1
    %p220 = por %p218, %p219
    %p222 = scmp.ne.s32.totalorder %s207, %s221
    %p223 = scmp.eq.s32.totalorder %s24, 0
    %p224 = por %p222, %p223
    %s226 = sadd.s32 %s225, 1
    %p229 = scmp.eq.s32.totalorder %s18, 1
    %p230 = scmp.ne.s32.totalorder %s225, %s227
    %p231 = scmp.eq.s32.totalorder %s18, 0
    %p232 = por %p230, %p231
    %p233 = scmp.ne.s32.totalorder %s225, %s227
    %p234 = scmp.eq.s32.totalorder %s23, 1
    %p235 = por %p233, %p234
    %p236 = scmp.ne.s32.totalorder %s227, %s228
    %p237 = scmp.eq.s32.totalorder %s23, 0
    %p238 = por %p236, %p237
    %p239 = scmp.ne.s32.totalorder %s227, %s228
    %p240 = scmp.eq.s32.totalorder %s24, 1
    %p241 = por %p239, %p240
    %p243 = scmp.ne.s32.totalorder %s228, %s242
    %p244 = scmp.eq.s32.totalorder %s24, 0
    %p245 = por %p243, %p244
    %s247 = sadd.s32 %s246, 1
    %p250 = scmp.eq.s32.totalorder %s18, 1
    %p251 = scmp.ne.s32.totalorder %s246, %s248
    %p252 = scmp.eq.s32.totalorder %s18, 0
    %p253 = por %p251, %p252
    %p254 = scmp.ne.s32.totalorder %s246, %s248
    %p255 = scmp.eq.s32.totalorder %s23, 1
    %p256 = por %p254, %p255
    %p257 = scmp.ne.s32.totalorder %s248, %s249
    %p258 = scmp.eq.s32.totalorder %s23, 0
    %p259 = por %p257, %p258
    %p260 = scmp.ne.s32.totalorder %s248, %s249
    %p261 = scmp.eq.s32.totalorder %s24, 1
    %p262 = por %p260, %p261
    %p264 = scmp.ne.s32.totalorder %s249, %s263
    %p265 = scmp.eq.s32.totalorder %s24, 0
    %p266 = por %p264, %p265
    %s268 = sadd.s32 %s267, 1
    %p271 = scmp.eq.s32.totalorder %s18, 1
    %p272 = scmp.ne.s32.totalorder %s267, %s269
    %p273 = scmp.eq.s32.totalorder %s18, 0
    %p274 = por %p272, %p273
    %p275 = scmp.ne.s32.totalorder %s267, %s269
    %p276 = scmp.eq.s32.totalorder %s23, 1
    %p277 = por %p275, %p276
    %p278 = scmp.ne.s32.totalorder %s269, %s270
    %p279 = scmp.eq.s32.totalorder %s23, 0
    %p280 = por %p278, %p279
    %p281 = scmp.ne.s32.totalorder %s269, %s270
    %p282 = scmp.eq.s32.totalorder %s24, 1
    %p283 = por %p281, %p282
    %p285 = scmp.ne.s32.totalorder %s270, %s284
    %p286 = scmp.eq.s32.totalorder %s24, 0
    %p287 = por %p285, %p286
    %s288 = ssub.s32 %s18, %s25
    %p289 = scmp.eq.s32.totalorder %s288, 0
    %s291 = sadd.s32 %s290, 1
    %s292 = scalar_select %p289, %s290, %s291
    %p295 = pneg %p289
    %p296 = scmp.eq.s32.totalorder %s18, 1
    %p297 = por %p295, %p296
    %p298 = scmp.ne.s32.totalorder %s290, %s293
    %p299 = scmp.eq.s32.totalorder %s18, 0
    %p300 = por %p298, %p299
    %p301 = scmp.ne.s32.totalorder %s290, %s293
    %p302 = scmp.eq.s32.totalorder %s23, 1
    %p303 = por %p301, %p302
    %p304 = scmp.ne.s32.totalorder %s293, %s294
    %p305 = scmp.eq.s32.totalorder %s23, 0
    %p306 = por %p304, %p305
    %p307 = scmp.ne.s32.totalorder %s293, %s294
    %p308 = scmp.eq.s32.totalorder %s24, 1
    %p309 = por %p307, %p308
    %p311 = scmp.ne.s32.totalorder %s294, %s310
    %p312 = scmp.eq.s32.totalorder %s24, 0
    %p313 = por %p311, %p312
    %p314 = scmp.le.s32.totalorder 1, %s18
    %p315 = scmp.lt.s32.totalorder %s18, 3
    %p316 = pnand %p314, %p315
    %p317 = pneg %p316
    // Predicated region
    $region9: #{transformer_fwd.10} parent=5 // pred_check
      _
    $region10: #{transformer_fwd.10} parent=5 // pred_check_branch
      %319 = sbr.rel (%p316) target = $region12
    $region11: #{transformer_fwd.10} parent=5 // pred_region
      %s320 = ssub.s32 %s18, 1
      // Predicated region
      $region13: #{transformer_fwd.10} parent=11 // pred_check
        %p321 = pneg %p91
      $region14: #{transformer_fwd.10} parent=11 // pred_check_branch
        %323 = sbr.rel (%p321) target = $region16
      $region15: #{transformer_fwd.10} parent=11 // pred_region
        _
      $region16: #{transformer_fwd.10} parent=11 // pred_fallthru
        _
      // Predicated region
      $region17: #{transformer_fwd.10} parent=11 // pred_check
        %p324 = pneg %p112
      $region18: #{transformer_fwd.10} parent=11 // pred_check_branch
        %326 = sbr.rel (%p324) target = $region20
      $region19: #{transformer_fwd.10} parent=11 // pred_region
        _
      $region20: #{transformer_fwd.10} parent=11 // pred_fallthru
        _
      // Predicated region
      $region21: #{transformer_fwd.10} parent=11 // pred_check
        %p327 = pneg %p133
      $region22: #{transformer_fwd.10} parent=11 // pred_check_branch
        %329 = sbr.rel (%p327) target = $region24
      $region23: #{transformer_fwd.10} parent=11 // pred_region
        _
      $region24: #{transformer_fwd.10} parent=11 // pred_fallthru
        _
      // Predicated region
      $region25: #{transformer_fwd.10} parent=11 // pred_check
        %p330 = pneg %p154
      $region26: #{transformer_fwd.10} parent=11 // pred_check_branch
        %332 = sbr.rel (%p330) target = $region28
      $region27: #{transformer_fwd.10} parent=11 // pred_region
        _
      $region28: #{transformer_fwd.10} parent=11 // pred_fallthru
        _
      // Predicated region
      $region29: #{transformer_fwd.10} parent=11 // pred_check
        %p333 = pneg %p175
      $region30: #{transformer_fwd.10} parent=11 // pred_check_branch
        %335 = sbr.rel (%p333) target = $region32
      $region31: #{transformer_fwd.10} parent=11 // pred_region
        _
      $region32: #{transformer_fwd.10} parent=11 // pred_fallthru
        _
      // Predicated region
      $region33: #{transformer_fwd.10} parent=11 // pred_check
        %p336 = pneg %p196
      $region34: #{transformer_fwd.10} parent=11 // pred_check_branch
        %338 = sbr.rel (%p336) target = $region36
      $region35: #{transformer_fwd.10} parent=11 // pred_region
        _
      $region36: #{transformer_fwd.10} parent=11 // pred_fallthru
        _
      // Predicated region
      $region37: #{transformer_fwd.10} parent=11 // pred_check
        %p339 = pneg %p217
      $region38: #{transformer_fwd.10} parent=11 // pred_check_branch
        %341 = sbr.rel (%p339) target = $region40
      $region39: #{transformer_fwd.10} parent=11 // pred_region
        _
      $region40: #{transformer_fwd.10} parent=11 // pred_fallthru
        _
      // Predicated region
      $region41: #{transformer_fwd.10} parent=11 // pred_check
        %p342 = pneg %p238
      $region42: #{transformer_fwd.10} parent=11 // pred_check_branch
        %344 = sbr.rel (%p342) target = $region44
      $region43: #{transformer_fwd.10} parent=11 // pred_region
        _
      $region44: #{transformer_fwd.10} parent=11 // pred_fallthru
        _
      // Predicated region
      $region45: #{transformer_fwd.10} parent=11 // pred_check
        %p345 = pneg %p259
      $region46: #{transformer_fwd.10} parent=11 // pred_check_branch
        %347 = sbr.rel (%p345) target = $region48
      $region47: #{transformer_fwd.10} parent=11 // pred_region
        _
      $region48: #{transformer_fwd.10} parent=11 // pred_fallthru
        _
      // Predicated region
      $region49: #{transformer_fwd.10} parent=11 // pred_check
        %p348 = pneg %p280
      $region50: #{transformer_fwd.10} parent=11 // pred_check_branch
        %350 = sbr.rel (%p348) target = $region52
      $region51: #{transformer_fwd.10} parent=11 // pred_region
        _
      $region52: #{transformer_fwd.10} parent=11 // pred_fallthru
        _
    $region12: #{transformer_fwd.10} parent=5 // pred_fallthru
      _
    %p351 = scmp.lt.s32.totalorder %s18, 2
    // Predicated region
    $region53: #{transformer_fwd.10} parent=5 // pred_check
      %p352 = pneg %p351
    $region54: #{transformer_fwd.10} parent=5 // pred_check_branch
      %354 = sbr.rel (%p352) target = $region56
    $region55: #{transformer_fwd.10} parent=5 // pred_region
      // Predicated region
      $region57: #{transformer_fwd.10} parent=55 // pred_check
        %p355 = pneg %p38
      $region58: #{transformer_fwd.10} parent=55 // pred_check_branch
        %357 = sbr.rel (%p355) target = $region60
      $region59: #{transformer_fwd.10} parent=55 // pred_region
        %p358 = scmp.lt.s32.totalorder %s18, 1
        %s359 = scalar_select %p358, %s18, 1
        %s360 = smul.addr %s359, 8
        %s361 = scalar_lea.vmem %s0, %s360
      $region60: #{transformer_fwd.10} parent=55 // pred_fallthru
        _
      // Predicated region
      $region61: #{transformer_fwd.10} parent=55 // pred_check
        %p362 = pneg %p64
      $region62: #{transformer_fwd.10} parent=55 // pred_check_branch
        %364 = sbr.rel (%p362) target = $region64
      $region63: #{transformer_fwd.10} parent=55 // pred_region
        %p365 = scmp.lt.s32.totalorder %s18, 1
        %s366 = scalar_select %p365, %s18, 1
        %s367 = smul.addr %s366, 8
        %s368 = scalar_lea.vmem %s1, %s367
      $region64: #{transformer_fwd.10} parent=55 // pred_fallthru
        _
    $region56: #{transformer_fwd.10} parent=5 // pred_fallthru
      _
    %p369 = scmp.le.s32.totalorder 1, %s18
    %p370 = scmp.lt.s32.totalorder %s18, 3
    %p371 = pnand %p369, %p370
    %p372 = pneg %p371
    // Predicated region
    $region65: #{transformer_fwd.10} parent=5 // pred_check
      _
    $region66: #{transformer_fwd.10} parent=5 // pred_check_branch
      %374 = sbr.rel (%p371) target = $region68
    $region67: #{transformer_fwd.10} parent=5 // pred_region
      %s375 = ssub.s32 %s18, 1
      %p376 = scmp.lt.s32.totalorder %s23, 1
      %s377 = scalar_select %p376, %s23, 1
      %s378 = smul.addr %s377, 8
      %s379 = scalar_lea.vmem %s0, %s378
      %p380 = pneg %p44
      %p381 = pneg %p41
      %p382 = scmp.lt.s32.totalorder %s23, 1
      %s383 = scalar_select %p382, %s23, 1
      %s384 = smul.addr %s383, 8
      %s385 = scalar_lea.vmem %s1, %s384
      %p386 = pneg %p70
      %p387 = pneg %p67
      %p388 = pneg %p91
      %p389 = pneg %p88
      %p390 = pneg %p112
      %p391 = pneg %p109
      %p392 = pneg %p133
      %p393 = pneg %p130
      %p394 = pneg %p154
      %p395 = pneg %p151
      %p396 = pneg %p175
      %p397 = pneg %p172
      %p398 = pneg %p196
      %p399 = pneg %p193
      %p400 = pneg %p217
      %p401 = pneg %p214
      %p402 = pneg %p238
      %p403 = pneg %p235
      %p404 = pneg %p259
      %p405 = pneg %p256
      %p406 = pneg %p280
      %p407 = pneg %p277
      %p408 = pneg %p306
      %p409 = pneg %p303
      %p410 = scmp.lt.s32.totalorder %s23, 1
      %s411 = scalar_select %p410, %s23, 1
      %s412 = smul.addr %s411, 8
      %s413 = scalar_lea.vmem %s12, %s412
      %p414 = scmp.lt.s32.totalorder %s23, 1
      %s415 = scalar_select %p414, %s23, 1
      %s416 = smul.addr %s415, 8
      %s417 = scalar_lea.vmem %s0, %s416
      %p418 = scmp.lt.s32.totalorder %s23, 1
      %s419 = scalar_select %p418, %s23, 1
      %s420 = smul.addr %s419, 8
      %s421 = scalar_lea.vmem %s1, %s420
      %p422 = scmp.lt.s32.totalorder %s23, 1
      %s423 = scalar_select %p422, %s23, 1
      %s424 = smul.addr %s423, 8
      %s425 = scalar_lea.vmem %s12, %s424
      %v426 = vld [vmem:[%s417] sm:$0xff]
      %v427 = vld [vmem:[%s421] sm:$0xff]
      %v428 = vld [vmem:[%s2] sm:$0xff]
      %v429 = vld [vmem:[%s2 + $0x8] sm:$0xff]
      %v430 = vld [vmem:[%s2 + $0x10] sm:$0xff]
      %v431 = vld [vmem:[%s2 + $0x18] sm:$0xff]
      %v432 = vld [vmem:[%s3] sm:$0x1]
      %v434 = vlaneseq
      %v435 = vshrl.u32 %v434, 7
      %v436 = vsub.s32 0, %v435
      %v437 = vrot.slane %v432, %v436
      %vm439 = vcmask 261120
      %v441 = vsel %vm439, %v426, 0
      %443 = vmatprep.subr.mxu0 0.0
      %444 = vmatpush1.msra.mxu0 %v428
      %445 = vmatprep.subr.mxu0 0.0
      %446 = vmatpush1.msra.mxu0 %v429
      %447 = vmatprep.subr.mxu0 0.0
      %448 = vmatpush1.msra.mxu0 %v430
      %449 = vmatprep.subr.mxu0 0.0
      %450 = vmatpush1.msra.mxu0 %v431
      %451 = vmatprep.subr.mxu0 0.0
      %452 = vmatpush1.msra.mxu0 0.0
      %453 = vmatprep.subr.mxu0 0.0
      %454 = vmatpush1.msra.mxu0 0.0
      %455 = vmatprep.subr.mxu0 0.0
      %456 = vmatpush1.msra.mxu0 0.0
      %457 = vmatprep.subr.mxu0 0.0
      %458 = vmatpush1.msra.mxu0 0.0
      %459 = vmatprep.subr.mxu0 0.0
      %460 = vmatpush1.msra.mxu0 0.0
      %461 = vmatprep.subr.mxu0 0.0
      %462 = vmatpush1.msra.mxu0 0.0
      %463 = vmatprep.subr.mxu0 0.0
      %464 = vmatpush1.msra.mxu0 0.0
      %465 = vmatprep.subr.mxu0 0.0
      %466 = vmatpush1.msra.mxu0 0.0
      %467 = vmatprep.subr.mxu0 0.0
      %468 = vmatpush1.msra.mxu0 0.0
      %469 = vmatprep.subr.mxu0 0.0
      %470 = vmatpush1.msra.mxu0 0.0
      %471 = vmatprep.subr.mxu0 0.0
      %472 = vmatpush1.msra.mxu0 0.0
      %473 = vmatprep.subr.mxu0 0.0
      %474 = vmatpush1.msra.mxu0 0.0
      %475 = vmatprep.subr.mxu0 0.0
      %476 = vmatpush1.msra.mxu0 0.0
      %477 = vmatprep.subr.mxu0 0.0
      %478 = vmatpush1.msra.mxu0 0.0
      %479 = vmatprep.subr.mxu0 0.0
      %480 = vmatpush1.msra.mxu0 0.0
      %481 = vmatprep.subr.mxu0 0.0
      %482 = vmatpush1.msra.mxu0 0.0
      %483 = vmatprep.subr.mxu0 0.0
      %484 = vmatpush1.msra.mxu0 0.0
      %485 = vmatprep.subr.mxu0 0.0
      %486 = vmatpush1.msra.mxu0 0.0
      %487 = vmatprep.subr.mxu0 0.0
      %488 = vmatpush1.msra.mxu0 0.0
      %489 = vmatprep.subr.mxu0 0.0
      %490 = vmatpush1.msra.mxu0 0.0
      %491 = vmatprep.subr.mxu0 0.0
      %492 = vmatpush1.msra.mxu0 0.0
      %493 = vmatprep.subr.mxu0 0.0
      %494 = vmatpush1.msra.mxu0 0.0
      %495 = vmatprep.subr.mxu0 0.0
      %496 = vmatpush1.msra.mxu0 0.0
      %497 = vmatprep.subr.mxu0 0.0
      %498 = vmatpush1.msra.mxu0 0.0
      %499 = vmatprep.subr.mxu0 0.0
      %500 = vmatpush1.msra.mxu0 0.0
      %501 = vmatprep.subr.mxu0 0.0
      %502 = vmatpush1.msra.mxu0 0.0
      %503 = vmatprep.subr.mxu0 0.0
      %504 = vmatpush1.msra.mxu0 0.0
      %505 = vmatprep.subr.mxu0 0.0
      %506 = vmatpush1.msra.mxu0 0.0
      %507 = vmatprep.mubr.f32.mxu0 0.0
      %508 = vmatmul.mubr.f32.gmra.mrb[0].mxu0 %v441
      %v509 = vpop.f32.mrb[0].mxu0
      %v510 = vadd.f32 %v437, %v509
      %v511 = vpop.f32.mrb[0].mxu0
      %512 = vdwg.mxu0
      %v513 = vld [vmem:[%s4] sm:$0xff]
      %v514 = vld [vmem:[%s4 + $0x8] sm:$0xff]
      %v515 = vld [vmem:[%s4 + $0x10] sm:$0xff]
      %v516 = vld [vmem:[%s4 + $0x18] sm:$0xff]
      %v517 = vld [vmem:[%s5] sm:$0x1]
      %v519 = vlaneseq
      %v520 = vshrl.u32 %v519, 7
      %v521 = vsub.s32 0, %v520
      %v522 = vrot.slane %v517, %v521
      %v525 = vsel %vm439, %v427, 0
      %527 = vmatprep.subr.mxu0 0.0
      %528 = vmatpush1.msra.mxu0 %v513
      %529 = vmatprep.subr.mxu0 0.0
      %530 = vmatpush1.msra.mxu0 %v514
      %531 = vmatprep.subr.mxu0 0.0
      %532 = vmatpush1.msra.mxu0 %v515
      %533 = vmatprep.subr.mxu0 0.0
      %534 = vmatpush1.msra.mxu0 %v516
      %535 = vmatprep.subr.mxu0 0.0
      %536 = vmatpush1.msra.mxu0 0.0
      %537 = vmatprep.subr.mxu0 0.0
      %538 = vmatpush1.msra.mxu0 0.0
      %539 = vmatprep.subr.mxu0 0.0
      %540 = vmatpush1.msra.mxu0 0.0
      %541 = vmatprep.subr.mxu0 0.0
      %542 = vmatpush1.msra.mxu0 0.0
      %543 = vmatprep.subr.mxu0 0.0
      %544 = vmatpush1.msra.mxu0 0.0
      %545 = vmatprep.subr.mxu0 0.0
      %546 = vmatpush1.msra.mxu0 0.0
      %547 = vmatprep.subr.mxu0 0.0
      %548 = vmatpush1.msra.mxu0 0.0
      %549 = vmatprep.subr.mxu0 0.0
      %550 = vmatpush1.msra.mxu0 0.0
      %551 = vmatprep.subr.mxu0 0.0
      %552 = vmatpush1.msra.mxu0 0.0
      %553 = vmatprep.subr.mxu0 0.0
      %554 = vmatpush1.msra.mxu0 0.0
      %555 = vmatprep.subr.mxu0 0.0
      %556 = vmatpush1.msra.mxu0 0.0
      %557 = vmatprep.subr.mxu0 0.0
      %558 = vmatpush1.msra.mxu0 0.0
      %559 = vmatprep.subr.mxu0 0.0
      %560 = vmatpush1.msra.mxu0 0.0
      %561 = vmatprep.subr.mxu0 0.0
      %562 = vmatpush1.msra.mxu0 0.0
      %563 = vmatprep.subr.mxu0 0.0
      %564 = vmatpush1.msra.mxu0 0.0
      %565 = vmatprep.subr.mxu0 0.0
      %566 = vmatpush1.msra.mxu0 0.0
      %567 = vmatprep.subr.mxu0 0.0
      %568 = vmatpush1.msra.mxu0 0.0
      %569 = vmatprep.subr.mxu0 0.0
      %570 = vmatpush1.msra.mxu0 0.0
      %571 = vmatprep.subr.mxu0 0.0
      %572 = vmatpush1.msra.mxu0 0.0
      %573 = vmatprep.subr.mxu0 0.0
      %574 = vmatpush1.msra.mxu0 0.0
      %575 = vmatprep.subr.mxu0 0.0
      %576 = vmatpush1.msra.mxu0 0.0
      %577 = vmatprep.subr.mxu0 0.0
      %578 = vmatpush1.msra.mxu0 0.0
      %579 = vmatprep.subr.mxu0 0.0
      %580 = vmatpush1.msra.mxu0 0.0
      %581 = vmatprep.subr.mxu0 0.0
      %582 = vmatpush1.msra.mxu0 0.0
      %583 = vmatprep.subr.mxu0 0.0
      %584 = vmatpush1.msra.mxu0 0.0
      %585 = vmatprep.subr.mxu0 0.0
      %586 = vmatpush1.msra.mxu0 0.0
      %587 = vmatprep.subr.mxu0 0.0
      %588 = vmatpush1.msra.mxu0 0.0
      %589 = vmatprep.subr.mxu0 0.0
      %590 = vmatpush1.msra.mxu0 0.0
      %591 = vmatprep.mubr.f32.mxu0 0.0
      %592 = vmatmul.mubr.f32.gmra.mrb[0].mxu0 %v525
      %v593 = vpop.f32.mrb[0].mxu0
      %v594 = vadd.f32 %v522, %v593
      %v595 = vpop.f32.mrb[0].mxu0
      %596 = vdwg.mxu0
      %v597 = vld [vmem:[%s6] sm:$0xff]
      %v598 = vld [vmem:[%s6 + $0x8] sm:$0xff]
      %v599 = vld [vmem:[%s6 + $0x10] sm:$0xff]
      %v600 = vld [vmem:[%s6 + $0x18] sm:$0xff]
      %v601 = vld [vmem:[%s7] sm:$0x1]
      %v603 = vlaneseq
      %v604 = vshrl.u32 %v603, 7
      %v605 = vsub.s32 0, %v604
      %v606 = vrot.slane %v601, %v605
      %608 = vmatprep.subr.mxu0 0.0
      %609 = vmatpush1.msra.mxu0 %v597
      %610 = vmatprep.subr.mxu0 0.0
      %611 = vmatpush1.msra.mxu0 %v598
      %612 = vmatprep.subr.mxu0 0.0
      %613 = vmatpush1.msra.mxu0 %v599
      %614 = vmatprep.subr.mxu0 0.0
      %615 = vmatpush1.msra.mxu0 %v600
      %616 = vmatprep.subr.mxu0 0.0
      %617 = vmatpush1.msra.mxu0 0.0
      %618 = vmatprep.subr.mxu0 0.0
      %619 = vmatpush1.msra.mxu0 0.0
      %620 = vmatprep.subr.mxu0 0.0
      %621 = vmatpush1.msra.mxu0 0.0
      %622 = vmatprep.subr.mxu0 0.0
      %623 = vmatpush1.msra.mxu0 0.0
      %624 = vmatprep.subr.mxu0 0.0
      %625 = vmatpush1.msra.mxu0 0.0
      %626 = vmatprep.subr.mxu0 0.0
      %627 = vmatpush1.msra.mxu0 0.0
      %628 = vmatprep.subr.mxu0 0.0
      %629 = vmatpush1.msra.mxu0 0.0
      %630 = vmatprep.subr.mxu0 0.0
      %631 = vmatpush1.msra.mxu0 0.0
      %632 = vmatprep.subr.mxu0 0.0
      %633 = vmatpush1.msra.mxu0 0.0
      %634 = vmatprep.subr.mxu0 0.0
      %635 = vmatpush1.msra.mxu0 0.0
      %636 = vmatprep.subr.mxu0 0.0
      %637 = vmatpush1.msra.mxu0 0.0
      %638 = vmatprep.subr.mxu0 0.0
      %639 = vmatpush1.msra.mxu0 0.0
      %640 = vmatprep.subr.mxu0 0.0
      %641 = vmatpush1.msra.mxu0 0.0
      %642 = vmatprep.subr.mxu0 0.0
      %643 = vmatpush1.msra.mxu0 0.0
      %644 = vmatprep.subr.mxu0 0.0
      %645 = vmatpush1.msra.mxu0 0.0
      %646 = vmatprep.subr.mxu0 0.0
      %647 = vmatpush1.msra.mxu0 0.0
      %648 = vmatprep.subr.mxu0 0.0
      %649 = vmatpush1.msra.mxu0 0.0
      %650 = vmatprep.subr.mxu0 0.0
      %651 = vmatpush1.msra.mxu0 0.0
      %652 = vmatprep.subr.mxu0 0.0
      %653 = vmatpush1.msra.mxu0 0.0
      %654 = vmatprep.subr.mxu0 0.0
      %655 = vmatpush1.msra.mxu0 0.0
      %656 = vmatprep.subr.mxu0 0.0
      %657 = vmatpush1.msra.mxu0 0.0
      %658 = vmatprep.subr.mxu0 0.0
      %659 = vmatpush1.msra.mxu0 0.0
      %660 = vmatprep.subr.mxu0 0.0
      %661 = vmatpush1.msra.mxu0 0.0
      %662 = vmatprep.subr.mxu0 0.0
      %663 = vmatpush1.msra.mxu0 0.0
      %664 = vmatprep.subr.mxu0 0.0
      %665 = vmatpush1.msra.mxu0 0.0
      %666 = vmatprep.subr.mxu0 0.0
      %667 = vmatpush1.msra.mxu0 0.0
      %668 = vmatprep.subr.mxu0 0.0
      %669 = vmatpush1.msra.mxu0 0.0
      %670 = vmatprep.subr.mxu0 0.0
      %671 = vmatpush1.msra.mxu0 0.0
      %672 = vmatprep.mubr.f32.mxu0 0.0
      %673 = vmatmul.mubr.f32.gmra.mrb[0].mxu0 %v525
      %v674 = vpop.f32.mrb[0].mxu0
      %v675 = vadd.f32 %v606, %v674
      %v676 = vpop.f32.mrb[0].mxu0
      %677 = vdwg.mxu0
      %v678 = vld [vmem:[%s8] sm:$0xff]
      %v679 = vld [vmem:[%s8 + $0x8] sm:$0xff]
      %v680 = vld [vmem:[%s8 + $0x10] sm:$0xff]
      %v681 = vld [vmem:[%s8 + $0x18] sm:$0xff]
      %vm682 = vcmask 64512
      %v684 = vsel %vm682, %v510, 0
      %v687 = vsel %vm682, %v594, 0
      %689 = vmatprep.subr.mxu0 0.0
      %690 = vmatpush1.xpose.msra.mxu0 %v687
      %691 = vmatprep.subr.mxu0 0.0
      %692 = vmatpush1.xpose.msra.mxu0 0.0
      %693 = vmatprep.subr.mxu0 0.0
      %694 = vmatpush1.xpose.msra.mxu0 0.0
      %695 = vmatprep.subr.mxu0 0.0
      %696 = vmatpush1.xpose.msra.mxu0 0.0
      %697 = vmatprep.subr.mxu0 0.0
      %698 = vmatpush1.xpose.msra.mxu0 0.0
      %699 = vmatprep.subr.mxu0 0.0
      %700 = vmatpush1.xpose.msra.mxu0 0.0
      %701 = vmatprep.subr.mxu0 0.0
      %702 = vmatpush1.xpose.msra.mxu0 0.0
      %703 = vmatprep.subr.mxu0 0.0
      %704 = vmatpush1.xpose.msra.mxu0 0.0
      %705 = vmatprep.subr.mxu0 0.0
      %706 = vmatpush1.xpose.msra.mxu0 0.0
      %707 = vmatprep.subr.mxu0 0.0
      %708 = vmatpush1.xpose.msra.mxu0 0.0
      %709 = vmatprep.subr.mxu0 0.0
      %710 = vmatpush1.xpose.msra.mxu0 0.0
      %711 = vmatprep.subr.mxu0 0.0
      %712 = vmatpush1.xpose.msra.mxu0 0.0
      %713 = vmatprep.subr.mxu0 0.0
      %714 = vmatpush1.xpose.msra.mxu0 0.0
      %715 = vmatprep.subr.mxu0 0.0
      %716 = vmatpush1.xpose.msra.mxu0 0.0
      %717 = vmatprep.subr.mxu0 0.0
      %718 = vmatpush1.xpose.msra.mxu0 0.0
      %719 = vmatprep.subr.mxu0 0.0
      %720 = vmatpush1.xpose.msra.mxu0 0.0
      %721 = vmatprep.subr.mxu0 0.0
      %722 = vmatpush1.xpose.msra.mxu0 0.0
      %723 = vmatprep.subr.mxu0 0.0
      %724 = vmatpush1.xpose.msra.mxu0 0.0
      %725 = vmatprep.subr.mxu0 0.0
      %726 = vmatpush1.xpose.msra.mxu0 0.0
      %727 = vmatprep.subr.mxu0 0.0
      %728 = vmatpush1.xpose.msra.mxu0 0.0
      %729 = vmatprep.subr.mxu0 0.0
      %730 = vmatpush1.xpose.msra.mxu0 0.0
      %731 = vmatprep.subr.mxu0 0.0
      %732 = vmatpush1.xpose.msra.mxu0 0.0
      %733 = vmatprep.subr.mxu0 0.0
      %734 = vmatpush1.xpose.msra.mxu0 0.0
      %735 = vmatprep.subr.mxu0 0.0
      %736 = vmatpush1.xpose.msra.mxu0 0.0
      %737 = vmatprep.subr.mxu0 0.0
      %738 = vmatpush1.xpose.msra.mxu0 0.0
      %739 = vmatprep.subr.mxu0 0.0
      %740 = vmatpush1.xpose.msra.mxu0 0.0
      %741 = vmatprep.subr.mxu0 0.0
      %742 = vmatpush1.xpose.msra.mxu0 0.0
      %743 = vmatprep.subr.mxu0 0.0
      %744 = vmatpush1.xpose.msra.mxu0 0.0
      %745 = vmatprep.subr.mxu0 0.0
      %746 = vmatpush1.xpose.msra.mxu0 0.0
      %747 = vmatprep.subr.mxu0 0.0
      %748 = vmatpush1.xpose.msra.mxu0 0.0
      %749 = vmatprep.subr.mxu0 0.0
      %750 = vmatpush1.xpose.msra.mxu0 0.0
      %751 = vmatprep.subr.mxu0 0.0
      %752 = vmatpush1.xpose.msra.mxu0 0.0
      %753 = vmatprep.mubr.f32.mxu0 0.0
      %754 = vmatmul.mubr.f32.gmra.mrb[0].mxu0 %v684
      %v755 = vpop.f32.mrb[0].mxu0
      %v756 = vadd.f32 0.0, %v755
      %v757 = vpop.f32.mrb[0].mxu0
      %758 = vdwg.mxu0
      %v759 = vmul.f32 %v756, 0.125
      %v760 = vsel %vm682, %v759, -inf
      %761 = vmax.xlane.f32.xlu0 %v760
      %v762 = vpop.xlane.xlu0 %761
      %v763 = vsub.f32 %v759, %v762
      %v764 = vmul.f32 %v763, 1.442695
      %v765 = vpow.pop %v764
      %v766 = vsel %vm682, %v765, 0.0
      %767 = vadd.xlane.f32.xlu0 %v766
      %v768 = vpop.xlane.xlu0 %767
      %v769 = vrcp.pop %v768
      %v770 = vmul.f32 %v765, %v769
      %v772 = vsel %vm682, %v770, 0
      %774 = vmatprep.subr.mxu0 0.0
      %775 = vmatpush1.msra.mxu0 %v675
      %776 = vmatprep.subr.mxu0 0.0
      %777 = vmatpush1.msra.mxu0 0.0
      %778 = vmatprep.subr.mxu0 0.0
      %779 = vmatpush1.msra.mxu0 0.0
      %780 = vmatprep.subr.mxu0 0.0
      %781 = vmatpush1.msra.mxu0 0.0
      %782 = vmatprep.subr.mxu0 0.0
      %783 = vmatpush1.msra.mxu0 0.0
      %784 = vmatprep.subr.mxu0 0.0
      %785 = vmatpush1.msra.mxu0 0.0
      %786 = vmatprep.subr.mxu0 0.0
      %787 = vmatpush1.msra.mxu0 0.0
      %788 = vmatprep.subr.mxu0 0.0
      %789 = vmatpush1.msra.mxu0 0.0
      %790 = vmatprep.subr.mxu0 0.0
      %791 = vmatpush1.msra.mxu0 0.0
      %792 = vmatprep.subr.mxu0 0.0
      %793 = vmatpush1.msra.mxu0 0.0
      %794 = vmatprep.subr.mxu0 0.0
      %795 = vmatpush1.msra.mxu0 0.0
      %796 = vmatprep.subr.mxu0 0.0
      %797 = vmatpush1.msra.mxu0 0.0
      %798 = vmatprep.subr.mxu0 0.0
      %799 = vmatpush1.msra.mxu0 0.0
      %800 = vmatprep.subr.mxu0 0.0
      %801 = vmatpush1.msra.mxu0 0.0
      %802 = vmatprep.subr.mxu0 0.0
      %803 = vmatpush1.msra.mxu0 0.0
      %804 = vmatprep.subr.mxu0 0.0
      %805 = vmatpush1.msra.mxu0 0.0
      %806 = vmatprep.subr.mxu0 0.0
      %807 = vmatpush1.msra.mxu0 0.0
      %808 = vmatprep.subr.mxu0 0.0
      %809 = vmatpush1.msra.mxu0 0.0
      %810 = vmatprep.subr.mxu0 0.0
      %811 = vmatpush1.msra.mxu0 0.0
      %812 = vmatprep.subr.mxu0 0.0
      %813 = vmatpush1.msra.mxu0 0.0
      %814 = vmatprep.subr.mxu0 0.0
      %815 = vmatpush1.msra.mxu0 0.0
      %816 = vmatprep.subr.mxu0 0.0
      %817 = vmatpush1.msra.mxu0 0.0
      %818 = vmatprep.subr.mxu0 0.0
      %819 = vmatpush1.msra.mxu0 0.0
      %820 = vmatprep.subr.mxu0 0.0
      %821 = vmatpush1.msra.mxu0 0.0
      %822 = vmatprep.subr.mxu0 0.0
      %823 = vmatpush1.msra.mxu0 0.0
      %824 = vmatprep.subr.mxu0 0.0
      %825 = vmatpush1.msra.mxu0 0.0
      %826 = vmatprep.subr.mxu0 0.0
      %827 = vmatpush1.msra.mxu0 0.0
      %828 = vmatprep.subr.mxu0 0.0
      %829 = vmatpush1.msra.mxu0 0.0
      %830 = vmatprep.subr.mxu0 0.0
      %831 = vmatpush1.msra.mxu0 0.0
      %832 = vmatprep.subr.mxu0 0.0
      %833 = vmatpush1.msra.mxu0 0.0
      %834 = vmatprep.subr.mxu0 0.0
      %835 = vmatpush1.msra.mxu0 0.0
      %836 = vmatprep.subr.mxu0 0.0
      %837 = vmatpush1.msra.mxu0 0.0
      %838 = vmatprep.mubr.f32.mxu0 0.0
      %839 = vmatmul.mubr.f32.gmra.mrb[0].mxu0 %v772
      %v840 = vpop.f32.mrb[0].mxu0
      %v841 = vadd.f32 0.0, %v840
      %v842 = vpop.f32.mrb[0].mxu0
      %843 = vdwg.mxu0
      %844 = vrot.lane.b32.xlu0 %v510, 120
      %v845 = vpop.permute.xlu0 %844
      %846 = vrot.lane.b32.xlu0 %v594, 120
      %v847 = vpop.permute.xlu0 %846
      %v848 = vsel %vm682, %v845, 0
      %v850 = vsel %vm682, %v847, 0
      %852 = vmatprep.subr.mxu0 0.0
      %853 = vmatpush1.xpose.msra.mxu0 %v850
      %854 = vmatprep.subr.mxu0 0.0
      %855 = vmatpush1.xpose.msra.mxu0 0.0
      %856 = vmatprep.subr.mxu0 0.0
      %857 = vmatpush1.xpose.msra.mxu0 0.0
      %858 = vmatprep.subr.mxu0 0.0
      %859 = vmatpush1.xpose.msra.mxu0 0.0
      %860 = vmatprep.subr.mxu0 0.0
      %861 = vmatpush1.xpose.msra.mxu0 0.0
      %862 = vmatprep.subr.mxu0 0.0
      %863 = vmatpush1.xpose.msra.mxu0 0.0
      %864 = vmatprep.subr.mxu0 0.0
      %865 = vmatpush1.xpose.msra.mxu0 0.0
      %866 = vmatprep.subr.mxu0 0.0
      %867 = vmatpush1.xpose.msra.mxu0 0.0
      %868 = vmatprep.subr.mxu0 0.0
      %869 = vmatpush1.xpose.msra.mxu0 0.0
      %870 = vmatprep.subr.mxu0 0.0
      %871 = vmatpush1.xpose.msra.mxu0 0.0
      %872 = vmatprep.subr.mxu0 0.0
      %873 = vmatpush1.xpose.msra.mxu0 0.0
      %874 = vmatprep.subr.mxu0 0.0
      %875 = vmatpush1.xpose.msra.mxu0 0.0
      %876 = vmatprep.subr.mxu0 0.0
      %877 = vmatpush1.xpose.msra.mxu0 0.0
      %878 = vmatprep.subr.mxu0 0.0
      %879 = vmatpush1.xpose.msra.mxu0 0.0
      %880 = vmatprep.subr.mxu0 0.0
      %881 = vmatpush1.xpose.msra.mxu0 0.0
      %882 = vmatprep.subr.mxu0 0.0
      %883 = vmatpush1.xpose.msra.mxu0 0.0
      %884 = vmatprep.subr.mxu0 0.0
      %885 = vmatpush1.xpose.msra.mxu0 0.0
      %886 = vmatprep.subr.mxu0 0.0
      %887 = vmatpush1.xpose.msra.mxu0 0.0
      %888 = vmatprep.subr.mxu0 0.0
      %889 = vmatpush1.xpose.msra.mxu0 0.0
      %890 = vmatprep.subr.mxu0 0.0
      %891 = vmatpush1.xpose.msra.mxu0 0.0
      %892 = vmatprep.subr.mxu0 0.0
      %893 = vmatpush1.xpose.msra.mxu0 0.0
      %894 = vmatprep.subr.mxu0 0.0
      %895 = vmatpush1.xpose.msra.mxu0 0.0
      %896 = vmatprep.subr.mxu0 0.0
      %897 = vmatpush1.xpose.msra.mxu0 0.0
      %898 = vmatprep.subr.mxu0 0.0
      %899 = vmatpush1.xpose.msra.mxu0 0.0
      %900 = vmatprep.subr.mxu0 0.0
      %901 = vmatpush1.xpose.msra.mxu0 0.0
      %902 = vmatprep.subr.mxu0 0.0
      %903 = vmatpush1.xpose.msra.mxu0 0.0
      %904 = vmatprep.subr.mxu0 0.0
      %905 = vmatpush1.xpose.msra.mxu0 0.0
      %906 = vmatprep.subr.mxu0 0.0
      %907 = vmatpush1.xpose.msra.mxu0 0.0
      %908 = vmatprep.subr.mxu0 0.0
      %909 = vmatpush1.xpose.msra.mxu0 0.0
      %910 = vmatprep.subr.mxu0 0.0
      %911 = vmatpush1.xpose.msra.mxu0 0.0
      %912 = vmatprep.subr.mxu0 0.0
      %913 = vmatpush1.xpose.msra.mxu0 0.0
      %914 = vmatprep.subr.mxu0 0.0
      %915 = vmatpush1.xpose.msra.mxu0 0.0
      %916 = vmatprep.mubr.f32.mxu0 0.0
      %917 = vmatmul.mubr.f32.gmra.mrb[0].mxu0 %v848
      %v918 = vpop.f32.mrb[0].mxu0
      %v919 = vadd.f32 0.0, %v918
      %v920 = vpop.f32.mrb[0].mxu0
      %921 = vdwg.mxu0
      %v922 = vmul.f32 %v919, 0.125
      %v923 = vsel %vm682, %v922, -inf
      %924 = vmax.xlane.f32.xlu0 %v923
      %v925 = vpop.xlane.xlu0 %924
      %v926 = vsub.f32 %v922, %v925
      %v927 = vmul.f32 %v926, 1.442695
      %v928 = vpow.pop %v927
      %v929 = vsel %vm682, %v928, 0.0
      %930 = vadd.xlane.f32.xlu0 %v929
      %v931 = vpop.xlane.xlu0 %930
      %v932 = vrcp.pop %v931
      %v933 = vmul.f32 %v928, %v932
      %935 = vrot.lane.b32.xlu0 %v675, 120
      %v936 = vpop.permute.xlu0 %935
      %v939 = vsel %vm682, %v933, 0
      %941 = vmatprep.subr.mxu0 0.0
      %942 = vmatpush1.msra.mxu0 %v936
      %943 = vmatprep.subr.mxu0 0.0
      %944 = vmatpush1.msra.mxu0 0.0
      %945 = vmatprep.subr.mxu0 0.0
      %946 = vmatpush1.msra.mxu0 0.0
      %947 = vmatprep.subr.mxu0 0.0
      %948 = vmatpush1.msra.mxu0 0.0
      %949 = vmatprep.subr.mxu0 0.0
      %950 = vmatpush1.msra.mxu0 0.0
      %951 = vmatprep.subr.mxu0 0.0
      %952 = vmatpush1.msra.mxu0 0.0
      %953 = vmatprep.subr.mxu0 0.0
      %954 = vmatpush1.msra.mxu0 0.0
      %955 = vmatprep.subr.mxu0 0.0
      %956 = vmatpush1.msra.mxu0 0.0
      %957 = vmatprep.subr.mxu0 0.0
      %958 = vmatpush1.msra.mxu0 0.0
      %959 = vmatprep.subr.mxu0 0.0
      %960 = vmatpush1.msra.mxu0 0.0
      %961 = vmatprep.subr.mxu0 0.0
      %962 = vmatpush1.msra.mxu0 0.0
      %963 = vmatprep.subr.mxu0 0.0
      %964 = vmatpush1.msra.mxu0 0.0
      %965 = vmatprep.subr.mxu0 0.0
      %966 = vmatpush1.msra.mxu0 0.0
      %967 = vmatprep.subr.mxu0 0.0
      %968 = vmatpush1.msra.mxu0 0.0
      %969 = vmatprep.subr.mxu0 0.0
      %970 = vmatpush1.msra.mxu0 0.0
      %971 = vmatprep.subr.mxu0 0.0
      %972 = vmatpush1.msra.mxu0 0.0
      %973 = vmatprep.subr.mxu0 0.0
      %974 = vmatpush1.msra.mxu0 0.0
      %975 = vmatprep.subr.mxu0 0.0
      %976 = vmatpush1.msra.mxu0 0.0
      %977 = vmatprep.subr.mxu0 0.0
      %978 = vmatpush1.msra.mxu0 0.0
      %979 = vmatprep.subr.mxu0 0.0
      %980 = vmatpush1.msra.mxu0 0.0
      %981 = vmatprep.subr.mxu0 0.0
      %982 = vmatpush1.msra.mxu0 0.0
      %983 = vmatprep.subr.mxu0 0.0
      %984 = vmatpush1.msra.mxu0 0.0
      %985 = vmatprep.subr.mxu0 0.0
      %986 = vmatpush1.msra.mxu0 0.0
      %987 = vmatprep.subr.mxu0 0.0
      %988 = vmatpush1.msra.mxu0 0.0
      %989 = vmatprep.subr.mxu0 0.0
      %990 = vmatpush1.msra.mxu0 0.0
      %991 = vmatprep.subr.mxu0 0.0
      %992 = vmatpush1.msra.mxu0 0.0
      %993 = vmatprep.subr.mxu0 0.0
      %994 = vmatpush1.msra.mxu0 0.0
      %995 = vmatprep.subr.mxu0 0.0
      %996 = vmatpush1.msra.mxu0 0.0
      %997 = vmatprep.subr.mxu0 0.0
      %998 = vmatpush1.msra.mxu0 0.0
      %999 = vmatprep.subr.mxu0 0.0
      %1000 = vmatpush1.msra.mxu0 0.0
      %1001 = vmatprep.subr.mxu0 0.0
      %1002 = vmatpush1.msra.mxu0 0.0
      %1003 = vmatprep.subr.mxu0 0.0
      %1004 = vmatpush1.msra.mxu0 0.0
      %1005 = vmatprep.mubr.f32.mxu0 0.0
      %1006 = vmatmul.mubr.f32.gmra.mrb[0].mxu0 %v939
      %v1007 = vpop.f32.mrb[0].mxu0
      %v1008 = vadd.f32 0.0, %v1007
      %v1009 = vpop.f32.mrb[0].mxu0
      %1010 = vdwg.mxu0
      %v1012 = vsel %vm682, %v1008, 0
      %1014 = vmatprep.subr.mxu0 0.0
      %1015 = vmatpush1.msra.mxu0 %v679
      %1016 = vmatprep.subr.mxu0 0.0
      %1017 = vmatpush1.msra.mxu0 0.0
      %1018 = vmatprep.subr.mxu0 0.0
      %1019 = vmatpush1.msra.mxu0 0.0
      %1020 = vmatprep.subr.mxu0 0.0
      %1021 = vmatpush1.msra.mxu0 0.0
      %1022 = vmatprep.subr.mxu0 0.0
      %1023 = vmatpush1.msra.mxu0 0.0
      %1024 = vmatprep.subr.mxu0 0.0
      %1025 = vmatpush1.msra.mxu0 0.0
      %1026 = vmatprep.subr.mxu0 0.0
      %1027 = vmatpush1.msra.mxu0 0.0
      %1028 = vmatprep.subr.mxu0 0.0
      %1029 = vmatpush1.msra.mxu0 0.0
      %1030 = vmatprep.subr.mxu0 0.0
      %1031 = vmatpush1.msra.mxu0 0.0
      %1032 = vmatprep.subr.mxu0 0.0
      %1033 = vmatpush1.msra.mxu0 0.0
      %1034 = vmatprep.subr.mxu0 0.0
      %1035 = vmatpush1.msra.mxu0 0.0
      %1036 = vmatprep.subr.mxu0 0.0
      %1037 = vmatpush1.msra.mxu0 0.0
      %1038 = vmatprep.subr.mxu0 0.0
      %1039 = vmatpush1.msra.mxu0 0.0
      %1040 = vmatprep.subr.mxu0 0.0
      %1041 = vmatpush1.msra.mxu0 0.0
      %1042 = vmatprep.subr.mxu0 0.0
      %1043 = vmatpush1.msra.mxu0 0.0
      %1044 = vmatprep.subr.mxu0 0.0
      %1045 = vmatpush1.msra.mxu0 0.0
      %1046 = vmatprep.subr.mxu0 0.0
      %1047 = vmatpush1.msra.mxu0 0.0
      %1048 = vmatprep.subr.mxu0 0.0
      %1049 = vmatpush1.msra.mxu0 0.0
      %1050 = vmatprep.subr.mxu0 0.0
      %1051 = vmatpush1.msra.mxu0 0.0
      %1052 = vmatprep.subr.mxu0 0.0
      %1053 = vmatpush1.msra.mxu0 0.0
      %1054 = vmatprep.subr.mxu0 0.0
      %1055 = vmatpush1.msra.mxu0 0.0
      %1056 = vmatprep.subr.mxu0 0.0
      %1057 = vmatpush1.msra.mxu0 0.0
      %1058 = vmatprep.subr.mxu0 0.0
      %1059 = vmatpush1.msra.mxu0 0.0
      %1060 = vmatprep.subr.mxu0 0.0
      %1061 = vmatpush1.msra.mxu0 0.0
      %1062 = vmatprep.subr.mxu0 0.0
      %1063 = vmatpush1.msra.mxu0 0.0
      %1064 = vmatprep.subr.mxu0 0.0
      %1065 = vmatpush1.msra.mxu0 0.0
      %1066 = vmatprep.subr.mxu0 0.0
      %1067 = vmatpush1.msra.mxu0 0.0
      %1068 = vmatprep.subr.mxu0 0.0
      %1069 = vmatpush1.msra.mxu0 0.0
      %1070 = vmatprep.subr.mxu0 0.0
      %1071 = vmatpush1.msra.mxu0 0.0
      %1072 = vmatprep.subr.mxu0 0.0
      %1073 = vmatpush1.msra.mxu0 0.0
      %1074 = vmatprep.subr.mxu0 0.0
      %1075 = vmatpush1.msra.mxu0 0.0
      %1076 = vmatprep.subr.mxu0 0.0
      %1077 = vmatpush1.msra.mxu0 0.0
      %1078 = vmatprep.mubr.f32.mxu0 0.0
      %1079 = vmatmul.mubr.f32.gmra.mrb[0].mxu0 %v1012
      %v1080 = vpop.f32.mrb[0].mxu0
      %v1081 = vadd.f32 0.0, %v1080
      %v1082 = vpop.f32.mrb[0].mxu0
      %1083 = vdwg.mxu0
      %v1085 = vsel %vm682, %v841, 0
      %1087 = vmatprep.subr.mxu0 0.0
      %1088 = vmatpush1.msra.mxu0 %v678
      %1089 = vmatprep.subr.mxu0 0.0
      %1090 = vmatpush1.msra.mxu0 0.0
      %1091 = vmatprep.subr.mxu0 0.0
      %1092 = vmatpush1.msra.mxu0 0.0
      %1093 = vmatprep.subr.mxu0 0.0
      %1094 = vmatpush1.msra.mxu0 0.0
      %1095 = vmatprep.subr.mxu0 0.0
      %1096 = vmatpush1.msra.mxu0 0.0
      %1097 = vmatprep.subr.mxu0 0.0
      %1098 = vmatpush1.msra.mxu0 0.0
      %1099 = vmatprep.subr.mxu0 0.0
      %1100 = vmatpush1.msra.mxu0 0.0
      %1101 = vmatprep.subr.mxu0 0.0
      %1102 = vmatpush1.msra.mxu0 0.0
      %1103 = vmatprep.subr.mxu0 0.0
      %1104 = vmatpush1.msra.mxu0 0.0
      %1105 = vmatprep.subr.mxu0 0.0
      %1106 = vmatpush1.msra.mxu0 0.0
      %1107 = vmatprep.subr.mxu0 0.0
      %1108 = vmatpush1.msra.mxu0 0.0
      %1109 = vmatprep.subr.mxu0 0.0
      %1110 = vmatpush1.msra.mxu0 0.0
      %1111 = vmatprep.subr.mxu0 0.0
      %1112 = vmatpush1.msra.mxu0 0.0
      %1113 = vmatprep.subr.mxu0 0.0
      %1114 = vmatpush1.msra.mxu0 0.0
      %1115 = vmatprep.subr.mxu0 0.0
      %1116 = vmatpush1.msra.mxu0 0.0
      %1117 = vmatprep.subr.mxu0 0.0
      %1118 = vmatpush1.msra.mxu0 0.0
      %1119 = vmatprep.subr.mxu0 0.0
      %1120 = vmatpush1.msra.mxu0 0.0
      %1121 = vmatprep.subr.mxu0 0.0
      %1122 = vmatpush1.msra.mxu0 0.0
      %1123 = vmatprep.subr.mxu0 0.0
      %1124 = vmatpush1.msra.mxu0 0.0
      %1125 = vmatprep.subr.mxu0 0.0
      %1126 = vmatpush1.msra.mxu0 0.0
      %1127 = vmatprep.subr.mxu0 0.0
      %1128 = vmatpush1.msra.mxu0 0.0
      %1129 = vmatprep.subr.mxu0 0.0
      %1130 = vmatpush1.msra.mxu0 0.0
      %1131 = vmatprep.subr.mxu0 0.0
      %1132 = vmatpush1.msra.mxu0 0.0
      %1133 = vmatprep.subr.mxu0 0.0
      %1134 = vmatpush1.msra.mxu0 0.0
      %1135 = vmatprep.subr.mxu0 0.0
      %1136 = vmatpush1.msra.mxu0 0.0
      %1137 = vmatprep.subr.mxu0 0.0
      %1138 = vmatpush1.msra.mxu0 0.0
      %1139 = vmatprep.subr.mxu0 0.0
      %1140 = vmatpush1.msra.mxu0 0.0
      %1141 = vmatprep.subr.mxu0 0.0
      %1142 = vmatpush1.msra.mxu0 0.0
      %1143 = vmatprep.subr.mxu0 0.0
      %1144 = vmatpush1.msra.mxu0 0.0
      %1145 = vmatprep.subr.mxu0 0.0
      %1146 = vmatpush1.msra.mxu0 0.0
      %1147 = vmatprep.subr.mxu0 0.0
      %1148 = vmatpush1.msra.mxu0 0.0
      %1149 = vmatprep.subr.mxu0 0.0
      %1150 = vmatpush1.msra.mxu0 0.0
      %1151 = vmatprep.mubr.f32.mxu0 0.0
      %1152 = vmatmul.mubr.f32.gmra.mrb[0].mxu0 %v1085
      %v1153 = vpop.f32.mrb[0].mxu0
      %v1154 = vadd.f32 %v1081, %v1153
      %v1155 = vpop.f32.mrb[0].mxu0
      %1156 = vdwg.mxu0
      %1157 = vrot.lane.b32.xlu0 %v510, 112
      %v1158 = vpop.permute.xlu0 %1157
      %1159 = vrot.lane.b32.xlu0 %v594, 112
      %v1160 = vpop.permute.xlu0 %1159
      %v1161 = vsel %vm682, %v1158, 0
      %v1163 = vsel %vm682, %v1160, 0
      %1165 = vmatprep.subr.mxu0 0.0
      %1166 = vmatpush1.xpose.msra.mxu0 %v1163
      %1167 = vmatprep.subr.mxu0 0.0
      %1168 = vmatpush1.xpose.msra.mxu0 0.0
      %1169 = vmatprep.subr.mxu0 0.0
      %1170 = vmatpush1.xpose.msra.mxu0 0.0
      %1171 = vmatprep.subr.mxu0 0.0
      %1172 = vmatpush1.xpose.msra.mxu0 0.0
      %1173 = vmatprep.subr.mxu0 0.0
      %1174 = vmatpush1.xpose.msra.mxu0 0.0
      %1175 = vmatprep.subr.mxu0 0.0
      %1176 = vmatpush1.xpose.msra.mxu0 0.0
      %1177 = vmatprep.subr.mxu0 0.0
      %1178 = vmatpush1.xpose.msra.mxu0 0.0
      %1179 = vmatprep.subr.mxu0 0.0
      %1180 = vmatpush1.xpose.msra.mxu0 0.0
      %1181 = vmatprep.subr.mxu0 0.0
      %1182 = vmatpush1.xpose.msra.mxu0 0.0
      %1183 = vmatprep.subr.mxu0 0.0
      %1184 = vmatpush1.xpose.msra.mxu0 0.0
      %1185 = vmatprep.subr.mxu0 0.0
      %1186 = vmatpush1.xpose.msra.mxu0 0.0
      %1187 = vmatprep.subr.mxu0 0.0
      %1188 = vmatpush1.xpose.msra.mxu0 0.0
      %1189 = vmatprep.subr.mxu0 0.0
      %1190 = vmatpush1.xpose.msra.mxu0 0.0
      %1191 = vmatprep.subr.mxu0 0.0
      %1192 = vmatpush1.xpose.msra.mxu0 0.0
      %1193 = vmatprep.subr.mxu0 0.0
      %1194 = vmatpush1.xpose.msra.mxu0 0.0
      %1195 = vmatprep.subr.mxu0 0.0
      %1196 = vmatpush1.xpose.msra.mxu0 0.0
      %1197 = vmatprep.subr.mxu0 0.0
      %1198 = vmatpush1.xpose.msra.mxu0 0.0
      %1199 = vmatprep.subr.mxu0 0.0
      %1200 = vmatpush1.xpose.msra.mxu0 0.0
      %1201 = vmatprep.subr.mxu0 0.0
      %1202 = vmatpush1.xpose.msra.mxu0 0.0
      %1203 = vmatprep.subr.mxu0 0.0
      %1204 = vmatpush1.xpose.msra.mxu0 0.0
      %1205 = vmatprep.subr.mxu0 0.0
      %1206 = vmatpush1.xpose.msra.mxu0 0.0
      %1207 = vmatprep.subr.mxu0 0.0
      %1208 = vmatpush1.xpose.msra.mxu0 0.0
      %1209 = vmatprep.subr.mxu0 0.0
      %1210 = vmatpush1.xpose.msra.mxu0 0.0
      %1211 = vmatprep.subr.mxu0 0.0
      %1212 = vmatpush1.xpose.msra.mxu0 0.0
      %1213 = vmatprep.subr.mxu0 0.0
      %1214 = vmatpush1.xpose.msra.mxu0 0.0
      %1215 = vmatprep.subr.mxu0 0.0
      %1216 = vmatpush1.xpose.msra.mxu0 0.0
      %1217 = vmatprep.subr.mxu0 0.0
      %1218 = vmatpush1.xpose.msra.mxu0 0.0
      %1219 = vmatprep.subr.mxu0 0.0
      %1220 = vmatpush1.xpose.msra.mxu0 0.0
      %1221 = vmatprep.subr.mxu0 0.0
      %1222 = vmatpush1.xpose.msra.mxu0 0.0
      %1223 = vmatprep.subr.mxu0 0.0
      %1224 = vmatpush1.xpose.msra.mxu0 0.0
      %1225 = vmatprep.subr.mxu0 0.0
      %1226 = vmatpush1.xpose.msra.mxu0 0.0
      %1227 = vmatprep.subr.mxu0 0.0
      %1228 = vmatpush1.xpose.msra.mxu0 0.0
      %1229 = vmatprep.mubr.f32.mxu0 0.0
      %1230 = vmatmul.mubr.f32.gmra.mrb[0].mxu0 %v1161
      %v1231 = vpop.f32.mrb[0].mxu0
      %v1232 = vadd.f32 0.0, %v1231
      %v1233 = vpop.f32.mrb[0].mxu0
      %1234 = vdwg.mxu0
      %v1235 = vmul.f32 %v1232, 0.125
      %v1236 = vsel %vm682, %v1235, -inf
      %1237 = vmax.xlane.f32.xlu0 %v1236
      %v1238 = vpop.xlane.xlu0 %1237
      %v1239 = vsub.f32 %v1235, %v1238
      %v1240 = vmul.f32 %v1239, 1.442695
      %v1241 = vpow.pop %v1240
      %v1242 = vsel %vm682, %v1241, 0.0
      %1243 = vadd.xlane.f32.xlu0 %v1242
      %v1244 = vpop.xlane.xlu0 %1243
      %v1245 = vrcp.pop %v1244
      %v1246 = vmul.f32 %v1241, %v1245
      %1247 = vrot.lane.b32.xlu0 %v675, 112
      %v1248 = vpop.permute.xlu0 %1247
      %v1251 = vsel %vm682, %v1246, 0
      %1253 = vmatprep.subr.mxu0 0.0
      %1254 = vmatpush1.msra.mxu0 %v1248
      %1255 = vmatprep.subr.mxu0 0.0
      %1256 = vmatpush1.msra.mxu0 0.0
      %1257 = vmatprep.subr.mxu0 0.0
      %1258 = vmatpush1.msra.mxu0 0.0
      %1259 = vmatprep.subr.mxu0 0.0
      %1260 = vmatpush1.msra.mxu0 0.0
      %1261 = vmatprep.subr.mxu0 0.0
      %1262 = vmatpush1.msra.mxu0 0.0
      %1263 = vmatprep.subr.mxu0 0.0
      %1264 = vmatpush1.msra.mxu0 0.0
      %1265 = vmatprep.subr.mxu0 0.0
      %1266 = vmatpush1.msra.mxu0 0.0
      %1267 = vmatprep.subr.mxu0 0.0
      %1268 = vmatpush1.msra.mxu0 0.0
      %1269 = vmatprep.subr.mxu0 0.0
      %1270 = vmatpush1.msra.mxu0 0.0
      %1271 = vmatprep.subr.mxu0 0.0
      %1272 = vmatpush1.msra.mxu0 0.0
      %1273 = vmatprep.subr.mxu0 0.0
      %1274 = vmatpush1.msra.mxu0 0.0
      %1275 = vmatprep.subr.mxu0 0.0
      %1276 = vmatpush1.msra.mxu0 0.0
      %1277 = vmatprep.subr.mxu0 0.0
      %1278 = vmatpush1.msra.mxu0 0.0
      %1279 = vmatprep.subr.mxu0 0.0
      %1280 = vmatpush1.msra.mxu0 0.0
      %1281 = vmatprep.subr.mxu0 0.0
      %1282 = vmatpush1.msra.mxu0 0.0
      %1283 = vmatprep.subr.mxu0 0.0
      %1284 = vmatpush1.msra.mxu0 0.0
      %1285 = vmatprep.subr.mxu0 0.0
      %1286 = vmatpush1.msra.mxu0 0.0
      %1287 = vmatprep.subr.mxu0 0.0
      %1288 = vmatpush1.msra.mxu0 0.0
      %1289 = vmatprep.subr.mxu0 0.0
      %1290 = vmatpush1.msra.mxu0 0.0
      %1291 = vmatprep.subr.mxu0 0.0
      %1292 = vmatpush1.msra.mxu0 0.0
      %1293 = vmatprep.subr.mxu0 0.0
      %1294 = vmatpush1.msra.mxu0 0.0
      %1295 = vmatprep.subr.mxu0 0.0
      %1296 = vmatpush1.msra.mxu0 0.0
      %1297 = vmatprep.subr.mxu0 0.0
      %1298 = vmatpush1.msra.mxu0 0.0
      %1299 = vmatprep.subr.mxu0 0.0
      %1300 = vmatpush1.msra.mxu0 0.0
      %1301 = vmatprep.subr.mxu0 0.0
      %1302 = vmatpush1.msra.mxu0 0.0
      %1303 = vmatprep.subr.mxu0 0.0
      %1304 = vmatpush1.msra.mxu0 0.0
      %1305 = vmatprep.subr.mxu0 0.0
      %1306 = vmatpush1.msra.mxu0 0.0
      %1307 = vmatprep.subr.mxu0 0.0
      %1308 = vmatpush1.msra.mxu0 0.0
      %1309 = vmatprep.subr.mxu0 0.0
      %1310 = vmatpush1.msra.mxu0 0.0
      %1311 = vmatprep.subr.mxu0 0.0
      %1312 = vmatpush1.msra.mxu0 0.0
      %1313 = vmatprep.subr.mxu0 0.0
      %1314 = vmatpush1.msra.mxu0 0.0
      %1315 = vmatprep.subr.mxu0 0.0
      %1316 = vmatpush1.msra.mxu0 0.0
      %1317 = vmatprep.mubr.f32.mxu0 0.0
      %1318 = vmatmul.mubr.f32.gmra.mrb[0].mxu0 %v1251
      %v1319 = vpop.f32.mrb[0].mxu0
      %v1320 = vadd.f32 0.0, %v1319
      %v1321 = vpop.f32.mrb[0].mxu0
      %1322 = vdwg.mxu0
      %v1324 = vsel %vm682, %v1320, 0
      %1326 = vmatprep.subr.mxu0 0.0
      %1327 = vmatpush1.msra.mxu0 %v680
      %1328 = vmatprep.subr.mxu0 0.0
      %1329 = vmatpush1.msra.mxu0 0.0
      %1330 = vmatprep.subr.mxu0 0.0
      %1331 = vmatpush1.msra.mxu0 0.0
      %1332 = vmatprep.subr.mxu0 0.0
      %1333 = vmatpush1.msra.mxu0 0.0
      %1334 = vmatprep.subr.mxu0 0.0
      %1335 = vmatpush1.msra.mxu0 0.0
      %1336 = vmatprep.subr.mxu0 0.0
      %1337 = vmatpush1.msra.mxu0 0.0
      %1338 = vmatprep.subr.mxu0 0.0
      %1339 = vmatpush1.msra.mxu0 0.0
      %1340 = vmatprep.subr.mxu0 0.0
      %1341 = vmatpush1.msra.mxu0 0.0
      %1342 = vmatprep.subr.mxu0 0.0
      %1343 = vmatpush1.msra.mxu0 0.0
      %1344 = vmatprep.subr.mxu0 0.0
      %1345 = vmatpush1.msra.mxu0 0.0
      %1346 = vmatprep.subr.mxu0 0.0
      %1347 = vmatpush1.msra.mxu0 0.0
      %1348 = vmatprep.subr.mxu0 0.0
      %1349 = vmatpush1.msra.mxu0 0.0
      %1350 = vmatprep.subr.mxu0 0.0
      %1351 = vmatpush1.msra.mxu0 0.0
      %1352 = vmatprep.subr.mxu0 0.0
      %1353 = vmatpush1.msra.mxu0 0.0
      %1354 = vmatprep.subr.mxu0 0.0
      %1355 = vmatpush1.msra.mxu0 0.0
      %1356 = vmatprep.subr.mxu0 0.0
      %1357 = vmatpush1.msra.mxu0 0.0
      %1358 = vmatprep.subr.mxu0 0.0
      %1359 = vmatpush1.msra.mxu0 0.0
      %1360 = vmatprep.subr.mxu0 0.0
      %1361 = vmatpush1.msra.mxu0 0.0
      %1362 = vmatprep.subr.mxu0 0.0
      %1363 = vmatpush1.msra.mxu0 0.0
      %1364 = vmatprep.subr.mxu0 0.0
      %1365 = vmatpush1.msra.mxu0 0.0
      %1366 = vmatprep.subr.mxu0 0.0
      %1367 = vmatpush1.msra.mxu0 0.0
      %1368 = vmatprep.subr.mxu0 0.0
      %1369 = vmatpush1.msra.mxu0 0.0
      %1370 = vmatprep.subr.mxu0 0.0
      %1371 = vmatpush1.msra.mxu0 0.0
      %1372 = vmatprep.subr.mxu0 0.0
      %1373 = vmatpush1.msra.mxu0 0.0
      %1374 = vmatprep.subr.mxu0 0.0
      %1375 = vmatpush1.msra.mxu0 0.0
      %1376 = vmatprep.subr.mxu0 0.0
      %1377 = vmatpush1.msra.mxu0 0.0
      %1378 = vmatprep.subr.mxu0 0.0
      %1379 = vmatpush1.msra.mxu0 0.0
      %1380 = vmatprep.subr.mxu0 0.0
      %1381 = vmatpush1.msra.mxu0 0.0
      %1382 = vmatprep.subr.mxu0 0.0
      %1383 = vmatpush1.msra.mxu0 0.0
      %1384 = vmatprep.subr.mxu0 0.0
      %1385 = vmatpush1.msra.mxu0 0.0
      %1386 = vmatprep.subr.mxu0 0.0
      %1387 = vmatpush1.msra.mxu0 0.0
      %1388 = vmatprep.subr.mxu0 0.0
      %1389 = vmatpush1.msra.mxu0 0.0
      %1390 = vmatprep.mubr.f32.mxu0 0.0
      %1391 = vmatmul.mubr.f32.gmra.mrb[0].mxu0 %v1324
      %v1392 = vpop.f32.mrb[0].mxu0
      %v1393 = vadd.f32 0.0, %v1392
      %v1394 = vpop.f32.mrb[0].mxu0
      %1395 = vdwg.mxu0
      %v1396 = vadd.f32 %v1154, %v1393
      %1397 = vrot.lane.b32.xlu0 %v510, 104
      %v1398 = vpop.permute.xlu0 %1397
      %1399 = vrot.lane.b32.xlu0 %v594, 104
      %v1400 = vpop.permute.xlu0 %1399
      %v1401 = vsel %vm682, %v1398, 0
      %v1403 = vsel %vm682, %v1400, 0
      %1405 = vmatprep.subr.mxu0 0.0
      %1406 = vmatpush1.xpose.msra.mxu0 %v1403
      %1407 = vmatprep.subr.mxu0 0.0
      %1408 = vmatpush1.xpose.msra.mxu0 0.0
      %1409 = vmatprep.subr.mxu0 0.0
      %1410 = vmatpush1.xpose.msra.mxu0 0.0
      %1411 = vmatprep.subr.mxu0 0.0
      %1412 = vmatpush1.xpose.msra.mxu0 0.0
      %1413 = vmatprep.subr.mxu0 0.0
      %1414 = vmatpush1.xpose.msra.mxu0 0.0
      %1415 = vmatprep.subr.mxu0 0.0
      %1416 = vmatpush1.xpose.msra.mxu0 0.0
      %1417 = vmatprep.subr.mxu0 0.0
      %1418 = vmatpush1.xpose.msra.mxu0 0.0
      %1419 = vmatprep.subr.mxu0 0.0
      %1420 = vmatpush1.xpose.msra.mxu0 0.0
      %1421 = vmatprep.subr.mxu0 0.0
      %1422 = vmatpush1.xpose.msra.mxu0 0.0
      %1423 = vmatprep.subr.mxu0 0.0
      %1424 = vmatpush1.xpose.msra.mxu0 0.0
      %1425 = vmatprep.subr.mxu0 0.0
      %1426 = vmatpush1.xpose.msra.mxu0 0.0
      %1427 = vmatprep.subr.mxu0 0.0
      %1428 = vmatpush1.xpose.msra.mxu0 0.0
      %1429 = vmatprep.subr.mxu0 0.0
      %1430 = vmatpush1.xpose.msra.mxu0 0.0
      %1431 = vmatprep.subr.mxu0 0.0
      %1432 = vmatpush1.xpose.msra.mxu0 0.0
      %1433 = vmatprep.subr.mxu0 0.0
      %1434 = vmatpush1.xpose.msra.mxu0 0.0
      %1435 = vmatprep.subr.mxu0 0.0
      %1436 = vmatpush1.xpose.msra.mxu0 0.0
      %1437 = vmatprep.subr.mxu0 0.0
      %1438 = vmatpush1.xpose.msra.mxu0 0.0
      %1439 = vmatprep.subr.mxu0 0.0
      %1440 = vmatpush1.xpose.msra.mxu0 0.0
      %1441 = vmatprep.subr.mxu0 0.0
      %1442 = vmatpush1.xpose.msra.mxu0 0.0
      %1443 = vmatprep.subr.mxu0 0.0
      %1444 = vmatpush1.xpose.msra.mxu0 0.0
      %1445 = vmatprep.subr.mxu0 0.0
      %1446 = vmatpush1.xpose.msra.mxu0 0.0
      %1447 = vmatprep.subr.mxu0 0.0
      %1448 = vmatpush1.xpose.msra.mxu0 0.0
      %1449 = vmatprep.subr.mxu0 0.0
      %1450 = vmatpush1.xpose.msra.mxu0 0.0
      %1451 = vmatprep.subr.mxu0 0.0
      %1452 = vmatpush1.xpose.msra.mxu0 0.0
      %1453 = vmatprep.subr.mxu0 0.0
      %1454 = vmatpush1.xpose.msra.mxu0 0.0
      %1455 = vmatprep.subr.mxu0 0.0
      %1456 = vmatpush1.xpose.msra.mxu0 0.0
      %1457 = vmatprep.subr.mxu0 0.0
      %1458 = vmatpush1.xpose.msra.mxu0 0.0
      %1459 = vmatprep.subr.mxu0 0.0
      %1460 = vmatpush1.xpose.msra.mxu0 0.0
      %1461 = vmatprep.subr.mxu0 0.0
      %1462 = vmatpush1.xpose.msra.mxu0 0.0
      %1463 = vmatprep.subr.mxu0 0.0
      %1464 = vmatpush1.xpose.msra.mxu0 0.0
      %1465 = vmatprep.subr.mxu0 0.0
      %1466 = vmatpush1.xpose.msra.mxu0 0.0
      %1467 = vmatprep.subr.mxu0 0.0
      %1468 = vmatpush1.xpose.msra.mxu0 0.0
      %1469 = vmatprep.mubr.f32.mxu0 0.0
      %1470 = vmatmul.mubr.f32.gmra.mrb[0].mxu0 %v1401
      %v1471 = vpop.f32.mrb[0].mxu0
      %v1472 = vadd.f32 0.0, %v1471
      %v1473 = vpop.f32.mrb[0].mxu0
      %1474 = vdwg.mxu0
      %v1475 = vmul.f32 %v1472, 0.125
      %v1476 = vsel %vm682, %v1475, -inf
      %1477 = vmax.xlane.f32.xlu0 %v1476
      %v1478 = vpop.xlane.xlu0 %1477
      %v1479 = vsub.f32 %v1475, %v1478
      %v1480 = vmul.f32 %v1479, 1.442695
      %v1481 = vpow.pop %v1480
      %v1482 = vsel %vm682, %v1481, 0.0
      %1483 = vadd.xlane.f32.xlu0 %v1482
      %v1484 = vpop.xlane.xlu0 %1483
      %v1485 = vrcp.pop %v1484
      %v1486 = vmul.f32 %v1481, %v1485
      %1487 = vrot.lane.b32.xlu0 %v675, 104
      %v1488 = vpop.permute.xlu0 %1487
      %v1491 = vsel %vm682, %v1486, 0
      %1493 = vmatprep.subr.mxu0 0.0
      %1494 = vmatpush1.msra.mxu0 %v1488
      %1495 = vmatprep.subr.mxu0 0.0
      %1496 = vmatpush1.msra.mxu0 0.0
      %1497 = vmatprep.subr.mxu0 0.0
      %1498 = vmatpush1.msra.mxu0 0.0
      %1499 = vmatprep.subr.mxu0 0.0
      %1500 = vmatpush1.msra.mxu0 0.0
      %1501 = vmatprep.subr.mxu0 0.0
      %1502 = vmatpush1.msra.mxu0 0.0
      %1503 = vmatprep.subr.mxu0 0.0
      %1504 = vmatpush1.msra.mxu0 0.0
      %1505 = vmatprep.subr.mxu0 0.0
      %1506 = vmatpush1.msra.mxu0 0.0
      %1507 = vmatprep.subr.mxu0 0.0
      %1508 = vmatpush1.msra.mxu0 0.0
      %1509 = vmatprep.subr.mxu0 0.0
      %1510 = vmatpush1.msra.mxu0 0.0
      %1511 = vmatprep.subr.mxu0 0.0
      %1512 = vmatpush1.msra.mxu0 0.0
      %1513 = vmatprep.subr.mxu0 0.0
      %1514 = vmatpush1.msra.mxu0 0.0
      %1515 = vmatprep.subr.mxu0 0.0
      %1516 = vmatpush1.msra.mxu0 0.0
      %1517 = vmatprep.subr.mxu0 0.0
      %1518 = vmatpush1.msra.mxu0 0.0
      %1519 = vmatprep.subr.mxu0 0.0
      %1520 = vmatpush1.msra.mxu0 0.0
      %1521 = vmatprep.subr.mxu0 0.0
      %1522 = vmatpush1.msra.mxu0 0.0
      %1523 = vmatprep.subr.mxu0 0.0
      %1524 = vmatpush1.msra.mxu0 0.0
      %1525 = vmatprep.subr.mxu0 0.0
      %1526 = vmatpush1.msra.mxu0 0.0
      %1527 = vmatprep.subr.mxu0 0.0
      %1528 = vmatpush1.msra.mxu0 0.0
      %1529 = vmatprep.subr.mxu0 0.0
      %1530 = vmatpush1.msra.mxu0 0.0
      %1531 = vmatprep.subr.mxu0 0.0
      %1532 = vmatpush1.msra.mxu0 0.0
      %1533 = vmatprep.subr.mxu0 0.0
      %1534 = vmatpush1.msra.mxu0 0.0
      %1535 = vmatprep.subr.mxu0 0.0
      %1536 = vmatpush1.msra.mxu0 0.0
      %1537 = vmatprep.subr.mxu0 0.0
      %1538 = vmatpush1.msra.mxu0 0.0
      %1539 = vmatprep.subr.mxu0 0.0
      %1540 = vmatpush1.msra.mxu0 0.0
      %1541 = vmatprep.subr.mxu0 0.0
      %1542 = vmatpush1.msra.mxu0 0.0
      %1543 = vmatprep.subr.mxu0 0.0
      %1544 = vmatpush1.msra.mxu0 0.0
      %1545 = vmatprep.subr.mxu0 0.0
      %1546 = vmatpush1.msra.mxu0 0.0
      %1547 = vmatprep.subr.mxu0 0.0
      %1548 = vmatpush1.msra.mxu0 0.0
      %1549 = vmatprep.subr.mxu0 0.0
      %1550 = vmatpush1.msra.mxu0 0.0
      %1551 = vmatprep.subr.mxu0 0.0
      %1552 = vmatpush1.msra.mxu0 0.0
      %1553 = vmatprep.subr.mxu0 0.0
      %1554 = vmatpush1.msra.mxu0 0.0
      %1555 = vmatprep.subr.mxu0 0.0
      %1556 = vmatpush1.msra.mxu0 0.0
      %1557 = vmatprep.mubr.f32.mxu0 0.0
      %1558 = vmatmul.mubr.f32.gmra.mrb[0].mxu0 %v1491
      %v1559 = vpop.f32.mrb[0].mxu0
      %v1560 = vadd.f32 0.0, %v1559
      %v1561 = vpop.f32.mrb[0].mxu0
      %1562 = vdwg.mxu0
      %v1564 = vsel %vm682, %v1560, 0
      %1566 = vmatprep.subr.mxu0 0.0
      %1567 = vmatpush1.msra.mxu0 %v681
      %1568 = vmatprep.subr.mxu0 0.0
      %1569 = vmatpush1.msra.mxu0 0.0
      %1570 = vmatprep.subr.mxu0 0.0
      %1571 = vmatpush1.msra.mxu0 0.0
      %1572 = vmatprep.subr.mxu0 0.0
      %1573 = vmatpush1.msra.mxu0 0.0
      %1574 = vmatprep.subr.mxu0 0.0
      %1575 = vmatpush1.msra.mxu0 0.0
      %1576 = vmatprep.subr.mxu0 0.0
      %1577 = vmatpush1.msra.mxu0 0.0
      %1578 = vmatprep.subr.mxu0 0.0
      %1579 = vmatpush1.msra.mxu0 0.0
      %1580 = vmatprep.subr.mxu0 0.0
      %1581 = vmatpush1.msra.mxu0 0.0
      %1582 = vmatprep.subr.mxu0 0.0
      %1583 = vmatpush1.msra.mxu0 0.0
      %1584 = vmatprep.subr.mxu0 0.0
      %1585 = vmatpush1.msra.mxu0 0.0
      %1586 = vmatprep.subr.mxu0 0.0
      %1587 = vmatpush1.msra.mxu0 0.0
      %1588 = vmatprep.subr.mxu0 0.0
      %1589 = vmatpush1.msra.mxu0 0.0
      %1590 = vmatprep.subr.mxu0 0.0
      %1591 = vmatpush1.msra.mxu0 0.0
      %1592 = vmatprep.subr.mxu0 0.0
      %1593 = vmatpush1.msra.mxu0 0.0
      %1594 = vmatprep.subr.mxu0 0.0
      %1595 = vmatpush1.msra.mxu0 0.0
      %1596 = vmatprep.subr.mxu0 0.0
      %1597 = vmatpush1.msra.mxu0 0.0
      %1598 = vmatprep.subr.mxu0 0.0
      %1599 = vmatpush1.msra.mxu0 0.0
      %1600 = vmatprep.subr.mxu0 0.0
      %1601 = vmatpush1.msra.mxu0 0.0
      %1602 = vmatprep.subr.mxu0 0.0
      %1603 = vmatpush1.msra.mxu0 0.0
      %1604 = vmatprep.subr.mxu0 0.0
      %1605 = vmatpush1.msra.mxu0 0.0
      %1606 = vmatprep.subr.mxu0 0.0
      %1607 = vmatpush1.msra.mxu0 0.0
      %1608 = vmatprep.subr.mxu0 0.0
      %1609 = vmatpush1.msra.mxu0 0.0
      %1610 = vmatprep.subr.mxu0 0.0
      %1611 = vmatpush1.msra.mxu0 0.0
      %1612 = vmatprep.subr.mxu0 0.0
      %1613 = vmatpush1.msra.mxu0 0.0
      %1614 = vmatprep.subr.mxu0 0.0
      %1615 = vmatpush1.msra.mxu0 0.0
      %1616 = vmatprep.subr.mxu0 0.0
      %1617 = vmatpush1.msra.mxu0 0.0
      %1618 = vmatprep.subr.mxu0 0.0
      %1619 = vmatpush1.msra.mxu0 0.0
      %1620 = vmatprep.subr.mxu0 0.0
      %1621 = vmatpush1.msra.mxu0 0.0
      %1622 = vmatprep.subr.mxu0 0.0
      %1623 = vmatpush1.msra.mxu0 0.0
      %1624 = vmatprep.subr.mxu0 0.0
      %1625 = vmatpush1.msra.mxu0 0.0
      %1626 = vmatprep.subr.mxu0 0.0
      %1627 = vmatpush1.msra.mxu0 0.0
      %1628 = vmatprep.subr.mxu0 0.0
      %1629 = vmatpush1.msra.mxu0 0.0
      %1630 = vmatprep.mubr.f32.mxu0 0.0
      %1631 = vmatmul.mubr.f32.gmra.mrb[0].mxu0 %v1564
      %v1632 = vpop.f32.mrb[0].mxu0
      %v1633 = vadd.f32 0.0, %v1632
      %v1634 = vpop.f32.mrb[0].mxu0
      %1635 = vdwg.mxu0
      %v1636 = vadd.f32 %v1396, %v1633
      %v1637 = vld [vmem:[%s9] sm:$0x1]
      %v1639 = vlaneseq
      %v1640 = vshrl.u32 %v1639, 7
      %v1641 = vsub.s32 0, %v1640
      %v1642 = vrot.slane %v1637, %v1641
      %v1644 = vadd.f32 %v1636, %v1642
      %v1645 = vadd.f32 %v426, %v1644
      %v1646 = vsel %vm439, %v1645, 0.0
      %1647 = vadd.xlane.f32.xlu0 %v1646
      %v1648 = vpop.xlane.xlu0 %1647
      %v1649 = vrot.slane %v1648, 4
      %v1650 = vadd.f32 %v1648, %v1649
      %v1651 = vrot.slane %v1650, 2
      %v1652 = vadd.f32 %v1650, %v1651
      %v1653 = vrot.slane %v1652, 1
      %v1654 = vadd.f32 %v1652, %v1653
      %s1655 = vtos %v1654
      %v1656 = vrcp.pop 256.0
      %s1657 = vtos %v1656
      %s1658 = smul.f32 %s1655, %s1657
      %v1659 = vstv %s1658
      %v1660 = vsub.f32 %v1645, %v1659
      %v1661 = vmul.f32 %v1660, %v1660
      %v1662 = vsel %vm439, %v1661, 0.0
      %1663 = vadd.xlane.f32.xlu0 %v1662
      %v1664 = vpop.xlane.xlu0 %1663
      %v1665 = vrot.slane %v1664, 4
      %v1666 = vadd.f32 %v1664, %v1665
      %v1667 = vrot.slane %v1666, 2
      %v1668 = vadd.f32 %v1666, %v1667
      %v1669 = vrot.slane %v1668, 1
      %v1670 = vadd.f32 %v1668, %v1669
      %s1671 = vtos %v1670
      %v1672 = vrcp.pop 256.0
      %s1673 = vtos %v1672
      %s1674 = smul.f32 %s1671, %s1673
      %s1675 = sadd.f32 %s1674, 1e-05
      %v1676 = vstv %s1675
      %v1677 = vrsqrt.pop %v1676
      %s1678 = vtos %v1677
      %v1679 = vstv %s1678
      %v1680 = vmul.f32 %v1660, %v1679
      %v1681 = vld [vmem:[%s10] sm:$0xff]
      %v1682 = vmul.f32 %v1680, %v1681
      %v1683 = vld [vmem:[%s11] sm:$0xff]
      %v1684 = vadd.f32 %v1682, %v1683
      %1685 = vst.msk [vmem:[%s425] sm:$0xff] %vm439, %v1684
      %p1686 = scmp.lt.s32.totalorder %s23, 1
      %s1687 = scalar_select %p1686, %s23, 1
      %s1688 = smul.addr %s1687, 8
      %s1689 = scalar_lea.vmem %s12, %s1688
      // Predicated region
      $region69: #{transformer_fwd.10} parent=67 // pred_check
        %p1690 = pneg %p303
      $region70: #{transformer_fwd.10} parent=67 // pred_check_branch
        %1692 = sbr.rel (%p1690) target = $region72
      $region71: #{transformer_fwd.10} parent=67 // pred_region
        _
      $region72: #{transformer_fwd.10} parent=67 // pred_fallthru
        _
    $region68: #{transformer_fwd.10} parent=5 // pred_fallthru
      _
    %p1693 = scmp.le.s32.totalorder 2, %s18
    // Predicated region
    $region73: #{transformer_fwd.10} parent=5 // pred_check
      %p1694 = pneg %p1693
    $region74: #{transformer_fwd.10} parent=5 // pred_check_branch
      %1696 = sbr.rel (%p1694) target = $region76
    $region75: #{transformer_fwd.10} parent=5 // pred_region
      %s1697 = ssub.s32 %s18, 2
      // Predicated region
      $region77: #{transformer_fwd.10} parent=75 // pred_check
        %p1698 = pneg %p309
      $region78: #{transformer_fwd.10} parent=75 // pred_check_branch
        %1700 = sbr.rel (%p1698) target = $region80
      $region79: #{transformer_fwd.10} parent=75 // pred_region
        %p1701 = scmp.lt.s32.totalorder %s24, 1
        %s1702 = scalar_select %p1701, %s24, 1
        %s1703 = smul.addr %s1702, 8
        %s1704 = scalar_lea.vmem %s12, %s1703
      $region80: #{transformer_fwd.10} parent=75 // pred_fallthru
        _
    $region76: #{transformer_fwd.10} parent=5 // pred_fallthru
      _
  $region6: #{transformer_fwd.10} parent=0 // loop_footer
    %s22 = sadd.s32 1, %s18
  $region7: #{transformer_fwd.10} parent=0 // loop_footer_branch
    %17 = sbr.rel target = $region3
  $region8: #{transformer_fwd.10} parent=0 // loop_exit
    _

// kernel: transformer_fwd.15
$region0: #{transformer_fwd.15}
  #allocation0 [shape = 'u32[]', space=smem, size = 0x4, offset = 0x4, fixed_abs, tag = 'smem constant byte address 0x4 - core index']
  #allocation1 [shape = 'u32[144,128]{1,0:T(1,128)}', space=vmem, size = 0x12000, scoped, tag = 'internal scratch']
  %s0 = inlined_call_operand.vmem [shape: f32[2,8,16], index: 0, kind: input, shape index: {}, may-alias: {0,1}]
  %s1 = inlined_call_operand.vmem [shape: f32[2,8,16], index: 1, kind: input, shape index: {}, may-alias: {0,1}]
  %s2 = inlined_call_operand.vmem [shape: f32[16,32], index: 2, kind: input, shape index: {}]
  %s3 = inlined_call_operand.vmem [shape: f32[1,32], index: 3, kind: input, shape index: {}]
  %s4 = inlined_call_operand.vmem [shape: f32[16,32], index: 4, kind: input, shape index: {}]
  %s5 = inlined_call_operand.vmem [shape: f32[1,32], index: 5, kind: input, shape index: {}]
  %s6 = inlined_call_operand.vmem [shape: f32[16,32], index: 6, kind: input, shape index: {}]
  %s7 = inlined_call_operand.vmem [shape: f32[1,32], index: 7, kind: input, shape index: {}]
  %s8 = inlined_call_operand.vmem [shape: f32[32,16], index: 8, kind: input, shape index: {}]
  %s9 = inlined_call_operand.vmem [shape: f32[1,16], index: 9, kind: input, shape index: {}]
  %s10 = inlined_call_operand.vmem [shape: f32[8,16], index: 10, kind: input, shape index: {}]
  %s11 = inlined_call_operand.vmem [shape: f32[8,16], index: 11, kind: input, shape index: {}]
  %s12 = inlined_call_operand.vmem [shape: f32[2,8,16], index: 12, kind: output, shape index: {}]
  %s13 = sld [smem:[#allocation0]]
  $region81: #{transformer_fwd.15} parent=0
    _
  %s15 = ssub.s32 1, %s13
  %s16 = scalar_select 0, %s15, %s13
  loop: start=0, step=1, limit=4
  $region2: #{transformer_fwd.15} parent=0 // loop_pre_header
    _
  $region3: #{transformer_fwd.15} parent=0 // loop_header
    %s18 = sphi 0, %s22
    %p19 = scmp.ge.s32.totalorder %s18, 4
    %s28 = sphi 0, %s30
    %s31 = sphi 0, %s28
    %s32 = sphi 0, %s31
    %s48 = sphi 0, %s32
    %s54 = sphi 0, %s56
    %s57 = sphi 0, %s54
    %s58 = sphi 0, %s57
    %s74 = sphi 0, %s58
    %s78 = sphi 0, %s78
    %s80 = sphi 0, %s78
    %s81 = sphi 0, %s80
    %s95 = sphi 0, %s81
    %s99 = sphi 0, %s99
    %s101 = sphi 0, %s99
    %s102 = sphi 0, %s101
    %s116 = sphi 0, %s102
    %s120 = sphi 0, %s120
    %s122 = sphi 0, %s120
    %s123 = sphi 0, %s122
    %s137 = sphi 0, %s123
    %s141 = sphi 0, %s141
    %s143 = sphi 0, %s141
    %s144 = sphi 0, %s143
    %s158 = sphi 0, %s144
    %s162 = sphi 0, %s162
    %s164 = sphi 0, %s162
    %s165 = sphi 0, %s164
    %s179 = sphi 0, %s165
    %s183 = sphi 0, %s183
    %s185 = sphi 0, %s183
    %s186 = sphi 0, %s185
    %s200 = sphi 0, %s186
    %s204 = sphi 0, %s204
    %s206 = sphi 0, %s204
    %s207 = sphi 0, %s206
    %s221 = sphi 0, %s207
    %s225 = sphi 0, %s225
    %s227 = sphi 0, %s225
    %s228 = sphi 0, %s227
    %s242 = sphi 0, %s228
    %s246 = sphi 0, %s246
    %s248 = sphi 0, %s246
    %s249 = sphi 0, %s248
    %s263 = sphi 0, %s249
    %s267 = sphi 0, %s267
    %s269 = sphi 0, %s267
    %s270 = sphi 0, %s269
    %s284 = sphi 0, %s270
    %s290 = sphi 0, %s292
    %s293 = sphi 0, %s290
    %s294 = sphi 0, %s293
    %s310 = sphi 0, %s294
  $region4: #{transformer_fwd.15} parent=0 // loop_header_branch
    %21 = sbr.rel (%p19) target = $region8
  $region5: #{transformer_fwd.15} parent=0 // loop_body
    %s23 = ssub.s32 %s18, 1
    %s24 = ssub.s32 %s18, 2
    %s25 = sadd.s32 %s18, 1
    %s26 = ssub.s32 %s18, %s25
    %p27 = scmp.eq.s32.totalorder %s26, 0
    %s29 = sadd.s32 %s28, 1
    %s30 = scalar_select %p27, %s28, %s29
    %p33 = pneg %p27
    %p34 = scmp.eq.s32.totalorder %s18, 1
    %p35 = por %p33, %p34
    %p36 = scmp.ne.s32.totalorder %s28, %s31
    %p37 = scmp.eq.s32.totalorder %s18, 0
    %p38 = por %p36, %p37
    %p39 = scmp.ne.s32.totalorder %s28, %s31
    %p40 = scmp.eq.s32.totalorder %s23, 1
    %p41 = por %p39, %p40
    %p42 = scmp.ne.s32.totalorder %s31, %s32
    %p43 = scmp.eq.s32.totalorder %s23, 0
    %p44 = por %p42, %p43
    %p45 = scmp.ne.s32.totalorder %s31, %s32
    %p46 = scmp.eq.s32.totalorder %s24, 1
    %p47 = por %p45, %p46
    %p49 = scmp.ne.s32.totalorder %s32, %s48
    %p50 = scmp.eq.s32.totalorder %s24, 0
    %p51 = por %p49, %p50
    %s52 = ssub.s32 %s18, %s25
    %p53 = scmp.eq.s32.totalorder %s52, 0
    %s55 = sadd.s32 %s54, 1
    %s56 = scalar_select %p53, %s54, %s55
    %p59 = pneg %p53
    %p60 = scmp.eq.s32.totalorder %s18, 1
    %p61 = por %p59, %p60
    %p62 = scmp.ne.s32.totalorder %s54, %s57
    %p63 = scmp.eq.s32.totalorder %s18, 0
    %p64 = por %p62, %p63
    %p65 = scmp.ne.s32.totalorder %s54, %s57
    %p66 = scmp.eq.s32.totalorder %s23, 1
    %p67 = por %p65, %p66
    %p68 = scmp.ne.s32.totalorder %s57, %s58
    %p69 = scmp.eq.s32.totalorder %s23, 0
    %p70 = por %p68, %p69
    %p71 = scmp.ne.s32.totalorder %s57, %s58
    %p72 = scmp.eq.s32.totalorder %s24, 1
    %p73 = por %p71, %p72
    %p75 = scmp.ne.s32.totalorder %s58, %s74
    %p76 = scmp.eq.s32.totalorder %s24, 0
    %p77 = por %p75, %p76
    %s79 = sadd.s32 %s78, 1
    %p82 = scmp.eq.s32.totalorder %s18, 1
    %p83 = scmp.ne.s32.totalorder %s78, %s80
    %p84 = scmp.eq.s32.totalorder %s18, 0
    %p85 = por %p83, %p84
    %p86 = scmp.ne.s32.totalorder %s78, %s80
    %p87 = scmp.eq.s32.totalorder %s23, 1
    %p88 = por %p86, %p87
    %p89 = scmp.ne.s32.totalorder %s80, %s81
    %p90 = scmp.eq.s32.totalorder %s23, 0
    %p91 = por %p89, %p90
    %p92 = scmp.ne.s32.totalorder %s80, %s81
    %p93 = scmp.eq.s32.totalorder %s24, 1
    %p94 = por %p92, %p93
    %p96 = scmp.ne.s32.totalorder %s81, %s95
    %p97 = scmp.eq.s32.totalorder %s24, 0
    %p98 = por %p96, %p97
    %s100 = sadd.s32 %s99, 1
    %p103 = scmp.eq.s32.totalorder %s18, 1
    %p104 = scmp.ne.s32.totalorder %s99, %s101
    %p105 = scmp.eq.s32.totalorder %s18, 0
    %p106 = por %p104, %p105
    %p107 = scmp.ne.s32.totalorder %s99, %s101
    %p108 = scmp.eq.s32.totalorder %s23, 1
    %p109 = por %p107, %p108
    %p110 = scmp.ne.s32.totalorder %s101, %s102
    %p111 = scmp.eq.s32.totalorder %s23, 0
    %p112 = por %p110, %p111
    %p113 = scmp.ne.s32.totalorder %s101, %s102
    %p114 = scmp.eq.s32.totalorder %s24, 1
    %p115 = por %p113, %p114
    %p117 = scmp.ne.s32.totalorder %s102, %s116
    %p118 = scmp.eq.s32.totalorder %s24, 0
    %p119 = por %p117, %p118
    %s121 = sadd.s32 %s120, 1
    %p124 = scmp.eq.s32.totalorder %s18, 1
    %p125 = scmp.ne.s32.totalorder %s120, %s122
    %p126 = scmp.eq.s32.totalorder %s18, 0
    %p127 = por %p125, %p126
    %p128 = scmp.ne.s32.totalorder %s120, %s122
    %p129 = scmp.eq.s32.totalorder %s23, 1
    %p130 = por %p128, %p129
    %p131 = scmp.ne.s32.totalorder %s122, %s123
    %p132 = scmp.eq.s32.totalorder %s23, 0
    %p133 = por %p131, %p132
    %p134 = scmp.ne.s32.totalorder %s122, %s123
    %p135 = scmp.eq.s32.totalorder %s24, 1
    %p136 = por %p134, %p135
    %p138 = scmp.ne.s32.totalorder %s123, %s137
    %p139 = scmp.eq.s32.totalorder %s24, 0
    %p140 = por %p138, %p139
    %s142 = sadd.s32 %s141, 1
    %p145 = scmp.eq.s32.totalorder %s18, 1
    %p146 = scmp.ne.s32.totalorder %s141, %s143
    %p147 = scmp.eq.s32.totalorder %s18, 0
    %p148 = por %p146, %p147
    %p149 = scmp.ne.s32.totalorder %s141, %s143
    %p150 = scmp.eq.s32.totalorder %s23, 1
    %p151 = por %p149, %p150
    %p152 = scmp.ne.s32.totalorder %s143, %s144
    %p153 = scmp.eq.s32.totalorder %s23, 0
    %p154 = por %p152, %p153
    %p155 = scmp.ne.s32.totalorder %s143, %s144
    %p156 = scmp.eq.s32.totalorder %s24, 1
    %p157 = por %p155, %p156
    %p159 = scmp.ne.s32.totalorder %s144, %s158
    %p160 = scmp.eq.s32.totalorder %s24, 0
    %p161 = por %p159, %p160
    %s163 = sadd.s32 %s162, 1
    %p166 = scmp.eq.s32.totalorder %s18, 1
    %p167 = scmp.ne.s32.totalorder %s162, %s164
    %p168 = scmp.eq.s32.totalorder %s18, 0
    %p169 = por %p167, %p168
    %p170 = scmp.ne.s32.totalorder %s162, %s164
    %p171 = scmp.eq.s32.totalorder %s23, 1
    %p172 = por %p170, %p171
    %p173 = scmp.ne.s32.totalorder %s164, %s165
    %p174 = scmp.eq.s32.totalorder %s23, 0
    %p175 = por %p173, %p174
    %p176 = scmp.ne.s32.totalorder %s164, %s165
    %p177 = scmp.eq.s32.totalorder %s24, 1
    %p178 = por %p176, %p177
    %p180 = scmp.ne.s32.totalorder %s165, %s179
    %p181 = scmp.eq.s32.totalorder %s24, 0
    %p182 = por %p180, %p181
    %s184 = sadd.s32 %s183, 1
    %p187 = scmp.eq.s32.totalorder %s18, 1
    %p188 = scmp.ne.s32.totalorder %s183, %s185
    %p189 = scmp.eq.s32.totalorder %s18, 0
    %p190 = por %p188, %p189
    %p191 = scmp.ne.s32.totalorder %s183, %s185
    %p192 = scmp.eq.s32.totalorder %s23, 1
    %p193 = por %p191, %p192
    %p194 = scmp.ne.s32.totalorder %s185, %s186
    %p195 = scmp.eq.s32.totalorder %s23, 0
    %p196 = por %p194, %p195
    %p197 = scmp.ne.s32.totalorder %s185, %s186
    %p198 = scmp.eq.s32.totalorder %s24, 1
    %p199 = por %p197, %p198
    %p201 = scmp.ne.s32.totalorder %s186, %s200
    %p202 = scmp.eq.s32.totalorder %s24, 0
    %p203 = por %p201, %p202
    %s205 = sadd.s32 %s204, 1
    %p208 = scmp.eq.s32.totalorder %s18, 1
    %p209 = scmp.ne.s32.totalorder %s204, %s206
    %p210 = scmp.eq.s32.totalorder %s18, 0
    %p211 = por %p209, %p210
    %p212 = scmp.ne.s32.totalorder %s204, %s206
    %p213 = scmp.eq.s32.totalorder %s23, 1
    %p214 = por %p212, %p213
    %p215 = scmp.ne.s32.totalorder %s206, %s207
    %p216 = scmp.eq.s32.totalorder %s23, 0
    %p217 = por %p215, %p216
    %p218 = scmp.ne.s32.totalorder %s206, %s207
    %p219 = scmp.eq.s32.totalorder %s24, 1
    %p220 = por %p218, %p219
    %p222 = scmp.ne.s32.totalorder %s207, %s221
    %p223 = scmp.eq.s32.totalorder %s24, 0
    %p224 = por %p222, %p223
    %s226 = sadd.s32 %s225, 1
    %p229 = scmp.eq.s32.totalorder %s18, 1
    %p230 = scmp.ne.s32.totalorder %s225, %s227
    %p231 = scmp.eq.s32.totalorder %s18, 0
    %p232 = por %p230, %p231
    %p233 = scmp.ne.s32.totalorder %s225, %s227
    %p234 = scmp.eq.s32.totalorder %s23, 1
    %p235 = por %p233, %p234
    %p236 = scmp.ne.s32.totalorder %s227, %s228
    %p237 = scmp.eq.s32.totalorder %s23, 0
    %p238 = por %p236, %p237
    %p239 = scmp.ne.s32.totalorder %s227, %s228
    %p240 = scmp.eq.s32.totalorder %s24, 1
    %p241 = por %p239, %p240
    %p243 = scmp.ne.s32.totalorder %s228, %s242
    %p244 = scmp.eq.s32.totalorder %s24, 0
    %p245 = por %p243, %p244
    %s247 = sadd.s32 %s246, 1
    %p250 = scmp.eq.s32.totalorder %s18, 1
    %p251 = scmp.ne.s32.totalorder %s246, %s248
    %p252 = scmp.eq.s32.totalorder %s18, 0
    %p253 = por %p251, %p252
    %p254 = scmp.ne.s32.totalorder %s246, %s248
    %p255 = scmp.eq.s32.totalorder %s23, 1
    %p256 = por %p254, %p255
    %p257 = scmp.ne.s32.totalorder %s248, %s249
    %p258 = scmp.eq.s32.totalorder %s23, 0
    %p259 = por %p257, %p258
    %p260 = scmp.ne.s32.totalorder %s248, %s249
    %p261 = scmp.eq.s32.totalorder %s24, 1
    %p262 = por %p260, %p261
    %p264 = scmp.ne.s32.totalorder %s249, %s263
    %p265 = scmp.eq.s32.totalorder %s24, 0
    %p266 = por %p264, %p265
    %s268 = sadd.s32 %s267, 1
    %p271 = scmp.eq.s32.totalorder %s18, 1
    %p272 = scmp.ne.s32.totalorder %s267, %s269
    %p273 = scmp.eq.s32.totalorder %s18, 0
    %p274 = por %p272, %p273
    %p275 = scmp.ne.s32.totalorder %s267, %s269
    %p276 = scmp.eq.s32.totalorder %s23, 1
    %p277 = por %p275, %p276
    %p278 = scmp.ne.s32.totalorder %s269, %s270
    %p279 = scmp.eq.s32.totalorder %s23, 0
    %p280 = por %p278, %p279
    %p281 = scmp.ne.s32.totalorder %s269, %s270
    %p282 = scmp.eq.s32.totalorder %s24, 1
    %p283 = por %p281, %p282
    %p285 = scmp.ne.s32.totalorder %s270, %s284
    %p286 = scmp.eq.s32.totalorder %s24, 0
    %p287 = por %p285, %p286
    %s288 = ssub.s32 %s18, %s25
    %p289 = scmp.eq.s32.totalorder %s288, 0
    %s291 = sadd.s32 %s290, 1
    %s292 = scalar_select %p289, %s290, %s291
    %p295 = pneg %p289
    %p296 = scmp.eq.s32.totalorder %s18, 1
    %p297 = por %p295, %p296
    %p298 = scmp.ne.s32.totalorder %s290, %s293
    %p299 = scmp.eq.s32.totalorder %s18, 0
    %p300 = por %p298, %p299
    %p301 = scmp.ne.s32.totalorder %s290, %s293
    %p302 = scmp.eq.s32.totalorder %s23, 1
    %p303 = por %p301, %p302
    %p304 = scmp.ne.s32.totalorder %s293, %s294
    %p305 = scmp.eq.s32.totalorder %s23, 0
    %p306 = por %p304, %p305
    %p307 = scmp.ne.s32.totalorder %s293, %s294
    %p308 = scmp.eq.s32.totalorder %s24, 1
    %p309 = por %p307, %p308
    %p311 = scmp.ne.s32.totalorder %s294, %s310
    %p312 = scmp.eq.s32.totalorder %s24, 0
    %p313 = por %p311, %p312
    %p314 = scmp.le.s32.totalorder 1, %s18
    %p315 = scmp.lt.s32.totalorder %s18, 3
    %p316 = pnand %p314, %p315
    %p317 = pneg %p316
    // Predicated region
    $region9: #{transformer_fwd.15} parent=5 // pred_check
      _
    $region10: #{transformer_fwd.15} parent=5 // pred_check_branch
      %319 = sbr.rel (%p316) target = $region12
    $region11: #{transformer_fwd.15} parent=5 // pred_region
      %s320 = ssub.s32 %s18, 1
      // Predicated region
      $region13: #{transformer_fwd.15} parent=11 // pred_check
        %p321 = pneg %p91
      $region14: #{transformer_fwd.15} parent=11 // pred_check_branch
        %323 = sbr.rel (%p321) target = $region16
      $region15: #{transformer_fwd.15} parent=11 // pred_region
        _
      $region16: #{transformer_fwd.15} parent=11 // pred_fallthru
        _
      // Predicated region
      $region17: #{transformer_fwd.15} parent=11 // pred_check
        %p324 = pneg %p112
      $region18: #{transformer_fwd.15} parent=11 // pred_check_branch
        %326 = sbr.rel (%p324) target = $region20
      $region19: #{transformer_fwd.15} parent=11 // pred_region
        _
      $region20: #{transformer_fwd.15} parent=11 // pred_fallthru
        _
      // Predicated region
      $region21: #{transformer_fwd.15} parent=11 // pred_check
        %p327 = pneg %p133
      $region22: #{transformer_fwd.15} parent=11 // pred_check_branch
        %329 = sbr.rel (%p327) target = $region24
      $region23: #{transformer_fwd.15} parent=11 // pred_region
        _
      $region24: #{transformer_fwd.15} parent=11 // pred_fallthru
        _
      // Predicated region
      $region25: #{transformer_fwd.15} parent=11 // pred_check
        %p330 = pneg %p154
      $region26: #{transformer_fwd.15} parent=11 // pred_check_branch
        %332 = sbr.rel (%p330) target = $region28
      $region27: #{transformer_fwd.15} parent=11 // pred_region
        _
      $region28: #{transformer_fwd.15} parent=11 // pred_fallthru
        _
      // Predicated region
      $region29: #{transformer_fwd.15} parent=11 // pred_check
        %p333 = pneg %p175
      $region30: #{transformer_fwd.15} parent=11 // pred_check_branch
        %335 = sbr.rel (%p333) target = $region32
      $region31: #{transformer_fwd.15} parent=11 // pred_region
        _
      $region32: #{transformer_fwd.15} parent=11 // pred_fallthru
        _
      // Predicated region
      $region33: #{transformer_fwd.15} parent=11 // pred_check
        %p336 = pneg %p196
      $region34: #{transformer_fwd.15} parent=11 // pred_check_branch
        %338 = sbr.rel (%p336) target = $region36
      $region35: #{transformer_fwd.15} parent=11 // pred_region
        _
      $region36: #{transformer_fwd.15} parent=11 // pred_fallthru
        _
      // Predicated region
      $region37: #{transformer_fwd.15} parent=11 // pred_check
        %p339 = pneg %p217
      $region38: #{transformer_fwd.15} parent=11 // pred_check_branch
        %341 = sbr.rel (%p339) target = $region40
      $region39: #{transformer_fwd.15} parent=11 // pred_region
        _
      $region40: #{transformer_fwd.15} parent=11 // pred_fallthru
        _
      // Predicated region
      $region41: #{transformer_fwd.15} parent=11 // pred_check
        %p342 = pneg %p238
      $region42: #{transformer_fwd.15} parent=11 // pred_check_branch
        %344 = sbr.rel (%p342) target = $region44
      $region43: #{transformer_fwd.15} parent=11 // pred_region
        _
      $region44: #{transformer_fwd.15} parent=11 // pred_fallthru
        _
      // Predicated region
      $region45: #{transformer_fwd.15} parent=11 // pred_check
        %p345 = pneg %p259
      $region46: #{transformer_fwd.15} parent=11 // pred_check_branch
        %347 = sbr.rel (%p345) target = $region48
      $region47: #{transformer_fwd.15} parent=11 // pred_region
        _
      $region48: #{transformer_fwd.15} parent=11 // pred_fallthru
        _
      // Predicated region
      $region49: #{transformer_fwd.15} parent=11 // pred_check
        %p348 = pneg %p280
      $region50: #{transformer_fwd.15} parent=11 // pred_check_branch
        %350 = sbr.rel (%p348) target = $region52
      $region51: #{transformer_fwd.15} parent=11 // pred_region
        _
      $region52: #{transformer_fwd.15} parent=11 // pred_fallthru
        _
    $region12: #{transformer_fwd.15} parent=5 // pred_fallthru
      _
    %p351 = scmp.lt.s32.totalorder %s18, 2
    // Predicated region
    $region53: #{transformer_fwd.15} parent=5 // pred_check
      %p352 = pneg %p351
    $region54: #{transformer_fwd.15} parent=5 // pred_check_branch
      %354 = sbr.rel (%p352) target = $region56
    $region55: #{transformer_fwd.15} parent=5 // pred_region
      // Predicated region
      $region57: #{transformer_fwd.15} parent=55 // pred_check
        %p355 = pneg %p38
      $region58: #{transformer_fwd.15} parent=55 // pred_check_branch
        %357 = sbr.rel (%p355) target = $region60
      $region59: #{transformer_fwd.15} parent=55 // pred_region
        %p358 = scmp.lt.s32.totalorder %s18, 1
        %s359 = scalar_select %p358, %s18, 1
        %s360 = smul.addr %s359, 8
        %s361 = scalar_lea.vmem %s0, %s360
      $region60: #{transformer_fwd.15} parent=55 // pred_fallthru
        _
      // Predicated region
      $region61: #{transformer_fwd.15} parent=55 // pred_check
        %p362 = pneg %p64
      $region62: #{transformer_fwd.15} parent=55 // pred_check_branch
        %364 = sbr.rel (%p362) target = $region64
      $region63: #{transformer_fwd.15} parent=55 // pred_region
        %p365 = scmp.lt.s32.totalorder %s18, 1
        %s366 = scalar_select %p365, %s18, 1
        %s367 = smul.addr %s366, 8
        %s368 = scalar_lea.vmem %s1, %s367
      $region64: #{transformer_fwd.15} parent=55 // pred_fallthru
        _
    $region56: #{transformer_fwd.15} parent=5 // pred_fallthru
      _
    %p369 = scmp.le.s32.totalorder 1, %s18
    %p370 = scmp.lt.s32.totalorder %s18, 3
    %p371 = pnand %p369, %p370
    %p372 = pneg %p371
    // Predicated region
    $region65: #{transformer_fwd.15} parent=5 // pred_check
      _
    $region66: #{transformer_fwd.15} parent=5 // pred_check_branch
      %374 = sbr.rel (%p371) target = $region68
    $region67: #{transformer_fwd.15} parent=5 // pred_region
      %s375 = ssub.s32 %s18, 1
      %p376 = scmp.lt.s32.totalorder %s23, 1
      %s377 = scalar_select %p376, %s23, 1
      %s378 = smul.addr %s377, 8
      %s379 = scalar_lea.vmem %s0, %s378
      %p380 = pneg %p44
      %p381 = pneg %p41
      %p382 = scmp.lt.s32.totalorder %s23, 1
      %s383 = scalar_select %p382, %s23, 1
      %s384 = smul.addr %s383, 8
      %s385 = scalar_lea.vmem %s1, %s384
      %p386 = pneg %p70
      %p387 = pneg %p67
      %p388 = pneg %p91
      %p389 = pneg %p88
      %p390 = pneg %p112
      %p391 = pneg %p109
      %p392 = pneg %p133
      %p393 = pneg %p130
      %p394 = pneg %p154
      %p395 = pneg %p151
      %p396 = pneg %p175
      %p397 = pneg %p172
      %p398 = pneg %p196
      %p399 = pneg %p193
      %p400 = pneg %p217
      %p401 = pneg %p214
      %p402 = pneg %p238
      %p403 = pneg %p235
      %p404 = pneg %p259
      %p405 = pneg %p256
      %p406 = pneg %p280
      %p407 = pneg %p277
      %p408 = pneg %p306
      %p409 = pneg %p303
      %p410 = scmp.lt.s32.totalorder %s23, 1
      %s411 = scalar_select %p410, %s23, 1
      %s412 = smul.addr %s411, 8
      %s413 = scalar_lea.vmem %s12, %s412
      %p414 = scmp.lt.s32.totalorder %s23, 1
      %s415 = scalar_select %p414, %s23, 1
      %s416 = smul.addr %s415, 8
      %s417 = scalar_lea.vmem %s0, %s416
      %p418 = scmp.lt.s32.totalorder %s23, 1
      %s419 = scalar_select %p418, %s23, 1
      %s420 = smul.addr %s419, 8
      %s421 = scalar_lea.vmem %s1, %s420
      %p422 = scmp.lt.s32.totalorder %s23, 1
      %s423 = scalar_select %p422, %s23, 1
      %s424 = smul.addr %s423, 8
      %s425 = scalar_lea.vmem %s12, %s424
      %v426 = vld [vmem:[%s417] sm:$0xff]
      %v427 = vld [vmem:[%s421] sm:$0xff]
      %v428 = vld [vmem:[%s2] sm:$0xff]
      %v429 = vld [vmem:[%s2 + $0x8] sm:$0xff]
      %v430 = vld [vmem:[%s3] sm:$0x1]
      %v432 = vlaneseq
      %v433 = vshrl.u32 %v432, 7
      %v434 = vsub.s32 0, %v433
      %v435 = vrot.slane %v430, %v434
      %vm437 = vcmask 130048
      %v439 = vsel %vm437, %v426, 0
      %441 = vmatprep.subr.mxu0 0.0
      %442 = vmatpush1.msra.mxu0 %v428
      %443 = vmatprep.subr.mxu0 0.0
      %444 = vmatpush1.msra.mxu0 %v429
      %445 = vmatprep.subr.mxu0 0.0
      %446 = vmatpush1.msra.mxu0 0.0
      %447 = vmatprep.subr.mxu0 0.0
      %448 = vmatpush1.msra.mxu0 0.0
      %449 = vmatprep.subr.mxu0 0.0
      %450 = vmatpush1.msra.mxu0 0.0
      %451 = vmatprep.subr.mxu0 0.0
      %452 = vmatpush1.msra.mxu0 0.0
      %453 = vmatprep.subr.mxu0 0.0
      %454 = vmatpush1.msra.mxu0 0.0
      %455 = vmatprep.subr.mxu0 0.0
      %456 = vmatpush1.msra.mxu0 0.0
      %457 = vmatprep.subr.mxu0 0.0
      %458 = vmatpush1.msra.mxu0 0.0
      %459 = vmatprep.subr.mxu0 0.0
      %460 = vmatpush1.msra.mxu0 0.0
      %461 = vmatprep.subr.mxu0 0.0
      %462 = vmatpush1.msra.mxu0 0.0
      %463 = vmatprep.subr.mxu0 0.0
      %464 = vmatpush1.msra.mxu0 0.0
      %465 = vmatprep.subr.mxu0 0.0
      %466 = vmatpush1.msra.mxu0 0.0
      %467 = vmatprep.subr.mxu0 0.0
      %468 = vmatpush1.msra.mxu0 0.0
      %469 = vmatprep.subr.mxu0 0.0
      %470 = vmatpush1.msra.mxu0 0.0
      %471 = vmatprep.subr.mxu0 0.0
      %472 = vmatpush1.msra.mxu0 0.0
      %473 = vmatprep.subr.mxu0 0.0
      %474 = vmatpush1.msra.mxu0 0.0
      %475 = vmatprep.subr.mxu0 0.0
      %476 = vmatpush1.msra.mxu0 0.0
      %477 = vmatprep.subr.mxu0 0.0
      %478 = vmatpush1.msra.mxu0 0.0
      %479 = vmatprep.subr.mxu0 0.0
      %480 = vmatpush1.msra.mxu0 0.0
      %481 = vmatprep.subr.mxu0 0.0
      %482 = vmatpush1.msra.mxu0 0.0
      %483 = vmatprep.subr.mxu0 0.0
      %484 = vmatpush1.msra.mxu0 0.0
      %485 = vmatprep.subr.mxu0 0.0
      %486 = vmatpush1.msra.mxu0 0.0
      %487 = vmatprep.subr.mxu0 0.0
      %488 = vmatpush1.msra.mxu0 0.0
      %489 = vmatprep.subr.mxu0 0.0
      %490 = vmatpush1.msra.mxu0 0.0
      %491 = vmatprep.subr.mxu0 0.0
      %492 = vmatpush1.msra.mxu0 0.0
      %493 = vmatprep.subr.mxu0 0.0
      %494 = vmatpush1.msra.mxu0 0.0
      %495 = vmatprep.subr.mxu0 0.0
      %496 = vmatpush1.msra.mxu0 0.0
      %497 = vmatprep.subr.mxu0 0.0
      %498 = vmatpush1.msra.mxu0 0.0
      %499 = vmatprep.subr.mxu0 0.0
      %500 = vmatpush1.msra.mxu0 0.0
      %501 = vmatprep.subr.mxu0 0.0
      %502 = vmatpush1.msra.mxu0 0.0
      %503 = vmatprep.subr.mxu0 0.0
      %504 = vmatpush1.msra.mxu0 0.0
      %505 = vmatprep.mubr.f32.mxu0 0.0
      %506 = vmatmul.mubr.f32.gmra.mrb[0].mxu0 %v439
      %v507 = vpop.f32.mrb[0].mxu0
      %v508 = vadd.f32 %v435, %v507
      %v509 = vpop.f32.mrb[0].mxu0
      %510 = vdwg.mxu0
      %v511 = vld [vmem:[%s4] sm:$0xff]
      %v512 = vld [vmem:[%s4 + $0x8] sm:$0xff]
      %v513 = vld [vmem:[%s5] sm:$0x1]
      %v515 = vlaneseq
      %v516 = vshrl.u32 %v515, 7
      %v517 = vsub.s32 0, %v516
      %v518 = vrot.slane %v513, %v517
      %v521 = vsel %vm437, %v427, 0
      %523 = vmatprep.subr.mxu0 0.0
      %524 = vmatpush1.msra.mxu0 %v511
      %525 = vmatprep.subr.mxu0 0.0
      %526 = vmatpush1.msra.mxu0 %v512
      %527 = vmatprep.subr.mxu0 0.0
      %528 = vmatpush1.msra.mxu0 0.0
      %529 = vmatprep.subr.mxu0 0.0
      %530 = vmatpush1.msra.mxu0 0.0
      %531 = vmatprep.subr.mxu0 0.0
      %532 = vmatpush1.msra.mxu0 0.0
      %533 = vmatprep.subr.mxu0 0.0
      %534 = vmatpush1.msra.mxu0 0.0
      %535 = vmatprep.subr.mxu0 0.0
      %536 = vmatpush1.msra.mxu0 0.0
      %537 = vmatprep.subr.mxu0 0.0
      %538 = vmatpush1.msra.mxu0 0.0
      %539 = vmatprep.subr.mxu0 0.0
      %540 = vmatpush1.msra.mxu0 0.0
      %541 = vmatprep.subr.mxu0 0.0
      %542 = vmatpush1.msra.mxu0 0.0
      %543 = vmatprep.subr.mxu0 0.0
      %544 = vmatpush1.msra.mxu0 0.0
      %545 = vmatprep.subr.mxu0 0.0
      %546 = vmatpush1.msra.mxu0 0.0
      %547 = vmatprep.subr.mxu0 0.0
      %548 = vmatpush1.msra.mxu0 0.0
      %549 = vmatprep.subr.mxu0 0.0
      %550 = vmatpush1.msra.mxu0 0.0
      %551 = vmatprep.subr.mxu0 0.0
      %552 = vmatpush1.msra.mxu0 0.0
      %553 = vmatprep.subr.mxu0 0.0
      %554 = vmatpush1.msra.mxu0 0.0
      %555 = vmatprep.subr.mxu0 0.0
      %556 = vmatpush1.msra.mxu0 0.0
      %557 = vmatprep.subr.mxu0 0.0
      %558 = vmatpush1.msra.mxu0 0.0
      %559 = vmatprep.subr.mxu0 0.0
      %560 = vmatpush1.msra.mxu0 0.0
      %561 = vmatprep.subr.mxu0 0.0
      %562 = vmatpush1.msra.mxu0 0.0
      %563 = vmatprep.subr.mxu0 0.0
      %564 = vmatpush1.msra.mxu0 0.0
      %565 = vmatprep.subr.mxu0 0.0
      %566 = vmatpush1.msra.mxu0 0.0
      %567 = vmatprep.subr.mxu0 0.0
      %568 = vmatpush1.msra.mxu0 0.0
      %569 = vmatprep.subr.mxu0 0.0
      %570 = vmatpush1.msra.mxu0 0.0
      %571 = vmatprep.subr.mxu0 0.0
      %572 = vmatpush1.msra.mxu0 0.0
      %573 = vmatprep.subr.mxu0 0.0
      %574 = vmatpush1.msra.mxu0 0.0
      %575 = vmatprep.subr.mxu0 0.0
      %576 = vmatpush1.msra.mxu0 0.0
      %577 = vmatprep.subr.mxu0 0.0
      %578 = vmatpush1.msra.mxu0 0.0
      %579 = vmatprep.subr.mxu0 0.0
      %580 = vmatpush1.msra.mxu0 0.0
      %581 = vmatprep.subr.mxu0 0.0
      %582 = vmatpush1.msra.mxu0 0.0
      %583 = vmatprep.subr.mxu0 0.0
      %584 = vmatpush1.msra.mxu0 0.0
      %585 = vmatprep.subr.mxu0 0.0
      %586 = vmatpush1.msra.mxu0 0.0
      %587 = vmatprep.mubr.f32.mxu0 0.0
      %588 = vmatmul.mubr.f32.gmra.mrb[0].mxu0 %v521
      %v589 = vpop.f32.mrb[0].mxu0
      %v590 = vadd.f32 %v518, %v589
      %v591 = vpop.f32.mrb[0].mxu0
      %592 = vdwg.mxu0
      %v593 = vld [vmem:[%s6] sm:$0xff]
      %v594 = vld [vmem:[%s6 + $0x8] sm:$0xff]
      %v595 = vld [vmem:[%s7] sm:$0x1]
      %v597 = vlaneseq
      %v598 = vshrl.u32 %v597, 7
      %v599 = vsub.s32 0, %v598
      %v600 = vrot.slane %v595, %v599
      %602 = vmatprep.subr.mxu0 0.0
      %603 = vmatpush1.msra.mxu0 %v593
      %604 = vmatprep.subr.mxu0 0.0
      %605 = vmatpush1.msra.mxu0 %v594
      %606 = vmatprep.subr.mxu0 0.0
      %607 = vmatpush1.msra.mxu0 0.0
      %608 = vmatprep.subr.mxu0 0.0
      %609 = vmatpush1.msra.mxu0 0.0
      %610 = vmatprep.subr.mxu0 0.0
      %611 = vmatpush1.msra.mxu0 0.0
      %612 = vmatprep.subr.mxu0 0.0
      %613 = vmatpush1.msra.mxu0 0.0
      %614 = vmatprep.subr.mxu0 0.0
      %615 = vmatpush1.msra.mxu0 0.0
      %616 = vmatprep.subr.mxu0 0.0
      %617 = vmatpush1.msra.mxu0 0.0
      %618 = vmatprep.subr.mxu0 0.0
      %619 = vmatpush1.msra.mxu0 0.0
      %620 = vmatprep.subr.mxu0 0.0
      %621 = vmatpush1.msra.mxu0 0.0
      %622 = vmatprep.subr.mxu0 0.0
      %623 = vmatpush1.msra.mxu0 0.0
      %624 = vmatprep.subr.mxu0 0.0
      %625 = vmatpush1.msra.mxu0 0.0
      %626 = vmatprep.subr.mxu0 0.0
      %627 = vmatpush1.msra.mxu0 0.0
      %628 = vmatprep.subr.mxu0 0.0
      %629 = vmatpush1.msra.mxu0 0.0
      %630 = vmatprep.subr.mxu0 0.0
      %631 = vmatpush1.msra.mxu0 0.0
      %632 = vmatprep.subr.mxu0 0.0
      %633 = vmatpush1.msra.mxu0 0.0
      %634 = vmatprep.subr.mxu0 0.0
      %635 = vmatpush1.msra.mxu0 0.0
      %636 = vmatprep.subr.mxu0 0.0
      %637 = vmatpush1.msra.mxu0 0.0
      %638 = vmatprep.subr.mxu0 0.0
      %639 = vmatpush1.msra.mxu0 0.0
      %640 = vmatprep.subr.mxu0 0.0
      %641 = vmatpush1.msra.mxu0 0.0
      %642 = vmatprep.subr.mxu0 0.0
      %643 = vmatpush1.msra.mxu0 0.0
      %644 = vmatprep.subr.mxu0 0.0
      %645 = vmatpush1.msra.mxu0 0.0
      %646 = vmatprep.subr.mxu0 0.0
      %647 = vmatpush1.msra.mxu0 0.0
      %648 = vmatprep.subr.mxu0 0.0
      %649 = vmatpush1.msra.mxu0 0.0
      %650 = vmatprep.subr.mxu0 0.0
      %651 = vmatpush1.msra.mxu0 0.0
      %652 = vmatprep.subr.mxu0 0.0
      %653 = vmatpush1.msra.mxu0 0.0
      %654 = vmatprep.subr.mxu0 0.0
      %655 = vmatpush1.msra.mxu0 0.0
      %656 = vmatprep.subr.mxu0 0.0
      %657 = vmatpush1.msra.mxu0 0.0
      %658 = vmatprep.subr.mxu0 0.0
      %659 = vmatpush1.msra.mxu0 0.0
      %660 = vmatprep.subr.mxu0 0.0
      %661 = vmatpush1.msra.mxu0 0.0
      %662 = vmatprep.subr.mxu0 0.0
      %663 = vmatpush1.msra.mxu0 0.0
      %664 = vmatprep.subr.mxu0 0.0
      %665 = vmatpush1.msra.mxu0 0.0
      %666 = vmatprep.mubr.f32.mxu0 0.0
      %667 = vmatmul.mubr.f32.gmra.mrb[0].mxu0 %v521
      %v668 = vpop.f32.mrb[0].mxu0
      %v669 = vadd.f32 %v600, %v668
      %v670 = vpop.f32.mrb[0].mxu0
      %671 = vdwg.mxu0
      %v672 = vld [vmem:[%s8] sm:$0xff]
      %v673 = vld [vmem:[%s8 + $0x8] sm:$0xff]
      %v674 = vld [vmem:[%s8 + $0x10] sm:$0xff]
      %v675 = vld [vmem:[%s8 + $0x18] sm:$0xff]
      %vm676 = vcmask 64512
      %v678 = vsel %vm676, %v508, 0
      %v681 = vsel %vm676, %v590, 0
      %683 = vmatprep.subr.mxu0 0.0
      %684 = vmatpush1.xpose.msra.mxu0 %v681
      %685 = vmatprep.subr.mxu0 0.0
      %686 = vmatpush1.xpose.msra.mxu0 0.0
      %687 = vmatprep.subr.mxu0 0.0
      %688 = vmatpush1.xpose.msra.mxu0 0.0
      %689 = vmatprep.subr.mxu0 0.0
      %690 = vmatpush1.xpose.msra.mxu0 0.0
      %691 = vmatprep.subr.mxu0 0.0
      %692 = vmatpush1.xpose.msra.mxu0 0.0
      %693 = vmatprep.subr.mxu0 0.0
      %694 = vmatpush1.xpose.msra.mxu0 0.0
      %695 = vmatprep.subr.mxu0 0.0
      %696 = vmatpush1.xpose.msra.mxu0 0.0
      %697 = vmatprep.subr.mxu0 0.0
      %698 = vmatpush1.xpose.msra.mxu0 0.0
      %699 = vmatprep.subr.mxu0 0.0
      %700 = vmatpush1.xpose.msra.mxu0 0.0
      %701 = vmatprep.subr.mxu0 0.0
      %702 = vmatpush1.xpose.msra.mxu0 0.0
      %703 = vmatprep.subr.mxu0 0.0
      %704 = vmatpush1.xpose.msra.mxu0 0.0
      %705 = vmatprep.subr.mxu0 0.0
      %706 = vmatpush1.xpose.msra.mxu0 0.0
      %707 = vmatprep.subr.mxu0 0.0
      %708 = vmatpush1.xpose.msra.mxu0 0.0
      %709 = vmatprep.subr.mxu0 0.0
      %710 = vmatpush1.xpose.msra.mxu0 0.0
      %711 = vmatprep.subr.mxu0 0.0
      %712 = vmatpush1.xpose.msra.mxu0 0.0
      %713 = vmatprep.subr.mxu0 0.0
      %714 = vmatpush1.xpose.msra.mxu0 0.0
      %715 = vmatprep.subr.mxu0 0.0
      %716 = vmatpush1.xpose.msra.mxu0 0.0
      %717 = vmatprep.subr.mxu0 0.0
      %718 = vmatpush1.xpose.msra.mxu0 0.0
      %719 = vmatprep.subr.mxu0 0.0
      %720 = vmatpush1.xpose.msra.mxu0 0.0
      %721 = vmatprep.subr.mxu0 0.0
      %722 = vmatpush1.xpose.msra.mxu0 0.0
      %723 = vmatprep.subr.mxu0 0.0
      %724 = vmatpush1.xpose.msra.mxu0 0.0
      %725 = vmatprep.subr.mxu0 0.0
      %726 = vmatpush1.xpose.msra.mxu0 0.0
      %727 = vmatprep.subr.mxu0 0.0
      %728 = vmatpush1.xpose.msra.mxu0 0.0
      %729 = vmatprep.subr.mxu0 0.0
      %730 = vmatpush1.xpose.msra.mxu0 0.0
      %731 = vmatprep.subr.mxu0 0.0
      %732 = vmatpush1.xpose.msra.mxu0 0.0
      %733 = vmatprep.subr.mxu0 0.0
      %734 = vmatpush1.xpose.msra.mxu0 0.0
      %735 = vmatprep.subr.mxu0 0.0
      %736 = vmatpush1.xpose.msra.mxu0 0.0
      %737 = vmatprep.subr.mxu0 0.0
      %738 = vmatpush1.xpose.msra.mxu0 0.0
      %739 = vmatprep.subr.mxu0 0.0
      %740 = vmatpush1.xpose.msra.mxu0 0.0
      %741 = vmatprep.subr.mxu0 0.0
      %742 = vmatpush1.xpose.msra.mxu0 0.0
      %743 = vmatprep.subr.mxu0 0.0
      %744 = vmatpush1.xpose.msra.mxu0 0.0
      %745 = vmatprep.subr.mxu0 0.0
      %746 = vmatpush1.xpose.msra.mxu0 0.0
      %747 = vmatprep.mubr.f32.mxu0 0.0
      %748 = vmatmul.mubr.f32.gmra.mrb[0].mxu0 %v678
      %v749 = vpop.f32.mrb[0].mxu0
      %v750 = vadd.f32 0.0, %v749
      %v751 = vpop.f32.mrb[0].mxu0
      %752 = vdwg.mxu0
      %v753 = vmul.f32 %v750, 0.125
      %v754 = vsel %vm676, %v753, -inf
      %755 = vmax.xlane.f32.xlu0 %v754
      %v756 = vpop.xlane.xlu0 %755
      %v757 = vsub.f32 %v753, %v756
      %v758 = vmul.f32 %v757, 1.442695
      %v759 = vpow.pop %v758
      %v760 = vsel %vm676, %v759, 0.0
      %761 = vadd.xlane.f32.xlu0 %v760
      %v762 = vpop.xlane.xlu0 %761
      %v763 = vrcp.pop %v762
      %v764 = vmul.f32 %v759, %v763
      %v766 = vsel %vm676, %v764, 0
      %768 = vmatprep.subr.mxu0 0.0
      %769 = vmatpush1.msra.mxu0 %v669
      %770 = vmatprep.subr.mxu0 0.0
      %771 = vmatpush1.msra.mxu0 0.0
      %772 = vmatprep.subr.mxu0 0.0
      %773 = vmatpush1.msra.mxu0 0.0
      %774 = vmatprep.subr.mxu0 0.0
      %775 = vmatpush1.msra.mxu0 0.0
      %776 = vmatprep.subr.mxu0 0.0
      %777 = vmatpush1.msra.mxu0 0.0
      %778 = vmatprep.subr.mxu0 0.0
      %779 = vmatpush1.msra.mxu0 0.0
      %780 = vmatprep.subr.mxu0 0.0
      %781 = vmatpush1.msra.mxu0 0.0
      %782 = vmatprep.subr.mxu0 0.0
      %783 = vmatpush1.msra.mxu0 0.0
      %784 = vmatprep.subr.mxu0 0.0
      %785 = vmatpush1.msra.mxu0 0.0
      %786 = vmatprep.subr.mxu0 0.0
      %787 = vmatpush1.msra.mxu0 0.0
      %788 = vmatprep.subr.mxu0 0.0
      %789 = vmatpush1.msra.mxu0 0.0
      %790 = vmatprep.subr.mxu0 0.0
      %791 = vmatpush1.msra.mxu0 0.0
      %792 = vmatprep.subr.mxu0 0.0
      %793 = vmatpush1.msra.mxu0 0.0
      %794 = vmatprep.subr.mxu0 0.0
      %795 = vmatpush1.msra.mxu0 0.0
      %796 = vmatprep.subr.mxu0 0.0
      %797 = vmatpush1.msra.mxu0 0.0
      %798 = vmatprep.subr.mxu0 0.0
      %799 = vmatpush1.msra.mxu0 0.0
      %800 = vmatprep.subr.mxu0 0.0
      %801 = vmatpush1.msra.mxu0 0.0
      %802 = vmatprep.subr.mxu0 0.0
      %803 = vmatpush1.msra.mxu0 0.0
      %804 = vmatprep.subr.mxu0 0.0
      %805 = vmatpush1.msra.mxu0 0.0
      %806 = vmatprep.subr.mxu0 0.0
      %807 = vmatpush1.msra.mxu0 0.0
      %808 = vmatprep.subr.mxu0 0.0
      %809 = vmatpush1.msra.mxu0 0.0
      %810 = vmatprep.subr.mxu0 0.0
      %811 = vmatpush1.msra.mxu0 0.0
      %812 = vmatprep.subr.mxu0 0.0
      %813 = vmatpush1.msra.mxu0 0.0
      %814 = vmatprep.subr.mxu0 0.0
      %815 = vmatpush1.msra.mxu0 0.0
      %816 = vmatprep.subr.mxu0 0.0
      %817 = vmatpush1.msra.mxu0 0.0
      %818 = vmatprep.subr.mxu0 0.0
      %819 = vmatpush1.msra.mxu0 0.0
      %820 = vmatprep.subr.mxu0 0.0
      %821 = vmatpush1.msra.mxu0 0.0
      %822 = vmatprep.subr.mxu0 0.0
      %823 = vmatpush1.msra.mxu0 0.0
      %824 = vmatprep.subr.mxu0 0.0
      %825 = vmatpush1.msra.mxu0 0.0
      %826 = vmatprep.subr.mxu0 0.0
      %827 = vmatpush1.msra.mxu0 0.0
      %828 = vmatprep.subr.mxu0 0.0
      %829 = vmatpush1.msra.mxu0 0.0
      %830 = vmatprep.subr.mxu0 0.0
      %831 = vmatpush1.msra.mxu0 0.0
      %832 = vmatprep.mubr.f32.mxu0 0.0
      %833 = vmatmul.mubr.f32.gmra.mrb[0].mxu0 %v766
      %v834 = vpop.f32.mrb[0].mxu0
      %v835 = vadd.f32 0.0, %v834
      %v836 = vpop.f32.mrb[0].mxu0
      %837 = vdwg.mxu0
      %838 = vrot.lane.b32.xlu0 %v508, 120
      %v839 = vpop.permute.xlu0 %838
      %840 = vrot.lane.b32.xlu0 %v590, 120
      %v841 = vpop.permute.xlu0 %840
      %v842 = vsel %vm676, %v839, 0
      %v844 = vsel %vm676, %v841, 0
      %846 = vmatprep.subr.mxu0 0.0
      %847 = vmatpush1.xpose.msra.mxu0 %v844
      %848 = vmatprep.subr.mxu0 0.0
      %849 = vmatpush1.xpose.msra.mxu0 0.0
      %850 = vmatprep.subr.mxu0 0.0
      %851 = vmatpush1.xpose.msra.mxu0 0.0
      %852 = vmatprep.subr.mxu0 0.0
      %853 = vmatpush1.xpose.msra.mxu0 0.0
      %854 = vmatprep.subr.mxu0 0.0
      %855 = vmatpush1.xpose.msra.mxu0 0.0
      %856 = vmatprep.subr.mxu0 0.0
      %857 = vmatpush1.xpose.msra.mxu0 0.0
      %858 = vmatprep.subr.mxu0 0.0
      %859 = vmatpush1.xpose.msra.mxu0 0.0
      %860 = vmatprep.subr.mxu0 0.0
      %861 = vmatpush1.xpose.msra.mxu0 0.0
      %862 = vmatprep.subr.mxu0 0.0
      %863 = vmatpush1.xpose.msra.mxu0 0.0
      %864 = vmatprep.subr.mxu0 0.0
      %865 = vmatpush1.xpose.msra.mxu0 0.0
      %866 = vmatprep.subr.mxu0 0.0
      %867 = vmatpush1.xpose.msra.mxu0 0.0
      %868 = vmatprep.subr.mxu0 0.0
      %869 = vmatpush1.xpose.msra.mxu0 0.0
      %870 = vmatprep.subr.mxu0 0.0
      %871 = vmatpush1.xpose.msra.mxu0 0.0
      %872 = vmatprep.subr.mxu0 0.0
      %873 = vmatpush1.xpose.msra.mxu0 0.0
      %874 = vmatprep.subr.mxu0 0.0
      %875 = vmatpush1.xpose.msra.mxu0 0.0
      %876 = vmatprep.subr.mxu0 0.0
      %877 = vmatpush1.xpose.msra.mxu0 0.0
      %878 = vmatprep.subr.mxu0 0.0
      %879 = vmatpush1.xpose.msra.mxu0 0.0
      %880 = vmatprep.subr.mxu0 0.0
      %881 = vmatpush1.xpose.msra.mxu0 0.0
      %882 = vmatprep.subr.mxu0 0.0
      %883 = vmatpush1.xpose.msra.mxu0 0.0
      %884 = vmatprep.subr.mxu0 0.0
      %885 = vmatpush1.xpose.msra.mxu0 0.0
      %886 = vmatprep.subr.mxu0 0.0
      %887 = vmatpush1.xpose.msra.mxu0 0.0
      %888 = vmatprep.subr.mxu0 0.0
      %889 = vmatpush1.xpose.msra.mxu0 0.0
      %890 = vmatprep.subr.mxu0 0.0
      %891 = vmatpush1.xpose.msra.mxu0 0.0
      %892 = vmatprep.subr.mxu0 0.0
      %893 = vmatpush1.xpose.msra.mxu0 0.0
      %894 = vmatprep.subr.mxu0 0.0
      %895 = vmatpush1.xpose.msra.mxu0 0.0
      %896 = vmatprep.subr.mxu0 0.0
      %897 = vmatpush1.xpose.msra.mxu0 0.0
      %898 = vmatprep.subr.mxu0 0.0
      %899 = vmatpush1.xpose.msra.mxu0 0.0
      %900 = vmatprep.subr.mxu0 0.0
      %901 = vmatpush1.xpose.msra.mxu0 0.0
      %902 = vmatprep.subr.mxu0 0.0
      %903 = vmatpush1.xpose.msra.mxu0 0.0
      %904 = vmatprep.subr.mxu0 0.0
      %905 = vmatpush1.xpose.msra.mxu0 0.0
      %906 = vmatprep.subr.mxu0 0.0
      %907 = vmatpush1.xpose.msra.mxu0 0.0
      %908 = vmatprep.subr.mxu0 0.0
      %909 = vmatpush1.xpose.msra.mxu0 0.0
      %910 = vmatprep.mubr.f32.mxu0 0.0
      %911 = vmatmul.mubr.f32.gmra.mrb[0].mxu0 %v842
      %v912 = vpop.f32.mrb[0].mxu0
      %v913 = vadd.f32 0.0, %v912
      %v914 = vpop.f32.mrb[0].mxu0
      %915 = vdwg.mxu0
      %v916 = vmul.f32 %v913, 0.125
      %v917 = vsel %vm676, %v916, -inf
      %918 = vmax.xlane.f32.xlu0 %v917
      %v919 = vpop.xlane.xlu0 %918
      %v920 = vsub.f32 %v916, %v919
      %v921 = vmul.f32 %v920, 1.442695
      %v922 = vpow.pop %v921
      %v923 = vsel %vm676, %v922, 0.0
      %924 = vadd.xlane.f32.xlu0 %v923
      %v925 = vpop.xlane.xlu0 %924
      %v926 = vrcp.pop %v925
      %v927 = vmul.f32 %v922, %v926
      %929 = vrot.lane.b32.xlu0 %v669, 120
      %v930 = vpop.permute.xlu0 %929
      %v933 = vsel %vm676, %v927, 0
      %935 = vmatprep.subr.mxu0 0.0
      %936 = vmatpush1.msra.mxu0 %v930
      %937 = vmatprep.subr.mxu0 0.0
      %938 = vmatpush1.msra.mxu0 0.0
      %939 = vmatprep.subr.mxu0 0.0
      %940 = vmatpush1.msra.mxu0 0.0
      %941 = vmatprep.subr.mxu0 0.0
      %942 = vmatpush1.msra.mxu0 0.0
      %943 = vmatprep.subr.mxu0 0.0
      %944 = vmatpush1.msra.mxu0 0.0
      %945 = vmatprep.subr.mxu0 0.0
      %946 = vmatpush1.msra.mxu0 0.0
      %947 = vmatprep.subr.mxu0 0.0
      %948 = vmatpush1.msra.mxu0 0.0
      %949 = vmatprep.subr.mxu0 0.0
      %950 = vmatpush1.msra.mxu0 0.0
      %951 = vmatprep.subr.mxu0 0.0
      %952 = vmatpush1.msra.mxu0 0.0
      %953 = vmatprep.subr.mxu0 0.0
      %954 = vmatpush1.msra.mxu0 0.0
      %955 = vmatprep.subr.mxu0 0.0
      %956 = vmatpush1.msra.mxu0 0.0
      %957 = vmatprep.subr.mxu0 0.0
      %958 = vmatpush1.msra.mxu0 0.0
      %959 = vmatprep.subr.mxu0 0.0
      %960 = vmatpush1.msra.mxu0 0.0
      %961 = vmatprep.subr.mxu0 0.0
      %962 = vmatpush1.msra.mxu0 0.0
      %963 = vmatprep.subr.mxu0 0.0
      %964 = vmatpush1.msra.mxu0 0.0
      %965 = vmatprep.subr.mxu0 0.0
      %966 = vmatpush1.msra.mxu0 0.0
      %967 = vmatprep.subr.mxu0 0.0
      %968 = vmatpush1.msra.mxu0 0.0
      %969 = vmatprep.subr.mxu0 0.0
      %970 = vmatpush1.msra.mxu0 0.0
      %971 = vmatprep.subr.mxu0 0.0
      %972 = vmatpush1.msra.mxu0 0.0
      %973 = vmatprep.subr.mxu0 0.0
      %974 = vmatpush1.msra.mxu0 0.0
      %975 = vmatprep.subr.mxu0 0.0
      %976 = vmatpush1.msra.mxu0 0.0
      %977 = vmatprep.subr.mxu0 0.0
      %978 = vmatpush1.msra.mxu0 0.0
      %979 = vmatprep.subr.mxu0 0.0
      %980 = vmatpush1.msra.mxu0 0.0
      %981 = vmatprep.subr.mxu0 0.0
      %982 = vmatpush1.msra.mxu0 0.0
      %983 = vmatprep.subr.mxu0 0.0
      %984 = vmatpush1.msra.mxu0 0.0
      %985 = vmatprep.subr.mxu0 0.0
      %986 = vmatpush1.msra.mxu0 0.0
      %987 = vmatprep.subr.mxu0 0.0
      %988 = vmatpush1.msra.mxu0 0.0
      %989 = vmatprep.subr.mxu0 0.0
      %990 = vmatpush1.msra.mxu0 0.0
      %991 = vmatprep.subr.mxu0 0.0
      %992 = vmatpush1.msra.mxu0 0.0
      %993 = vmatprep.subr.mxu0 0.0
      %994 = vmatpush1.msra.mxu0 0.0
      %995 = vmatprep.subr.mxu0 0.0
      %996 = vmatpush1.msra.mxu0 0.0
      %997 = vmatprep.subr.mxu0 0.0
      %998 = vmatpush1.msra.mxu0 0.0
      %999 = vmatprep.mubr.f32.mxu0 0.0
      %1000 = vmatmul.mubr.f32.gmra.mrb[0].mxu0 %v933
      %v1001 = vpop.f32.mrb[0].mxu0
      %v1002 = vadd.f32 0.0, %v1001
      %v1003 = vpop.f32.mrb[0].mxu0
      %1004 = vdwg.mxu0
      %v1006 = vsel %vm676, %v1002, 0
      %1008 = vmatprep.subr.mxu0 0.0
      %1009 = vmatpush1.msra.mxu0 %v673
      %1010 = vmatprep.subr.mxu0 0.0
      %1011 = vmatpush1.msra.mxu0 0.0
      %1012 = vmatprep.subr.mxu0 0.0
      %1013 = vmatpush1.msra.mxu0 0.0
      %1014 = vmatprep.subr.mxu0 0.0
      %1015 = vmatpush1.msra.mxu0 0.0
      %1016 = vmatprep.subr.mxu0 0.0
      %1017 = vmatpush1.msra.mxu0 0.0
      %1018 = vmatprep.subr.mxu0 0.0
      %1019 = vmatpush1.msra.mxu0 0.0
      %1020 = vmatprep.subr.mxu0 0.0
      %1021 = vmatpush1.msra.mxu0 0.0
      %1022 = vmatprep.subr.mxu0 0.0
      %1023 = vmatpush1.msra.mxu0 0.0
      %1024 = vmatprep.subr.mxu0 0.0
      %1025 = vmatpush1.msra.mxu0 0.0
      %1026 = vmatprep.subr.mxu0 0.0
      %1027 = vmatpush1.msra.mxu0 0.0
      %1028 = vmatprep.subr.mxu0 0.0
      %1029 = vmatpush1.msra.mxu0 0.0
      %1030 = vmatprep.subr.mxu0 0.0
      %1031 = vmatpush1.msra.mxu0 0.0
      %1032 = vmatprep.subr.mxu0 0.0
      %1033 = vmatpush1.msra.mxu0 0.0
      %1034 = vmatprep.subr.mxu0 0.0
      %1035 = vmatpush1.msra.mxu0 0.0
      %1036 = vmatprep.subr.mxu0 0.0
      %1037 = vmatpush1.msra.mxu0 0.0
      %1038 = vmatprep.subr.mxu0 0.0
      %1039 = vmatpush1.msra.mxu0 0.0
      %1040 = vmatprep.subr.mxu0 0.0
      %1041 = vmatpush1.msra.mxu0 0.0
      %1042 = vmatprep.subr.mxu0 0.0
      %1043 = vmatpush1.msra.mxu0 0.0
      %1044 = vmatprep.subr.mxu0 0.0
      %1045 = vmatpush1.msra.mxu0 0.0
      %1046 = vmatprep.subr.mxu0 0.0
      %1047 = vmatpush1.msra.mxu0 0.0
      %1048 = vmatprep.subr.mxu0 0.0
      %1049 = vmatpush1.msra.mxu0 0.0
      %1050 = vmatprep.subr.mxu0 0.0
      %1051 = vmatpush1.msra.mxu0 0.0
      %1052 = vmatprep.subr.mxu0 0.0
      %1053 = vmatpush1.msra.mxu0 0.0
      %1054 = vmatprep.subr.mxu0 0.0
      %1055 = vmatpush1.msra.mxu0 0.0
      %1056 = vmatprep.subr.mxu0 0.0
      %1057 = vmatpush1.msra.mxu0 0.0
      %1058 = vmatprep.subr.mxu0 0.0
      %1059 = vmatpush1.msra.mxu0 0.0
      %1060 = vmatprep.subr.mxu0 0.0
      %1061 = vmatpush1.msra.mxu0 0.0
      %1062 = vmatprep.subr.mxu0 0.0
      %1063 = vmatpush1.msra.mxu0 0.0
      %1064 = vmatprep.subr.mxu0 0.0
      %1065 = vmatpush1.msra.mxu0 0.0
      %1066 = vmatprep.subr.mxu0 0.0
      %1067 = vmatpush1.msra.mxu0 0.0
      %1068 = vmatprep.subr.mxu0 0.0
      %1069 = vmatpush1.msra.mxu0 0.0
      %1070 = vmatprep.subr.mxu0 0.0
      %1071 = vmatpush1.msra.mxu0 0.0
      %1072 = vmatprep.mubr.f32.mxu0 0.0
      %1073 = vmatmul.mubr.f32.gmra.mrb[0].mxu0 %v1006
      %v1074 = vpop.f32.mrb[0].mxu0
      %v1075 = vadd.f32 0.0, %v1074
      %v1076 = vpop.f32.mrb[0].mxu0
      %1077 = vdwg.mxu0
      %v1079 = vsel %vm676, %v835, 0
      %1081 = vmatprep.subr.mxu0 0.0
      %1082 = vmatpush1.msra.mxu0 %v672
      %1083 = vmatprep.subr.mxu0 0.0
      %1084 = vmatpush1.msra.mxu0 0.0
      %1085 = vmatprep.subr.mxu0 0.0
      %1086 = vmatpush1.msra.mxu0 0.0
      %1087 = vmatprep.subr.mxu0 0.0
      %1088 = vmatpush1.msra.mxu0 0.0
      %1089 = vmatprep.subr.mxu0 0.0
      %1090 = vmatpush1.msra.mxu0 0.0
      %1091 = vmatprep.subr.mxu0 0.0
      %1092 = vmatpush1.msra.mxu0 0.0
      %1093 = vmatprep.subr.mxu0 0.0
      %1094 = vmatpush1.msra.mxu0 0.0
      %1095 = vmatprep.subr.mxu0 0.0
      %1096 = vmatpush1.msra.mxu0 0.0
      %1097 = vmatprep.subr.mxu0 0.0
      %1098 = vmatpush1.msra.mxu0 0.0
      %1099 = vmatprep.subr.mxu0 0.0
      %1100 = vmatpush1.msra.mxu0 0.0
      %1101 = vmatprep.subr.mxu0 0.0
      %1102 = vmatpush1.msra.mxu0 0.0
      %1103 = vmatprep.subr.mxu0 0.0
      %1104 = vmatpush1.msra.mxu0 0.0
      %1105 = vmatprep.subr.mxu0 0.0
      %1106 = vmatpush1.msra.mxu0 0.0
      %1107 = vmatprep.subr.mxu0 0.0
      %1108 = vmatpush1.msra.mxu0 0.0
      %1109 = vmatprep.subr.mxu0 0.0
      %1110 = vmatpush1.msra.mxu0 0.0
      %1111 = vmatprep.subr.mxu0 0.0
      %1112 = vmatpush1.msra.mxu0 0.0
      %1113 = vmatprep.subr.mxu0 0.0
      %1114 = vmatpush1.msra.mxu0 0.0
      %1115 = vmatprep.subr.mxu0 0.0
      %1116 = vmatpush1.msra.mxu0 0.0
      %1117 = vmatprep.subr.mxu0 0.0
      %1118 = vmatpush1.msra.mxu0 0.0
      %1119 = vmatprep.subr.mxu0 0.0
      %1120 = vmatpush1.msra.mxu0 0.0
      %1121 = vmatprep.subr.mxu0 0.0
      %1122 = vmatpush1.msra.mxu0 0.0
      %1123 = vmatprep.subr.mxu0 0.0
      %1124 = vmatpush1.msra.mxu0 0.0
      %1125 = vmatprep.subr.mxu0 0.0
      %1126 = vmatpush1.msra.mxu0 0.0
      %1127 = vmatprep.subr.mxu0 0.0
      %1128 = vmatpush1.msra.mxu0 0.0
      %1129 = vmatprep.subr.mxu0 0.0
      %1130 = vmatpush1.msra.mxu0 0.0
      %1131 = vmatprep.subr.mxu0 0.0
      %1132 = vmatpush1.msra.mxu0 0.0
      %1133 = vmatprep.subr.mxu0 0.0
      %1134 = vmatpush1.msra.mxu0 0.0
      %1135 = vmatprep.subr.mxu0 0.0
      %1136 = vmatpush1.msra.mxu0 0.0
      %1137 = vmatprep.subr.mxu0 0.0
      %1138 = vmatpush1.msra.mxu0 0.0
      %1139 = vmatprep.subr.mxu0 0.0
      %1140 = vmatpush1.msra.mxu0 0.0
      %1141 = vmatprep.subr.mxu0 0.0
      %1142 = vmatpush1.msra.mxu0 0.0
      %1143 = vmatprep.subr.mxu0 0.0
      %1144 = vmatpush1.msra.mxu0 0.0
      %1145 = vmatprep.mubr.f32.mxu0 0.0
      %1146 = vmatmul.mubr.f32.gmra.mrb[0].mxu0 %v1079
      %v1147 = vpop.f32.mrb[0].mxu0
      %v1148 = vadd.f32 %v1075, %v1147
      %v1149 = vpop.f32.mrb[0].mxu0
      %1150 = vdwg.mxu0
      %1151 = vrot.lane.b32.xlu0 %v508, 112
      %v1152 = vpop.permute.xlu0 %1151
      %1153 = vrot.lane.b32.xlu0 %v590, 112
      %v1154 = vpop.permute.xlu0 %1153
      %v1155 = vsel %vm676, %v1152, 0
      %v1157 = vsel %vm676, %v1154, 0
      %1159 = vmatprep.subr.mxu0 0.0
      %1160 = vmatpush1.xpose.msra.mxu0 %v1157
      %1161 = vmatprep.subr.mxu0 0.0
      %1162 = vmatpush1.xpose.msra.mxu0 0.0
      %1163 = vmatprep.subr.mxu0 0.0
      %1164 = vmatpush1.xpose.msra.mxu0 0.0
      %1165 = vmatprep.subr.mxu0 0.0
      %1166 = vmatpush1.xpose.msra.mxu0 0.0
      %1167 = vmatprep.subr.mxu0 0.0
      %1168 = vmatpush1.xpose.msra.mxu0 0.0
      %1169 = vmatprep.subr.mxu0 0.0
      %1170 = vmatpush1.xpose.msra.mxu0 0.0
      %1171 = vmatprep.subr.mxu0 0.0
      %1172 = vmatpush1.xpose.msra.mxu0 0.0
      %1173 = vmatprep.subr.mxu0 0.0
      %1174 = vmatpush1.xpose.msra.mxu0 0.0
      %1175 = vmatprep.subr.mxu0 0.0
      %1176 = vmatpush1.xpose.msra.mxu0 0.0
      %1177 = vmatprep.subr.mxu0 0.0
      %1178 = vmatpush1.xpose.msra.mxu0 0.0
      %1179 = vmatprep.subr.mxu0 0.0
      %1180 = vmatpush1.xpose.msra.mxu0 0.0
      %1181 = vmatprep.subr.mxu0 0.0
      %1182 = vmatpush1.xpose.msra.mxu0 0.0
      %1183 = vmatprep.subr.mxu0 0.0
      %1184 = vmatpush1.xpose.msra.mxu0 0.0
      %1185 = vmatprep.subr.mxu0 0.0
      %1186 = vmatpush1.xpose.msra.mxu0 0.0
      %1187 = vmatprep.subr.mxu0 0.0
      %1188 = vmatpush1.xpose.msra.mxu0 0.0
      %1189 = vmatprep.subr.mxu0 0.0
      %1190 = vmatpush1.xpose.msra.mxu0 0.0
      %1191 = vmatprep.subr.mxu0 0.0
      %1192 = vmatpush1.xpose.msra.mxu0 0.0
      %1193 = vmatprep.subr.mxu0 0.0
      %1194 = vmatpush1.xpose.msra.mxu0 0.0
      %1195 = vmatprep.subr.mxu0 0.0
      %1196 = vmatpush1.xpose.msra.mxu0 0.0
      %1197 = vmatprep.subr.mxu0 0.0
      %1198 = vmatpush1.xpose.msra.mxu0 0.0
      %1199 = vmatprep.subr.mxu0 0.0
      %1200 = vmatpush1.xpose.msra.mxu0 0.0
      %1201 = vmatprep.subr.mxu0 0.0
      %1202 = vmatpush1.xpose.msra.mxu0 0.0
      %1203 = vmatprep.subr.mxu0 0.0
      %1204 = vmatpush1.xpose.msra.mxu0 0.0
      %1205 = vmatprep.subr.mxu0 0.0
      %1206 = vmatpush1.xpose.msra.mxu0 0.0
      %1207 = vmatprep.subr.mxu0 0.0
      %1208 = vmatpush1.xpose.msra.mxu0 0.0
      %1209 = vmatprep.subr.mxu0 0.0
      %1210 = vmatpush1.xpose.msra.mxu0 0.0
      %1211 = vmatprep.subr.mxu0 0.0
      %1212 = vmatpush1.xpose.msra.mxu0 0.0
      %1213 = vmatprep.subr.mxu0 0.0
      %1214 = vmatpush1.xpose.msra.mxu0 0.0
      %1215 = vmatprep.subr.mxu0 0.0
      %1216 = vmatpush1.xpose.msra.mxu0 0.0
      %1217 = vmatprep.subr.mxu0 0.0
      %1218 = vmatpush1.xpose.msra.mxu0 0.0
      %1219 = vmatprep.subr.mxu0 0.0
      %1220 = vmatpush1.xpose.msra.mxu0 0.0
      %1221 = vmatprep.subr.mxu0 0.0
      %1222 = vmatpush1.xpose.msra.mxu0 0.0
      %1223 = vmatprep.mubr.f32.mxu0 0.0
      %1224 = vmatmul.mubr.f32.gmra.mrb[0].mxu0 %v1155
      %v1225 = vpop.f32.mrb[0].mxu0
      %v1226 = vadd.f32 0.0, %v1225
      %v1227 = vpop.f32.mrb[0].mxu0
      %1228 = vdwg.mxu0
      %v1229 = vmul.f32 %v1226, 0.125
      %v1230 = vsel %vm676, %v1229, -inf
      %1231 = vmax.xlane.f32.xlu0 %v1230
      %v1232 = vpop.xlane.xlu0 %1231
      %v1233 = vsub.f32 %v1229, %v1232
      %v1234 = vmul.f32 %v1233, 1.442695
      %v1235 = vpow.pop %v1234
      %v1236 = vsel %vm676, %v1235, 0.0
      %1237 = vadd.xlane.f32.xlu0 %v1236
      %v1238 = vpop.xlane.xlu0 %1237
      %v1239 = vrcp.pop %v1238
      %v1240 = vmul.f32 %v1235, %v1239
      %1241 = vrot.lane.b32.xlu0 %v669, 112
      %v1242 = vpop.permute.xlu0 %1241
      %v1245 = vsel %vm676, %v1240, 0
      %1247 = vmatprep.subr.mxu0 0.0
      %1248 = vmatpush1.msra.mxu0 %v1242
      %1249 = vmatprep.subr.mxu0 0.0
      %1250 = vmatpush1.msra.mxu0 0.0
      %1251 = vmatprep.subr.mxu0 0.0
      %1252 = vmatpush1.msra.mxu0 0.0
      %1253 = vmatprep.subr.mxu0 0.0
      %1254 = vmatpush1.msra.mxu0 0.0
      %1255 = vmatprep.subr.mxu0 0.0
      %1256 = vmatpush1.msra.mxu0 0.0
      %1257 = vmatprep.subr.mxu0 0.0
      %1258 = vmatpush1.msra.mxu0 0.0
      %1259 = vmatprep.subr.mxu0 0.0
      %1260 = vmatpush1.msra.mxu0 0.0
      %1261 = vmatprep.subr.mxu0 0.0
      %1262 = vmatpush1.msra.mxu0 0.0
      %1263 = vmatprep.subr.mxu0 0.0
      %1264 = vmatpush1.msra.mxu0 0.0
      %1265 = vmatprep.subr.mxu0 0.0
      %1266 = vmatpush1.msra.mxu0 0.0
      %1267 = vmatprep.subr.mxu0 0.0
      %1268 = vmatpush1.msra.mxu0 0.0
      %1269 = vmatprep.subr.mxu0 0.0
      %1270 = vmatpush1.msra.mxu0 0.0
      %1271 = vmatprep.subr.mxu0 0.0
      %1272 = vmatpush1.msra.mxu0 0.0
      %1273 = vmatprep.subr.mxu0 0.0
      %1274 = vmatpush1.msra.mxu0 0.0
      %1275 = vmatprep.subr.mxu0 0.0
      %1276 = vmatpush1.msra.mxu0 0.0
      %1277 = vmatprep.subr.mxu0 0.0
      %1278 = vmatpush1.msra.mxu0 0.0
      %1279 = vmatprep.subr.mxu0 0.0
      %1280 = vmatpush1.msra.mxu0 0.0
      %1281 = vmatprep.subr.mxu0 0.0
      %1282 = vmatpush1.msra.mxu0 0.0
      %1283 = vmatprep.subr.mxu0 0.0
      %1284 = vmatpush1.msra.mxu0 0.0
      %1285 = vmatprep.subr.mxu0 0.0
      %1286 = vmatpush1.msra.mxu0 0.0
      %1287 = vmatprep.subr.mxu0 0.0
      %1288 = vmatpush1.msra.mxu0 0.0
      %1289 = vmatprep.subr.mxu0 0.0
      %1290 = vmatpush1.msra.mxu0 0.0
      %1291 = vmatprep.subr.mxu0 0.0
      %1292 = vmatpush1.msra.mxu0 0.0
      %1293 = vmatprep.subr.mxu0 0.0
      %1294 = vmatpush1.msra.mxu0 0.0
      %1295 = vmatprep.subr.mxu0 0.0
      %1296 = vmatpush1.msra.mxu0 0.0
      %1297 = vmatprep.subr.mxu0 0.0
      %1298 = vmatpush1.msra.mxu0 0.0
      %1299 = vmatprep.subr.mxu0 0.0
      %1300 = vmatpush1.msra.mxu0 0.0
      %1301 = vmatprep.subr.mxu0 0.0
      %1302 = vmatpush1.msra.mxu0 0.0
      %1303 = vmatprep.subr.mxu0 0.0
      %1304 = vmatpush1.msra.mxu0 0.0
      %1305 = vmatprep.subr.mxu0 0.0
      %1306 = vmatpush1.msra.mxu0 0.0
      %1307 = vmatprep.subr.mxu0 0.0
      %1308 = vmatpush1.msra.mxu0 0.0
      %1309 = vmatprep.subr.mxu0 0.0
      %1310 = vmatpush1.msra.mxu0 0.0
      %1311 = vmatprep.mubr.f32.mxu0 0.0
      %1312 = vmatmul.mubr.f32.gmra.mrb[0].mxu0 %v1245
      %v1313 = vpop.f32.mrb[0].mxu0
      %v1314 = vadd.f32 0.0, %v1313
      %v1315 = vpop.f32.mrb[0].mxu0
      %1316 = vdwg.mxu0
      %v1318 = vsel %vm676, %v1314, 0
      %1320 = vmatprep.subr.mxu0 0.0
      %1321 = vmatpush1.msra.mxu0 %v674
      %1322 = vmatprep.subr.mxu0 0.0
      %1323 = vmatpush1.msra.mxu0 0.0
      %1324 = vmatprep.subr.mxu0 0.0
      %1325 = vmatpush1.msra.mxu0 0.0
      %1326 = vmatprep.subr.mxu0 0.0
      %1327 = vmatpush1.msra.mxu0 0.0
      %1328 = vmatprep.subr.mxu0 0.0
      %1329 = vmatpush1.msra.mxu0 0.0
      %1330 = vmatprep.subr.mxu0 0.0
      %1331 = vmatpush1.msra.mxu0 0.0
      %1332 = vmatprep.subr.mxu0 0.0
      %1333 = vmatpush1.msra.mxu0 0.0
      %1334 = vmatprep.subr.mxu0 0.0
      %1335 = vmatpush1.msra.mxu0 0.0
      %1336 = vmatprep.subr.mxu0 0.0
      %1337 = vmatpush1.msra.mxu0 0.0
      %1338 = vmatprep.subr.mxu0 0.0
      %1339 = vmatpush1.msra.mxu0 0.0
      %1340 = vmatprep.subr.mxu0 0.0
      %1341 = vmatpush1.msra.mxu0 0.0
      %1342 = vmatprep.subr.mxu0 0.0
      %1343 = vmatpush1.msra.mxu0 0.0
      %1344 = vmatprep.subr.mxu0 0.0
      %1345 = vmatpush1.msra.mxu0 0.0
      %1346 = vmatprep.subr.mxu0 0.0
      %1347 = vmatpush1.msra.mxu0 0.0
      %1348 = vmatprep.subr.mxu0 0.0
      %1349 = vmatpush1.msra.mxu0 0.0
      %1350 = vmatprep.subr.mxu0 0.0
      %1351 = vmatpush1.msra.mxu0 0.0
      %1352 = vmatprep.subr.mxu0 0.0
      %1353 = vmatpush1.msra.mxu0 0.0
      %1354 = vmatprep.subr.mxu0 0.0
      %1355 = vmatpush1.msra.mxu0 0.0
      %1356 = vmatprep.subr.mxu0 0.0
      %1357 = vmatpush1.msra.mxu0 0.0
      %1358 = vmatprep.subr.mxu0 0.0
      %1359 = vmatpush1.msra.mxu0 0.0
      %1360 = vmatprep.subr.mxu0 0.0
      %1361 = vmatpush1.msra.mxu0 0.0
      %1362 = vmatprep.subr.mxu0 0.0
      %1363 = vmatpush1.msra.mxu0 0.0
      %1364 = vmatprep.subr.mxu0 0.0
      %1365 = vmatpush1.msra.mxu0 0.0
      %1366 = vmatprep.subr.mxu0 0.0
      %1367 = vmatpush1.msra.mxu0 0.0
      %1368 = vmatprep.subr.mxu0 0.0
      %1369 = vmatpush1.msra.mxu0 0.0
      %1370 = vmatprep.subr.mxu0 0.0
      %1371 = vmatpush1.msra.mxu0 0.0
      %1372 = vmatprep.subr.mxu0 0.0
      %1373 = vmatpush1.msra.mxu0 0.0
      %1374 = vmatprep.subr.mxu0 0.0
      %1375 = vmatpush1.msra.mxu0 0.0
      %1376 = vmatprep.subr.mxu0 0.0
      %1377 = vmatpush1.msra.mxu0 0.0
      %1378 = vmatprep.subr.mxu0 0.0
      %1379 = vmatpush1.msra.mxu0 0.0
      %1380 = vmatprep.subr.mxu0 0.0
      %1381 = vmatpush1.msra.mxu0 0.0
      %1382 = vmatprep.subr.mxu0 0.0
      %1383 = vmatpush1.msra.mxu0 0.0
      %1384 = vmatprep.mubr.f32.mxu0 0.0
      %1385 = vmatmul.mubr.f32.gmra.mrb[0].mxu0 %v1318
      %v1386 = vpop.f32.mrb[0].mxu0
      %v1387 = vadd.f32 0.0, %v1386
      %v1388 = vpop.f32.mrb[0].mxu0
      %1389 = vdwg.mxu0
      %v1390 = vadd.f32 %v1148, %v1387
      %1391 = vrot.lane.b32.xlu0 %v508, 104
      %v1392 = vpop.permute.xlu0 %1391
      %1393 = vrot.lane.b32.xlu0 %v590, 104
      %v1394 = vpop.permute.xlu0 %1393
      %v1395 = vsel %vm676, %v1392, 0
      %v1397 = vsel %vm676, %v1394, 0
      %1399 = vmatprep.subr.mxu0 0.0
      %1400 = vmatpush1.xpose.msra.mxu0 %v1397
      %1401 = vmatprep.subr.mxu0 0.0
      %1402 = vmatpush1.xpose.msra.mxu0 0.0
      %1403 = vmatprep.subr.mxu0 0.0
      %1404 = vmatpush1.xpose.msra.mxu0 0.0
      %1405 = vmatprep.subr.mxu0 0.0
      %1406 = vmatpush1.xpose.msra.mxu0 0.0
      %1407 = vmatprep.subr.mxu0 0.0
      %1408 = vmatpush1.xpose.msra.mxu0 0.0
      %1409 = vmatprep.subr.mxu0 0.0
      %1410 = vmatpush1.xpose.msra.mxu0 0.0
      %1411 = vmatprep.subr.mxu0 0.0
      %1412 = vmatpush1.xpose.msra.mxu0 0.0
      %1413 = vmatprep.subr.mxu0 0.0
      %1414 = vmatpush1.xpose.msra.mxu0 0.0
      %1415 = vmatprep.subr.mxu0 0.0
      %1416 = vmatpush1.xpose.msra.mxu0 0.0
      %1417 = vmatprep.subr.mxu0 0.0
      %1418 = vmatpush1.xpose.msra.mxu0 0.0
      %1419 = vmatprep.subr.mxu0 0.0
      %1420 = vmatpush1.xpose.msra.mxu0 0.0
      %1421 = vmatprep.subr.mxu0 0.0
      %1422 = vmatpush1.xpose.msra.mxu0 0.0
      %1423 = vmatprep.subr.mxu0 0.0
      %1424 = vmatpush1.xpose.msra.mxu0 0.0
      %1425 = vmatprep.subr.mxu0 0.0
      %1426 = vmatpush1.xpose.msra.mxu0 0.0
      %1427 = vmatprep.subr.mxu0 0.0
      %1428 = vmatpush1.xpose.msra.mxu0 0.0
      %1429 = vmatprep.subr.mxu0 0.0
      %1430 = vmatpush1.xpose.msra.mxu0 0.0
      %1431 = vmatprep.subr.mxu0 0.0
      %1432 = vmatpush1.xpose.msra.mxu0 0.0
      %1433 = vmatprep.subr.mxu0 0.0
      %1434 = vmatpush1.xpose.msra.mxu0 0.0
      %1435 = vmatprep.subr.mxu0 0.0
      %1436 = vmatpush1.xpose.msra.mxu0 0.0
      %1437 = vmatprep.subr.mxu0 0.0
      %1438 = vmatpush1.xpose.msra.mxu0 0.0
      %1439 = vmatprep.subr.mxu0 0.0
      %1440 = vmatpush1.xpose.msra.mxu0 0.0
      %1441 = vmatprep.subr.mxu0 0.0
      %1442 = vmatpush1.xpose.msra.mxu0 0.0
      %1443 = vmatprep.subr.mxu0 0.0
      %1444 = vmatpush1.xpose.msra.mxu0 0.0
      %1445 = vmatprep.subr.mxu0 0.0
      %1446 = vmatpush1.xpose.msra.mxu0 0.0
      %1447 = vmatprep.subr.mxu0 0.0
      %1448 = vmatpush1.xpose.msra.mxu0 0.0
      %1449 = vmatprep.subr.mxu0 0.0
      %1450 = vmatpush1.xpose.msra.mxu0 0.0
      %1451 = vmatprep.subr.mxu0 0.0
      %1452 = vmatpush1.xpose.msra.mxu0 0.0
      %1453 = vmatprep.subr.mxu0 0.0
      %1454 = vmatpush1.xpose.msra.mxu0 0.0
      %1455 = vmatprep.subr.mxu0 0.0
      %1456 = vmatpush1.xpose.msra.mxu0 0.0
      %1457 = vmatprep.subr.mxu0 0.0
      %1458 = vmatpush1.xpose.msra.mxu0 0.0
      %1459 = vmatprep.subr.mxu0 0.0
      %1460 = vmatpush1.xpose.msra.mxu0 0.0
      %1461 = vmatprep.subr.mxu0 0.0
      %1462 = vmatpush1.xpose.msra.mxu0 0.0
      %1463 = vmatprep.mubr.f32.mxu0 0.0
      %1464 = vmatmul.mubr.f32.gmra.mrb[0].mxu0 %v1395
      %v1465 = vpop.f32.mrb[0].mxu0
      %v1466 = vadd.f32 0.0, %v1465
      %v1467 = vpop.f32.mrb[0].mxu0
      %1468 = vdwg.mxu0
      %v1469 = vmul.f32 %v1466, 0.125
      %v1470 = vsel %vm676, %v1469, -inf
      %1471 = vmax.xlane.f32.xlu0 %v1470
      %v1472 = vpop.xlane.xlu0 %1471
      %v1473 = vsub.f32 %v1469, %v1472
      %v1474 = vmul.f32 %v1473, 1.442695
      %v1475 = vpow.pop %v1474
      %v1476 = vsel %vm676, %v1475, 0.0
      %1477 = vadd.xlane.f32.xlu0 %v1476
      %v1478 = vpop.xlane.xlu0 %1477
      %v1479 = vrcp.pop %v1478
      %v1480 = vmul.f32 %v1475, %v1479
      %1481 = vrot.lane.b32.xlu0 %v669, 104
      %v1482 = vpop.permute.xlu0 %1481
      %v1485 = vsel %vm676, %v1480, 0
      %1487 = vmatprep.subr.mxu0 0.0
      %1488 = vmatpush1.msra.mxu0 %v1482
      %1489 = vmatprep.subr.mxu0 0.0
      %1490 = vmatpush1.msra.mxu0 0.0
      %1491 = vmatprep.subr.mxu0 0.0
      %1492 = vmatpush1.msra.mxu0 0.0
      %1493 = vmatprep.subr.mxu0 0.0
      %1494 = vmatpush1.msra.mxu0 0.0
      %1495 = vmatprep.subr.mxu0 0.0
      %1496 = vmatpush1.msra.mxu0 0.0
      %1497 = vmatprep.subr.mxu0 0.0
      %1498 = vmatpush1.msra.mxu0 0.0
      %1499 = vmatprep.subr.mxu0 0.0
      %1500 = vmatpush1.msra.mxu0 0.0
      %1501 = vmatprep.subr.mxu0 0.0
      %1502 = vmatpush1.msra.mxu0 0.0
      %1503 = vmatprep.subr.mxu0 0.0
      %1504 = vmatpush1.msra.mxu0 0.0
      %1505 = vmatprep.subr.mxu0 0.0
      %1506 = vmatpush1.msra.mxu0 0.0
      %1507 = vmatprep.subr.mxu0 0.0
      %1508 = vmatpush1.msra.mxu0 0.0
      %1509 = vmatprep.subr.mxu0 0.0
      %1510 = vmatpush1.msra.mxu0 0.0
      %1511 = vmatprep.subr.mxu0 0.0
      %1512 = vmatpush1.msra.mxu0 0.0
      %1513 = vmatprep.subr.mxu0 0.0
      %1514 = vmatpush1.msra.mxu0 0.0
      %1515 = vmatprep.subr.mxu0 0.0
      %1516 = vmatpush1.msra.mxu0 0.0
      %1517 = vmatprep.subr.mxu0 0.0
      %1518 = vmatpush1.msra.mxu0 0.0
      %1519 = vmatprep.subr.mxu0 0.0
      %1520 = vmatpush1.msra.mxu0 0.0
      %1521 = vmatprep.subr.mxu0 0.0
      %1522 = vmatpush1.msra.mxu0 0.0
      %1523 = vmatprep.subr.mxu0 0.0
      %1524 = vmatpush1.msra.mxu0 0.0
      %1525 = vmatprep.subr.mxu0 0.0
      %1526 = vmatpush1.msra.mxu0 0.0
      %1527 = vmatprep.subr.mxu0 0.0
      %1528 = vmatpush1.msra.mxu0 0.0
      %1529 = vmatprep.subr.mxu0 0.0
      %1530 = vmatpush1.msra.mxu0 0.0
      %1531 = vmatprep.subr.mxu0 0.0
      %1532 = vmatpush1.msra.mxu0 0.0
      %1533 = vmatprep.subr.mxu0 0.0
      %1534 = vmatpush1.msra.mxu0 0.0
      %1535 = vmatprep.subr.mxu0 0.0
      %1536 = vmatpush1.msra.mxu0 0.0
      %1537 = vmatprep.subr.mxu0 0.0
      %1538 = vmatpush1.msra.mxu0 0.0
      %1539 = vmatprep.subr.mxu0 0.0
      %1540 = vmatpush1.msra.mxu0 0.0
      %1541 = vmatprep.subr.mxu0 0.0
      %1542 = vmatpush1.msra.mxu0 0.0
      %1543 = vmatprep.subr.mxu0 0.0
      %1544 = vmatpush1.msra.mxu0 0.0
      %1545 = vmatprep.subr.mxu0 0.0
      %1546 = vmatpush1.msra.mxu0 0.0
      %1547 = vmatprep.subr.mxu0 0.0
      %1548 = vmatpush1.msra.mxu0 0.0
      %1549 = vmatprep.subr.mxu0 0.0
      %1550 = vmatpush1.msra.mxu0 0.0
      %1551 = vmatprep.mubr.f32.mxu0 0.0
      %1552 = vmatmul.mubr.f32.gmra.mrb[0].mxu0 %v1485
      %v1553 = vpop.f32.mrb[0].mxu0
      %v1554 = vadd.f32 0.0, %v1553
      %v1555 = vpop.f32.mrb[0].mxu0
      %1556 = vdwg.mxu0
      %v1558 = vsel %vm676, %v1554, 0
      %1560 = vmatprep.subr.mxu0 0.0
      %1561 = vmatpush1.msra.mxu0 %v675
      %1562 = vmatprep.subr.mxu0 0.0
      %1563 = vmatpush1.msra.mxu0 0.0
      %1564 = vmatprep.subr.mxu0 0.0
      %1565 = vmatpush1.msra.mxu0 0.0
      %1566 = vmatprep.subr.mxu0 0.0
      %1567 = vmatpush1.msra.mxu0 0.0
      %1568 = vmatprep.subr.mxu0 0.0
      %1569 = vmatpush1.msra.mxu0 0.0
      %1570 = vmatprep.subr.mxu0 0.0
      %1571 = vmatpush1.msra.mxu0 0.0
      %1572 = vmatprep.subr.mxu0 0.0
      %1573 = vmatpush1.msra.mxu0 0.0
      %1574 = vmatprep.subr.mxu0 0.0
      %1575 = vmatpush1.msra.mxu0 0.0
      %1576 = vmatprep.subr.mxu0 0.0
      %1577 = vmatpush1.msra.mxu0 0.0
      %1578 = vmatprep.subr.mxu0 0.0
      %1579 = vmatpush1.msra.mxu0 0.0
      %1580 = vmatprep.subr.mxu0 0.0
      %1581 = vmatpush1.msra.mxu0 0.0
      %1582 = vmatprep.subr.mxu0 0.0
      %1583 = vmatpush1.msra.mxu0 0.0
      %1584 = vmatprep.subr.mxu0 0.0
      %1585 = vmatpush1.msra.mxu0 0.0
      %1586 = vmatprep.subr.mxu0 0.0
      %1587 = vmatpush1.msra.mxu0 0.0
      %1588 = vmatprep.subr.mxu0 0.0
      %1589 = vmatpush1.msra.mxu0 0.0
      %1590 = vmatprep.subr.mxu0 0.0
      %1591 = vmatpush1.msra.mxu0 0.0
      %1592 = vmatprep.subr.mxu0 0.0
      %1593 = vmatpush1.msra.mxu0 0.0
      %1594 = vmatprep.subr.mxu0 0.0
      %1595 = vmatpush1.msra.mxu0 0.0
      %1596 = vmatprep.subr.mxu0 0.0
      %1597 = vmatpush1.msra.mxu0 0.0
      %1598 = vmatprep.subr.mxu0 0.0
      %1599 = vmatpush1.msra.mxu0 0.0
      %1600 = vmatprep.subr.mxu0 0.0
      %1601 = vmatpush1.msra.mxu0 0.0
      %1602 = vmatprep.subr.mxu0 0.0
      %1603 = vmatpush1.msra.mxu0 0.0
      %1604 = vmatprep.subr.mxu0 0.0
      %1605 = vmatpush1.msra.mxu0 0.0
      %1606 = vmatprep.subr.mxu0 0.0
      %1607 = vmatpush1.msra.mxu0 0.0
      %1608 = vmatprep.subr.mxu0 0.0
      %1609 = vmatpush1.msra.mxu0 0.0
      %1610 = vmatprep.subr.mxu0 0.0
      %1611 = vmatpush1.msra.mxu0 0.0
      %1612 = vmatprep.subr.mxu0 0.0
      %1613 = vmatpush1.msra.mxu0 0.0
      %1614 = vmatprep.subr.mxu0 0.0
      %1615 = vmatpush1.msra.mxu0 0.0
      %1616 = vmatprep.subr.mxu0 0.0
      %1617 = vmatpush1.msra.mxu0 0.0
      %1618 = vmatprep.subr.mxu0 0.0
      %1619 = vmatpush1.msra.mxu0 0.0
      %1620 = vmatprep.subr.mxu0 0.0
      %1621 = vmatpush1.msra.mxu0 0.0
      %1622 = vmatprep.subr.mxu0 0.0
      %1623 = vmatpush1.msra.mxu0 0.0
      %1624 = vmatprep.mubr.f32.mxu0 0.0
      %1625 = vmatmul.mubr.f32.gmra.mrb[0].mxu0 %v1558
      %v1626 = vpop.f32.mrb[0].mxu0
      %v1627 = vadd.f32 0.0, %v1626
      %v1628 = vpop.f32.mrb[0].mxu0
      %1629 = vdwg.mxu0
      %v1630 = vadd.f32 %v1390, %v1627
      %v1631 = vld [vmem:[%s9] sm:$0x1]
      %v1633 = vlaneseq
      %v1634 = vshrl.u32 %v1633, 7
      %v1635 = vsub.s32 0, %v1634
      %v1636 = vrot.slane %v1631, %v1635
      %v1638 = vadd.f32 %v1630, %v1636
      %v1639 = vadd.f32 %v426, %v1638
      %v1640 = vsel %vm437, %v1639, 0.0
      %1641 = vadd.xlane.f32.xlu0 %v1640
      %v1642 = vpop.xlane.xlu0 %1641
      %v1643 = vrot.slane %v1642, 4
      %v1644 = vadd.f32 %v1642, %v1643
      %v1645 = vrot.slane %v1644, 2
      %v1646 = vadd.f32 %v1644, %v1645
      %v1647 = vrot.slane %v1646, 1
      %v1648 = vadd.f32 %v1646, %v1647
      %s1649 = vtos %v1648
      %v1650 = vrcp.pop 128.0
      %s1651 = vtos %v1650
      %s1652 = smul.f32 %s1649, %s1651
      %v1653 = vstv %s1652
      %v1654 = vsub.f32 %v1639, %v1653
      %v1655 = vmul.f32 %v1654, %v1654
      %v1656 = vsel %vm437, %v1655, 0.0
      %1657 = vadd.xlane.f32.xlu0 %v1656
      %v1658 = vpop.xlane.xlu0 %1657
      %v1659 = vrot.slane %v1658, 4
      %v1660 = vadd.f32 %v1658, %v1659
      %v1661 = vrot.slane %v1660, 2
      %v1662 = vadd.f32 %v1660, %v1661
      %v1663 = vrot.slane %v1662, 1
      %v1664 = vadd.f32 %v1662, %v1663
      %s1665 = vtos %v1664
      %v1666 = vrcp.pop 128.0
      %s1667 = vtos %v1666
      %s1668 = smul.f32 %s1665, %s1667
      %s1669 = sadd.f32 %s1668, 1e-05
      %v1670 = vstv %s1669
      %v1671 = vrsqrt.pop %v1670
      %s1672 = vtos %v1671
      %v1673 = vstv %s1672
      %v1674 = vmul.f32 %v1654, %v1673
      %v1675 = vld [vmem:[%s10] sm:$0xff]
      %v1676 = vmul.f32 %v1674, %v1675
      %v1677 = vld [vmem:[%s11] sm:$0xff]
      %v1678 = vadd.f32 %v1676, %v1677
      %1679 = vst.msk [vmem:[%s425] sm:$0xff] %vm437, %v1678
      %p1680 = scmp.lt.s32.totalorder %s23, 1
      %s1681 = scalar_select %p1680, %s23, 1
      %s1682 = smul.addr %s1681, 8
      %s1683 = scalar_lea.vmem %s12, %s1682
      // Predicated region
      $region69: #{transformer_fwd.15} parent=67 // pred_check
        %p1684 = pneg %p303
      $region70: #{transformer_fwd.15} parent=67 // pred_check_branch
        %1686 = sbr.rel (%p1684) target = $region72
      $region71: #{transformer_fwd.15} parent=67 // pred_region
        _
      $region72: #{transformer_fwd.15} parent=67 // pred_fallthru
        _
    $region68: #{transformer_fwd.15} parent=5 // pred_fallthru
      _
    %p1687 = scmp.le.s32.totalorder 2, %s18
    // Predicated region
    $region73: #{transformer_fwd.15} parent=5 // pred_check
      %p1688 = pneg %p1687
    $region74: #{transformer_fwd.15} parent=5 // pred_check_branch
      %1690 = sbr.rel (%p1688) target = $region76
    $region75: #{transformer_fwd.15} parent=5 // pred_region
      %s1691 = ssub.s32 %s18, 2
      // Predicated region
      $region77: #{transformer_fwd.15} parent=75 // pred_check
        %p1692 = pneg %p309
      $region78: #{transformer_fwd.15} parent=75 // pred_check_branch
        %1694 = sbr.rel (%p1692) target = $region80
      $region79: #{transformer_fwd.15} parent=75 // pred_region
        %p1695 = scmp.lt.s32.totalorder %s24, 1
        %s1696 = scalar_select %p1695, %s24, 1
        %s1697 = smul.addr %s1696, 8
        %s1698 = scalar_lea.vmem %s12, %s1697
      $region80: #{transformer_fwd.15} parent=75 // pred_fallthru
        _
    $region76: #{transformer_fwd.15} parent=5 // pred_fallthru
      _
  $region6: #{transformer_fwd.15} parent=0 // loop_footer
    %s22 = sadd.s32 1, %s18
  $region7: #{transformer_fwd.15} parent=0 // loop_footer_branch
    %17 = sbr.rel target = $region3
  $region8: #{transformer_fwd.15} parent=0 // loop_exit
    _

// kernel: transformer_fwd.14
$region0: #{transformer_fwd.14}
  #allocation0 [shape = 'u32[]', space=smem, size = 0x4, offset = 0x4, fixed_abs, tag = 'smem constant byte address 0x4 - core index']
  #allocation1 [shape = 'u32[144,128]{1,0:T(1,128)}', space=vmem, size = 0x12000, scoped, tag = 'internal scratch']
  %s0 = inlined_call_operand.vmem [shape: f32[2,8,16], index: 0, kind: input, shape index: {}]
  %s1 = inlined_call_operand.vmem [shape: f32[2,8,32], index: 1, kind: input, shape index: {}]
  %s2 = inlined_call_operand.vmem [shape: f32[16,32], index: 2, kind: input, shape index: {}]
  %s3 = inlined_call_operand.vmem [shape: f32[1,32], index: 3, kind: input, shape index: {}]
  %s4 = inlined_call_operand.vmem [shape: f32[32,32], index: 4, kind: input, shape index: {}]
  %s5 = inlined_call_operand.vmem [shape: f32[1,32], index: 5, kind: input, shape index: {}]
  %s6 = inlined_call_operand.vmem [shape: f32[32,32], index: 6, kind: input, shape index: {}]
  %s7 = inlined_call_operand.vmem [shape: f32[1,32], index: 7, kind: input, shape index: {}]
  %s8 = inlined_call_operand.vmem [shape: f32[32,16], index: 8, kind: input, shape index: {}]
  %s9 = inlined_call_operand.vmem [shape: f32[1,16], index: 9, kind: input, shape index: {}]
  %s10 = inlined_call_operand.vmem [shape: f32[8,16], index: 10, kind: input, shape index: {}]
  %s11 = inlined_call_operand.vmem [shape: f32[8,16], index: 11, kind: input, shape index: {}]
  %s12 = inlined_call_operand.vmem [shape: f32[2,8,16], index: 12, kind: output, shape index: {}]
  %s13 = sld [smem:[#allocation0]]
  $region81: #{transformer_fwd.14} parent=0
    _
  %s15 = ssub.s32 1, %s13
  %s16 = scalar_select 0, %s15, %s13
  loop: start=0, step=1, limit=4
  $region2: #{transformer_fwd.14} parent=0 // loop_pre_header
    _
  $region3: #{transformer_fwd.14} parent=0 // loop_header
    %s18 = sphi 0, %s22
    %p19 = scmp.ge.s32.totalorder %s18, 4
    %s28 = sphi 0, %s30
    %s31 = sphi 0, %s28
    %s32 = sphi 0, %s31
    %s48 = sphi 0, %s32
    %s54 = sphi 0, %s56
    %s57 = sphi 0, %s54
    %s58 = sphi 0, %s57
    %s74 = sphi 0, %s58
    %s78 = sphi 0, %s78
    %s80 = sphi 0, %s78
    %s81 = sphi 0, %s80
    %s95 = sphi 0, %s81
    %s99 = sphi 0, %s99
    %s101 = sphi 0, %s99
    %s102 = sphi 0, %s101
    %s116 = sphi 0, %s102
    %s120 = sphi 0, %s120
    %s122 = sphi 0, %s120
    %s123 = sphi 0, %s122
    %s137 = sphi 0, %s123
    %s141 = sphi 0, %s141
    %s143 = sphi 0, %s141
    %s144 = sphi 0, %s143
    %s158 = sphi 0, %s144
    %s162 = sphi 0, %s162
    %s164 = sphi 0, %s162
    %s165 = sphi 0, %s164
    %s179 = sphi 0, %s165
    %s183 = sphi 0, %s183
    %s185 = sphi 0, %s183
    %s186 = sphi 0, %s185
    %s200 = sphi 0, %s186
    %s204 = sphi 0, %s204
    %s206 = sphi 0, %s204
    %s207 = sphi 0, %s206
    %s221 = sphi 0, %s207
    %s225 = sphi 0, %s225
    %s227 = sphi 0, %s225
    %s228 = sphi 0, %s227
    %s242 = sphi 0, %s228
    %s246 = sphi 0, %s246
    %s248 = sphi 0, %s246
    %s249 = sphi 0, %s248
    %s263 = sphi 0, %s249
    %s267 = sphi 0, %s267
    %s269 = sphi 0, %s267
    %s270 = sphi 0, %s269
    %s284 = sphi 0, %s270
    %s290 = sphi 0, %s292
    %s293 = sphi 0, %s290
    %s294 = sphi 0, %s293
    %s310 = sphi 0, %s294
  $region4: #{transformer_fwd.14} parent=0 // loop_header_branch
    %21 = sbr.rel (%p19) target = $region8
  $region5: #{transformer_fwd.14} parent=0 // loop_body
    %s23 = ssub.s32 %s18, 1
    %s24 = ssub.s32 %s18, 2
    %s25 = sadd.s32 %s18, 1
    %s26 = ssub.s32 %s18, %s25
    %p27 = scmp.eq.s32.totalorder %s26, 0
    %s29 = sadd.s32 %s28, 1
    %s30 = scalar_select %p27, %s28, %s29
    %p33 = pneg %p27
    %p34 = scmp.eq.s32.totalorder %s18, 1
    %p35 = por %p33, %p34
    %p36 = scmp.ne.s32.totalorder %s28, %s31
    %p37 = scmp.eq.s32.totalorder %s18, 0
    %p38 = por %p36, %p37
    %p39 = scmp.ne.s32.totalorder %s28, %s31
    %p40 = scmp.eq.s32.totalorder %s23, 1
    %p41 = por %p39, %p40
    %p42 = scmp.ne.s32.totalorder %s31, %s32
    %p43 = scmp.eq.s32.totalorder %s23, 0
    %p44 = por %p42, %p43
    %p45 = scmp.ne.s32.totalorder %s31, %s32
    %p46 = scmp.eq.s32.totalorder %s24, 1
    %p47 = por %p45, %p46
    %p49 = scmp.ne.s32.totalorder %s32, %s48
    %p50 = scmp.eq.s32.totalorder %s24, 0
    %p51 = por %p49, %p50
    %s52 = ssub.s32 %s18, %s25
    %p53 = scmp.eq.s32.totalorder %s52, 0
    %s55 = sadd.s32 %s54, 1
    %s56 = scalar_select %p53, %s54, %s55
    %p59 = pneg %p53
    %p60 = scmp.eq.s32.totalorder %s18, 1
    %p61 = por %p59, %p60
    %p62 = scmp.ne.s32.totalorder %s54, %s57
    %p63 = scmp.eq.s32.totalorder %s18, 0
    %p64 = por %p62, %p63
    %p65 = scmp.ne.s32.totalorder %s54, %s57
    %p66 = scmp.eq.s32.totalorder %s23, 1
    %p67 = por %p65, %p66
    %p68 = scmp.ne.s32.totalorder %s57, %s58
    %p69 = scmp.eq.s32.totalorder %s23, 0
    %p70 = por %p68, %p69
    %p71 = scmp.ne.s32.totalorder %s57, %s58
    %p72 = scmp.eq.s32.totalorder %s24, 1
    %p73 = por %p71, %p72
    %p75 = scmp.ne.s32.totalorder %s58, %s74
    %p76 = scmp.eq.s32.totalorder %s24, 0
    %p77 = por %p75, %p76
    %s79 = sadd.s32 %s78, 1
    %p82 = scmp.eq.s32.totalorder %s18, 1
    %p83 = scmp.ne.s32.totalorder %s78, %s80
    %p84 = scmp.eq.s32.totalorder %s18, 0
    %p85 = por %p83, %p84
    %p86 = scmp.ne.s32.totalorder %s78, %s80
    %p87 = scmp.eq.s32.totalorder %s23, 1
    %p88 = por %p86, %p87
    %p89 = scmp.ne.s32.totalorder %s80, %s81
    %p90 = scmp.eq.s32.totalorder %s23, 0
    %p91 = por %p89, %p90
    %p92 = scmp.ne.s32.totalorder %s80, %s81
    %p93 = scmp.eq.s32.totalorder %s24, 1
    %p94 = por %p92, %p93
    %p96 = scmp.ne.s32.totalorder %s81, %s95
    %p97 = scmp.eq.s32.totalorder %s24, 0
    %p98 = por %p96, %p97
    %s100 = sadd.s32 %s99, 1
    %p103 = scmp.eq.s32.totalorder %s18, 1
    %p104 = scmp.ne.s32.totalorder %s99, %s101
    %p105 = scmp.eq.s32.totalorder %s18, 0
    %p106 = por %p104, %p105
    %p107 = scmp.ne.s32.totalorder %s99, %s101
    %p108 = scmp.eq.s32.totalorder %s23, 1
    %p109 = por %p107, %p108
    %p110 = scmp.ne.s32.totalorder %s101, %s102
    %p111 = scmp.eq.s32.totalorder %s23, 0
    %p112 = por %p110, %p111
    %p113 = scmp.ne.s32.totalorder %s101, %s102
    %p114 = scmp.eq.s32.totalorder %s24, 1
    %p115 = por %p113, %p114
    %p117 = scmp.ne.s32.totalorder %s102, %s116
    %p118 = scmp.eq.s32.totalorder %s24, 0
    %p119 = por %p117, %p118
    %s121 = sadd.s32 %s120, 1
    %p124 = scmp.eq.s32.totalorder %s18, 1
    %p125 = scmp.ne.s32.totalorder %s120, %s122
    %p126 = scmp.eq.s32.totalorder %s18, 0
    %p127 = por %p125, %p126
    %p128 = scmp.ne.s32.totalorder %s120, %s122
    %p129 = scmp.eq.s32.totalorder %s23, 1
    %p130 = por %p128, %p129
    %p131 = scmp.ne.s32.totalorder %s122, %s123
    %p132 = scmp.eq.s32.totalorder %s23, 0
    %p133 = por %p131, %p132
    %p134 = scmp.ne.s32.totalorder %s122, %s123
    %p135 = scmp.eq.s32.totalorder %s24, 1
    %p136 = por %p134, %p135
    %p138 = scmp.ne.s32.totalorder %s123, %s137
    %p139 = scmp.eq.s32.totalorder %s24, 0
    %p140 = por %p138, %p139
    %s142 = sadd.s32 %s141, 1
    %p145 = scmp.eq.s32.totalorder %s18, 1
    %p146 = scmp.ne.s32.totalorder %s141, %s143
    %p147 = scmp.eq.s32.totalorder %s18, 0
    %p148 = por %p146, %p147
    %p149 = scmp.ne.s32.totalorder %s141, %s143
    %p150 = scmp.eq.s32.totalorder %s23, 1
    %p151 = por %p149, %p150
    %p152 = scmp.ne.s32.totalorder %s143, %s144
    %p153 = scmp.eq.s32.totalorder %s23, 0
    %p154 = por %p152, %p153
    %p155 = scmp.ne.s32.totalorder %s143, %s144
    %p156 = scmp.eq.s32.totalorder %s24, 1
    %p157 = por %p155, %p156
    %p159 = scmp.ne.s32.totalorder %s144, %s158
    %p160 = scmp.eq.s32.totalorder %s24, 0
    %p161 = por %p159, %p160
    %s163 = sadd.s32 %s162, 1
    %p166 = scmp.eq.s32.totalorder %s18, 1
    %p167 = scmp.ne.s32.totalorder %s162, %s164
    %p168 = scmp.eq.s32.totalorder %s18, 0
    %p169 = por %p167, %p168
    %p170 = scmp.ne.s32.totalorder %s162, %s164
    %p171 = scmp.eq.s32.totalorder %s23, 1
    %p172 = por %p170, %p171
    %p173 = scmp.ne.s32.totalorder %s164, %s165
    %p174 = scmp.eq.s32.totalorder %s23, 0
    %p175 = por %p173, %p174
    %p176 = scmp.ne.s32.totalorder %s164, %s165
    %p177 = scmp.eq.s32.totalorder %s24, 1
    %p178 = por %p176, %p177
    %p180 = scmp.ne.s32.totalorder %s165, %s179
    %p181 = scmp.eq.s32.totalorder %s24, 0
    %p182 = por %p180, %p181
    %s184 = sadd.s32 %s183, 1
    %p187 = scmp.eq.s32.totalorder %s18, 1
    %p188 = scmp.ne.s32.totalorder %s183, %s185
    %p189 = scmp.eq.s32.totalorder %s18, 0
    %p190 = por %p188, %p189
    %p191 = scmp.ne.s32.totalorder %s183, %s185
    %p192 = scmp.eq.s32.totalorder %s23, 1
    %p193 = por %p191, %p192
    %p194 = scmp.ne.s32.totalorder %s185, %s186
    %p195 = scmp.eq.s32.totalorder %s23, 0
    %p196 = por %p194, %p195
    %p197 = scmp.ne.s32.totalorder %s185, %s186
    %p198 = scmp.eq.s32.totalorder %s24, 1
    %p199 = por %p197, %p198
    %p201 = scmp.ne.s32.totalorder %s186, %s200
    %p202 = scmp.eq.s32.totalorder %s24, 0
    %p203 = por %p201, %p202
    %s205 = sadd.s32 %s204, 1
    %p208 = scmp.eq.s32.totalorder %s18, 1
    %p209 = scmp.ne.s32.totalorder %s204, %s206
    %p210 = scmp.eq.s32.totalorder %s18, 0
    %p211 = por %p209, %p210
    %p212 = scmp.ne.s32.totalorder %s204, %s206
    %p213 = scmp.eq.s32.totalorder %s23, 1
    %p214 = por %p212, %p213
    %p215 = scmp.ne.s32.totalorder %s206, %s207
    %p216 = scmp.eq.s32.totalorder %s23, 0
    %p217 = por %p215, %p216
    %p218 = scmp.ne.s32.totalorder %s206, %s207
    %p219 = scmp.eq.s32.totalorder %s24, 1
    %p220 = por %p218, %p219
    %p222 = scmp.ne.s32.totalorder %s207, %s221
    %p223 = scmp.eq.s32.totalorder %s24, 0
    %p224 = por %p222, %p223
    %s226 = sadd.s32 %s225, 1
    %p229 = scmp.eq.s32.totalorder %s18, 1
    %p230 = scmp.ne.s32.totalorder %s225, %s227
    %p231 = scmp.eq.s32.totalorder %s18, 0
    %p232 = por %p230, %p231
    %p233 = scmp.ne.s32.totalorder %s225, %s227
    %p234 = scmp.eq.s32.totalorder %s23, 1
    %p235 = por %p233, %p234
    %p236 = scmp.ne.s32.totalorder %s227, %s228
    %p237 = scmp.eq.s32.totalorder %s23, 0
    %p238 = por %p236, %p237
    %p239 = scmp.ne.s32.totalorder %s227, %s228
    %p240 = scmp.eq.s32.totalorder %s24, 1
    %p241 = por %p239, %p240
    %p243 = scmp.ne.s32.totalorder %s228, %s242
    %p244 = scmp.eq.s32.totalorder %s24, 0
    %p245 = por %p243, %p244
    %s247 = sadd.s32 %s246, 1
    %p250 = scmp.eq.s32.totalorder %s18, 1
    %p251 = scmp.ne.s32.totalorder %s246, %s248
    %p252 = scmp.eq.s32.totalorder %s18, 0
    %p253 = por %p251, %p252
    %p254 = scmp.ne.s32.totalorder %s246, %s248
    %p255 = scmp.eq.s32.totalorder %s23, 1
    %p256 = por %p254, %p255
    %p257 = scmp.ne.s32.totalorder %s248, %s249
    %p258 = scmp.eq.s32.totalorder %s23, 0
    %p259 = por %p257, %p258
    %p260 = scmp.ne.s32.totalorder %s248, %s249
    %p261 = scmp.eq.s32.totalorder %s24, 1
    %p262 = por %p260, %p261
    %p264 = scmp.ne.s32.totalorder %s249, %s263
    %p265 = scmp.eq.s32.totalorder %s24, 0
    %p266 = por %p264, %p265
    %s268 = sadd.s32 %s267, 1
    %p271 = scmp.eq.s32.totalorder %s18, 1
    %p272 = scmp.ne.s32.totalorder %s267, %s269
    %p273 = scmp.eq.s32.totalorder %s18, 0
    %p274 = por %p272, %p273
    %p275 = scmp.ne.s32.totalorder %s267, %s269
    %p276 = scmp.eq.s32.totalorder %s23, 1
    %p277 = por %p275, %p276
    %p278 = scmp.ne.s32.totalorder %s269, %s270
    %p279 = scmp.eq.s32.totalorder %s23, 0
    %p280 = por %p278, %p279
    %p281 = scmp.ne.s32.totalorder %s269, %s270
    %p282 = scmp.eq.s32.totalorder %s24, 1
    %p283 = por %p281, %p282
    %p285 = scmp.ne.s32.totalorder %s270, %s284
    %p286 = scmp.eq.s32.totalorder %s24, 0
    %p287 = por %p285, %p286
    %s288 = ssub.s32 %s18, %s25
    %p289 = scmp.eq.s32.totalorder %s288, 0
    %s291 = sadd.s32 %s290, 1
    %s292 = scalar_select %p289, %s290, %s291
    %p295 = pneg %p289
    %p296 = scmp.eq.s32.totalorder %s18, 1
    %p297 = por %p295, %p296
    %p298 = scmp.ne.s32.totalorder %s290, %s293
    %p299 = scmp.eq.s32.totalorder %s18, 0
    %p300 = por %p298, %p299
    %p301 = scmp.ne.s32.totalorder %s290, %s293
    %p302 = scmp.eq.s32.totalorder %s23, 1
    %p303 = por %p301, %p302
    %p304 = scmp.ne.s32.totalorder %s293, %s294
    %p305 = scmp.eq.s32.totalorder %s23, 0
    %p306 = por %p304, %p305
    %p307 = scmp.ne.s32.totalorder %s293, %s294
    %p308 = scmp.eq.s32.totalorder %s24, 1
    %p309 = por %p307, %p308
    %p311 = scmp.ne.s32.totalorder %s294, %s310
    %p312 = scmp.eq.s32.totalorder %s24, 0
    %p313 = por %p311, %p312
    %p314 = scmp.le.s32.totalorder 1, %s18
    %p315 = scmp.lt.s32.totalorder %s18, 3
    %p316 = pnand %p314, %p315
    %p317 = pneg %p316
    // Predicated region
    $region9: #{transformer_fwd.14} parent=5 // pred_check
      _
    $region10: #{transformer_fwd.14} parent=5 // pred_check_branch
      %319 = sbr.rel (%p316) target = $region12
    $region11: #{transformer_fwd.14} parent=5 // pred_region
      %s320 = ssub.s32 %s18, 1
      // Predicated region
      $region13: #{transformer_fwd.14} parent=11 // pred_check
        %p321 = pneg %p91
      $region14: #{transformer_fwd.14} parent=11 // pred_check_branch
        %323 = sbr.rel (%p321) target = $region16
      $region15: #{transformer_fwd.14} parent=11 // pred_region
        _
      $region16: #{transformer_fwd.14} parent=11 // pred_fallthru
        _
      // Predicated region
      $region17: #{transformer_fwd.14} parent=11 // pred_check
        %p324 = pneg %p112
      $region18: #{transformer_fwd.14} parent=11 // pred_check_branch
        %326 = sbr.rel (%p324) target = $region20
      $region19: #{transformer_fwd.14} parent=11 // pred_region
        _
      $region20: #{transformer_fwd.14} parent=11 // pred_fallthru
        _
      // Predicated region
      $region21: #{transformer_fwd.14} parent=11 // pred_check
        %p327 = pneg %p133
      $region22: #{transformer_fwd.14} parent=11 // pred_check_branch
        %329 = sbr.rel (%p327) target = $region24
      $region23: #{transformer_fwd.14} parent=11 // pred_region
        _
      $region24: #{transformer_fwd.14} parent=11 // pred_fallthru
        _
      // Predicated region
      $region25: #{transformer_fwd.14} parent=11 // pred_check
        %p330 = pneg %p154
      $region26: #{transformer_fwd.14} parent=11 // pred_check_branch
        %332 = sbr.rel (%p330) target = $region28
      $region27: #{transformer_fwd.14} parent=11 // pred_region
        _
      $region28: #{transformer_fwd.14} parent=11 // pred_fallthru
        _
      // Predicated region
      $region29: #{transformer_fwd.14} parent=11 // pred_check
        %p333 = pneg %p175
      $region30: #{transformer_fwd.14} parent=11 // pred_check_branch
        %335 = sbr.rel (%p333) target = $region32
      $region31: #{transformer_fwd.14} parent=11 // pred_region
        _
      $region32: #{transformer_fwd.14} parent=11 // pred_fallthru
        _
      // Predicated region
      $region33: #{transformer_fwd.14} parent=11 // pred_check
        %p336 = pneg %p196
      $region34: #{transformer_fwd.14} parent=11 // pred_check_branch
        %338 = sbr.rel (%p336) target = $region36
      $region35: #{transformer_fwd.14} parent=11 // pred_region
        _
      $region36: #{transformer_fwd.14} parent=11 // pred_fallthru
        _
      // Predicated region
      $region37: #{transformer_fwd.14} parent=11 // pred_check
        %p339 = pneg %p217
      $region38: #{transformer_fwd.14} parent=11 // pred_check_branch
        %341 = sbr.rel (%p339) target = $region40
      $region39: #{transformer_fwd.14} parent=11 // pred_region
        _
      $region40: #{transformer_fwd.14} parent=11 // pred_fallthru
        _
      // Predicated region
      $region41: #{transformer_fwd.14} parent=11 // pred_check
        %p342 = pneg %p238
      $region42: #{transformer_fwd.14} parent=11 // pred_check_branch
        %344 = sbr.rel (%p342) target = $region44
      $region43: #{transformer_fwd.14} parent=11 // pred_region
        _
      $region44: #{transformer_fwd.14} parent=11 // pred_fallthru
        _
      // Predicated region
      $region45: #{transformer_fwd.14} parent=11 // pred_check
        %p345 = pneg %p259
      $region46: #{transformer_fwd.14} parent=11 // pred_check_branch
        %347 = sbr.rel (%p345) target = $region48
      $region47: #{transformer_fwd.14} parent=11 // pred_region
        _
      $region48: #{transformer_fwd.14} parent=11 // pred_fallthru
        _
      // Predicated region
      $region49: #{transformer_fwd.14} parent=11 // pred_check
        %p348 = pneg %p280
      $region50: #{transformer_fwd.14} parent=11 // pred_check_branch
        %350 = sbr.rel (%p348) target = $region52
      $region51: #{transformer_fwd.14} parent=11 // pred_region
        _
      $region52: #{transformer_fwd.14} parent=11 // pred_fallthru
        _
    $region12: #{transformer_fwd.14} parent=5 // pred_fallthru
      _
    %p351 = scmp.lt.s32.totalorder %s18, 2
    // Predicated region
    $region53: #{transformer_fwd.14} parent=5 // pred_check
      %p352 = pneg %p351
    $region54: #{transformer_fwd.14} parent=5 // pred_check_branch
      %354 = sbr.rel (%p352) target = $region56
    $region55: #{transformer_fwd.14} parent=5 // pred_region
      // Predicated region
      $region57: #{transformer_fwd.14} parent=55 // pred_check
        %p355 = pneg %p38
      $region58: #{transformer_fwd.14} parent=55 // pred_check_branch
        %357 = sbr.rel (%p355) target = $region60
      $region59: #{transformer_fwd.14} parent=55 // pred_region
        %p358 = scmp.lt.s32.totalorder %s18, 1
        %s359 = scalar_select %p358, %s18, 1
        %s360 = smul.addr %s359, 8
        %s361 = scalar_lea.vmem %s0, %s360
      $region60: #{transformer_fwd.14} parent=55 // pred_fallthru
        _
      // Predicated region
      $region61: #{transformer_fwd.14} parent=55 // pred_check
        %p362 = pneg %p64
      $region62: #{transformer_fwd.14} parent=55 // pred_check_branch
        %364 = sbr.rel (%p362) target = $region64
      $region63: #{transformer_fwd.14} parent=55 // pred_region
        %p365 = scmp.lt.s32.totalorder %s18, 1
        %s366 = scalar_select %p365, %s18, 1
        %s367 = smul.addr %s366, 8
        %s368 = scalar_lea.vmem %s1, %s367
      $region64: #{transformer_fwd.14} parent=55 // pred_fallthru
        _
    $region56: #{transformer_fwd.14} parent=5 // pred_fallthru
      _
    %p369 = scmp.le.s32.totalorder 1, %s18
    %p370 = scmp.lt.s32.totalorder %s18, 3
    %p371 = pnand %p369, %p370
    %p372 = pneg %p371
    // Predicated region
    $region65: #{transformer_fwd.14} parent=5 // pred_check
      _
    $region66: #{transformer_fwd.14} parent=5 // pred_check_branch
      %374 = sbr.rel (%p371) target = $region68
    $region67: #{transformer_fwd.14} parent=5 // pred_region
      %s375 = ssub.s32 %s18, 1
      %p376 = scmp.lt.s32.totalorder %s23, 1
      %s377 = scalar_select %p376, %s23, 1
      %s378 = smul.addr %s377, 8
      %s379 = scalar_lea.vmem %s0, %s378
      %p380 = pneg %p44
      %p381 = pneg %p41
      %p382 = scmp.lt.s32.totalorder %s23, 1
      %s383 = scalar_select %p382, %s23, 1
      %s384 = smul.addr %s383, 8
      %s385 = scalar_lea.vmem %s1, %s384
      %p386 = pneg %p70
      %p387 = pneg %p67
      %p388 = pneg %p91
      %p389 = pneg %p88
      %p390 = pneg %p112
      %p391 = pneg %p109
      %p392 = pneg %p133
      %p393 = pneg %p130
      %p394 = pneg %p154
      %p395 = pneg %p151
      %p396 = pneg %p175
      %p397 = pneg %p172
      %p398 = pneg %p196
      %p399 = pneg %p193
      %p400 = pneg %p217
      %p401 = pneg %p214
      %p402 = pneg %p238
      %p403 = pneg %p235
      %p404 = pneg %p259
      %p405 = pneg %p256
      %p406 = pneg %p280
      %p407 = pneg %p277
      %p408 = pneg %p306
      %p409 = pneg %p303
      %p410 = scmp.lt.s32.totalorder %s23, 1
      %s411 = scalar_select %p410, %s23, 1
      %s412 = smul.addr %s411, 8
      %s413 = scalar_lea.vmem %s12, %s412
      %p414 = scmp.lt.s32.totalorder %s23, 1
      %s415 = scalar_select %p414, %s23, 1
      %s416 = smul.addr %s415, 8
      %s417 = scalar_lea.vmem %s0, %s416
      %p418 = scmp.lt.s32.totalorder %s23, 1
      %s419 = scalar_select %p418, %s23, 1
      %s420 = smul.addr %s419, 8
      %s421 = scalar_lea.vmem %s1, %s420
      %p422 = scmp.lt.s32.totalorder %s23, 1
      %s423 = scalar_select %p422, %s23, 1
      %s424 = smul.addr %s423, 8
      %s425 = scalar_lea.vmem %s12, %s424
      %v426 = vld [vmem:[%s417] sm:$0xff]
      %v427 = vld [vmem:[%s421] sm:$0xff]
      %v428 = vld [vmem:[%s2] sm:$0xff]
      %v429 = vld [vmem:[%s2 + $0x8] sm:$0xff]
      %v430 = vld [vmem:[%s3] sm:$0x1]
      %v432 = vlaneseq
      %v433 = vshrl.u32 %v432, 7
      %v434 = vsub.s32 0, %v433
      %v435 = vrot.slane %v430, %v434
      %vm437 = vcmask 130048
      %v439 = vsel %vm437, %v426, 0
      %441 = vmatprep.subr.mxu0 0.0
      %442 = vmatpush1.msra.mxu0 %v428
      %443 = vmatprep.subr.mxu0 0.0
      %444 = vmatpush1.msra.mxu0 %v429
      %445 = vmatprep.subr.mxu0 0.0
      %446 = vmatpush1.msra.mxu0 0.0
      %447 = vmatprep.subr.mxu0 0.0
      %448 = vmatpush1.msra.mxu0 0.0
      %449 = vmatprep.subr.mxu0 0.0
      %450 = vmatpush1.msra.mxu0 0.0
      %451 = vmatprep.subr.mxu0 0.0
      %452 = vmatpush1.msra.mxu0 0.0
      %453 = vmatprep.subr.mxu0 0.0
      %454 = vmatpush1.msra.mxu0 0.0
      %455 = vmatprep.subr.mxu0 0.0
      %456 = vmatpush1.msra.mxu0 0.0
      %457 = vmatprep.subr.mxu0 0.0
      %458 = vmatpush1.msra.mxu0 0.0
      %459 = vmatprep.subr.mxu0 0.0
      %460 = vmatpush1.msra.mxu0 0.0
      %461 = vmatprep.subr.mxu0 0.0
      %462 = vmatpush1.msra.mxu0 0.0
      %463 = vmatprep.subr.mxu0 0.0
      %464 = vmatpush1.msra.mxu0 0.0
      %465 = vmatprep.subr.mxu0 0.0
      %466 = vmatpush1.msra.mxu0 0.0
      %467 = vmatprep.subr.mxu0 0.0
      %468 = vmatpush1.msra.mxu0 0.0
      %469 = vmatprep.subr.mxu0 0.0
      %470 = vmatpush1.msra.mxu0 0.0
      %471 = vmatprep.subr.mxu0 0.0
      %472 = vmatpush1.msra.mxu0 0.0
      %473 = vmatprep.subr.mxu0 0.0
      %474 = vmatpush1.msra.mxu0 0.0
      %475 = vmatprep.subr.mxu0 0.0
      %476 = vmatpush1.msra.mxu0 0.0
      %477 = vmatprep.subr.mxu0 0.0
      %478 = vmatpush1.msra.mxu0 0.0
      %479 = vmatprep.subr.mxu0 0.0
      %480 = vmatpush1.msra.mxu0 0.0
      %481 = vmatprep.subr.mxu0 0.0
      %482 = vmatpush1.msra.mxu0 0.0
      %483 = vmatprep.subr.mxu0 0.0
      %484 = vmatpush1.msra.mxu0 0.0
      %485 = vmatprep.subr.mxu0 0.0
      %486 = vmatpush1.msra.mxu0 0.0
      %487 = vmatprep.subr.mxu0 0.0
      %488 = vmatpush1.msra.mxu0 0.0
      %489 = vmatprep.subr.mxu0 0.0
      %490 = vmatpush1.msra.mxu0 0.0
      %491 = vmatprep.subr.mxu0 0.0
      %492 = vmatpush1.msra.mxu0 0.0
      %493 = vmatprep.subr.mxu0 0.0
      %494 = vmatpush1.msra.mxu0 0.0
      %495 = vmatprep.subr.mxu0 0.0
      %496 = vmatpush1.msra.mxu0 0.0
      %497 = vmatprep.subr.mxu0 0.0
      %498 = vmatpush1.msra.mxu0 0.0
      %499 = vmatprep.subr.mxu0 0.0
      %500 = vmatpush1.msra.mxu0 0.0
      %501 = vmatprep.subr.mxu0 0.0
      %502 = vmatpush1.msra.mxu0 0.0
      %503 = vmatprep.subr.mxu0 0.0
      %504 = vmatpush1.msra.mxu0 0.0
      %505 = vmatprep.mubr.f32.mxu0 0.0
      %506 = vmatmul.mubr.f32.gmra.mrb[0].mxu0 %v439
      %v507 = vpop.f32.mrb[0].mxu0
      %v508 = vadd.f32 %v435, %v507
      %v509 = vpop.f32.mrb[0].mxu0
      %510 = vdwg.mxu0
      %v511 = vld [vmem:[%s4] sm:$0xff]
      %v512 = vld [vmem:[%s4 + $0x8] sm:$0xff]
      %v513 = vld [vmem:[%s4 + $0x10] sm:$0xff]
      %v514 = vld [vmem:[%s4 + $0x18] sm:$0xff]
      %v515 = vld [vmem:[%s5] sm:$0x1]
      %v517 = vlaneseq
      %v518 = vshrl.u32 %v517, 7
      %v519 = vsub.s32 0, %v518
      %v520 = vrot.slane %v515, %v519
      %vm522 = vcmask 261120
      %v524 = vsel %vm522, %v427, 0
      %526 = vmatprep.subr.mxu0 0.0
      %527 = vmatpush1.msra.mxu0 %v511
      %528 = vmatprep.subr.mxu0 0.0
      %529 = vmatpush1.msra.mxu0 %v512
      %530 = vmatprep.subr.mxu0 0.0
      %531 = vmatpush1.msra.mxu0 %v513
      %532 = vmatprep.subr.mxu0 0.0
      %533 = vmatpush1.msra.mxu0 %v514
      %534 = vmatprep.subr.mxu0 0.0
      %535 = vmatpush1.msra.mxu0 0.0
      %536 = vmatprep.subr.mxu0 0.0
      %537 = vmatpush1.msra.mxu0 0.0
      %538 = vmatprep.subr.mxu0 0.0
      %539 = vmatpush1.msra.mxu0 0.0
      %540 = vmatprep.subr.mxu0 0.0
      %541 = vmatpush1.msra.mxu0 0.0
      %542 = vmatprep.subr.mxu0 0.0
      %543 = vmatpush1.msra.mxu0 0.0
      %544 = vmatprep.subr.mxu0 0.0
      %545 = vmatpush1.msra.mxu0 0.0
      %546 = vmatprep.subr.mxu0 0.0
      %547 = vmatpush1.msra.mxu0 0.0
      %548 = vmatprep.subr.mxu0 0.0
      %549 = vmatpush1.msra.mxu0 0.0
      %550 = vmatprep.subr.mxu0 0.0
      %551 = vmatpush1.msra.mxu0 0.0
      %552 = vmatprep.subr.mxu0 0.0
      %553 = vmatpush1.msra.mxu0 0.0
      %554 = vmatprep.subr.mxu0 0.0
      %555 = vmatpush1.msra.mxu0 0.0
      %556 = vmatprep.subr.mxu0 0.0
      %557 = vmatpush1.msra.mxu0 0.0
      %558 = vmatprep.subr.mxu0 0.0
      %559 = vmatpush1.msra.mxu0 0.0
      %560 = vmatprep.subr.mxu0 0.0
      %561 = vmatpush1.msra.mxu0 0.0
      %562 = vmatprep.subr.mxu0 0.0
      %563 = vmatpush1.msra.mxu0 0.0
      %564 = vmatprep.subr.mxu0 0.0
      %565 = vmatpush1.msra.mxu0 0.0
      %566 = vmatprep.subr.mxu0 0.0
      %567 = vmatpush1.msra.mxu0 0.0
      %568 = vmatprep.subr.mxu0 0.0
      %569 = vmatpush1.msra.mxu0 0.0
      %570 = vmatprep.subr.mxu0 0.0
      %571 = vmatpush1.msra.mxu0 0.0
      %572 = vmatprep.subr.mxu0 0.0
      %573 = vmatpush1.msra.mxu0 0.0
      %574 = vmatprep.subr.mxu0 0.0
      %575 = vmatpush1.msra.mxu0 0.0
      %576 = vmatprep.subr.mxu0 0.0
      %577 = vmatpush1.msra.mxu0 0.0
      %578 = vmatprep.subr.mxu0 0.0
      %579 = vmatpush1.msra.mxu0 0.0
      %580 = vmatprep.subr.mxu0 0.0
      %581 = vmatpush1.msra.mxu0 0.0
      %582 = vmatprep.subr.mxu0 0.0
      %583 = vmatpush1.msra.mxu0 0.0
      %584 = vmatprep.subr.mxu0 0.0
      %585 = vmatpush1.msra.mxu0 0.0
      %586 = vmatprep.subr.mxu0 0.0
      %587 = vmatpush1.msra.mxu0 0.0
      %588 = vmatprep.subr.mxu0 0.0
      %589 = vmatpush1.msra.mxu0 0.0
      %590 = vmatprep.mubr.f32.mxu0 0.0
      %591 = vmatmul.mubr.f32.gmra.mrb[0].mxu0 %v524
      %v592 = vpop.f32.mrb[0].mxu0
      %v593 = vadd.f32 %v520, %v592
      %v594 = vpop.f32.mrb[0].mxu0
      %595 = vdwg.mxu0
      %v596 = vld [vmem:[%s6] sm:$0xff]
      %v597 = vld [vmem:[%s6 + $0x8] sm:$0xff]
      %v598 = vld [vmem:[%s6 + $0x10] sm:$0xff]
      %v599 = vld [vmem:[%s6 + $0x18] sm:$0xff]
      %v600 = vld [vmem:[%s7] sm:$0x1]
      %v602 = vlaneseq
      %v603 = vshrl.u32 %v602, 7
      %v604 = vsub.s32 0, %v603
      %v605 = vrot.slane %v600, %v604
      %607 = vmatprep.subr.mxu0 0.0
      %608 = vmatpush1.msra.mxu0 %v596
      %609 = vmatprep.subr.mxu0 0.0
      %610 = vmatpush1.msra.mxu0 %v597
      %611 = vmatprep.subr.mxu0 0.0
      %612 = vmatpush1.msra.mxu0 %v598
      %613 = vmatprep.subr.mxu0 0.0
      %614 = vmatpush1.msra.mxu0 %v599
      %615 = vmatprep.subr.mxu0 0.0
      %616 = vmatpush1.msra.mxu0 0.0
      %617 = vmatprep.subr.mxu0 0.0
      %618 = vmatpush1.msra.mxu0 0.0
      %619 = vmatprep.subr.mxu0 0.0
      %620 = vmatpush1.msra.mxu0 0.0
      %621 = vmatprep.subr.mxu0 0.0
      %622 = vmatpush1.msra.mxu0 0.0
      %623 = vmatprep.subr.mxu0 0.0
      %624 = vmatpush1.msra.mxu0 0.0
      %625 = vmatprep.subr.mxu0 0.0
      %626 = vmatpush1.msra.mxu0 0.0
      %627 = vmatprep.subr.mxu0 0.0
      %628 = vmatpush1.msra.mxu0 0.0
      %629 = vmatprep.subr.mxu0 0.0
      %630 = vmatpush1.msra.mxu0 0.0
      %631 = vmatprep.subr.mxu0 0.0
      %632 = vmatpush1.msra.mxu0 0.0
      %633 = vmatprep.subr.mxu0 0.0
      %634 = vmatpush1.msra.mxu0 0.0
      %635 = vmatprep.subr.mxu0 0.0
      %636 = vmatpush1.msra.mxu0 0.0
      %637 = vmatprep.subr.mxu0 0.0
      %638 = vmatpush1.msra.mxu0 0.0
      %639 = vmatprep.subr.mxu0 0.0
      %640 = vmatpush1.msra.mxu0 0.0
      %641 = vmatprep.subr.mxu0 0.0
      %642 = vmatpush1.msra.mxu0 0.0
      %643 = vmatprep.subr.mxu0 0.0
      %644 = vmatpush1.msra.mxu0 0.0
      %645 = vmatprep.subr.mxu0 0.0
      %646 = vmatpush1.msra.mxu0 0.0
      %647 = vmatprep.subr.mxu0 0.0
      %648 = vmatpush1.msra.mxu0 0.0
      %649 = vmatprep.subr.mxu0 0.0
      %650 = vmatpush1.msra.mxu0 0.0
      %651 = vmatprep.subr.mxu0 0.0
      %652 = vmatpush1.msra.mxu0 0.0
      %653 = vmatprep.subr.mxu0 0.0
      %654 = vmatpush1.msra.mxu0 0.0
      %655 = vmatprep.subr.mxu0 0.0
      %656 = vmatpush1.msra.mxu0 0.0
      %657 = vmatprep.subr.mxu0 0.0
      %658 = vmatpush1.msra.mxu0 0.0
      %659 = vmatprep.subr.mxu0 0.0
      %660 = vmatpush1.msra.mxu0 0.0
      %661 = vmatprep.subr.mxu0 0.0
      %662 = vmatpush1.msra.mxu0 0.0
      %663 = vmatprep.subr.mxu0 0.0
      %664 = vmatpush1.msra.mxu0 0.0
      %665 = vmatprep.subr.mxu0 0.0
      %666 = vmatpush1.msra.mxu0 0.0
      %667 = vmatprep.subr.mxu0 0.0
      %668 = vmatpush1.msra.mxu0 0.0
      %669 = vmatprep.subr.mxu0 0.0
      %670 = vmatpush1.msra.mxu0 0.0
      %671 = vmatprep.mubr.f32.mxu0 0.0
      %672 = vmatmul.mubr.f32.gmra.mrb[0].mxu0 %v524
      %v673 = vpop.f32.mrb[0].mxu0
      %v674 = vadd.f32 %v605, %v673
      %v675 = vpop.f32.mrb[0].mxu0
      %676 = vdwg.mxu0
      %v677 = vld [vmem:[%s8] sm:$0xff]
      %v678 = vld [vmem:[%s8 + $0x8] sm:$0xff]
      %v679 = vld [vmem:[%s8 + $0x10] sm:$0xff]
      %v680 = vld [vmem:[%s8 + $0x18] sm:$0xff]
      %vm681 = vcmask 64512
      %v683 = vsel %vm681, %v508, 0
      %v686 = vsel %vm681, %v593, 0
      %688 = vmatprep.subr.mxu0 0.0
      %689 = vmatpush1.xpose.msra.mxu0 %v686
      %690 = vmatprep.subr.mxu0 0.0
      %691 = vmatpush1.xpose.msra.mxu0 0.0
      %692 = vmatprep.subr.mxu0 0.0
      %693 = vmatpush1.xpose.msra.mxu0 0.0
      %694 = vmatprep.subr.mxu0 0.0
      %695 = vmatpush1.xpose.msra.mxu0 0.0
      %696 = vmatprep.subr.mxu0 0.0
      %697 = vmatpush1.xpose.msra.mxu0 0.0
      %698 = vmatprep.subr.mxu0 0.0
      %699 = vmatpush1.xpose.msra.mxu0 0.0
      %700 = vmatprep.subr.mxu0 0.0
      %701 = vmatpush1.xpose.msra.mxu0 0.0
      %702 = vmatprep.subr.mxu0 0.0
      %703 = vmatpush1.xpose.msra.mxu0 0.0
      %704 = vmatprep.subr.mxu0 0.0
      %705 = vmatpush1.xpose.msra.mxu0 0.0
      %706 = vmatprep.subr.mxu0 0.0
      %707 = vmatpush1.xpose.msra.mxu0 0.0
      %708 = vmatprep.subr.mxu0 0.0
      %709 = vmatpush1.xpose.msra.mxu0 0.0
      %710 = vmatprep.subr.mxu0 0.0
      %711 = vmatpush1.xpose.msra.mxu0 0.0
      %712 = vmatprep.subr.mxu0 0.0
      %713 = vmatpush1.xpose.msra.mxu0 0.0
      %714 = vmatprep.subr.mxu0 0.0
      %715 = vmatpush1.xpose.msra.mxu0 0.0
      %716 = vmatprep.subr.mxu0 0.0
      %717 = vmatpush1.xpose.msra.mxu0 0.0
      %718 = vmatprep.subr.mxu0 0.0
      %719 = vmatpush1.xpose.msra.mxu0 0.0
      %720 = vmatprep.subr.mxu0 0.0
      %721 = vmatpush1.xpose.msra.mxu0 0.0
      %722 = vmatprep.subr.mxu0 0.0
      %723 = vmatpush1.xpose.msra.mxu0 0.0
      %724 = vmatprep.subr.mxu0 0.0
      %725 = vmatpush1.xpose.msra.mxu0 0.0
      %726 = vmatprep.subr.mxu0 0.0
      %727 = vmatpush1.xpose.msra.mxu0 0.0
      %728 = vmatprep.subr.mxu0 0.0
      %729 = vmatpush1.xpose.msra.mxu0 0.0
      %730 = vmatprep.subr.mxu0 0.0
      %731 = vmatpush1.xpose.msra.mxu0 0.0
      %732 = vmatprep.subr.mxu0 0.0
      %733 = vmatpush1.xpose.msra.mxu0 0.0
      %734 = vmatprep.subr.mxu0 0.0
      %735 = vmatpush1.xpose.msra.mxu0 0.0
      %736 = vmatprep.subr.mxu0 0.0
      %737 = vmatpush1.xpose.msra.mxu0 0.0
      %738 = vmatprep.subr.mxu0 0.0
      %739 = vmatpush1.xpose.msra.mxu0 0.0
      %740 = vmatprep.subr.mxu0 0.0
      %741 = vmatpush1.xpose.msra.mxu0 0.0
      %742 = vmatprep.subr.mxu0 0.0
      %743 = vmatpush1.xpose.msra.mxu0 0.0
      %744 = vmatprep.subr.mxu0 0.0
      %745 = vmatpush1.xpose.msra.mxu0 0.0
      %746 = vmatprep.subr.mxu0 0.0
      %747 = vmatpush1.xpose.msra.mxu0 0.0
      %748 = vmatprep.subr.mxu0 0.0
      %749 = vmatpush1.xpose.msra.mxu0 0.0
      %750 = vmatprep.subr.mxu0 0.0
      %751 = vmatpush1.xpose.msra.mxu0 0.0
      %752 = vmatprep.mubr.f32.mxu0 0.0
      %753 = vmatmul.mubr.f32.gmra.mrb[0].mxu0 %v683
      %v754 = vpop.f32.mrb[0].mxu0
      %v755 = vadd.f32 0.0, %v754
      %v756 = vpop.f32.mrb[0].mxu0
      %757 = vdwg.mxu0
      %v758 = vmul.f32 %v755, 0.125
      %v759 = vsel %vm681, %v758, -inf
      %760 = vmax.xlane.f32.xlu0 %v759
      %v761 = vpop.xlane.xlu0 %760
      %v762 = vsub.f32 %v758, %v761
      %v763 = vmul.f32 %v762, 1.442695
      %v764 = vpow.pop %v763
      %v765 = vsel %vm681, %v764, 0.0
      %766 = vadd.xlane.f32.xlu0 %v765
      %v767 = vpop.xlane.xlu0 %766
      %v768 = vrcp.pop %v767
      %v769 = vmul.f32 %v764, %v768
      %v771 = vsel %vm681, %v769, 0
      %773 = vmatprep.subr.mxu0 0.0
      %774 = vmatpush1.msra.mxu0 %v674
      %775 = vmatprep.subr.mxu0 0.0
      %776 = vmatpush1.msra.mxu0 0.0
      %777 = vmatprep.subr.mxu0 0.0
      %778 = vmatpush1.msra.mxu0 0.0
      %779 = vmatprep.subr.mxu0 0.0
      %780 = vmatpush1.msra.mxu0 0.0
      %781 = vmatprep.subr.mxu0 0.0
      %782 = vmatpush1.msra.mxu0 0.0
      %783 = vmatprep.subr.mxu0 0.0
      %784 = vmatpush1.msra.mxu0 0.0
      %785 = vmatprep.subr.mxu0 0.0
      %786 = vmatpush1.msra.mxu0 0.0
      %787 = vmatprep.subr.mxu0 0.0
      %788 = vmatpush1.msra.mxu0 0.0
      %789 = vmatprep.subr.mxu0 0.0
      %790 = vmatpush1.msra.mxu0 0.0
      %791 = vmatprep.subr.mxu0 0.0
      %792 = vmatpush1.msra.mxu0 0.0
      %793 = vmatprep.subr.mxu0 0.0
      %794 = vmatpush1.msra.mxu0 0.0
      %795 = vmatprep.subr.mxu0 0.0
      %796 = vmatpush1.msra.mxu0 0.0
      %797 = vmatprep.subr.mxu0 0.0
      %798 = vmatpush1.msra.mxu0 0.0
      %799 = vmatprep.subr.mxu0 0.0
      %800 = vmatpush1.msra.mxu0 0.0
      %801 = vmatprep.subr.mxu0 0.0
      %802 = vmatpush1.msra.mxu0 0.0
      %803 = vmatprep.subr.mxu0 0.0
      %804 = vmatpush1.msra.mxu0 0.0
      %805 = vmatprep.subr.mxu0 0.0
      %806 = vmatpush1.msra.mxu0 0.0
      %807 = vmatprep.subr.mxu0 0.0
      %808 = vmatpush1.msra.mxu0 0.0
      %809 = vmatprep.subr.mxu0 0.0
      %810 = vmatpush1.msra.mxu0 0.0
      %811 = vmatprep.subr.mxu0 0.0
      %812 = vmatpush1.msra.mxu0 0.0
      %813 = vmatprep.subr.mxu0 0.0
      %814 = vmatpush1.msra.mxu0 0.0
      %815 = vmatprep.subr.mxu0 0.0
      %816 = vmatpush1.msra.mxu0 0.0
      %817 = vmatprep.subr.mxu0 0.0
      %818 = vmatpush1.msra.mxu0 0.0
      %819 = vmatprep.subr.mxu0 0.0
      %820 = vmatpush1.msra.mxu0 0.0
      %821 = vmatprep.subr.mxu0 0.0
      %822 = vmatpush1.msra.mxu0 0.0
      %823 = vmatprep.subr.mxu0 0.0
      %824 = vmatpush1.msra.mxu0 0.0
      %825 = vmatprep.subr.mxu0 0.0
      %826 = vmatpush1.msra.mxu0 0.0
      %827 = vmatprep.subr.mxu0 0.0
      %828 = vmatpush1.msra.mxu0 0.0
      %829 = vmatprep.subr.mxu0 0.0
      %830 = vmatpush1.msra.mxu0 0.0
      %831 = vmatprep.subr.mxu0 0.0
      %832 = vmatpush1.msra.mxu0 0.0
      %833 = vmatprep.subr.mxu0 0.0
      %834 = vmatpush1.msra.mxu0 0.0
      %835 = vmatprep.subr.mxu0 0.0
      %836 = vmatpush1.msra.mxu0 0.0
      %837 = vmatprep.mubr.f32.mxu0 0.0
      %838 = vmatmul.mubr.f32.gmra.mrb[0].mxu0 %v771
      %v839 = vpop.f32.mrb[0].mxu0
      %v840 = vadd.f32 0.0, %v839
      %v841 = vpop.f32.mrb[0].mxu0
      %842 = vdwg.mxu0
      %843 = vrot.lane.b32.xlu0 %v508, 120
      %v844 = vpop.permute.xlu0 %843
      %845 = vrot.lane.b32.xlu0 %v593, 120
      %v846 = vpop.permute.xlu0 %845
      %v847 = vsel %vm681, %v844, 0
      %v849 = vsel %vm681, %v846, 0
      %851 = vmatprep.subr.mxu0 0.0
      %852 = vmatpush1.xpose.msra.mxu0 %v849
      %853 = vmatprep.subr.mxu0 0.0
      %854 = vmatpush1.xpose.msra.mxu0 0.0
      %855 = vmatprep.subr.mxu0 0.0
      %856 = vmatpush1.xpose.msra.mxu0 0.0
      %857 = vmatprep.subr.mxu0 0.0
      %858 = vmatpush1.xpose.msra.mxu0 0.0
      %859 = vmatprep.subr.mxu0 0.0
      %860 = vmatpush1.xpose.msra.mxu0 0.0
      %861 = vmatprep.subr.mxu0 0.0
      %862 = vmatpush1.xpose.msra.mxu0 0.0
      %863 = vmatprep.subr.mxu0 0.0
      %864 = vmatpush1.xpose.msra.mxu0 0.0
      %865 = vmatprep.subr.mxu0 0.0
      %866 = vmatpush1.xpose.msra.mxu0 0.0
      %867 = vmatprep.subr.mxu0 0.0
      %868 = vmatpush1.xpose.msra.mxu0 0.0
      %869 = vmatprep.subr.mxu0 0.0
      %870 = vmatpush1.xpose.msra.mxu0 0.0
      %871 = vmatprep.subr.mxu0 0.0
      %872 = vmatpush1.xpose.msra.mxu0 0.0
      %873 = vmatprep.subr.mxu0 0.0
      %874 = vmatpush1.xpose.msra.mxu0 0.0
      %875 = vmatprep.subr.mxu0 0.0
      %876 = vmatpush1.xpose.msra.mxu0 0.0
      %877 = vmatprep.subr.mxu0 0.0
      %878 = vmatpush1.xpose.msra.mxu0 0.0
      %879 = vmatprep.subr.mxu0 0.0
      %880 = vmatpush1.xpose.msra.mxu0 0.0
      %881 = vmatprep.subr.mxu0 0.0
      %882 = vmatpush1.xpose.msra.mxu0 0.0
      %883 = vmatprep.subr.mxu0 0.0
      %884 = vmatpush1.xpose.msra.mxu0 0.0
      %885 = vmatprep.subr.mxu0 0.0
      %886 = vmatpush1.xpose.msra.mxu0 0.0
      %887 = vmatprep.subr.mxu0 0.0
      %888 = vmatpush1.xpose.msra.mxu0 0.0
      %889 = vmatprep.subr.mxu0 0.0
      %890 = vmatpush1.xpose.msra.mxu0 0.0
      %891 = vmatprep.subr.mxu0 0.0
      %892 = vmatpush1.xpose.msra.mxu0 0.0
      %893 = vmatprep.subr.mxu0 0.0
      %894 = vmatpush1.xpose.msra.mxu0 0.0
      %895 = vmatprep.subr.mxu0 0.0
      %896 = vmatpush1.xpose.msra.mxu0 0.0
      %897 = vmatprep.subr.mxu0 0.0
      %898 = vmatpush1.xpose.msra.mxu0 0.0
      %899 = vmatprep.subr.mxu0 0.0
      %900 = vmatpush1.xpose.msra.mxu0 0.0
      %901 = vmatprep.subr.mxu0 0.0
      %902 = vmatpush1.xpose.msra.mxu0 0.0
      %903 = vmatprep.subr.mxu0 0.0
      %904 = vmatpush1.xpose.msra.mxu0 0.0
      %905 = vmatprep.subr.mxu0 0.0
      %906 = vmatpush1.xpose.msra.mxu0 0.0
      %907 = vmatprep.subr.mxu0 0.0
      %908 = vmatpush1.xpose.msra.mxu0 0.0
      %909 = vmatprep.subr.mxu0 0.0
      %910 = vmatpush1.xpose.msra.mxu0 0.0
      %911 = vmatprep.subr.mxu0 0.0
      %912 = vmatpush1.xpose.msra.mxu0 0.0
      %913 = vmatprep.subr.mxu0 0.0
      %914 = vmatpush1.xpose.msra.mxu0 0.0
      %915 = vmatprep.mubr.f32.mxu0 0.0
      %916 = vmatmul.mubr.f32.gmra.mrb[0].mxu0 %v847
      %v917 = vpop.f32.mrb[0].mxu0
      %v918 = vadd.f32 0.0, %v917
      %v919 = vpop.f32.mrb[0].mxu0
      %920 = vdwg.mxu0
      %v921 = vmul.f32 %v918, 0.125
      %v922 = vsel %vm681, %v921, -inf
      %923 = vmax.xlane.f32.xlu0 %v922
      %v924 = vpop.xlane.xlu0 %923
      %v925 = vsub.f32 %v921, %v924
      %v926 = vmul.f32 %v925, 1.442695
      %v927 = vpow.pop %v926
      %v928 = vsel %vm681, %v927, 0.0
      %929 = vadd.xlane.f32.xlu0 %v928
      %v930 = vpop.xlane.xlu0 %929
      %v931 = vrcp.pop %v930
      %v932 = vmul.f32 %v927, %v931
      %934 = vrot.lane.b32.xlu0 %v674, 120
      %v935 = vpop.permute.xlu0 %934
      %v938 = vsel %vm681, %v932, 0
      %940 = vmatprep.subr.mxu0 0.0
      %941 = vmatpush1.msra.mxu0 %v935
      %942 = vmatprep.subr.mxu0 0.0
      %943 = vmatpush1.msra.mxu0 0.0
      %944 = vmatprep.subr.mxu0 0.0
      %945 = vmatpush1.msra.mxu0 0.0
      %946 = vmatprep.subr.mxu0 0.0
      %947 = vmatpush1.msra.mxu0 0.0
      %948 = vmatprep.subr.mxu0 0.0
      %949 = vmatpush1.msra.mxu0 0.0
      %950 = vmatprep.subr.mxu0 0.0
      %951 = vmatpush1.msra.mxu0 0.0
      %952 = vmatprep.subr.mxu0 0.0
      %953 = vmatpush1.msra.mxu0 0.0
      %954 = vmatprep.subr.mxu0 0.0
      %955 = vmatpush1.msra.mxu0 0.0
      %956 = vmatprep.subr.mxu0 0.0
      %957 = vmatpush1.msra.mxu0 0.0
      %958 = vmatprep.subr.mxu0 0.0
      %959 = vmatpush1.msra.mxu0 0.0
      %960 = vmatprep.subr.mxu0 0.0
      %961 = vmatpush1.msra.mxu0 0.0
      %962 = vmatprep.subr.mxu0 0.0
      %963 = vmatpush1.msra.mxu0 0.0
      %964 = vmatprep.subr.mxu0 0.0
      %965 = vmatpush1.msra.mxu0 0.0
      %966 = vmatprep.subr.mxu0 0.0
      %967 = vmatpush1.msra.mxu0 0.0
      %968 = vmatprep.subr.mxu0 0.0
      %969 = vmatpush1.msra.mxu0 0.0
      %970 = vmatprep.subr.mxu0 0.0
      %971 = vmatpush1.msra.mxu0 0.0
      %972 = vmatprep.subr.mxu0 0.0
      %973 = vmatpush1.msra.mxu0 0.0
      %974 = vmatprep.subr.mxu0 0.0
      %975 = vmatpush1.msra.mxu0 0.0
      %976 = vmatprep.subr.mxu0 0.0
      %977 = vmatpush1.msra.mxu0 0.0
      %978 = vmatprep.subr.mxu0 0.0
      %979 = vmatpush1.msra.mxu0 0.0
      %980 = vmatprep.subr.mxu0 0.0
      %981 = vmatpush1.msra.mxu0 0.0
      %982 = vmatprep.subr.mxu0 0.0
      %983 = vmatpush1.msra.mxu0 0.0
      %984 = vmatprep.subr.mxu0 0.0
      %985 = vmatpush1.msra.mxu0 0.0
      %986 = vmatprep.subr.mxu0 0.0
      %987 = vmatpush1.msra.mxu0 0.0
      %988 = vmatprep.subr.mxu0 0.0
      %989 = vmatpush1.msra.mxu0 0.0
      %990 = vmatprep.subr.mxu0 0.0
      %991 = vmatpush1.msra.mxu0 0.0
      %992 = vmatprep.subr.mxu0 0.0
      %993 = vmatpush1.msra.mxu0 0.0
      %994 = vmatprep.subr.mxu0 0.0
      %995 = vmatpush1.msra.mxu0 0.0
      %996 = vmatprep.subr.mxu0 0.0
      %997 = vmatpush1.msra.mxu0 0.0
      %998 = vmatprep.subr.mxu0 0.0
      %999 = vmatpush1.msra.mxu0 0.0
      %1000 = vmatprep.subr.mxu0 0.0
      %1001 = vmatpush1.msra.mxu0 0.0
      %1002 = vmatprep.subr.mxu0 0.0
      %1003 = vmatpush1.msra.mxu0 0.0
      %1004 = vmatprep.mubr.f32.mxu0 0.0
      %1005 = vmatmul.mubr.f32.gmra.mrb[0].mxu0 %v938
      %v1006 = vpop.f32.mrb[0].mxu0
      %v1007 = vadd.f32 0.0, %v1006
      %v1008 = vpop.f32.mrb[0].mxu0
      %1009 = vdwg.mxu0
      %v1011 = vsel %vm681, %v1007, 0
      %1013 = vmatprep.subr.mxu0 0.0
      %1014 = vmatpush1.msra.mxu0 %v678
      %1015 = vmatprep.subr.mxu0 0.0
      %1016 = vmatpush1.msra.mxu0 0.0
      %1017 = vmatprep.subr.mxu0 0.0
      %1018 = vmatpush1.msra.mxu0 0.0
      %1019 = vmatprep.subr.mxu0 0.0
      %1020 = vmatpush1.msra.mxu0 0.0
      %1021 = vmatprep.subr.mxu0 0.0
      %1022 = vmatpush1.msra.mxu0 0.0
      %1023 = vmatprep.subr.mxu0 0.0
      %1024 = vmatpush1.msra.mxu0 0.0
      %1025 = vmatprep.subr.mxu0 0.0
      %1026 = vmatpush1.msra.mxu0 0.0
      %1027 = vmatprep.subr.mxu0 0.0
      %1028 = vmatpush1.msra.mxu0 0.0
      %1029 = vmatprep.subr.mxu0 0.0
      %1030 = vmatpush1.msra.mxu0 0.0
      %1031 = vmatprep.subr.mxu0 0.0
      %1032 = vmatpush1.msra.mxu0 0.0
      %1033 = vmatprep.subr.mxu0 0.0
      %1034 = vmatpush1.msra.mxu0 0.0
      %1035 = vmatprep.subr.mxu0 0.0
      %1036 = vmatpush1.msra.mxu0 0.0
      %1037 = vmatprep.subr.mxu0 0.0
      %1038 = vmatpush1.msra.mxu0 0.0
      %1039 = vmatprep.subr.mxu0 0.0
      %1040 = vmatpush1.msra.mxu0 0.0
      %1041 = vmatprep.subr.mxu0 0.0
      %1042 = vmatpush1.msra.mxu0 0.0
      %1043 = vmatprep.subr.mxu0 0.0
      %1044 = vmatpush1.msra.mxu0 0.0
      %1045 = vmatprep.subr.mxu0 0.0
      %1046 = vmatpush1.msra.mxu0 0.0
      %1047 = vmatprep.subr.mxu0 0.0
      %1048 = vmatpush1.msra.mxu0 0.0
      %1049 = vmatprep.subr.mxu0 0.0
      %1050 = vmatpush1.msra.mxu0 0.0
      %1051 = vmatprep.subr.mxu0 0.0
      %1052 = vmatpush1.msra.mxu0 0.0
      %1053 = vmatprep.subr.mxu0 0.0
      %1054 = vmatpush1.msra.mxu0 0.0
      %1055 = vmatprep.subr.mxu0 0.0
      %1056 = vmatpush1.msra.mxu0 0.0
      %1057 = vmatprep.subr.mxu0 0.0
      %1058 = vmatpush1.msra.mxu0 0.0
      %1059 = vmatprep.subr.mxu0 0.0
      %1060 = vmatpush1.msra.mxu0 0.0
      %1061 = vmatprep.subr.mxu0 0.0
      %1062 = vmatpush1.msra.mxu0 0.0
      %1063 = vmatprep.subr.mxu0 0.0
      %1064 = vmatpush1.msra.mxu0 0.0
      %1065 = vmatprep.subr.mxu0 0.0
      %1066 = vmatpush1.msra.mxu0 0.0
      %1067 = vmatprep.subr.mxu0 0.0
      %1068 = vmatpush1.msra.mxu0 0.0
      %1069 = vmatprep.subr.mxu0 0.0
      %1070 = vmatpush1.msra.mxu0 0.0
      %1071 = vmatprep.subr.mxu0 0.0
      %1072 = vmatpush1.msra.mxu0 0.0
      %1073 = vmatprep.subr.mxu0 0.0
      %1074 = vmatpush1.msra.mxu0 0.0
      %1075 = vmatprep.subr.mxu0 0.0
      %1076 = vmatpush1.msra.mxu0 0.0
      %1077 = vmatprep.mubr.f32.mxu0 0.0
      %1078 = vmatmul.mubr.f32.gmra.mrb[0].mxu0 %v1011
      %v1079 = vpop.f32.mrb[0].mxu0
      %v1080 = vadd.f32 0.0, %v1079
      %v1081 = vpop.f32.mrb[0].mxu0
      %1082 = vdwg.mxu0
      %v1084 = vsel %vm681, %v840, 0
      %1086 = vmatprep.subr.mxu0 0.0
      %1087 = vmatpush1.msra.mxu0 %v677
      %1088 = vmatprep.subr.mxu0 0.0
      %1089 = vmatpush1.msra.mxu0 0.0
      %1090 = vmatprep.subr.mxu0 0.0
      %1091 = vmatpush1.msra.mxu0 0.0
      %1092 = vmatprep.subr.mxu0 0.0
      %1093 = vmatpush1.msra.mxu0 0.0
      %1094 = vmatprep.subr.mxu0 0.0
      %1095 = vmatpush1.msra.mxu0 0.0
      %1096 = vmatprep.subr.mxu0 0.0
      %1097 = vmatpush1.msra.mxu0 0.0
      %1098 = vmatprep.subr.mxu0 0.0
      %1099 = vmatpush1.msra.mxu0 0.0
      %1100 = vmatprep.subr.mxu0 0.0
      %1101 = vmatpush1.msra.mxu0 0.0
      %1102 = vmatprep.subr.mxu0 0.0
      %1103 = vmatpush1.msra.mxu0 0.0
      %1104 = vmatprep.subr.mxu0 0.0
      %1105 = vmatpush1.msra.mxu0 0.0
      %1106 = vmatprep.subr.mxu0 0.0
      %1107 = vmatpush1.msra.mxu0 0.0
      %1108 = vmatprep.subr.mxu0 0.0
      %1109 = vmatpush1.msra.mxu0 0.0
      %1110 = vmatprep.subr.mxu0 0.0
      %1111 = vmatpush1.msra.mxu0 0.0
      %1112 = vmatprep.subr.mxu0 0.0
      %1113 = vmatpush1.msra.mxu0 0.0
      %1114 = vmatprep.subr.mxu0 0.0
      %1115 = vmatpush1.msra.mxu0 0.0
      %1116 = vmatprep.subr.mxu0 0.0
      %1117 = vmatpush1.msra.mxu0 0.0
      %1118 = vmatprep.subr.mxu0 0.0
      %1119 = vmatpush1.msra.mxu0 0.0
      %1120 = vmatprep.subr.mxu0 0.0
      %1121 = vmatpush1.msra.mxu0 0.0
      %1122 = vmatprep.subr.mxu0 0.0
      %1123 = vmatpush1.msra.mxu0 0.0
      %1124 = vmatprep.subr.mxu0 0.0
      %1125 = vmatpush1.msra.mxu0 0.0
      %1126 = vmatprep.subr.mxu0 0.0
      %1127 = vmatpush1.msra.mxu0 0.0
      %1128 = vmatprep.subr.mxu0 0.0
      %1129 = vmatpush1.msra.mxu0 0.0
      %1130 = vmatprep.subr.mxu0 0.0
      %1131 = vmatpush1.msra.mxu0 0.0
      %1132 = vmatprep.subr.mxu0 0.0
      %1133 = vmatpush1.msra.mxu0 0.0
      %1134 = vmatprep.subr.mxu0 0.0
      %1135 = vmatpush1.msra.mxu0 0.0
      %1136 = vmatprep.subr.mxu0 0.0
      %1137 = vmatpush1.msra.mxu0 0.0
      %1138 = vmatprep.subr.mxu0 0.0
      %1139 = vmatpush1.msra.mxu0 0.0
      %1140 = vmatprep.subr.mxu0 0.0
      %1141 = vmatpush1.msra.mxu0 0.0
      %1142 = vmatprep.subr.mxu0 0.0
      %1143 = vmatpush1.msra.mxu0 0.0
      %1144 = vmatprep.subr.mxu0 0.0
      %1145 = vmatpush1.msra.mxu0 0.0
      %1146 = vmatprep.subr.mxu0 0.0
      %1147 = vmatpush1.msra.mxu0 0.0
      %1148 = vmatprep.subr.mxu0 0.0
      %1149 = vmatpush1.msra.mxu0 0.0
      %1150 = vmatprep.mubr.f32.mxu0 0.0
      %1151 = vmatmul.mubr.f32.gmra.mrb[0].mxu0 %v1084
      %v1152 = vpop.f32.mrb[0].mxu0
      %v1153 = vadd.f32 %v1080, %v1152
      %v1154 = vpop.f32.mrb[0].mxu0
      %1155 = vdwg.mxu0
      %1156 = vrot.lane.b32.xlu0 %v508, 112
      %v1157 = vpop.permute.xlu0 %1156
      %1158 = vrot.lane.b32.xlu0 %v593, 112
      %v1159 = vpop.permute.xlu0 %1158
      %v1160 = vsel %vm681, %v1157, 0
      %v1162 = vsel %vm681, %v1159, 0
      %1164 = vmatprep.subr.mxu0 0.0
      %1165 = vmatpush1.xpose.msra.mxu0 %v1162
      %1166 = vmatprep.subr.mxu0 0.0
      %1167 = vmatpush1.xpose.msra.mxu0 0.0
      %1168 = vmatprep.subr.mxu0 0.0
      %1169 = vmatpush1.xpose.msra.mxu0 0.0
      %1170 = vmatprep.subr.mxu0 0.0
      %1171 = vmatpush1.xpose.msra.mxu0 0.0
      %1172 = vmatprep.subr.mxu0 0.0
      %1173 = vmatpush1.xpose.msra.mxu0 0.0
      %1174 = vmatprep.subr.mxu0 0.0
      %1175 = vmatpush1.xpose.msra.mxu0 0.0
      %1176 = vmatprep.subr.mxu0 0.0
      %1177 = vmatpush1.xpose.msra.mxu0 0.0
      %1178 = vmatprep.subr.mxu0 0.0
      %1179 = vmatpush1.xpose.msra.mxu0 0.0
      %1180 = vmatprep.subr.mxu0 0.0
      %1181 = vmatpush1.xpose.msra.mxu0 0.0
      %1182 = vmatprep.subr.mxu0 0.0
      %1183 = vmatpush1.xpose.msra.mxu0 0.0
      %1184 = vmatprep.subr.mxu0 0.0
      %1185 = vmatpush1.xpose.msra.mxu0 0.0
      %1186 = vmatprep.subr.mxu0 0.0
      %1187 = vmatpush1.xpose.msra.mxu0 0.0
      %1188 = vmatprep.subr.mxu0 0.0
      %1189 = vmatpush1.xpose.msra.mxu0 0.0
      %1190 = vmatprep.subr.mxu0 0.0
      %1191 = vmatpush1.xpose.msra.mxu0 0.0
      %1192 = vmatprep.subr.mxu0 0.0
      %1193 = vmatpush1.xpose.msra.mxu0 0.0
      %1194 = vmatprep.subr.mxu0 0.0
      %1195 = vmatpush1.xpose.msra.mxu0 0.0
      %1196 = vmatprep.subr.mxu0 0.0
      %1197 = vmatpush1.xpose.msra.mxu0 0.0
      %1198 = vmatprep.subr.mxu0 0.0
      %1199 = vmatpush1.xpose.msra.mxu0 0.0
      %1200 = vmatprep.subr.mxu0 0.0
      %1201 = vmatpush1.xpose.msra.mxu0 0.0
      %1202 = vmatprep.subr.mxu0 0.0
      %1203 = vmatpush1.xpose.msra.mxu0 0.0
      %1204 = vmatprep.subr.mxu0 0.0
      %1205 = vmatpush1.xpose.msra.mxu0 0.0
      %1206 = vmatprep.subr.mxu0 0.0
      %1207 = vmatpush1.xpose.msra.mxu0 0.0
      %1208 = vmatprep.subr.mxu0 0.0
      %1209 = vmatpush1.xpose.msra.mxu0 0.0
      %1210 = vmatprep.subr.mxu0 0.0
      %1211 = vmatpush1.xpose.msra.mxu0 0.0
      %1212 = vmatprep.subr.mxu0 0.0
      %1213 = vmatpush1.xpose.msra.mxu0 0.0
      %1214 = vmatprep.subr.mxu0 0.0
      %1215 = vmatpush1.xpose.msra.mxu0 0.0
      %1216 = vmatprep.subr.mxu0 0.0
      %1217 = vmatpush1.xpose.msra.mxu0 0.0
      %1218 = vmatprep.subr.mxu0 0.0
      %1219 = vmatpush1.xpose.msra.mxu0 0.0
      %1220 = vmatprep.subr.mxu0 0.0
      %1221 = vmatpush1.xpose.msra.mxu0 0.0
      %1222 = vmatprep.subr.mxu0 0.0
      %1223 = vmatpush1.xpose.msra.mxu0 0.0
      %1224 = vmatprep.subr.mxu0 0.0
      %1225 = vmatpush1.xpose.msra.mxu0 0.0
      %1226 = vmatprep.subr.mxu0 0.0
      %1227 = vmatpush1.xpose.msra.mxu0 0.0
      %1228 = vmatprep.mubr.f32.mxu0 0.0
      %1229 = vmatmul.mubr.f32.gmra.mrb[0].mxu0 %v1160
      %v1230 = vpop.f32.mrb[0].mxu0
      %v1231 = vadd.f32 0.0, %v1230
      %v1232 = vpop.f32.mrb[0].mxu0
      %1233 = vdwg.mxu0
      %v1234 = vmul.f32 %v1231, 0.125
      %v1235 = vsel %vm681, %v1234, -inf
      %1236 = vmax.xlane.f32.xlu0 %v1235
      %v1237 = vpop.xlane.xlu0 %1236
      %v1238 = vsub.f32 %v1234, %v1237
      %v1239 = vmul.f32 %v1238, 1.442695
      %v1240 = vpow.pop %v1239
      %v1241 = vsel %vm681, %v1240, 0.0
      %1242 = vadd.xlane.f32.xlu0 %v1241
      %v1243 = vpop.xlane.xlu0 %1242
      %v1244 = vrcp.pop %v1243
      %v1245 = vmul.f32 %v1240, %v1244
      %1246 = vrot.lane.b32.xlu0 %v674, 112
      %v1247 = vpop.permute.xlu0 %1246
      %v1250 = vsel %vm681, %v1245, 0
      %1252 = vmatprep.subr.mxu0 0.0
      %1253 = vmatpush1.msra.mxu0 %v1247
      %1254 = vmatprep.subr.mxu0 0.0
      %1255 = vmatpush1.msra.mxu0 0.0
      %1256 = vmatprep.subr.mxu0 0.0
      %1257 = vmatpush1.msra.mxu0 0.0
      %1258 = vmatprep.subr.mxu0 0.0
      %1259 = vmatpush1.msra.mxu0 0.0
      %1260 = vmatprep.subr.mxu0 0.0
      %1261 = vmatpush1.msra.mxu0 0.0
      %1262 = vmatprep.subr.mxu0 0.0
      %1263 = vmatpush1.msra.mxu0 0.0
      %1264 = vmatprep.subr.mxu0 0.0
      %1265 = vmatpush1.msra.mxu0 0.0
      %1266 = vmatprep.subr.mxu0 0.0
      %1267 = vmatpush1.msra.mxu0 0.0
      %1268 = vmatprep.subr.mxu0 0.0
      %1269 = vmatpush1.msra.mxu0 0.0
      %1270 = vmatprep.subr.mxu0 0.0
      %1271 = vmatpush1.msra.mxu0 0.0
      %1272 = vmatprep.subr.mxu0 0.0
      %1273 = vmatpush1.msra.mxu0 0.0
      %1274 = vmatprep.subr.mxu0 0.0
      %1275 = vmatpush1.msra.mxu0 0.0
      %1276 = vmatprep.subr.mxu0 0.0
      %1277 = vmatpush1.msra.mxu0 0.0
      %1278 = vmatprep.subr.mxu0 0.0
      %1279 = vmatpush1.msra.mxu0 0.0
      %1280 = vmatprep.subr.mxu0 0.0
      %1281 = vmatpush1.msra.mxu0 0.0
      %1282 = vmatprep.subr.mxu0 0.0
      %1283 = vmatpush1.msra.mxu0 0.0
      %1284 = vmatprep.subr.mxu0 0.0
      %1285 = vmatpush1.msra.mxu0 0.0
      %1286 = vmatprep.subr.mxu0 0.0
      %1287 = vmatpush1.msra.mxu0 0.0
      %1288 = vmatprep.subr.mxu0 0.0
      %1289 = vmatpush1.msra.mxu0 0.0
      %1290 = vmatprep.subr.mxu0 0.0
      %1291 = vmatpush1.msra.mxu0 0.0
      %1292 = vmatprep.subr.mxu0 0.0
      %1293 = vmatpush1.msra.mxu0 0.0
      %1294 = vmatprep.subr.mxu0 0.0
      %1295 = vmatpush1.msra.mxu0 0.0
      %1296 = vmatprep.subr.mxu0 0.0
      %1297 = vmatpush1.msra.mxu0 0.0
      %1298 = vmatprep.subr.mxu0 0.0
      %1299 = vmatpush1.msra.mxu0 0.0
      %1300 = vmatprep.subr.mxu0 0.0
      %1301 = vmatpush1.msra.mxu0 0.0
      %1302 = vmatprep.subr.mxu0 0.0
      %1303 = vmatpush1.msra.mxu0 0.0
      %1304 = vmatprep.subr.mxu0 0.0
      %1305 = vmatpush1.msra.mxu0 0.0
      %1306 = vmatprep.subr.mxu0 0.0
      %1307 = vmatpush1.msra.mxu0 0.0
      %1308 = vmatprep.subr.mxu0 0.0
      %1309 = vmatpush1.msra.mxu0 0.0
      %1310 = vmatprep.subr.mxu0 0.0
      %1311 = vmatpush1.msra.mxu0 0.0
      %1312 = vmatprep.subr.mxu0 0.0
      %1313 = vmatpush1.msra.mxu0 0.0
      %1314 = vmatprep.subr.mxu0 0.0
      %1315 = vmatpush1.msra.mxu0 0.0
      %1316 = vmatprep.mubr.f32.mxu0 0.0
      %1317 = vmatmul.mubr.f32.gmra.mrb[0].mxu0 %v1250
      %v1318 = vpop.f32.mrb[0].mxu0
      %v1319 = vadd.f32 0.0, %v1318
      %v1320 = vpop.f32.mrb[0].mxu0
      %1321 = vdwg.mxu0
      %v1323 = vsel %vm681, %v1319, 0
      %1325 = vmatprep.subr.mxu0 0.0
      %1326 = vmatpush1.msra.mxu0 %v679
      %1327 = vmatprep.subr.mxu0 0.0
      %1328 = vmatpush1.msra.mxu0 0.0
      %1329 = vmatprep.subr.mxu0 0.0
      %1330 = vmatpush1.msra.mxu0 0.0
      %1331 = vmatprep.subr.mxu0 0.0
      %1332 = vmatpush1.msra.mxu0 0.0
      %1333 = vmatprep.subr.mxu0 0.0
      %1334 = vmatpush1.msra.mxu0 0.0
      %1335 = vmatprep.subr.mxu0 0.0
      %1336 = vmatpush1.msra.mxu0 0.0
      %1337 = vmatprep.subr.mxu0 0.0
      %1338 = vmatpush1.msra.mxu0 0.0
      %1339 = vmatprep.subr.mxu0 0.0
      %1340 = vmatpush1.msra.mxu0 0.0
      %1341 = vmatprep.subr.mxu0 0.0
      %1342 = vmatpush1.msra.mxu0 0.0
      %1343 = vmatprep.subr.mxu0 0.0
      %1344 = vmatpush1.msra.mxu0 0.0
      %1345 = vmatprep.subr.mxu0 0.0
      %1346 = vmatpush1.msra.mxu0 0.0
      %1347 = vmatprep.subr.mxu0 0.0
      %1348 = vmatpush1.msra.mxu0 0.0
      %1349 = vmatprep.subr.mxu0 0.0
      %1350 = vmatpush1.msra.mxu0 0.0
      %1351 = vmatprep.subr.mxu0 0.0
      %1352 = vmatpush1.msra.mxu0 0.0
      %1353 = vmatprep.subr.mxu0 0.0
      %1354 = vmatpush1.msra.mxu0 0.0
      %1355 = vmatprep.subr.mxu0 0.0
      %1356 = vmatpush1.msra.mxu0 0.0
      %1357 = vmatprep.subr.mxu0 0.0
      %1358 = vmatpush1.msra.mxu0 0.0
      %1359 = vmatprep.subr.mxu0 0.0
      %1360 = vmatpush1.msra.mxu0 0.0
      %1361 = vmatprep.subr.mxu0 0.0
      %1362 = vmatpush1.msra.mxu0 0.0
      %1363 = vmatprep.subr.mxu0 0.0
      %1364 = vmatpush1.msra.mxu0 0.0
      %1365 = vmatprep.subr.mxu0 0.0
      %1366 = vmatpush1.msra.mxu0 0.0
      %1367 = vmatprep.subr.mxu0 0.0
      %1368 = vmatpush1.msra.mxu0 0.0
      %1369 = vmatprep.subr.mxu0 0.0
      %1370 = vmatpush1.msra.mxu0 0.0
      %1371 = vmatprep.subr.mxu0 0.0
      %1372 = vmatpush1.msra.mxu0 0.0
      %1373 = vmatprep.subr.mxu0 0.0
      %1374 = vmatpush1.msra.mxu0 0.0
      %1375 = vmatprep.subr.mxu0 0.0
      %1376 = vmatpush1.msra.mxu0 0.0
      %1377 = vmatprep.subr.mxu0 0.0
      %1378 = vmatpush1.msra.mxu0 0.0
      %1379 = vmatprep.subr.mxu0 0.0
      %1380 = vmatpush1.msra.mxu0 0.0
      %1381 = vmatprep.subr.mxu0 0.0
      %1382 = vmatpush1.msra.mxu0 0.0
      %1383 = vmatprep.subr.mxu0 0.0
      %1384 = vmatpush1.msra.mxu0 0.0
      %1385 = vmatprep.subr.mxu0 0.0
      %1386 = vmatpush1.msra.mxu0 0.0
      %1387 = vmatprep.subr.mxu0 0.0
      %1388 = vmatpush1.msra.mxu0 0.0
      %1389 = vmatprep.mubr.f32.mxu0 0.0
      %1390 = vmatmul.mubr.f32.gmra.mrb[0].mxu0 %v1323
      %v1391 = vpop.f32.mrb[0].mxu0
      %v1392 = vadd.f32 0.0, %v1391
      %v1393 = vpop.f32.mrb[0].mxu0
      %1394 = vdwg.mxu0
      %v1395 = vadd.f32 %v1153, %v1392
      %1396 = vrot.lane.b32.xlu0 %v508, 104
      %v1397 = vpop.permute.xlu0 %1396
      %1398 = vrot.lane.b32.xlu0 %v593, 104
      %v1399 = vpop.permute.xlu0 %1398
      %v1400 = vsel %vm681, %v1397, 0
      %v1402 = vsel %vm681, %v1399, 0
      %1404 = vmatprep.subr.mxu0 0.0
      %1405 = vmatpush1.xpose.msra.mxu0 %v1402
      %1406 = vmatprep.subr.mxu0 0.0
      %1407 = vmatpush1.xpose.msra.mxu0 0.0
      %1408 = vmatprep.subr.mxu0 0.0
      %1409 = vmatpush1.xpose.msra.mxu0 0.0
      %1410 = vmatprep.subr.mxu0 0.0
      %1411 = vmatpush1.xpose.msra.mxu0 0.0
      %1412 = vmatprep.subr.mxu0 0.0
      %1413 = vmatpush1.xpose.msra.mxu0 0.0
      %1414 = vmatprep.subr.mxu0 0.0
      %1415 = vmatpush1.xpose.msra.mxu0 0.0
      %1416 = vmatprep.subr.mxu0 0.0
      %1417 = vmatpush1.xpose.msra.mxu0 0.0
      %1418 = vmatprep.subr.mxu0 0.0
      %1419 = vmatpush1.xpose.msra.mxu0 0.0
      %1420 = vmatprep.subr.mxu0 0.0
      %1421 = vmatpush1.xpose.msra.mxu0 0.0
      %1422 = vmatprep.subr.mxu0 0.0
      %1423 = vmatpush1.xpose.msra.mxu0 0.0
      %1424 = vmatprep.subr.mxu0 0.0
      %1425 = vmatpush1.xpose.msra.mxu0 0.0
      %1426 = vmatprep.subr.mxu0 0.0
      %1427 = vmatpush1.xpose.msra.mxu0 0.0
      %1428 = vmatprep.subr.mxu0 0.0
      %1429 = vmatpush1.xpose.msra.mxu0 0.0
      %1430 = vmatprep.subr.mxu0 0.0
      %1431 = vmatpush1.xpose.msra.mxu0 0.0
      %1432 = vmatprep.subr.mxu0 0.0
      %1433 = vmatpush1.xpose.msra.mxu0 0.0
      %1434 = vmatprep.subr.mxu0 0.0
      %1435 = vmatpush1.xpose.msra.mxu0 0.0
      %1436 = vmatprep.subr.mxu0 0.0
      %1437 = vmatpush1.xpose.msra.mxu0 0.0
      %1438 = vmatprep.subr.mxu0 0.0
      %1439 = vmatpush1.xpose.msra.mxu0 0.0
      %1440 = vmatprep.subr.mxu0 0.0
      %1441 = vmatpush1.xpose.msra.mxu0 0.0
      %1442 = vmatprep.subr.mxu0 0.0
      %1443 = vmatpush1.xpose.msra.mxu0 0.0
      %1444 = vmatprep.subr.mxu0 0.0
      %1445 = vmatpush1.xpose.msra.mxu0 0.0
      %1446 = vmatprep.subr.mxu0 0.0
      %1447 = vmatpush1.xpose.msra.mxu0 0.0
      %1448 = vmatprep.subr.mxu0 0.0
      %1449 = vmatpush1.xpose.msra.mxu0 0.0
      %1450 = vmatprep.subr.mxu0 0.0
      %1451 = vmatpush1.xpose.msra.mxu0 0.0
      %1452 = vmatprep.subr.mxu0 0.0
      %1453 = vmatpush1.xpose.msra.mxu0 0.0
      %1454 = vmatprep.subr.mxu0 0.0
      %1455 = vmatpush1.xpose.msra.mxu0 0.0
      %1456 = vmatprep.subr.mxu0 0.0
      %1457 = vmatpush1.xpose.msra.mxu0 0.0
      %1458 = vmatprep.subr.mxu0 0.0
      %1459 = vmatpush1.xpose.msra.mxu0 0.0
      %1460 = vmatprep.subr.mxu0 0.0
      %1461 = vmatpush1.xpose.msra.mxu0 0.0
      %1462 = vmatprep.subr.mxu0 0.0
      %1463 = vmatpush1.xpose.msra.mxu0 0.0
      %1464 = vmatprep.subr.mxu0 0.0
      %1465 = vmatpush1.xpose.msra.mxu0 0.0
      %1466 = vmatprep.subr.mxu0 0.0
      %1467 = vmatpush1.xpose.msra.mxu0 0.0
      %1468 = vmatprep.mubr.f32.mxu0 0.0
      %1469 = vmatmul.mubr.f32.gmra.mrb[0].mxu0 %v1400
      %v1470 = vpop.f32.mrb[0].mxu0
      %v1471 = vadd.f32 0.0, %v1470
      %v1472 = vpop.f32.mrb[0].mxu0
      %1473 = vdwg.mxu0
      %v1474 = vmul.f32 %v1471, 0.125
      %v1475 = vsel %vm681, %v1474, -inf
      %1476 = vmax.xlane.f32.xlu0 %v1475
      %v1477 = vpop.xlane.xlu0 %1476
      %v1478 = vsub.f32 %v1474, %v1477
      %v1479 = vmul.f32 %v1478, 1.442695
      %v1480 = vpow.pop %v1479
      %v1481 = vsel %vm681, %v1480, 0.0
      %1482 = vadd.xlane.f32.xlu0 %v1481
      %v1483 = vpop.xlane.xlu0 %1482
      %v1484 = vrcp.pop %v1483
      %v1485 = vmul.f32 %v1480, %v1484
      %1486 = vrot.lane.b32.xlu0 %v674, 104
      %v1487 = vpop.permute.xlu0 %1486
      %v1490 = vsel %vm681, %v1485, 0
      %1492 = vmatprep.subr.mxu0 0.0
      %1493 = vmatpush1.msra.mxu0 %v1487
      %1494 = vmatprep.subr.mxu0 0.0
      %1495 = vmatpush1.msra.mxu0 0.0
      %1496 = vmatprep.subr.mxu0 0.0
      %1497 = vmatpush1.msra.mxu0 0.0
      %1498 = vmatprep.subr.mxu0 0.0
      %1499 = vmatpush1.msra.mxu0 0.0
      %1500 = vmatprep.subr.mxu0 0.0
      %1501 = vmatpush1.msra.mxu0 0.0
      %1502 = vmatprep.subr.mxu0 0.0
      %1503 = vmatpush1.msra.mxu0 0.0
      %1504 = vmatprep.subr.mxu0 0.0
      %1505 = vmatpush1.msra.mxu0 0.0
      %1506 = vmatprep.subr.mxu0 0.0
      %1507 = vmatpush1.msra.mxu0 0.0
      %1508 = vmatprep.subr.mxu0 0.0
      %1509 = vmatpush1.msra.mxu0 0.0
      %1510 = vmatprep.subr.mxu0 0.0
      %1511 = vmatpush1.msra.mxu0 0.0
      %1512 = vmatprep.subr.mxu0 0.0
      %1513 = vmatpush1.msra.mxu0 0.0
      %1514 = vmatprep.subr.mxu0 0.0
      %1515 = vmatpush1.msra.mxu0 0.0
      %1516 = vmatprep.subr.mxu0 0.0
      %1517 = vmatpush1.msra.mxu0 0.0
      %1518 = vmatprep.subr.mxu0 0.0
      %1519 = vmatpush1.msra.mxu0 0.0
      %1520 = vmatprep.subr.mxu0 0.0
      %1521 = vmatpush1.msra.mxu0 0.0
      %1522 = vmatprep.subr.mxu0 0.0
      %1523 = vmatpush1.msra.mxu0 0.0
      %1524 = vmatprep.subr.mxu0 0.0
      %1525 = vmatpush1.msra.mxu0 0.0
      %1526 = vmatprep.subr.mxu0 0.0
      %1527 = vmatpush1.msra.mxu0 0.0
      %1528 = vmatprep.subr.mxu0 0.0
      %1529 = vmatpush1.msra.mxu0 0.0
      %1530 = vmatprep.subr.mxu0 0.0
      %1531 = vmatpush1.msra.mxu0 0.0
      %1532 = vmatprep.subr.mxu0 0.0
      %1533 = vmatpush1.msra.mxu0 0.0
      %1534 = vmatprep.subr.mxu0 0.0
      %1535 = vmatpush1.msra.mxu0 0.0
      %1536 = vmatprep.subr.mxu0 0.0
      %1537 = vmatpush1.msra.mxu0 0.0
      %1538 = vmatprep.subr.mxu0 0.0
      %1539 = vmatpush1.msra.mxu0 0.0
      %1540 = vmatprep.subr.mxu0 0.0
      %1541 = vmatpush1.msra.mxu0 0.0
      %1542 = vmatprep.subr.mxu0 0.0
      %1543 = vmatpush1.msra.mxu0 0.0
      %1544 = vmatprep.subr.mxu0 0.0
      %1545 = vmatpush1.msra.mxu0 0.0
      %1546 = vmatprep.subr.mxu0 0.0
      %1547 = vmatpush1.msra.mxu0 0.0
      %1548 = vmatprep.subr.mxu0 0.0
      %1549 = vmatpush1.msra.mxu0 0.0
      %1550 = vmatprep.subr.mxu0 0.0
      %1551 = vmatpush1.msra.mxu0 0.0
      %1552 = vmatprep.subr.mxu0 0.0
      %1553 = vmatpush1.msra.mxu0 0.0
      %1554 = vmatprep.subr.mxu0 0.0
      %1555 = vmatpush1.msra.mxu0 0.0
      %1556 = vmatprep.mubr.f32.mxu0 0.0
      %1557 = vmatmul.mubr.f32.gmra.mrb[0].mxu0 %v1490
      %v1558 = vpop.f32.mrb[0].mxu0
      %v1559 = vadd.f32 0.0, %v1558
      %v1560 = vpop.f32.mrb[0].mxu0
      %1561 = vdwg.mxu0
      %v1563 = vsel %vm681, %v1559, 0
      %1565 = vmatprep.subr.mxu0 0.0
      %1566 = vmatpush1.msra.mxu0 %v680
      %1567 = vmatprep.subr.mxu0 0.0
      %1568 = vmatpush1.msra.mxu0 0.0
      %1569 = vmatprep.subr.mxu0 0.0
      %1570 = vmatpush1.msra.mxu0 0.0
      %1571 = vmatprep.subr.mxu0 0.0
      %1572 = vmatpush1.msra.mxu0 0.0
      %1573 = vmatprep.subr.mxu0 0.0
      %1574 = vmatpush1.msra.mxu0 0.0
      %1575 = vmatprep.subr.mxu0 0.0
      %1576 = vmatpush1.msra.mxu0 0.0
      %1577 = vmatprep.subr.mxu0 0.0
      %1578 = vmatpush1.msra.mxu0 0.0
      %1579 = vmatprep.subr.mxu0 0.0
      %1580 = vmatpush1.msra.mxu0 0.0
      %1581 = vmatprep.subr.mxu0 0.0
      %1582 = vmatpush1.msra.mxu0 0.0
      %1583 = vmatprep.subr.mxu0 0.0
      %1584 = vmatpush1.msra.mxu0 0.0
      %1585 = vmatprep.subr.mxu0 0.0
      %1586 = vmatpush1.msra.mxu0 0.0
      %1587 = vmatprep.subr.mxu0 0.0
      %1588 = vmatpush1.msra.mxu0 0.0
      %1589 = vmatprep.subr.mxu0 0.0
      %1590 = vmatpush1.msra.mxu0 0.0
      %1591 = vmatprep.subr.mxu0 0.0
      %1592 = vmatpush1.msra.mxu0 0.0
      %1593 = vmatprep.subr.mxu0 0.0
      %1594 = vmatpush1.msra.mxu0 0.0
      %1595 = vmatprep.subr.mxu0 0.0
      %1596 = vmatpush1.msra.mxu0 0.0
      %1597 = vmatprep.subr.mxu0 0.0
      %1598 = vmatpush1.msra.mxu0 0.0
      %1599 = vmatprep.subr.mxu0 0.0
      %1600 = vmatpush1.msra.mxu0 0.0
      %1601 = vmatprep.subr.mxu0 0.0
      %1602 = vmatpush1.msra.mxu0 0.0
      %1603 = vmatprep.subr.mxu0 0.0
      %1604 = vmatpush1.msra.mxu0 0.0
      %1605 = vmatprep.subr.mxu0 0.0
      %1606 = vmatpush1.msra.mxu0 0.0
      %1607 = vmatprep.subr.mxu0 0.0
      %1608 = vmatpush1.msra.mxu0 0.0
      %1609 = vmatprep.subr.mxu0 0.0
      %1610 = vmatpush1.msra.mxu0 0.0
      %1611 = vmatprep.subr.mxu0 0.0
      %1612 = vmatpush1.msra.mxu0 0.0
      %1613 = vmatprep.subr.mxu0 0.0
      %1614 = vmatpush1.msra.mxu0 0.0
      %1615 = vmatprep.subr.mxu0 0.0
      %1616 = vmatpush1.msra.mxu0 0.0
      %1617 = vmatprep.subr.mxu0 0.0
      %1618 = vmatpush1.msra.mxu0 0.0
      %1619 = vmatprep.subr.mxu0 0.0
      %1620 = vmatpush1.msra.mxu0 0.0
      %1621 = vmatprep.subr.mxu0 0.0
      %1622 = vmatpush1.msra.mxu0 0.0
      %1623 = vmatprep.subr.mxu0 0.0
      %1624 = vmatpush1.msra.mxu0 0.0
      %1625 = vmatprep.subr.mxu0 0.0
      %1626 = vmatpush1.msra.mxu0 0.0
      %1627 = vmatprep.subr.mxu0 0.0
      %1628 = vmatpush1.msra.mxu0 0.0
      %1629 = vmatprep.mubr.f32.mxu0 0.0
      %1630 = vmatmul.mubr.f32.gmra.mrb[0].mxu0 %v1563
      %v1631 = vpop.f32.mrb[0].mxu0
      %v1632 = vadd.f32 0.0, %v1631
      %v1633 = vpop.f32.mrb[0].mxu0
      %1634 = vdwg.mxu0
      %v1635 = vadd.f32 %v1395, %v1632
      %v1636 = vld [vmem:[%s9] sm:$0x1]
      %v1638 = vlaneseq
      %v1639 = vshrl.u32 %v1638, 7
      %v1640 = vsub.s32 0, %v1639
      %v1641 = vrot.slane %v1636, %v1640
      %v1643 = vadd.f32 %v1635, %v1641
      %v1644 = vadd.f32 %v426, %v1643
      %v1645 = vsel %vm437, %v1644, 0.0
      %1646 = vadd.xlane.f32.xlu0 %v1645
      %v1647 = vpop.xlane.xlu0 %1646
      %v1648 = vrot.slane %v1647, 4
      %v1649 = vadd.f32 %v1647, %v1648
      %v1650 = vrot.slane %v1649, 2
      %v1651 = vadd.f32 %v1649, %v1650
      %v1652 = vrot.slane %v1651, 1
      %v1653 = vadd.f32 %v1651, %v1652
      %s1654 = vtos %v1653
      %v1655 = vrcp.pop 128.0
      %s1656 = vtos %v1655
      %s1657 = smul.f32 %s1654, %s1656
      %v1658 = vstv %s1657
      %v1659 = vsub.f32 %v1644, %v1658
      %v1660 = vmul.f32 %v1659, %v1659
      %v1661 = vsel %vm437, %v1660, 0.0
      %1662 = vadd.xlane.f32.xlu0 %v1661
      %v1663 = vpop.xlane.xlu0 %1662
      %v1664 = vrot.slane %v1663, 4
      %v1665 = vadd.f32 %v1663, %v1664
      %v1666 = vrot.slane %v1665, 2
      %v1667 = vadd.f32 %v1665, %v1666
      %v1668 = vrot.slane %v1667, 1
      %v1669 = vadd.f32 %v1667, %v1668
      %s1670 = vtos %v1669
      %v1671 = vrcp.pop 128.0
      %s1672 = vtos %v1671
      %s1673 = smul.f32 %s1670, %s1672
      %s1674 = sadd.f32 %s1673, 1e-05
      %v1675 = vstv %s1674
      %v1676 = vrsqrt.pop %v1675
      %s1677 = vtos %v1676
      %v1678 = vstv %s1677
      %v1679 = vmul.f32 %v1659, %v1678
      %v1680 = vld [vmem:[%s10] sm:$0xff]
      %v1681 = vmul.f32 %v1679, %v1680
      %v1682 = vld [vmem:[%s11] sm:$0xff]
      %v1683 = vadd.f32 %v1681, %v1682
      %1684 = vst.msk [vmem:[%s425] sm:$0xff] %vm437, %v1683
      %p1685 = scmp.lt.s32.totalorder %s23, 1
      %s1686 = scalar_select %p1685, %s23, 1
      %s1687 = smul.addr %s1686, 8
      %s1688 = scalar_lea.vmem %s12, %s1687
      // Predicated region
      $region69: #{transformer_fwd.14} parent=67 // pred_check
        %p1689 = pneg %p303
      $region70: #{transformer_fwd.14} parent=67 // pred_check_branch
        %1691 = sbr.rel (%p1689) target = $region72
      $region71: #{transformer_fwd.14} parent=67 // pred_region
        _
      $region72: #{transformer_fwd.14} parent=67 // pred_fallthru
        _
    $region68: #{transformer_fwd.14} parent=5 // pred_fallthru
      _
    %p1692 = scmp.le.s32.totalorder 2, %s18
    // Predicated region
    $region73: #{transformer_fwd.14} parent=5 // pred_check
      %p1693 = pneg %p1692
    $region74: #{transformer_fwd.14} parent=5 // pred_check_branch
      %1695 = sbr.rel (%p1693) target = $region76
    $region75: #{transformer_fwd.14} parent=5 // pred_region
      %s1696 = ssub.s32 %s18, 2
      // Predicated region
      $region77: #{transformer_fwd.14} parent=75 // pred_check
        %p1697 = pneg %p309
      $region78: #{transformer_fwd.14} parent=75 // pred_check_branch
        %1699 = sbr.rel (%p1697) target = $region80
      $region79: #{transformer_fwd.14} parent=75 // pred_region
        %p1700 = scmp.lt.s32.totalorder %s24, 1
        %s1701 = scalar_select %p1700, %s24, 1
        %s1702 = smul.addr %s1701, 8
        %s1703 = scalar_lea.vmem %s12, %s1702
      $region80: #{transformer_fwd.14} parent=75 // pred_fallthru
        _
    $region76: #{transformer_fwd.14} parent=5 // pred_fallthru
      _
  $region6: #{transformer_fwd.14} parent=0 // loop_footer
    %s22 = sadd.s32 1, %s18
  $region7: #{transformer_fwd.14} parent=0 // loop_footer_branch
    %17 = sbr.rel target = $region3
  $region8: #{transformer_fwd.14} parent=0 // loop_exit
    _

// kernel: transformer_fwd.19
$region0: #{transformer_fwd.19}
  #allocation0 [shape = 'u32[]', space=smem, size = 0x4, offset = 0x4, fixed_abs, tag = 'smem constant byte address 0x4 - core index']
  #allocation1 [shape = 'u32[144,128]{1,0:T(1,128)}', space=vmem, size = 0x12000, scoped, tag = 'internal scratch']
  %s0 = inlined_call_operand.vmem [shape: f32[2,8,16], index: 0, kind: input, shape index: {}]
  %s1 = inlined_call_operand.vmem [shape: f32[16,64], index: 1, kind: input, shape index: {}]
  %s2 = inlined_call_operand.vmem [shape: f32[1,64], index: 2, kind: input, shape index: {}]
  %s3 = inlined_call_operand.vmem [shape: f32[64,16], index: 3, kind: input, shape index: {}]
  %s4 = inlined_call_operand.vmem [shape: f32[1,16], index: 4, kind: input, shape index: {}]
  %s5 = inlined_call_operand.vmem [shape: f32[8,16], index: 5, kind: input, shape index: {}]
  %s6 = inlined_call_operand.vmem [shape: f32[8,16], index: 6, kind: input, shape index: {}]
  %s7 = inlined_call_operand.hbm [shape: f32[2,8,16], index: 7, kind: output, shape index: {}]
  %s8 = sld [smem:[#allocation0]]
  $region61: #{transformer_fwd.19} parent=0
    _
  %s10 = ssub.s32 1, %s8
  %s11 = scalar_select 0, %s10, %s8
  $region1: #{transformer_fwd.19} parent=0
    #allocation2 [shape = 'u8[8192]{0}', space=vmem, size = 0x2000, scoped, tag = 'output window, operand 0']
    #allocation3 [shape = 's32[2]{0}', space=sflag, size = 0x8, scoped, tag = 'scoped memory for transformer_fwd.19']
    %12 = vsyncpa [#allocation3], 0
    %s13 = scalar_lea.sflag [#allocation3], 1
    %14 = vsyncpa %s13, 0
    loop: start=0, step=1, limit=4
    $region2: #{transformer_fwd.19} parent=1 // loop_pre_header
      _
    $region3: #{transformer_fwd.19} parent=1 // loop_header
      %s16 = sphi 0, %s20
      %p17 = scmp.ge.s32.totalorder %s16, 4
      %s26 = sphi 0, %s28
      %s29 = sphi 0, %s26
      %s30 = sphi 0, %s29
      %s46 = sphi 0, %s30
      %s50 = sphi 0, %s50
      %s52 = sphi 0, %s50
      %s53 = sphi 0, %s52
      %s67 = sphi 0, %s53
      %s71 = sphi 0, %s71
      %s73 = sphi 0, %s71
      %s74 = sphi 0, %s73
      %s88 = sphi 0, %s74
      %s92 = sphi 0, %s92
      %s94 = sphi 0, %s92
      %s95 = sphi 0, %s94
      %s109 = sphi 0, %s95
      %s113 = sphi 0, %s113
      %s115 = sphi 0, %s113
      %s116 = sphi 0, %s115
      %s130 = sphi 0, %s116
      %s134 = sphi 0, %s134
      %s136 = sphi 0, %s134
      %s137 = sphi 0, %s136
      %s151 = sphi 0, %s137
      %s155 = sphi 0, %s155
      %s157 = sphi 0, %s155
      %s158 = sphi 0, %s157
      %s172 = sphi 0, %s158
      %s178 = sphi 0, %s180
      %s181 = sphi 0, %s178
      %s182 = sphi 0, %s181
      %s198 = sphi 0, %s182
    $region4: #{transformer_fwd.19} parent=1 // loop_header_branch
      %19 = sbr.rel (%p17) target = $region8
    $region5: #{transformer_fwd.19} parent=1 // loop_body
      %s21 = ssub.s32 %s16, 1
      %s22 = ssub.s32 %s16, 2
      %s23 = sadd.s32 %s16, 1
      %s24 = ssub.s32 %s16, %s23
      %p25 = scmp.eq.s32.totalorder %s24, 0
      %s27 = sadd.s32 %s26, 1
      %s28 = scalar_select %p25, %s26, %s27
      %p31 = pneg %p25
      %p32 = scmp.eq.s32.totalorder %s16, 1
      %p33 = por %p31, %p32
      %p34 = scmp.ne.s32.totalorder %s26, %s29
      %p35 = scmp.eq.s32.totalorder %s16, 0
      %p36 = por %p34, %p35
      %p37 = scmp.ne.s32.totalorder %s26, %s29
      %p38 = scmp.eq.s32.totalorder %s21, 1
      %p39 = por %p37, %p38
      %p40 = scmp.ne.s32.totalorder %s29, %s30
      %p41 = scmp.eq.s32.totalorder %s21, 0
      %p42 = por %p40, %p41
      %p43 = scmp.ne.s32.totalorder %s29, %s30
      %p44 = scmp.eq.s32.totalorder %s22, 1
      %p45 = por %p43, %p44
      %p47 = scmp.ne.s32.totalorder %s30, %s46
      %p48 = scmp.eq.s32.totalorder %s22, 0
      %p49 = por %p47, %p48
      %s51 = sadd.s32 %s50, 1
      %p54 = scmp.eq.s32.totalorder %s16, 1
      %p55 = scmp.ne.s32.totalorder %s50, %s52
      %p56 = scmp.eq.s32.totalorder %s16, 0
      %p57 = por %p55, %p56
      %p58 = scmp.ne.s32.totalorder %s50, %s52
      %p59 = scmp.eq.s32.totalorder %s21, 1
      %p60 = por %p58, %p59
      %p61 = scmp.ne.s32.totalorder %s52, %s53
      %p62 = scmp.eq.s32.totalorder %s21, 0
      %p63 = por %p61, %p62
      %p64 = scmp.ne.s32.totalorder %s52, %s53
      %p65 = scmp.eq.s32.totalorder %s22, 1
      %p66 = por %p64, %p65
      %p68 = scmp.ne.s32.totalorder %s53, %s67
      %p69 = scmp.eq.s32.totalorder %s22, 0
      %p70 = por %p68, %p69
      %s72 = sadd.s32 %s71, 1
      %p75 = scmp.eq.s32.totalorder %s16, 1
      %p76 = scmp.ne.s32.totalorder %s71, %s73
      %p77 = scmp.eq.s32.totalorder %s16, 0
      %p78 = por %p76, %p77
      %p79 = scmp.ne.s32.totalorder %s71, %s73
      %p80 = scmp.eq.s32.totalorder %s21, 1
      %p81 = por %p79, %p80
      %p82 = scmp.ne.s32.totalorder %s73, %s74
      %p83 = scmp.eq.s32.totalorder %s21, 0
      %p84 = por %p82, %p83
      %p85 = scmp.ne.s32.totalorder %s73, %s74
      %p86 = scmp.eq.s32.totalorder %s22, 1
      %p87 = por %p85, %p86
      %p89 = scmp.ne.s32.totalorder %s74, %s88
      %p90 = scmp.eq.s32.totalorder %s22, 0
      %p91 = por %p89, %p90
      %s93 = sadd.s32 %s92, 1
      %p96 = scmp.eq.s32.totalorder %s16, 1
      %p97 = scmp.ne.s32.totalorder %s92, %s94
      %p98 = scmp.eq.s32.totalorder %s16, 0
      %p99 = por %p97, %p98
      %p100 = scmp.ne.s32.totalorder %s92, %s94
      %p101 = scmp.eq.s32.totalorder %s21, 1
      %p102 = por %p100, %p101
      %p103 = scmp.ne.s32.totalorder %s94, %s95
      %p104 = scmp.eq.s32.totalorder %s21, 0
      %p105 = por %p103, %p104
      %p106 = scmp.ne.s32.totalorder %s94, %s95
      %p107 = scmp.eq.s32.totalorder %s22, 1
      %p108 = por %p106, %p107
      %p110 = scmp.ne.s32.totalorder %s95, %s109
      %p111 = scmp.eq.s32.totalorder %s22, 0
      %p112 = por %p110, %p111
      %s114 = sadd.s32 %s113, 1
      %p117 = scmp.eq.s32.totalorder %s16, 1
      %p118 = scmp.ne.s32.totalorder %s113, %s115
      %p119 = scmp.eq.s32.totalorder %s16, 0
      %p120 = por %p118, %p119
      %p121 = scmp.ne.s32.totalorder %s113, %s115
      %p122 = scmp.eq.s32.totalorder %s21, 1
      %p123 = por %p121, %p122
      %p124 = scmp.ne.s32.totalorder %s115, %s116
      %p125 = scmp.eq.s32.totalorder %s21, 0
      %p126 = por %p124, %p125
      %p127 = scmp.ne.s32.totalorder %s115, %s116
      %p128 = scmp.eq.s32.totalorder %s22, 1
      %p129 = por %p127, %p128
      %p131 = scmp.ne.s32.totalorder %s116, %s130
      %p132 = scmp.eq.s32.totalorder %s22, 0
      %p133 = por %p131, %p132
      %s135 = sadd.s32 %s134, 1
      %p138 = scmp.eq.s32.totalorder %s16, 1
      %p139 = scmp.ne.s32.totalorder %s134, %s136
      %p140 = scmp.eq.s32.totalorder %s16, 0
      %p141 = por %p139, %p140
      %p142 = scmp.ne.s32.totalorder %s134, %s136
      %p143 = scmp.eq.s32.totalorder %s21, 1
      %p144 = por %p142, %p143
      %p145 = scmp.ne.s32.totalorder %s136, %s137
      %p146 = scmp.eq.s32.totalorder %s21, 0
      %p147 = por %p145, %p146
      %p148 = scmp.ne.s32.totalorder %s136, %s137
      %p149 = scmp.eq.s32.totalorder %s22, 1
      %p150 = por %p148, %p149
      %p152 = scmp.ne.s32.totalorder %s137, %s151
      %p153 = scmp.eq.s32.totalorder %s22, 0
      %p154 = por %p152, %p153
      %s156 = sadd.s32 %s155, 1
      %p159 = scmp.eq.s32.totalorder %s16, 1
      %p160 = scmp.ne.s32.totalorder %s155, %s157
      %p161 = scmp.eq.s32.totalorder %s16, 0
      %p162 = por %p160, %p161
      %p163 = scmp.ne.s32.totalorder %s155, %s157
      %p164 = scmp.eq.s32.totalorder %s21, 1
      %p165 = por %p163, %p164
      %p166 = scmp.ne.s32.totalorder %s157, %s158
      %p167 = scmp.eq.s32.totalorder %s21, 0
      %p168 = por %p166, %p167
      %p169 = scmp.ne.s32.totalorder %s157, %s158
      %p170 = scmp.eq.s32.totalorder %s22, 1
      %p171 = por %p169, %p170
      %p173 = scmp.ne.s32.totalorder %s158, %s172
      %p174 = scmp.eq.s32.totalorder %s22, 0
      %p175 = por %p173, %p174
      %s176 = ssub.s32 %s16, %s23
      %p177 = scmp.eq.s32.totalorder %s176, 0
      %s179 = sadd.s32 %s178, 1
      %s180 = scalar_select %p177, %s178, %s179
      %p183 = pneg %p177
      %p184 = scmp.eq.s32.totalorder %s16, 1
      %p185 = por %p183, %p184
      %p186 = scmp.ne.s32.totalorder %s178, %s181
      %p187 = scmp.eq.s32.totalorder %s16, 0
      %p188 = por %p186, %p187
      %p189 = scmp.ne.s32.totalorder %s178, %s181
      %p190 = scmp.eq.s32.totalorder %s21, 1
      %p191 = por %p189, %p190
      %p192 = scmp.ne.s32.totalorder %s181, %s182
      %p193 = scmp.eq.s32.totalorder %s21, 0
      %p194 = por %p192, %p193
      %p195 = scmp.ne.s32.totalorder %s181, %s182
      %p196 = scmp.eq.s32.totalorder %s22, 1
      %p197 = por %p195, %p196
      %p199 = scmp.ne.s32.totalorder %s182, %s198
      %p200 = scmp.eq.s32.totalorder %s22, 0
      %p201 = por %p199, %p200
      %p202 = scmp.le.s32.totalorder 1, %s16
      %p203 = scmp.lt.s32.totalorder %s16, 3
      %p204 = pnand %p202, %p203
      %p205 = pneg %p204
      // Predicated region
      $region9: #{transformer_fwd.19} parent=5 // pred_check
        _
      $region10: #{transformer_fwd.19} parent=5 // pred_check_branch
        %207 = sbr.rel (%p204) target = $region12
      $region11: #{transformer_fwd.19} parent=5 // pred_region
        %s208 = ssub.s32 %s16, 1
        // Predicated region
        $region13: #{transformer_fwd.19} parent=11 // pred_check
          %p209 = pneg %p63
        $region14: #{transformer_fwd.19} parent=11 // pred_check_branch
          %211 = sbr.rel (%p209) target = $region16
        $region15: #{transformer_fwd.19} parent=11 // pred_region
          _
        $region16: #{transformer_fwd.19} parent=11 // pred_fallthru
          _
        // Predicated region
        $region17: #{transformer_fwd.19} parent=11 // pred_check
          %p212 = pneg %p84
        $region18: #{transformer_fwd.19} parent=11 // pred_check_branch
          %214 = sbr.rel (%p212) target = $region20
        $region19: #{transformer_fwd.19} parent=11 // pred_region
          _
        $region20: #{transformer_fwd.19} parent=11 // pred_fallthru
          _
        // Predicated region
        $region21: #{transformer_fwd.19} parent=11 // pred_check
          %p215 = pneg %p105
        $region22: #{transformer_fwd.19} parent=11 // pred_check_branch
          %217 = sbr.rel (%p215) target = $region24
        $region23: #{transformer_fwd.19} parent=11 // pred_region
          _
        $region24: #{transformer_fwd.19} parent=11 // pred_fallthru
          _
        // Predicated region
        $region25: #{transformer_fwd.19} parent=11 // pred_check
          %p218 = pneg %p126
        $region26: #{transformer_fwd.19} parent=11 // pred_check_branch
          %220 = sbr.rel (%p218) target = $region28
        $region27: #{transformer_fwd.19} parent=11 // pred_region
          _
        $region28: #{transformer_fwd.19} parent=11 // pred_fallthru
          _
        // Predicated region
        $region29: #{transformer_fwd.19} parent=11 // pred_check
          %p221 = pneg %p147
        $region30: #{transformer_fwd.19} parent=11 // pred_check_branch
          %223 = sbr.rel (%p221) target = $region32
        $region31: #{transformer_fwd.19} parent=11 // pred_region
          _
        $region32: #{transformer_fwd.19} parent=11 // pred_fallthru
          _
        // Predicated region
        $region33: #{transformer_fwd.19} parent=11 // pred_check
          %p224 = pneg %p168
        $region34: #{transformer_fwd.19} parent=11 // pred_check_branch
          %226 = sbr.rel (%p224) target = $region36
        $region35: #{transformer_fwd.19} parent=11 // pred_region
          _
        $region36: #{transformer_fwd.19} parent=11 // pred_fallthru
          _
      $region12: #{transformer_fwd.19} parent=5 // pred_fallthru
        _
      %p227 = scmp.lt.s32.totalorder %s16, 2
      // Predicated region
      $region37: #{transformer_fwd.19} parent=5 // pred_check
        %p228 = pneg %p227
      $region38: #{transformer_fwd.19} parent=5 // pred_check_branch
        %230 = sbr.rel (%p228) target = $region40
      $region39: #{transformer_fwd.19} parent=5 // pred_region
        // Predicated region
        $region41: #{transformer_fwd.19} parent=39 // pred_check
          %p231 = pneg %p36
        $region42: #{transformer_fwd.19} parent=39 // pred_check_branch
          %233 = sbr.rel (%p231) target = $region44
        $region43: #{transformer_fwd.19} parent=39 // pred_region
          %p234 = scmp.lt.s32.totalorder %s16, 1
          %s235 = scalar_select %p234, %s16, 1
          %s236 = smul.addr %s235, 8
          %s237 = scalar_lea.vmem %s0, %s236
        $region44: #{transformer_fwd.19} parent=39 // pred_fallthru
          _
      $region40: #{transformer_fwd.19} parent=5 // pred_fallthru
        _
      %p238 = scmp.le.s32.totalorder 1, %s16
      %p239 = scmp.lt.s32.totalorder %s16, 3
      %p240 = pnand %p238, %p239
      %p241 = pneg %p240
      // Predicated region
      $region45: #{transformer_fwd.19} parent=5 // pred_check
        _
      $region46: #{transformer_fwd.19} parent=5 // pred_check_branch
        %243 = sbr.rel (%p240) target = $region48
      $region47: #{transformer_fwd.19} parent=5 // pred_region
        %s244 = ssub.s32 %s16, 1
        %p245 = scmp.lt.s32.totalorder %s21, 1
        %s246 = scalar_select %p245, %s21, 1
        %s247 = smul.addr %s246, 8
        %s248 = scalar_lea.vmem %s0, %s247
        %p249 = pneg %p42
        %p250 = pneg %p39
        %p251 = pneg %p63
        %p252 = pneg %p60
        %p253 = pneg %p84
        %p254 = pneg %p81
        %p255 = pneg %p105
        %p256 = pneg %p102
        %p257 = pneg %p126
        %p258 = pneg %p123
        %p259 = pneg %p147
        %p260 = pneg %p144
        %p261 = pneg %p168
        %p262 = pneg %p165
        %p263 = pneg %p194
        %p264 = pneg %p191
        %s265 = sand.u32 %s181, 1
        %s266 = scalar_lea.sflag [#allocation3], %s265
        %s267 = sand.u32 %s181, 1
        %s268 = smul.addr %s267, 8
        %s269 = scalar_lea.vmem [#allocation2], %s268
        %p270 = scmp.lt.s32.totalorder %s21, 1
        %s271 = scalar_select %p270, %s21, 1
        %s272 = smul.addr %s271, 8
        %s273 = scalar_lea.vmem %s0, %s272
        %v274 = vld [vmem:[%s273] sm:$0xff]
        %v275 = vld [vmem:[%s1] sm:$0xff]
        %v276 = vld [vmem:[%s1 + $0x8] sm:$0xff]
        %v277 = vld [vmem:[%s2] sm:$0x1]
        %v279 = vlaneseq
        %v280 = vshrl.u32 %v279, 7
        %v281 = vsub.s32 0, %v280
        %v282 = vrot.slane %v277, %v281
        %vm284 = vcmask 130048
        %v286 = vsel %vm284, %v274, 0
        %288 = vmatprep.subr.mxu0 0.0
        %289 = vmatpush1.msra.mxu0 %v275
        %290 = vmatprep.subr.mxu0 0.0
        %291 = vmatpush1.msra.mxu0 %v276
        %292 = vmatprep.subr.mxu0 0.0
        %293 = vmatpush1.msra.mxu0 0.0
        %294 = vmatprep.subr.mxu0 0.0
        %295 = vmatpush1.msra.mxu0 0.0
        %296 = vmatprep.subr.mxu0 0.0
        %297 = vmatpush1.msra.mxu0 0.0
        %298 = vmatprep.subr.mxu0 0.0
        %299 = vmatpush1.msra.mxu0 0.0
        %300 = vmatprep.subr.mxu0 0.0
        %301 = vmatpush1.msra.mxu0 0.0
        %302 = vmatprep.subr.mxu0 0.0
        %303 = vmatpush1.msra.mxu0 0.0
        %304 = vmatprep.subr.mxu0 0.0
        %305 = vmatpush1.msra.mxu0 0.0
        %306 = vmatprep.subr.mxu0 0.0
        %307 = vmatpush1.msra.mxu0 0.0
        %308 = vmatprep.subr.mxu0 0.0
        %309 = vmatpush1.msra.mxu0 0.0
        %310 = vmatprep.subr.mxu0 0.0
        %311 = vmatpush1.msra.mxu0 0.0
        %312 = vmatprep.subr.mxu0 0.0
        %313 = vmatpush1.msra.mxu0 0.0
        %314 = vmatprep.subr.mxu0 0.0
        %315 = vmatpush1.msra.mxu0 0.0
        %316 = vmatprep.subr.mxu0 0.0
        %317 = vmatpush1.msra.mxu0 0.0
        %318 = vmatprep.subr.mxu0 0.0
        %319 = vmatpush1.msra.mxu0 0.0
        %320 = vmatprep.subr.mxu0 0.0
        %321 = vmatpush1.msra.mxu0 0.0
        %322 = vmatprep.subr.mxu0 0.0
        %323 = vmatpush1.msra.mxu0 0.0
        %324 = vmatprep.subr.mxu0 0.0
        %325 = vmatpush1.msra.mxu0 0.0
        %326 = vmatprep.subr.mxu0 0.0
        %327 = vmatpush1.msra.mxu0 0.0
        %328 = vmatprep.subr.mxu0 0.0
        %329 = vmatpush1.msra.mxu0 0.0
        %330 = vmatprep.subr.mxu0 0.0
        %331 = vmatpush1.msra.mxu0 0.0
        %332 = vmatprep.subr.mxu0 0.0
        %333 = vmatpush1.msra.mxu0 0.0
        %334 = vmatprep.subr.mxu0 0.0
        %335 = vmatpush1.msra.mxu0 0.0
        %336 = vmatprep.subr.mxu0 0.0
        %337 = vmatpush1.msra.mxu0 0.0
        %338 = vmatprep.subr.mxu0 0.0
        %339 = vmatpush1.msra.mxu0 0.0
        %340 = vmatprep.subr.mxu0 0.0
        %341 = vmatpush1.msra.mxu0 0.0
        %342 = vmatprep.subr.mxu0 0.0
        %343 = vmatpush1.msra.mxu0 0.0
        %344 = vmatprep.subr.mxu0 0.0
        %345 = vmatpush1.msra.mxu0 0.0
        %346 = vmatprep.subr.mxu0 0.0
        %347 = vmatpush1.msra.mxu0 0.0
        %348 = vmatprep.subr.mxu0 0.0
        %349 = vmatpush1.msra.mxu0 0.0
        %350 = vmatprep.subr.mxu0 0.0
        %351 = vmatpush1.msra.mxu0 0.0
        %352 = vmatprep.mubr.f32.mxu0 0.0
        %353 = vmatmul.mubr.f32.gmra.mrb[0].mxu0 %v286
        %v354 = vpop.f32.mrb[0].mxu0
        %v355 = vadd.f32 %v282, %v354
        %v356 = vpop.f32.mrb[0].mxu0
        %357 = vdwg.mxu0
        %v358 = vmax.f32 %v355, 0.0
        %v359 = vld [vmem:[%s3] sm:$0xff]
        %v360 = vld [vmem:[%s3 + $0x8] sm:$0xff]
        %v361 = vld [vmem:[%s3 + $0x10] sm:$0xff]
        %v362 = vld [vmem:[%s3 + $0x18] sm:$0xff]
        %v363 = vld [vmem:[%s3 + $0x20] sm:$0xff]
        %v364 = vld [vmem:[%s3 + $0x28] sm:$0xff]
        %v365 = vld [vmem:[%s3 + $0x30] sm:$0xff]
        %v366 = vld [vmem:[%s3 + $0x38] sm:$0xff]
        %v367 = vld [vmem:[%s4] sm:$0x1]
        %v369 = vlaneseq
        %v370 = vshrl.u32 %v369, 7
        %v371 = vsub.s32 0, %v370
        %v372 = vrot.slane %v367, %v371
        %vm374 = vcmask 523264
        %v376 = vsel %vm374, %v358, 0
        %378 = vmatprep.subr.mxu0 0.0
        %379 = vmatpush1.msra.mxu0 %v359
        %380 = vmatprep.subr.mxu0 0.0
        %381 = vmatpush1.msra.mxu0 %v360
        %382 = vmatprep.subr.mxu0 0.0
        %383 = vmatpush1.msra.mxu0 %v361
        %384 = vmatprep.subr.mxu0 0.0
        %385 = vmatpush1.msra.mxu0 %v362
        %386 = vmatprep.subr.mxu0 0.0
        %387 = vmatpush1.msra.mxu0 %v363
        %388 = vmatprep.subr.mxu0 0.0
        %389 = vmatpush1.msra.mxu0 %v364
        %390 = vmatprep.subr.mxu0 0.0
        %391 = vmatpush1.msra.mxu0 %v365
        %392 = vmatprep.subr.mxu0 0.0
        %393 = vmatpush1.msra.mxu0 %v366
        %394 = vmatprep.subr.mxu0 0.0
        %395 = vmatpush1.msra.mxu0 0.0
        %396 = vmatprep.subr.mxu0 0.0
        %397 = vmatpush1.msra.mxu0 0.0
        %398 = vmatprep.subr.mxu0 0.0
        %399 = vmatpush1.msra.mxu0 0.0
        %400 = vmatprep.subr.mxu0 0.0
        %401 = vmatpush1.msra.mxu0 0.0
        %402 = vmatprep.subr.mxu0 0.0
        %403 = vmatpush1.msra.mxu0 0.0
        %404 = vmatprep.subr.mxu0 0.0
        %405 = vmatpush1.msra.mxu0 0.0
        %406 = vmatprep.subr.mxu0 0.0
        %407 = vmatpush1.msra.mxu0 0.0
        %408 = vmatprep.subr.mxu0 0.0
        %409 = vmatpush1.msra.mxu0 0.0
        %410 = vmatprep.subr.mxu0 0.0
        %411 = vmatpush1.msra.mxu0 0.0
        %412 = vmatprep.subr.mxu0 0.0
        %413 = vmatpush1.msra.mxu0 0.0
        %414 = vmatprep.subr.mxu0 0.0
        %415 = vmatpush1.msra.mxu0 0.0
        %416 = vmatprep.subr.mxu0 0.0
        %417 = vmatpush1.msra.mxu0 0.0
        %418 = vmatprep.subr.mxu0 0.0
        %419 = vmatpush1.msra.mxu0 0.0
        %420 = vmatprep.subr.mxu0 0.0
        %421 = vmatpush1.msra.mxu0 0.0
        %422 = vmatprep.subr.mxu0 0.0
        %423 = vmatpush1.msra.mxu0 0.0
        %424 = vmatprep.subr.mxu0 0.0
        %425 = vmatpush1.msra.mxu0 0.0
        %426 = vmatprep.subr.mxu0 0.0
        %427 = vmatpush1.msra.mxu0 0.0
        %428 = vmatprep.subr.mxu0 0.0
        %429 = vmatpush1.msra.mxu0 0.0
        %430 = vmatprep.subr.mxu0 0.0
        %431 = vmatpush1.msra.mxu0 0.0
        %432 = vmatprep.subr.mxu0 0.0
        %433 = vmatpush1.msra.mxu0 0.0
        %434 = vmatprep.subr.mxu0 0.0
        %435 = vmatpush1.msra.mxu0 0.0
        %436 = vmatprep.subr.mxu0 0.0
        %437 = vmatpush1.msra.mxu0 0.0
        %438 = vmatprep.subr.mxu0 0.0
        %439 = vmatpush1.msra.mxu0 0.0
        %440 = vmatprep.subr.mxu0 0.0
        %441 = vmatpush1.msra.mxu0 0.0
        %442 = vmatprep.mubr.f32.mxu0 0.0
        %443 = vmatmul.mubr.f32.gmra.mrb[0].mxu0 %v376
        %v444 = vpop.f32.mrb[0].mxu0
        %v445 = vadd.f32 %v372, %v444
        %v446 = vpop.f32.mrb[0].mxu0
        %447 = vdwg.mxu0
        %v448 = vadd.f32 %v445, %v274
        %v449 = vsel %vm284, %v448, 0.0
        %450 = vadd.xlane.f32.xlu0 %v449
        %v451 = vpop.xlane.xlu0 %450
        %v452 = vrot.slane %v451, 4
        %v453 = vadd.f32 %v451, %v452
        %v454 = vrot.slane %v453, 2
        %v455 = vadd.f32 %v453, %v454
        %v456 = vrot.slane %v455, 1
        %v457 = vadd.f32 %v455, %v456
        %s458 = vtos %v457
        %v459 = vrcp.pop 128.0
        %s460 = vtos %v459
        %s461 = smul.f32 %s458, %s460
        %v462 = vstv %s461
        %v463 = vsub.f32 %v448, %v462
        %v464 = vmul.f32 %v463, %v463
        %v465 = vsel %vm284, %v464, 0.0
        %466 = vadd.xlane.f32.xlu0 %v465
        %v467 = vpop.xlane.xlu0 %466
        %v468 = vrot.slane %v467, 4
        %v469 = vadd.f32 %v467, %v468
        %v470 = vrot.slane %v469, 2
        %v471 = vadd.f32 %v469, %v470
        %v472 = vrot.slane %v471, 1
        %v473 = vadd.f32 %v471, %v472
        %s474 = vtos %v473
        %v475 = vrcp.pop 128.0
        %s476 = vtos %v475
        %s477 = smul.f32 %s474, %s476
        %s478 = sadd.f32 %s477, 1e-05
        %v479 = vstv %s478
        %v480 = vrsqrt.pop %v479
        %s481 = vtos %v480
        %v482 = vstv %s481
        %v483 = vmul.f32 %v463, %v482
        %v484 = vld [vmem:[%s5] sm:$0xff]
        %v485 = vmul.f32 %v483, %v484
        %v486 = vld [vmem:[%s6] sm:$0xff]
        %v487 = vadd.f32 %v485, %v486
        %488 = vst.msk [vmem:[%s269] sm:$0xff] %vm284, %v487
        %s489 = sand.u32 %s181, 1
        %s490 = scalar_lea.sflag [#allocation3], %s489
        %s491 = sand.u32 %s181, 1
        %s492 = smul.addr %s491, 8
        %s493 = scalar_lea.vmem [#allocation2], %s492
        // Predicated region
        $region49: #{transformer_fwd.19} parent=47 // pred_check
          %p494 = pneg %p191
        $region50: #{transformer_fwd.19} parent=47 // pred_check_branch
          %496 = sbr.rel (%p494) target = $region52
        $region51: #{transformer_fwd.19} parent=47 // pred_region
          %s498 = ssub.s32 128, 128
          %499 = vsyncadd %s490, %s498
          %s500 = smul.addr %s21, 128
          %s501 = scalar_lea.hbm %s7, %s500
          %s503 = sshll.u32 %s493, 4
          %s504 = int_to_ptr.vmem [resolvable:$true] %s503
          %506 = dma.vmem_to_hbm [thread:$0]  %s504, 128, %s501, %s490
        $region52: #{transformer_fwd.19} parent=47 // pred_fallthru
          _
      $region48: #{transformer_fwd.19} parent=5 // pred_fallthru
        _
      %p507 = scmp.le.s32.totalorder 2, %s16
      // Predicated region
      $region53: #{transformer_fwd.19} parent=5 // pred_check
        %p508 = pneg %p507
      $region54: #{transformer_fwd.19} parent=5 // pred_check_branch
        %510 = sbr.rel (%p508) target = $region56
      $region55: #{transformer_fwd.19} parent=5 // pred_region
        %s511 = ssub.s32 %s16, 2
        // Predicated region
        $region57: #{transformer_fwd.19} parent=55 // pred_check
          %p512 = pneg %p197
        $region58: #{transformer_fwd.19} parent=55 // pred_check_branch
          %514 = sbr.rel (%p512) target = $region60
        $region59: #{transformer_fwd.19} parent=55 // pred_region
          %s515 = sand.u32 %s182, 1
          %s516 = scalar_lea.sflag [#allocation3], %s515
          %s517 = sand.u32 %s182, 1
          %s518 = smul.addr %s517, 8
          %s519 = scalar_lea.vmem [#allocation2], %s518
          %520 = dma.done %s516, 128
        $region60: #{transformer_fwd.19} parent=55 // pred_fallthru
          _
      $region56: #{transformer_fwd.19} parent=5 // pred_fallthru
        _
    $region6: #{transformer_fwd.19} parent=1 // loop_footer
      %s20 = sadd.s32 1, %s16
    $region7: #{transformer_fwd.19} parent=1 // loop_footer_branch
      %15 = sbr.rel target = $region3
    $region8: #{transformer_fwd.19} parent=1 // loop_exit
      _
    %521 = vsyncpa [#allocation3], 1
    %s522 = scalar_lea.sflag [#allocation3], 1
    %523 = vsyncpa %s522, 1

// kernel: transformer_fwd.16
$region0: #{transformer_fwd.16}
  #allocation0 [shape = 'u32[]', space=smem, size = 0x4, offset = 0x4, fixed_abs, tag = 'smem constant byte address 0x4 - core index']
  #allocation1 [shape = 'u32[144,128]{1,0:T(1,128)}', space=vmem, size = 0x12000, scoped, tag = 'internal scratch']
  %s0 = inlined_call_operand.vmem [shape: f32[2,8,16], index: 0, kind: input, shape index: {}]
  %s1 = inlined_call_operand.vmem [shape: f32[16,64], index: 1, kind: input, shape index: {}]
  %s2 = inlined_call_operand.vmem [shape: f32[1,64], index: 2, kind: input, shape index: {}]
  %s3 = inlined_call_operand.vmem [shape: f32[64,16], index: 3, kind: input, shape index: {}]
  %s4 = inlined_call_operand.vmem [shape: f32[1,16], index: 4, kind: input, shape index: {}]
  %s5 = inlined_call_operand.vmem [shape: f32[8,16], index: 5, kind: input, shape index: {}]
  %s6 = inlined_call_operand.vmem [shape: f32[8,16], index: 6, kind: input, shape index: {}]
  %s7 = inlined_call_operand.vmem [shape: f32[2,8,16], index: 7, kind: output, shape index: {}]
  %s8 = sld [smem:[#allocation0]]
  $region61: #{transformer_fwd.16} parent=0
    _
  %s10 = ssub.s32 1, %s8
  %s11 = scalar_select 0, %s10, %s8
  loop: start=0, step=1, limit=4
  $region2: #{transformer_fwd.16} parent=0 // loop_pre_header
    _
  $region3: #{transformer_fwd.16} parent=0 // loop_header
    %s13 = sphi 0, %s17
    %p14 = scmp.ge.s32.totalorder %s13, 4
    %s23 = sphi 0, %s25
    %s26 = sphi 0, %s23
    %s27 = sphi 0, %s26
    %s43 = sphi 0, %s27
    %s47 = sphi 0, %s47
    %s49 = sphi 0, %s47
    %s50 = sphi 0, %s49
    %s64 = sphi 0, %s50
    %s68 = sphi 0, %s68
    %s70 = sphi 0, %s68
    %s71 = sphi 0, %s70
    %s85 = sphi 0, %s71
    %s89 = sphi 0, %s89
    %s91 = sphi 0, %s89
    %s92 = sphi 0, %s91
    %s106 = sphi 0, %s92
    %s110 = sphi 0, %s110
    %s112 = sphi 0, %s110
    %s113 = sphi 0, %s112
    %s127 = sphi 0, %s113
    %s131 = sphi 0, %s131
    %s133 = sphi 0, %s131
    %s134 = sphi 0, %s133
    %s148 = sphi 0, %s134
    %s152 = sphi 0, %s152
    %s154 = sphi 0, %s152
    %s155 = sphi 0, %s154
    %s169 = sphi 0, %s155
    %s175 = sphi 0, %s177
    %s178 = sphi 0, %s175
    %s179 = sphi 0, %s178
    %s195 = sphi 0, %s179
  $region4: #{transformer_fwd.16} parent=0 // loop_header_branch
    %16 = sbr.rel (%p14) target = $region8
  $region5: #{transformer_fwd.16} parent=0 // loop_body
    %s18 = ssub.s32 %s13, 1
    %s19 = ssub.s32 %s13, 2
    %s20 = sadd.s32 %s13, 1
    %s21 = ssub.s32 %s13, %s20
    %p22 = scmp.eq.s32.totalorder %s21, 0
    %s24 = sadd.s32 %s23, 1
    %s25 = scalar_select %p22, %s23, %s24
    %p28 = pneg %p22
    %p29 = scmp.eq.s32.totalorder %s13, 1
    %p30 = por %p28, %p29
    %p31 = scmp.ne.s32.totalorder %s23, %s26
    %p32 = scmp.eq.s32.totalorder %s13, 0
    %p33 = por %p31, %p32
    %p34 = scmp.ne.s32.totalorder %s23, %s26
    %p35 = scmp.eq.s32.totalorder %s18, 1
    %p36 = por %p34, %p35
    %p37 = scmp.ne.s32.totalorder %s26, %s27
    %p38 = scmp.eq.s32.totalorder %s18, 0
    %p39 = por %p37, %p38
    %p40 = scmp.ne.s32.totalorder %s26, %s27
    %p41 = scmp.eq.s32.totalorder %s19, 1
    %p42 = por %p40, %p41
    %p44 = scmp.ne.s32.totalorder %s27, %s43
    %p45 = scmp.eq.s32.totalorder %s19, 0
    %p46 = por %p44, %p45
    %s48 = sadd.s32 %s47, 1
    %p51 = scmp.eq.s32.totalorder %s13, 1
    %p52 = scmp.ne.s32.totalorder %s47, %s49
    %p53 = scmp.eq.s32.totalorder %s13, 0
    %p54 = por %p52, %p53
    %p55 = scmp.ne.s32.totalorder %s47, %s49
    %p56 = scmp.eq.s32.totalorder %s18, 1
    %p57 = por %p55, %p56
    %p58 = scmp.ne.s32.totalorder %s49, %s50
    %p59 = scmp.eq.s32.totalorder %s18, 0
    %p60 = por %p58, %p59
    %p61 = scmp.ne.s32.totalorder %s49, %s50
    %p62 = scmp.eq.s32.totalorder %s19, 1
    %p63 = por %p61, %p62
    %p65 = scmp.ne.s32.totalorder %s50, %s64
    %p66 = scmp.eq.s32.totalorder %s19, 0
    %p67 = por %p65, %p66
    %s69 = sadd.s32 %s68, 1
    %p72 = scmp.eq.s32.totalorder %s13, 1
    %p73 = scmp.ne.s32.totalorder %s68, %s70
    %p74 = scmp.eq.s32.totalorder %s13, 0
    %p75 = por %p73, %p74
    %p76 = scmp.ne.s32.totalorder %s68, %s70
    %p77 = scmp.eq.s32.totalorder %s18, 1
    %p78 = por %p76, %p77
    %p79 = scmp.ne.s32.totalorder %s70, %s71
    %p80 = scmp.eq.s32.totalorder %s18, 0
    %p81 = por %p79, %p80
    %p82 = scmp.ne.s32.totalorder %s70, %s71
    %p83 = scmp.eq.s32.totalorder %s19, 1
    %p84 = por %p82, %p83
    %p86 = scmp.ne.s32.totalorder %s71, %s85
    %p87 = scmp.eq.s32.totalorder %s19, 0
    %p88 = por %p86, %p87
    %s90 = sadd.s32 %s89, 1
    %p93 = scmp.eq.s32.totalorder %s13, 1
    %p94 = scmp.ne.s32.totalorder %s89, %s91
    %p95 = scmp.eq.s32.totalorder %s13, 0
    %p96 = por %p94, %p95
    %p97 = scmp.ne.s32.totalorder %s89, %s91
    %p98 = scmp.eq.s32.totalorder %s18, 1
    %p99 = por %p97, %p98
    %p100 = scmp.ne.s32.totalorder %s91, %s92
    %p101 = scmp.eq.s32.totalorder %s18, 0
    %p102 = por %p100, %p101
    %p103 = scmp.ne.s32.totalorder %s91, %s92
    %p104 = scmp.eq.s32.totalorder %s19, 1
    %p105 = por %p103, %p104
    %p107 = scmp.ne.s32.totalorder %s92, %s106
    %p108 = scmp.eq.s32.totalorder %s19, 0
    %p109 = por %p107, %p108
    %s111 = sadd.s32 %s110, 1
    %p114 = scmp.eq.s32.totalorder %s13, 1
    %p115 = scmp.ne.s32.totalorder %s110, %s112
    %p116 = scmp.eq.s32.totalorder %s13, 0
    %p117 = por %p115, %p116
    %p118 = scmp.ne.s32.totalorder %s110, %s112
    %p119 = scmp.eq.s32.totalorder %s18, 1
    %p120 = por %p118, %p119
    %p121 = scmp.ne.s32.totalorder %s112, %s113
    %p122 = scmp.eq.s32.totalorder %s18, 0
    %p123 = por %p121, %p122
    %p124 = scmp.ne.s32.totalorder %s112, %s113
    %p125 = scmp.eq.s32.totalorder %s19, 1
    %p126 = por %p124, %p125
    %p128 = scmp.ne.s32.totalorder %s113, %s127
    %p129 = scmp.eq.s32.totalorder %s19, 0
    %p130 = por %p128, %p129
    %s132 = sadd.s32 %s131, 1
    %p135 = scmp.eq.s32.totalorder %s13, 1
    %p136 = scmp.ne.s32.totalorder %s131, %s133
    %p137 = scmp.eq.s32.totalorder %s13, 0
    %p138 = por %p136, %p137
    %p139 = scmp.ne.s32.totalorder %s131, %s133
    %p140 = scmp.eq.s32.totalorder %s18, 1
    %p141 = por %p139, %p140
    %p142 = scmp.ne.s32.totalorder %s133, %s134
    %p143 = scmp.eq.s32.totalorder %s18, 0
    %p144 = por %p142, %p143
    %p145 = scmp.ne.s32.totalorder %s133, %s134
    %p146 = scmp.eq.s32.totalorder %s19, 1
    %p147 = por %p145, %p146
    %p149 = scmp.ne.s32.totalorder %s134, %s148
    %p150 = scmp.eq.s32.totalorder %s19, 0
    %p151 = por %p149, %p150
    %s153 = sadd.s32 %s152, 1
    %p156 = scmp.eq.s32.totalorder %s13, 1
    %p157 = scmp.ne.s32.totalorder %s152, %s154
    %p158 = scmp.eq.s32.totalorder %s13, 0
    %p159 = por %p157, %p158
    %p160 = scmp.ne.s32.totalorder %s152, %s154
    %p161 = scmp.eq.s32.totalorder %s18, 1
    %p162 = por %p160, %p161
    %p163 = scmp.ne.s32.totalorder %s154, %s155
    %p164 = scmp.eq.s32.totalorder %s18, 0
    %p165 = por %p163, %p164
    %p166 = scmp.ne.s32.totalorder %s154, %s155
    %p167 = scmp.eq.s32.totalorder %s19, 1
    %p168 = por %p166, %p167
    %p170 = scmp.ne.s32.totalorder %s155, %s169
    %p171 = scmp.eq.s32.totalorder %s19, 0
    %p172 = por %p170, %p171
    %s173 = ssub.s32 %s13, %s20
    %p174 = scmp.eq.s32.totalorder %s173, 0
    %s176 = sadd.s32 %s175, 1
    %s177 = scalar_select %p174, %s175, %s176
    %p180 = pneg %p174
    %p181 = scmp.eq.s32.totalorder %s13, 1
    %p182 = por %p180, %p181
    %p183 = scmp.ne.s32.totalorder %s175, %s178
    %p184 = scmp.eq.s32.totalorder %s13, 0
    %p185 = por %p183, %p184
    %p186 = scmp.ne.s32.totalorder %s175, %s178
    %p187 = scmp.eq.s32.totalorder %s18, 1
    %p188 = por %p186, %p187
    %p189 = scmp.ne.s32.totalorder %s178, %s179
    %p190 = scmp.eq.s32.totalorder %s18, 0
    %p191 = por %p189, %p190
    %p192 = scmp.ne.s32.totalorder %s178, %s179
    %p193 = scmp.eq.s32.totalorder %s19, 1
    %p194 = por %p192, %p193
    %p196 = scmp.ne.s32.totalorder %s179, %s195
    %p197 = scmp.eq.s32.totalorder %s19, 0
    %p198 = por %p196, %p197
    %p199 = scmp.le.s32.totalorder 1, %s13
    %p200 = scmp.lt.s32.totalorder %s13, 3
    %p201 = pnand %p199, %p200
    %p202 = pneg %p201
    // Predicated region
    $region9: #{transformer_fwd.16} parent=5 // pred_check
      _
    $region10: #{transformer_fwd.16} parent=5 // pred_check_branch
      %204 = sbr.rel (%p201) target = $region12
    $region11: #{transformer_fwd.16} parent=5 // pred_region
      %s205 = ssub.s32 %s13, 1
      // Predicated region
      $region13: #{transformer_fwd.16} parent=11 // pred_check
        %p206 = pneg %p60
      $region14: #{transformer_fwd.16} parent=11 // pred_check_branch
        %208 = sbr.rel (%p206) target = $region16
      $region15: #{transformer_fwd.16} parent=11 // pred_region
        _
      $region16: #{transformer_fwd.16} parent=11 // pred_fallthru
        _
      // Predicated region
      $region17: #{transformer_fwd.16} parent=11 // pred_check
        %p209 = pneg %p81
      $region18: #{transformer_fwd.16} parent=11 // pred_check_branch
        %211 = sbr.rel (%p209) target = $region20
      $region19: #{transformer_fwd.16} parent=11 // pred_region
        _
      $region20: #{transformer_fwd.16} parent=11 // pred_fallthru
        _
      // Predicated region
      $region21: #{transformer_fwd.16} parent=11 // pred_check
        %p212 = pneg %p102
      $region22: #{transformer_fwd.16} parent=11 // pred_check_branch
        %214 = sbr.rel (%p212) target = $region24
      $region23: #{transformer_fwd.16} parent=11 // pred_region
        _
      $region24: #{transformer_fwd.16} parent=11 // pred_fallthru
        _
      // Predicated region
      $region25: #{transformer_fwd.16} parent=11 // pred_check
        %p215 = pneg %p123
      $region26: #{transformer_fwd.16} parent=11 // pred_check_branch
        %217 = sbr.rel (%p215) target = $region28
      $region27: #{transformer_fwd.16} parent=11 // pred_region
        _
      $region28: #{transformer_fwd.16} parent=11 // pred_fallthru
        _
      // Predicated region
      $region29: #{transformer_fwd.16} parent=11 // pred_check
        %p218 = pneg %p144
      $region30: #{transformer_fwd.16} parent=11 // pred_check_branch
        %220 = sbr.rel (%p218) target = $region32
      $region31: #{transformer_fwd.16} parent=11 // pred_region
        _
      $region32: #{transformer_fwd.16} parent=11 // pred_fallthru
        _
      // Predicated region
      $region33: #{transformer_fwd.16} parent=11 // pred_check
        %p221 = pneg %p165
      $region34: #{transformer_fwd.16} parent=11 // pred_check_branch
        %223 = sbr.rel (%p221) target = $region36
      $region35: #{transformer_fwd.16} parent=11 // pred_region
        _
      $region36: #{transformer_fwd.16} parent=11 // pred_fallthru
        _
    $region12: #{transformer_fwd.16} parent=5 // pred_fallthru
      _
    %p224 = scmp.lt.s32.totalorder %s13, 2
    // Predicated region
    $region37: #{transformer_fwd.16} parent=5 // pred_check
      %p225 = pneg %p224
    $region38: #{transformer_fwd.16} parent=5 // pred_check_branch
      %227 = sbr.rel (%p225) target = $region40
    $region39: #{transformer_fwd.16} parent=5 // pred_region
      // Predicated region
      $region41: #{transformer_fwd.16} parent=39 // pred_check
        %p228 = pneg %p33
      $region42: #{transformer_fwd.16} parent=39 // pred_check_branch
        %230 = sbr.rel (%p228) target = $region44
      $region43: #{transformer_fwd.16} parent=39 // pred_region
        %p231 = scmp.lt.s32.totalorder %s13, 1
        %s232 = scalar_select %p231, %s13, 1
        %s233 = smul.addr %s232, 8
        %s234 = scalar_lea.vmem %s0, %s233
      $region44: #{transformer_fwd.16} parent=39 // pred_fallthru
        _
    $region40: #{transformer_fwd.16} parent=5 // pred_fallthru
      _
    %p235 = scmp.le.s32.totalorder 1, %s13
    %p236 = scmp.lt.s32.totalorder %s13, 3
    %p237 = pnand %p235, %p236
    %p238 = pneg %p237
    // Predicated region
    $region45: #{transformer_fwd.16} parent=5 // pred_check
      _
    $region46: #{transformer_fwd.16} parent=5 // pred_check_branch
      %240 = sbr.rel (%p237) target = $region48
    $region47: #{transformer_fwd.16} parent=5 // pred_region
      %s241 = ssub.s32 %s13, 1
      %p242 = scmp.lt.s32.totalorder %s18, 1
      %s243 = scalar_select %p242, %s18, 1
      %s244 = smul.addr %s243, 8
      %s245 = scalar_lea.vmem %s0, %s244
      %p246 = pneg %p39
      %p247 = pneg %p36
      %p248 = pneg %p60
      %p249 = pneg %p57
      %p250 = pneg %p81
      %p251 = pneg %p78
      %p252 = pneg %p102
      %p253 = pneg %p99
      %p254 = pneg %p123
      %p255 = pneg %p120
      %p256 = pneg %p144
      %p257 = pneg %p141
      %p258 = pneg %p165
      %p259 = pneg %p162
      %p260 = pneg %p191
      %p261 = pneg %p188
      %p262 = scmp.lt.s32.totalorder %s18, 1
      %s263 = scalar_select %p262, %s18, 1
      %s264 = smul.addr %s263, 8
      %s265 = scalar_lea.vmem %s7, %s264
      %p266 = scmp.lt.s32.totalorder %s18, 1
      %s267 = scalar_select %p266, %s18, 1
      %s268 = smul.addr %s267, 8
      %s269 = scalar_lea.vmem %s0, %s268
      %p270 = scmp.lt.s32.totalorder %s18, 1
      %s271 = scalar_select %p270, %s18, 1
      %s272 = smul.addr %s271, 8
      %s273 = scalar_lea.vmem %s7, %s272
      %v274 = vld [vmem:[%s269] sm:$0xff]
      %v275 = vld [vmem:[%s1] sm:$0xff]
      %v276 = vld [vmem:[%s1 + $0x8] sm:$0xff]
      %v277 = vld [vmem:[%s2] sm:$0x1]
      %v279 = vlaneseq
      %v280 = vshrl.u32 %v279, 7
      %v281 = vsub.s32 0, %v280
      %v282 = vrot.slane %v277, %v281
      %vm284 = vcmask 130048
      %v286 = vsel %vm284, %v274, 0
      %288 = vmatprep.subr.mxu0 0.0
      %289 = vmatpush1.msra.mxu0 %v275
      %290 = vmatprep.subr.mxu0 0.0
      %291 = vmatpush1.msra.mxu0 %v276
      %292 = vmatprep.subr.mxu0 0.0
      %293 = vmatpush1.msra.mxu0 0.0
      %294 = vmatprep.subr.mxu0 0.0
      %295 = vmatpush1.msra.mxu0 0.0
      %296 = vmatprep.subr.mxu0 0.0
      %297 = vmatpush1.msra.mxu0 0.0
      %298 = vmatprep.subr.mxu0 0.0
      %299 = vmatpush1.msra.mxu0 0.0
      %300 = vmatprep.subr.mxu0 0.0
      %301 = vmatpush1.msra.mxu0 0.0
      %302 = vmatprep.subr.mxu0 0.0
      %303 = vmatpush1.msra.mxu0 0.0
      %304 = vmatprep.subr.mxu0 0.0
      %305 = vmatpush1.msra.mxu0 0.0
      %306 = vmatprep.subr.mxu0 0.0
      %307 = vmatpush1.msra.mxu0 0.0
      %308 = vmatprep.subr.mxu0 0.0
      %309 = vmatpush1.msra.mxu0 0.0
      %310 = vmatprep.subr.mxu0 0.0
      %311 = vmatpush1.msra.mxu0 0.0
      %312 = vmatprep.subr.mxu0 0.0
      %313 = vmatpush1.msra.mxu0 0.0
      %314 = vmatprep.subr.mxu0 0.0
      %315 = vmatpush1.msra.mxu0 0.0
      %316 = vmatprep.subr.mxu0 0.0
      %317 = vmatpush1.msra.mxu0 0.0
      %318 = vmatprep.subr.mxu0 0.0
      %319 = vmatpush1.msra.mxu0 0.0
      %320 = vmatprep.subr.mxu0 0.0
      %321 = vmatpush1.msra.mxu0 0.0
      %322 = vmatprep.subr.mxu0 0.0
      %323 = vmatpush1.msra.mxu0 0.0
      %324 = vmatprep.subr.mxu0 0.0
      %325 = vmatpush1.msra.mxu0 0.0
      %326 = vmatprep.subr.mxu0 0.0
      %327 = vmatpush1.msra.mxu0 0.0
      %328 = vmatprep.subr.mxu0 0.0
      %329 = vmatpush1.msra.mxu0 0.0
      %330 = vmatprep.subr.mxu0 0.0
      %331 = vmatpush1.msra.mxu0 0.0
      %332 = vmatprep.subr.mxu0 0.0
      %333 = vmatpush1.msra.mxu0 0.0
      %334 = vmatprep.subr.mxu0 0.0
      %335 = vmatpush1.msra.mxu0 0.0
      %336 = vmatprep.subr.mxu0 0.0
      %337 = vmatpush1.msra.mxu0 0.0
      %338 = vmatprep.subr.mxu0 0.0
      %339 = vmatpush1.msra.mxu0 0.0
      %340 = vmatprep.subr.mxu0 0.0
      %341 = vmatpush1.msra.mxu0 0.0
      %342 = vmatprep.subr.mxu0 0.0
      %343 = vmatpush1.msra.mxu0 0.0
      %344 = vmatprep.subr.mxu0 0.0
      %345 = vmatpush1.msra.mxu0 0.0
      %346 = vmatprep.subr.mxu0 0.0
      %347 = vmatpush1.msra.mxu0 0.0
      %348 = vmatprep.subr.mxu0 0.0
      %349 = vmatpush1.msra.mxu0 0.0
      %350 = vmatprep.subr.mxu0 0.0
      %351 = vmatpush1.msra.mxu0 0.0
      %352 = vmatprep.mubr.f32.mxu0 0.0
      %353 = vmatmul.mubr.f32.gmra.mrb[0].mxu0 %v286
      %v354 = vpop.f32.mrb[0].mxu0
      %v355 = vadd.f32 %v282, %v354
      %v356 = vpop.f32.mrb[0].mxu0
      %357 = vdwg.mxu0
      %v358 = vmax.f32 %v355, 0.0
      %v359 = vld [vmem:[%s3] sm:$0xff]
      %v360 = vld [vmem:[%s3 + $0x8] sm:$0xff]
      %v361 = vld [vmem:[%s3 + $0x10] sm:$0xff]
      %v362 = vld [vmem:[%s3 + $0x18] sm:$0xff]
      %v363 = vld [vmem:[%s3 + $0x20] sm:$0xff]
      %v364 = vld [vmem:[%s3 + $0x28] sm:$0xff]
      %v365 = vld [vmem:[%s3 + $0x30] sm:$0xff]
      %v366 = vld [vmem:[%s3 + $0x38] sm:$0xff]
      %v367 = vld [vmem:[%s4] sm:$0x1]
      %v369 = vlaneseq
      %v370 = vshrl.u32 %v369, 7
      %v371 = vsub.s32 0, %v370
      %v372 = vrot.slane %v367, %v371
      %vm374 = vcmask 523264
      %v376 = vsel %vm374, %v358, 0
      %378 = vmatprep.subr.mxu0 0.0
      %379 = vmatpush1.msra.mxu0 %v359
      %380 = vmatprep.subr.mxu0 0.0
      %381 = vmatpush1.msra.mxu0 %v360
      %382 = vmatprep.subr.mxu0 0.0
      %383 = vmatpush1.msra.mxu0 %v361
      %384 = vmatprep.subr.mxu0 0.0
      %385 = vmatpush1.msra.mxu0 %v362
      %386 = vmatprep.subr.mxu0 0.0
      %387 = vmatpush1.msra.mxu0 %v363
      %388 = vmatprep.subr.mxu0 0.0
      %389 = vmatpush1.msra.mxu0 %v364
      %390 = vmatprep.subr.mxu0 0.0
      %391 = vmatpush1.msra.mxu0 %v365
      %392 = vmatprep.subr.mxu0 0.0
      %393 = vmatpush1.msra.mxu0 %v366
      %394 = vmatprep.subr.mxu0 0.0
      %395 = vmatpush1.msra.mxu0 0.0
      %396 = vmatprep.subr.mxu0 0.0
      %397 = vmatpush1.msra.mxu0 0.0
      %398 = vmatprep.subr.mxu0 0.0
      %399 = vmatpush1.msra.mxu0 0.0
      %400 = vmatprep.subr.mxu0 0.0
      %401 = vmatpush1.msra.mxu0 0.0
      %402 = vmatprep.subr.mxu0 0.0
      %403 = vmatpush1.msra.mxu0 0.0
      %404 = vmatprep.subr.mxu0 0.0
      %405 = vmatpush1.msra.mxu0 0.0
      %406 = vmatprep.subr.mxu0 0.0
      %407 = vmatpush1.msra.mxu0 0.0
      %408 = vmatprep.subr.mxu0 0.0
      %409 = vmatpush1.msra.mxu0 0.0
      %410 = vmatprep.subr.mxu0 0.0
      %411 = vmatpush1.msra.mxu0 0.0
      %412 = vmatprep.subr.mxu0 0.0
      %413 = vmatpush1.msra.mxu0 0.0
      %414 = vmatprep.subr.mxu0 0.0
      %415 = vmatpush1.msra.mxu0 0.0
      %416 = vmatprep.subr.mxu0 0.0
      %417 = vmatpush1.msra.mxu0 0.0
      %418 = vmatprep.subr.mxu0 0.0
      %419 = vmatpush1.msra.mxu0 0.0
      %420 = vmatprep.subr.mxu0 0.0
      %421 = vmatpush1.msra.mxu0 0.0
      %422 = vmatprep.subr.mxu0 0.0
      %423 = vmatpush1.msra.mxu0 0.0
      %424 = vmatprep.subr.mxu0 0.0
      %425 = vmatpush1.msra.mxu0 0.0
      %426 = vmatprep.subr.mxu0 0.0
      %427 = vmatpush1.msra.mxu0 0.0
      %428 = vmatprep.subr.mxu0 0.0
      %429 = vmatpush1.msra.mxu0 0.0
      %430 = vmatprep.subr.mxu0 0.0
      %431 = vmatpush1.msra.mxu0 0.0
      %432 = vmatprep.subr.mxu0 0.0
      %433 = vmatpush1.msra.mxu0 0.0
      %434 = vmatprep.subr.mxu0 0.0
      %435 = vmatpush1.msra.mxu0 0.0
      %436 = vmatprep.subr.mxu0 0.0
      %437 = vmatpush1.msra.mxu0 0.0
      %438 = vmatprep.subr.mxu0 0.0
      %439 = vmatpush1.msra.mxu0 0.0
      %440 = vmatprep.subr.mxu0 0.0
      %441 = vmatpush1.msra.mxu0 0.0
      %442 = vmatprep.mubr.f32.mxu0 0.0
      %443 = vmatmul.mubr.f32.gmra.mrb[0].mxu0 %v376
      %v444 = vpop.f32.mrb[0].mxu0
      %v445 = vadd.f32 %v372, %v444
      %v446 = vpop.f32.mrb[0].mxu0
      %447 = vdwg.mxu0
      %v448 = vadd.f32 %v445, %v274
      %v449 = vsel %vm284, %v448, 0.0
      %450 = vadd.xlane.f32.xlu0 %v449
      %v451 = vpop.xlane.xlu0 %450
      %v452 = vrot.slane %v451, 4
      %v453 = vadd.f32 %v451, %v452
      %v454 = vrot.slane %v453, 2
      %v455 = vadd.f32 %v453, %v454
      %v456 = vrot.slane %v455, 1
      %v457 = vadd.f32 %v455, %v456
      %s458 = vtos %v457
      %v459 = vrcp.pop 128.0
      %s460 = vtos %v459
      %s461 = smul.f32 %s458, %s460
      %v462 = vstv %s461
      %v463 = vsub.f32 %v448, %v462
      %v464 = vmul.f32 %v463, %v463
      %v465 = vsel %vm284, %v464, 0.0
      %466 = vadd.xlane.f32.xlu0 %v465
      %v467 = vpop.xlane.xlu0 %466
      %v468 = vrot.slane %v467, 4
      %v469 = vadd.f32 %v467, %v468
      %v470 = vrot.slane %v469, 2
      %v471 = vadd.f32 %v469, %v470
      %v472 = vrot.slane %v471, 1
      %v473 = vadd.f32 %v471, %v472
      %s474 = vtos %v473
      %v475 = vrcp.pop 128.0
      %s476 = vtos %v475
      %s477 = smul.f32 %s474, %s476
      %s478 = sadd.f32 %s477, 1e-05
      %v479 = vstv %s478
      %v480 = vrsqrt.pop %v479
      %s481 = vtos %v480
      %v482 = vstv %s481
      %v483 = vmul.f32 %v463, %v482
      %v484 = vld [vmem:[%s5] sm:$0xff]
      %v485 = vmul.f32 %v483, %v484
      %v486 = vld [vmem:[%s6] sm:$0xff]
      %v487 = vadd.f32 %v485, %v486
      %488 = vst.msk [vmem:[%s273] sm:$0xff] %vm284, %v487
      %p489 = scmp.lt.s32.totalorder %s18, 1
      %s490 = scalar_select %p489, %s18, 1
      %s491 = smul.addr %s490, 8
      %s492 = scalar_lea.vmem %s7, %s491
      // Predicated region
      $region49: #{transformer_fwd.16} parent=47 // pred_check
        %p493 = pneg %p188
      $region50: #{transformer_fwd.16} parent=47 // pred_check_branch
        %495 = sbr.rel (%p493) target = $region52
      $region51: #{transformer_fwd.16} parent=47 // pred_region
        _
      $region52: #{transformer_fwd.16} parent=47 // pred_fallthru
        _
    $region48: #{transformer_fwd.16} parent=5 // pred_fallthru
      _
    %p496 = scmp.le.s32.totalorder 2, %s13
    // Predicated region
    $region53: #{transformer_fwd.16} parent=5 // pred_check
      %p497 = pneg %p496
    $region54: #{transformer_fwd.16} parent=5 // pred_check_branch
      %499 = sbr.rel (%p497) target = $region56
    $region55: #{transformer_fwd.16} parent=5 // pred_region
      %s500 = ssub.s32 %s13, 2
      // Predicated region
      $region57: #{transformer_fwd.16} parent=55 // pred_check
        %p501 = pneg %p194
      $region58: #{transformer_fwd.16} parent=55 // pred_check_branch
        %503 = sbr.rel (%p501) target = $region60
      $region59: #{transformer_fwd.16} parent=55 // pred_region
        %p504 = scmp.lt.s32.totalorder %s19, 1
        %s505 = scalar_select %p504, %s19, 1
        %s506 = smul.addr %s505, 8
        %s507 = scalar_lea.vmem %s7, %s506
      $region60: #{transformer_fwd.16} parent=55 // pred_fallthru
        _
    $region56: #{transformer_fwd.16} parent=5 // pred_fallthru
      _
  $region6: #{transformer_fwd.16} parent=0 // loop_footer
    %s17 = sadd.s32 1, %s13
  $region7: #{transformer_fwd.16} parent=0 // loop_footer_branch
    %12 = sbr.rel target = $region3
  $region8: #{transformer_fwd.16} parent=0 // loop_exit
    _

</llo_original>
